<compile_context>
chip_gen: v6e
topology: v6e:2x2x1
jax: 0.10.0
libtpu: 0.0.40
codegen_flags: <defaults>
</compile_context>

<pallas_src>
import functools

import jax
import jax.numpy as jnp
from jax import lax
from jax.experimental import pallas as pl
from jax.experimental.pallas import tpu as pltpu

EPS = 1e-6


# ----------------------------- in-kernel helpers ------------------------------------
def _layernorm(x):
    # LayerNorm(elementwise_affine=False, eps=1e-6), biased variance (PyTorch semantics)
    mu = jnp.mean(x, axis=-1, keepdims=True)
    var = jnp.mean((x - mu) ** 2, axis=-1, keepdims=True)
    return (x - mu) * lax.rsqrt(var + EPS)


def _gelu_tanh(x):
    # keep the transcendental path in f32 (v5e EUP/VPU has no bf16)
    c = 0.7978845608028654  # sqrt(2/pi)
    return 0.5 * x * (1.0 + jnp.tanh(c * (x + 0.044715 * x * x * x)))


def _mha(q, k, v, w_proj, b_proj, num_heads, head_dim):
    """Multi-head softmax attention.

    q: (Tq, C) f32, attention scale already folded in.
    k, v: (Tk, C) bf16 (resident in VMEM scratch).
    w_proj: (C, C) bf16, b_proj: (1, C) f32.

    Per-head QK^T / softmax / PV are 2-D MXU matmuls; per-head outputs are
    concatenated along lanes once and projected with a single full-C matmul
    (no per-head K=head_dim projection accumulations).
    """
    q = q.astype(jnp.bfloat16)
    heads = []
    for h in range(num_heads):
        lo = h * head_dim
        qh = q[:, lo:lo + head_dim]
        kh = k[:, lo:lo + head_dim]
        vh = v[:, lo:lo + head_dim]
        # s = qh @ kh^T  (contract on head_dim, rhs transposed in dimension_numbers)
        s = lax.dot_general(qh, kh, (((1,), (1,)), ((), ())),
                            preferred_element_type=jnp.float32)          # (Tq, Tk) f32
        s = s - jnp.max(s, axis=-1, keepdims=True)
        e = jnp.exp(s)
        p = e * pl.reciprocal(jnp.sum(e, axis=-1, keepdims=True), approx=True)
        oh = jnp.dot(p.astype(jnp.bfloat16), vh,
                     preferred_element_type=jnp.float32)                  # (Tq, d)
        heads.append(oh.astype(jnp.bfloat16))
    o = jnp.concatenate(heads, axis=-1)                                   # (Tq, C) bf16
    return jnp.dot(o, w_proj, preferred_element_type=jnp.float32) + b_proj


# ----------------------------------- kernel -----------------------------------------
def dit_block_kernel(xt_ref, xf_ref, y_ref, t_ref, sst_ref,
                     wq_s_ref, bq_s_ref, wkv_s_ref, bkv_s_ref,
                     wproj_ref, bproj_ref,
                     wq_c_ref, bq_c_ref, wkv_c_ref, bkv_c_ref,
                     wcp_ref, bcp_ref,
                     w1_ref, b1_ref, w2_ref, b2_ref,
                     o_ref,
                     ks_ref, vs_ref, kc_ref, vc_ref,
                     *, num_heads):
    C = xt_ref.shape[-1]
    head_dim = C // num_heads
    scale = head_dim ** -0.5

    # adaLN-single modulation parameters (per batch)
    mod = sst_ref[...] + t_ref[0]                 # (6, C) f32
    shift_msa, scale_msa, gate_msa = mod[0:1], mod[1:2], mod[2:3]
    shift_mlp, scale_mlp, gate_mlp = mod[3:4], mod[4:5], mod[5:6]

    # ---- per-batch K/V precompute (runs only on the first token tile of each batch) ----
    @pl.when(pl.program_id(1) == 0)
    def _():
        # self-attention K/V from the full sequence (norm1 + modulation of original x)
        xf = xf_ref[0]                                                     # (N, C) f32
        xmf = (_layernorm(xf) * (1.0 + scale_msa) + shift_msa).astype(jnp.bfloat16)
        kv = (jnp.dot(xmf, wkv_s_ref[...], preferred_element_type=jnp.float32)
              + bkv_s_ref[...])                                            # (N, 2C) f32
        ks_ref[...] = kv[:, :C].astype(jnp.bfloat16)
        vs_ref[...] = kv[:, C:].astype(jnp.bfloat16)
        # cross-attention K/V from y
        yb = y_ref[0].astype(jnp.bfloat16)                                 # (M, C)
        kvc = (jnp.dot(yb, wkv_c_ref[...], preferred_element_type=jnp.float32)
               + bkv_c_ref[...])                                           # (M, 2C) f32
        kc_ref[...] = kvc[:, :C].astype(jnp.bfloat16)
        vc_ref[...] = kvc[:, C:].astype(jnp.bfloat16)

    x = xt_ref[0]                                                          # (tN, C) f32

    # ---- self-attention branch (AttentionKVCompress, sr_ratio=1, sampling=None) ----
    xm = _layernorm(x) * (1.0 + scale_msa) + shift_msa                     # t2i_modulate(norm1(x))
    q = (jnp.dot(xm.astype(jnp.bfloat16), wq_s_ref[...],
                 preferred_element_type=jnp.float32) + bq_s_ref[...]) * scale
    attn = _mha(q, ks_ref[...], vs_ref[...], wproj_ref[...], bproj_ref[...],
                num_heads, head_dim)
    x = x + gate_msa * attn

    # ---- cross-attention branch (MultiHeadCrossAttention, mask=None) ----
    cq = (jnp.dot(x.astype(jnp.bfloat16), wq_c_ref[...],
                  preferred_element_type=jnp.float32) + bq_c_ref[...]) * scale
    cross = _mha(cq, kc_ref[...], vc_ref[...], wcp_ref[...], bcp_ref[...],
                 num_heads, head_dim)
    x = x + cross

    # ---- MLP branch (Linear -> GELU(tanh) -> Linear) ----
    xm2 = _layernorm(x) * (1.0 + scale_mlp) + shift_mlp                    # t2i_modulate(norm2(x))
    h = (jnp.dot(xm2.astype(jnp.bfloat16), w1_ref[...],
                 preferred_element_type=jnp.float32) + b1_ref[...])
    h = _gelu_tanh(h)
    m = (jnp.dot(h.astype(jnp.bfloat16), w2_ref[...],
                 preferred_element_type=jnp.float32) + b2_ref[...])
    x = x + gate_mlp * m

    o_ref[0] = x.astype(o_ref.dtype)


# ----------------------------------- wrapper -----------------------------------------
def dit_block(x, y, t, params, num_heads, *, tile_n=64):
    B, N, C = x.shape
    M = y.shape[1]
    assert C % num_heads == 0

    # token-tile size: must divide N and satisfy the (8,128) sublane constraint
    if N % tile_n != 0 or tile_n % 8 != 0:
        tile_n = N
    n_tiles = N // tile_n

    t3 = t.reshape(B, 6, C)                       # glue: t.reshape(B, 6, -1)
    bf = lambda a: a.astype(jnp.bfloat16)

    # split fused qkv into q-part and kv-part; cast all weights to bf16 (biases stay f32)
    wqkv, bqkv = params["wqkv"], params["bqkv"]
    w_list = [
        bf(wqkv[:, :C]), bqkv[:, :C],             # self-attn  q
        bf(wqkv[:, C:]), bqkv[:, C:],             # self-attn  kv
        bf(params["wproj"]), params["bproj"],     # self-attn  out proj
        bf(params["wq"]), params["bq"],           # cross-attn q
        bf(params["wkv"]), params["bkv"],         # cross-attn kv
        bf(params["wcproj"]), params["bcproj"],   # cross-attn out proj
        bf(params["w1"]), params["b1"],           # mlp fc1
        bf(params["w2"]), params["b2"],           # mlp fc2
    ]
    # TODO(synk): at real DiT scale (C~1152) pad C/M to 128 multiples (masking padded keys)
    # and stream w1/w2 from HBM instead of keeping all weights VMEM-resident.
    w_specs = [pl.BlockSpec(a.shape, lambda b, i, _nd=a.ndim: (0,) * _nd)
               for a in w_list]

    in_specs = [
        pl.BlockSpec((1, tile_n, C), lambda b, i: (b, i, 0)),   # x (query/residual tile)
        pl.BlockSpec((1, N, C), lambda b, i: (b, 0, 0)),        # x (full seq, K/V source)
        pl.BlockSpec((1, M, C), lambda b, i: (b, 0, 0)),        # y
        pl.BlockSpec((1, 6, C), lambda b, i: (b, 0, 0)),        # t
        pl.BlockSpec((6, C), lambda b, i: (0, 0)),              # scale_shift_table
    ] + w_specs

    kernel = functools.partial(dit_block_kernel, num_heads=num_heads)
    return pl.pallas_call(
        kernel,
        out_shape=jax.ShapeDtypeStruct((B, N, C), jnp.float32),
        grid=(B, n_tiles),
        in_specs=in_specs,
        out_specs=pl.BlockSpec((1, tile_n, C), lambda b, i: (b, i, 0)),
        scratch_shapes=[
            pltpu.VMEM((N, C), jnp.bfloat16),    # self-attn K (full seq, per batch)
            pltpu.VMEM((N, C), jnp.bfloat16),    # self-attn V
            pltpu.VMEM((M, C), jnp.bfloat16),    # cross-attn K (per batch)
            pltpu.VMEM((M, C), jnp.bfloat16),    # cross-attn V
        ],
        compiler_params=pltpu.CompilerParams(
            dimension_semantics=("parallel", "arbitrary"),
            vmem_limit_bytes=48 * 1024 * 1024,
        ),
    )(x, x, y, t3, params["scale_shift_table"], *w_list)


# ------------------------------ params / reference -----------------------------------
def init_params(key, C, mlp_ratio=4.0):
    hidden = int(C * mlp_ratio)
    ks = jax.random.split(key, 16)

    def lin(kw, kb, din, dout):
        w = jax.random.normal(kw, (din, dout), jnp.float32) * 0.02
        b = jax.random.normal(kb, (1, dout), jnp.float32) * 0.02
        return w, b

    p = {}
    p["wqkv"], p["bqkv"] = lin(ks[0], ks[1], C, 3 * C)
    p["wproj"], p["bproj"] = lin(ks[2], ks[3], C, C)
    p["wq"], p["bq"] = lin(ks[4], ks[5], C, C)
    p["wkv"], p["bkv"] = lin(ks[6], ks[7], C, 2 * C)
    p["wcproj"], p["bcproj"] = lin(ks[8], ks[9], C, C)
    p["w1"], p["b1"] = lin(ks[10], ks[11], C, hidden)
    p["w2"], p["b2"] = lin(ks[12], ks[13], hidden, C)
    p["scale_shift_table"] = (jax.random.normal(ks[14], (6, C), jnp.float32)
                              / (C ** 0.5))
    return p


def dit_block_ref(x, y, t, params, num_heads):
    """Pure-JAX f32 reference implementation (for correctness check only)."""
    B, N, C = x.shape
    H, d = num_heads, C // num_heads
    mod = params["scale_shift_table"][None] + t.reshape(B, 6, C)
    shift_msa, scale_msa, gate_msa, shift_mlp, scale_mlp, gate_mlp = (
        mod[:, i:i + 1, :] for i in range(6))

    def ln(a):
        mu = a.mean(-1, keepdims=True)
        var = ((a - mu) ** 2).mean(-1, keepdims=True)
        return (a - mu) / jnp.sqrt(var + EPS)

    def mha(q, k, v):
        qh = q.reshape(q.shape[0], q.shape[1], H, d)
        kh = k.reshape(k.shape[0], k.shape[1], H, d)
        vh = v.reshape(v.shape[0], v.shape[1], H, d)
        s = jnp.einsum('bnhd,bmhd->bhnm', qh, kh) * (d ** -0.5)
        p = jax.nn.softmax(s, axis=-1)
        o = jnp.einsum('bhnm,bmhd->bnhd', p, vh)
        return o.reshape(q.shape[0], q.shape[1], C)

    xm = ln(x) * (1 + scale_msa) + shift_msa
    qkv = xm @ params["wqkv"] + params["bqkv"]
    q, k, v = jnp.split(qkv, 3, axis=-1)
    x = x + gate_msa * (mha(q, k, v) @ params["wproj"] + params["bproj"])

    cq = x @ params["wq"] + params["bq"]
    kv = y @ params["wkv"] + params["bkv"]
    ck, cv = jnp.split(kv, 2, axis=-1)
    x = x + (mha(cq, ck, cv) @ params["wcproj"] + params["bcproj"])

    xm2 = ln(x) * (1 + scale_mlp) + shift_mlp
    h = jax.nn.gelu(xm2 @ params["w1"] + params["b1"], approximate=True)
    x = x + gate_mlp * (h @ params["w2"] + params["b2"])
    return x


# -------------------------------------- main ------------------------------------------
if __name__ == "__main__":
    # batch, x tokens, y tokens, hidden size, heads  (128-aligned, lane-dense shapes)
    B, N, M, C, H = 2, 128, 64, 128, 4
    key = jax.random.PRNGKey(0)
    kx, ky, kt, kp = jax.random.split(key, 4)
    x = jax.random.normal(kx, (B, N, C), jnp.float32)
    y = jax.random.normal(ky, (B, M, C), jnp.float32)
    t = jax.random.normal(kt, (B, 6 * C), jnp.float32)
    params = init_params(kp, C, mlp_ratio=4.0)

    out = dit_block(x, y, t, params, H, tile_n=64)
    out = jax.block_until_ready(out)

    ref = dit_block_ref(x, y, t, params, H)
    max_err = float(jnp.max(jnp.abs(out - ref)))
    # bf16 MXU inputs with f32 accumulation -> slightly looser tolerance than pure f32
    assert jnp.allclose(out, ref, atol=5e-2, rtol=5e-2), f"max abs err = {max_err}"

    print("KERNEL_OK")
</pallas_src>

<mosaic_0001>
module attributes {stable_mosaic.version = 11 : i64} {
  func.func @dit_block_kernel(%arg0: i32, %arg1: i32, %arg2: memref<1x64x128xf32, #tpu.memory_space<vmem>>, %arg3: memref<1x128x128xf32, #tpu.memory_space<vmem>>, %arg4: memref<1x64x128xf32, #tpu.memory_space<vmem>>, %arg5: memref<1x6x128xf32, #tpu.memory_space<vmem>>, %arg6: memref<6x128xf32, #tpu.memory_space<vmem>>, %arg7: memref<128x128xbf16, #tpu.memory_space<vmem>>, %arg8: memref<1x128xf32, #tpu.memory_space<vmem>>, %arg9: memref<128x256xbf16, #tpu.memory_space<vmem>>, %arg10: memref<1x256xf32, #tpu.memory_space<vmem>>, %arg11: memref<128x128xbf16, #tpu.memory_space<vmem>>, %arg12: memref<1x128xf32, #tpu.memory_space<vmem>>, %arg13: memref<128x128xbf16, #tpu.memory_space<vmem>>, %arg14: memref<1x128xf32, #tpu.memory_space<vmem>>, %arg15: memref<128x256xbf16, #tpu.memory_space<vmem>>, %arg16: memref<1x256xf32, #tpu.memory_space<vmem>>, %arg17: memref<128x128xbf16, #tpu.memory_space<vmem>>, %arg18: memref<1x128xf32, #tpu.memory_space<vmem>>, %arg19: memref<128x512xbf16, #tpu.memory_space<vmem>>, %arg20: memref<1x512xf32, #tpu.memory_space<vmem>>, %arg21: memref<512x128xbf16, #tpu.memory_space<vmem>>, %arg22: memref<1x128xf32, #tpu.memory_space<vmem>>, %arg23: memref<1x64x128xf32, #tpu.memory_space<vmem>>, %arg24: memref<128x128xbf16, #tpu.memory_space<vmem>>, %arg25: memref<128x128xbf16, #tpu.memory_space<vmem>>, %arg26: memref<64x128xbf16, #tpu.memory_space<vmem>>, %arg27: memref<64x128xbf16, #tpu.memory_space<vmem>>) attributes {dimension_semantics = [#tpu.dimension_semantics<parallel>, #tpu.dimension_semantics<arbitrary>], iteration_bounds = array<i64: 2, 2>, scalar_prefetch = 0 : i64, scratch_operands = 4 : i64, tpu.core_type = #tpu.core_type<tc>, window_params = [{transform_indices = @transform_0, window_bounds = array<i64: 1, 64, 128>}, {transform_indices = @transform_1, window_bounds = array<i64: 1, 128, 128>}, {transform_indices = @transform_2, window_bounds = array<i64: 1, 64, 128>}, {transform_indices = @transform_3, window_bounds = array<i64: 1, 6, 128>}, {pipeline_mode = #tpu.pipeline_mode<synchronous>, transform_indices = @transform_4, window_bounds = array<i64: 6, 128>}, {pipeline_mode = #tpu.pipeline_mode<synchronous>, transform_indices = @transform_5, window_bounds = array<i64: 128, 128>}, {pipeline_mode = #tpu.pipeline_mode<synchronous>, transform_indices = @transform_6, window_bounds = array<i64: 1, 128>}, {pipeline_mode = #tpu.pipeline_mode<synchronous>, transform_indices = @transform_7, window_bounds = array<i64: 128, 256>}, {pipeline_mode = #tpu.pipeline_mode<synchronous>, transform_indices = @transform_8, window_bounds = array<i64: 1, 256>}, {pipeline_mode = #tpu.pipeline_mode<synchronous>, transform_indices = @transform_9, window_bounds = array<i64: 128, 128>}, {pipeline_mode = #tpu.pipeline_mode<synchronous>, transform_indices = @transform_10, window_bounds = array<i64: 1, 128>}, {pipeline_mode = #tpu.pipeline_mode<synchronous>, transform_indices = @transform_11, window_bounds = array<i64: 128, 128>}, {pipeline_mode = #tpu.pipeline_mode<synchronous>, transform_indices = @transform_12, window_bounds = array<i64: 1, 128>}, {pipeline_mode = #tpu.pipeline_mode<synchronous>, transform_indices = @transform_13, window_bounds = array<i64: 128, 256>}, {pipeline_mode = #tpu.pipeline_mode<synchronous>, transform_indices = @transform_14, window_bounds = array<i64: 1, 256>}, {pipeline_mode = #tpu.pipeline_mode<synchronous>, transform_indices = @transform_15, window_bounds = array<i64: 128, 128>}, {pipeline_mode = #tpu.pipeline_mode<synchronous>, transform_indices = @transform_16, window_bounds = array<i64: 1, 128>}, {pipeline_mode = #tpu.pipeline_mode<synchronous>, transform_indices = @transform_17, window_bounds = array<i64: 128, 512>}, {pipeline_mode = #tpu.pipeline_mode<synchronous>, transform_indices = @transform_18, window_bounds = array<i64: 1, 512>}, {pipeline_mode = #tpu.pipeline_mode<synchronous>, transform_indices = @transform_19, window_bounds = array<i64: 512, 128>}, {pipeline_mode = #tpu.pipeline_mode<synchronous>, transform_indices = @transform_20, window_bounds = array<i64: 1, 128>}, {transform_indices = @transform_21, window_bounds = array<i64: 1, 64, 128>}]} {
    %c0 = arith.constant 0 : index
    %c0_0 = arith.constant 0 : index
    %0 = vector.load %arg6[%c0, %c0_0] : memref<6x128xf32, #tpu.memory_space<vmem>>, vector<6x128xf32>
    %c0_1 = arith.constant 0 : index
    %c0_2 = arith.constant 0 : index
    %c0_3 = arith.constant 0 : index
    %1 = vector.load %arg5[%c0_1, %c0_2, %c0_3] : memref<1x6x128xf32, #tpu.memory_space<vmem>>, vector<1x6x128xf32>
    %2 = vector.shape_cast %1 : vector<1x6x128xf32> to vector<6x128xf32>
    %3 = arith.addf %0, %2 : vector<6x128xf32>
    %4 = vector.extract_strided_slice %3 {offsets = [0, 0], sizes = [1, 128], strides = [1, 1]} : vector<6x128xf32> to vector<1x128xf32>
    %5 = vector.extract_strided_slice %3 {offsets = [1, 0], sizes = [1, 128], strides = [1, 1]} : vector<6x128xf32> to vector<1x128xf32>
    %6 = vector.extract_strided_slice %3 {offsets = [2, 0], sizes = [1, 128], strides = [1, 1]} : vector<6x128xf32> to vector<1x128xf32>
    %7 = vector.extract_strided_slice %3 {offsets = [3, 0], sizes = [1, 128], strides = [1, 1]} : vector<6x128xf32> to vector<1x128xf32>
    %8 = vector.extract_strided_slice %3 {offsets = [4, 0], sizes = [1, 128], strides = [1, 1]} : vector<6x128xf32> to vector<1x128xf32>
    %9 = vector.extract_strided_slice %3 {offsets = [5, 0], sizes = [1, 128], strides = [1, 1]} : vector<6x128xf32> to vector<1x128xf32>
    %c0_i32 = arith.constant 0 : i32
    %10 = arith.cmpi eq, %arg1, %c0_i32 : i32
    %11 = arith.extui %10 : i1 to i32
    %c0_i32_4 = arith.constant 0 : i32
    %12 = arith.cmpi ne, %11, %c0_i32_4 : i32
    scf.if %12 {
      %c0_98 = arith.constant 0 : index
      %c0_99 = arith.constant 0 : index
      %c0_100 = arith.constant 0 : index
      %268 = vector.load %arg3[%c0_98, %c0_99, %c0_100] : memref<1x128x128xf32, #tpu.memory_space<vmem>>, vector<1x128x128xf32>
      %269 = vector.shape_cast %268 : vector<1x128x128xf32> to vector<128x128xf32>
      %cst_101 = arith.constant dense<0.000000e+00> : vector<128xf32>
      %270 = vector.multi_reduction <add>, %269, %cst_101 [1] : vector<128x128xf32> to vector<128xf32>
      %271 = vector.shape_cast %270 : vector<128xf32> to vector<128x1xf32>
      %cst_102 = arith.constant 1.280000e+02 : f32
      %272 = vector.broadcast %cst_102 : f32 to vector<128x1xf32>
      %273 = arith.divf %271, %272 : vector<128x1xf32>
      %274 = vector.broadcast %273 : vector<128x1xf32> to vector<128x128xf32>
      %275 = arith.subf %269, %274 : vector<128x128xf32>
      %276 = arith.mulf %275, %275 : vector<128x128xf32>
      %cst_103 = arith.constant dense<0.000000e+00> : vector<128xf32>
      %277 = vector.multi_reduction <add>, %276, %cst_103 [1] : vector<128x128xf32> to vector<128xf32>
      %278 = vector.shape_cast %277 : vector<128xf32> to vector<128x1xf32>
      %cst_104 = arith.constant 1.280000e+02 : f32
      %279 = vector.broadcast %cst_104 : f32 to vector<128x1xf32>
      %280 = arith.divf %278, %279 : vector<128x1xf32>
      %281 = vector.broadcast %273 : vector<128x1xf32> to vector<128x128xf32>
      %282 = arith.subf %269, %281 : vector<128x128xf32>
      %cst_105 = arith.constant 9.99999997E-7 : f32
      %283 = vector.broadcast %cst_105 : f32 to vector<128x1xf32>
      %284 = arith.addf %280, %283 : vector<128x1xf32>
      %285 = math.rsqrt %284 : vector<128x1xf32>
      %286 = vector.broadcast %285 : vector<128x1xf32> to vector<128x128xf32>
      %287 = arith.mulf %282, %286 : vector<128x128xf32>
      %cst_106 = arith.constant 1.000000e+00 : f32
      %288 = vector.broadcast %cst_106 : f32 to vector<1x128xf32>
      %289 = arith.addf %288, %5 : vector<1x128xf32>
      %290 = vector.broadcast %289 : vector<1x128xf32> to vector<128x128xf32>
      %291 = arith.mulf %287, %290 : vector<128x128xf32>
      %292 = vector.broadcast %4 : vector<1x128xf32> to vector<128x128xf32>
      %293 = arith.addf %291, %292 : vector<128x128xf32>
      %294 = arith.truncf %293 : vector<128x128xf32> to vector<128x128xbf16>
      %c0_107 = arith.constant 0 : index
      %c0_108 = arith.constant 0 : index
      %295 = vector.load %arg9[%c0_107, %c0_108] : memref<128x256xbf16, #tpu.memory_space<vmem>>, vector<128x256xbf16>
      %cst_109 = arith.constant dense<0.000000e+00> : vector<128x256xf32>
      %296 = tpu.matmul %294, %295, %cst_109 {dimension_numbers = #tpu.dot_dimension_numbers<[1], [0], [0], [1], [0, 0, 1, 1], [], []>} : vector<128x128xbf16>, vector<128x256xbf16>, vector<128x256xf32> -> vector<128x256xf32>
      %c0_110 = arith.constant 0 : index
      %c0_111 = arith.constant 0 : index
      %297 = vector.load %arg10[%c0_110, %c0_111] : memref<1x256xf32, #tpu.memory_space<vmem>>, vector<1x256xf32>
      %298 = vector.broadcast %297 : vector<1x256xf32> to vector<128x256xf32>
      %299 = arith.addf %296, %298 : vector<128x256xf32>
      %300 = vector.extract_strided_slice %299 {offsets = [0, 0], sizes = [128, 128], strides = [1, 1]} : vector<128x256xf32> to vector<128x128xf32>
      %301 = arith.truncf %300 : vector<128x128xf32> to vector<128x128xbf16>
      %c0_112 = arith.constant 0 : index
      %c0_113 = arith.constant 0 : index
      %302 = vector.load %arg24[%c0_112, %c0_113] : memref<128x128xbf16, #tpu.memory_space<vmem>>, vector<128x128xbf16>
      tpu.vector_store %arg24[%c0_112, %c0_113], %301 {strides = array<i32>} : memref<128x128xbf16, #tpu.memory_space<vmem>>, vector<128x128xbf16>,
      %303 = vector.extract_strided_slice %299 {offsets = [0, 128], sizes = [128, 128], strides = [1, 1]} : vector<128x256xf32> to vector<128x128xf32>
      %304 = arith.truncf %303 : vector<128x128xf32> to vector<128x128xbf16>
      %c0_114 = arith.constant 0 : index
      %c0_115 = arith.constant 0 : index
      %305 = vector.load %arg25[%c0_114, %c0_115] : memref<128x128xbf16, #tpu.memory_space<vmem>>, vector<128x128xbf16>
      tpu.vector_store %arg25[%c0_114, %c0_115], %304 {strides = array<i32>} : memref<128x128xbf16, #tpu.memory_space<vmem>>, vector<128x128xbf16>,
      %c0_116 = arith.constant 0 : index
      %c0_117 = arith.constant 0 : index
      %c0_118 = arith.constant 0 : index
      %306 = vector.load %arg4[%c0_116, %c0_117, %c0_118] : memref<1x64x128xf32, #tpu.memory_space<vmem>>, vector<1x64x128xf32>
      %307 = vector.shape_cast %306 : vector<1x64x128xf32> to vector<64x128xf32>
      %308 = arith.truncf %307 : vector<64x128xf32> to vector<64x128xbf16>
      %c0_119 = arith.constant 0 : index
      %c0_120 = arith.constant 0 : index
      %309 = vector.load %arg15[%c0_119, %c0_120] : memref<128x256xbf16, #tpu.memory_space<vmem>>, vector<128x256xbf16>
      %cst_121 = arith.constant dense<0.000000e+00> : vector<64x256xf32>
      %310 = tpu.matmul %308, %309, %cst_121 {dimension_numbers = #tpu.dot_dimension_numbers<[1], [0], [0], [1], [0, 0, 1, 1], [], []>} : vector<64x128xbf16>, vector<128x256xbf16>, vector<64x256xf32> -> vector<64x256xf32>
      %c0_122 = arith.constant 0 : index
      %c0_123 = arith.constant 0 : index
      %311 = vector.load %arg16[%c0_122, %c0_123] : memref<1x256xf32, #tpu.memory_space<vmem>>, vector<1x256xf32>
      %312 = vector.broadcast %311 : vector<1x256xf32> to vector<64x256xf32>
      %313 = arith.addf %310, %312 : vector<64x256xf32>
      %314 = vector.extract_strided_slice %313 {offsets = [0, 0], sizes = [64, 128], strides = [1, 1]} : vector<64x256xf32> to vector<64x128xf32>
      %315 = arith.truncf %314 : vector<64x128xf32> to vector<64x128xbf16>
      %c0_124 = arith.constant 0 : index
      %c0_125 = arith.constant 0 : index
      %316 = vector.load %arg26[%c0_124, %c0_125] : memref<64x128xbf16, #tpu.memory_space<vmem>>, vector<64x128xbf16>
      tpu.vector_store %arg26[%c0_124, %c0_125], %315 {strides = array<i32>} : memref<64x128xbf16, #tpu.memory_space<vmem>>, vector<64x128xbf16>,
      %317 = vector.extract_strided_slice %313 {offsets = [0, 128], sizes = [64, 128], strides = [1, 1]} : vector<64x256xf32> to vector<64x128xf32>
      %318 = arith.truncf %317 : vector<64x128xf32> to vector<64x128xbf16>
      %c0_126 = arith.constant 0 : index
      %c0_127 = arith.constant 0 : index
      %319 = vector.load %arg27[%c0_126, %c0_127] : memref<64x128xbf16, #tpu.memory_space<vmem>>, vector<64x128xbf16>
      tpu.vector_store %arg27[%c0_126, %c0_127], %318 {strides = array<i32>} : memref<64x128xbf16, #tpu.memory_space<vmem>>, vector<64x128xbf16>,
    } else {
    }
    %c0_5 = arith.constant 0 : index
    %c0_6 = arith.constant 0 : index
    %c0_7 = arith.constant 0 : index
    %13 = vector.load %arg2[%c0_5, %c0_6, %c0_7] : memref<1x64x128xf32, #tpu.memory_space<vmem>>, vector<1x64x128xf32>
    %14 = vector.shape_cast %13 : vector<1x64x128xf32> to vector<64x128xf32>
    %cst = arith.constant dense<0.000000e+00> : vector<64xf32>
    %15 = vector.multi_reduction <add>, %14, %cst [1] : vector<64x128xf32> to vector<64xf32>
    %16 = vector.shape_cast %15 : vector<64xf32> to vector<64x1xf32>
    %cst_8 = arith.constant 1.280000e+02 : f32
    %17 = vector.broadcast %cst_8 : f32 to vector<64x1xf32>
    %18 = arith.divf %16, %17 : vector<64x1xf32>
    %19 = vector.broadcast %18 : vector<64x1xf32> to vector<64x128xf32>
    %20 = arith.subf %14, %19 : vector<64x128xf32>
    %21 = arith.mulf %20, %20 : vector<64x128xf32>
    %cst_9 = arith.constant dense<0.000000e+00> : vector<64xf32>
    %22 = vector.multi_reduction <add>, %21, %cst_9 [1] : vector<64x128xf32> to vector<64xf32>
    %23 = vector.shape_cast %22 : vector<64xf32> to vector<64x1xf32>
    %cst_10 = arith.constant 1.280000e+02 : f32
    %24 = vector.broadcast %cst_10 : f32 to vector<64x1xf32>
    %25 = arith.divf %23, %24 : vector<64x1xf32>
    %26 = vector.broadcast %18 : vector<64x1xf32> to vector<64x128xf32>
    %27 = arith.subf %14, %26 : vector<64x128xf32>
    %cst_11 = arith.constant 9.99999997E-7 : f32
    %28 = vector.broadcast %cst_11 : f32 to vector<64x1xf32>
    %29 = arith.addf %25, %28 : vector<64x1xf32>
    %30 = math.rsqrt %29 : vector<64x1xf32>
    %31 = vector.broadcast %30 : vector<64x1xf32> to vector<64x128xf32>
    %32 = arith.mulf %27, %31 : vector<64x128xf32>
    %cst_12 = arith.constant 1.000000e+00 : f32
    %33 = vector.broadcast %cst_12 : f32 to vector<1x128xf32>
    %34 = arith.addf %33, %5 : vector<1x128xf32>
    %35 = vector.broadcast %34 : vector<1x128xf32> to vector<64x128xf32>
    %36 = arith.mulf %32, %35 : vector<64x128xf32>
    %37 = vector.broadcast %4 : vector<1x128xf32> to vector<64x128xf32>
    %38 = arith.addf %36, %37 : vector<64x128xf32>
    %39 = arith.truncf %38 : vector<64x128xf32> to vector<64x128xbf16>
    %c0_13 = arith.constant 0 : index
    %c0_14 = arith.constant 0 : index
    %40 = vector.load %arg7[%c0_13, %c0_14] : memref<128x128xbf16, #tpu.memory_space<vmem>>, vector<128x128xbf16>
    %cst_15 = arith.constant dense<0.000000e+00> : vector<64x128xf32>
    %41 = tpu.matmul %39, %40, %cst_15 {dimension_numbers = #tpu.dot_dimension_numbers<[1], [0], [0], [1], [0, 0, 1, 1], [], []>} : vector<64x128xbf16>, vector<128x128xbf16>, vector<64x128xf32> -> vector<64x128xf32>
    %c0_16 = arith.constant 0 : index
    %c0_17 = arith.constant 0 : index
    %42 = vector.load %arg8[%c0_16, %c0_17] : memref<1x128xf32, #tpu.memory_space<vmem>>, vector<1x128xf32>
    %43 = vector.broadcast %42 : vector<1x128xf32> to vector<64x128xf32>
    %44 = arith.addf %41, %43 : vector<64x128xf32>
    %cst_18 = arith.constant 0.176776692 : f32
    %45 = vector.broadcast %cst_18 : f32 to vector<64x128xf32>
    %46 = arith.mulf %44, %45 : vector<64x128xf32>
    %c0_19 = arith.constant 0 : index
    %c0_20 = arith.constant 0 : index
    %47 = vector.load %arg24[%c0_19, %c0_20] : memref<128x128xbf16, #tpu.memory_space<vmem>>, vector<128x128xbf16>
    %c0_21 = arith.constant 0 : index
    %c0_22 = arith.constant 0 : index
    %48 = vector.load %arg25[%c0_21, %c0_22] : memref<128x128xbf16, #tpu.memory_space<vmem>>, vector<128x128xbf16>
    %c0_23 = arith.constant 0 : index
    %c0_24 = arith.constant 0 : index
    %49 = vector.load %arg11[%c0_23, %c0_24] : memref<128x128xbf16, #tpu.memory_space<vmem>>, vector<128x128xbf16>
    %c0_25 = arith.constant 0 : index
    %c0_26 = arith.constant 0 : index
    %50 = vector.load %arg12[%c0_25, %c0_26] : memref<1x128xf32, #tpu.memory_space<vmem>>, vector<1x128xf32>
    %51 = arith.truncf %46 : vector<64x128xf32> to vector<64x128xbf16>
    %52 = vector.extract_strided_slice %51 {offsets = [0, 0], sizes = [64, 32], strides = [1, 1]} : vector<64x128xbf16> to vector<64x32xbf16>
    %53 = vector.extract_strided_slice %47 {offsets = [0, 0], sizes = [128, 32], strides = [1, 1]} : vector<128x128xbf16> to vector<128x32xbf16>
    %54 = vector.extract_strided_slice %48 {offsets = [0, 0], sizes = [128, 32], strides = [1, 1]} : vector<128x128xbf16> to vector<128x32xbf16>
    %cst_27 = arith.constant dense<0.000000e+00> : vector<64x128xf32>
    %55 = tpu.matmul %52, %53, %cst_27 {dimension_numbers = #tpu.dot_dimension_numbers<[1], [1], [0], [0], [0, 0, 1, 0], [], []>} : vector<64x32xbf16>, vector<128x32xbf16>, vector<64x128xf32> -> vector<64x128xf32>
    %cst_28 = arith.constant dense<0xFF800000> : vector<64xf32>
    %56 = vector.multi_reduction <maximumf>, %55, %cst_28 [1] : vector<64x128xf32> to vector<64xf32>
    %57 = vector.shape_cast %56 : vector<64xf32> to vector<64x1xf32>
    %58 = vector.broadcast %57 : vector<64x1xf32> to vector<64x128xf32>
    %59 = arith.subf %55, %58 : vector<64x128xf32>
    %60 = math.exp %59 : vector<64x128xf32>
    %cst_29 = arith.constant dense<0.000000e+00> : vector<64xf32>
    %61 = vector.multi_reduction <add>, %60, %cst_29 [1] : vector<64x128xf32> to vector<64xf32>
    %62 = vector.shape_cast %61 : vector<64xf32> to vector<64x1xf32>
    %63 = tpu.reciprocal %62 {approx = true} : vector<64x1xf32> -> vector<64x1xf32>
    %64 = vector.broadcast %63 : vector<64x1xf32> to vector<64x128xf32>
    %65 = arith.mulf %60, %64 : vector<64x128xf32>
    %66 = arith.truncf %65 : vector<64x128xf32> to vector<64x128xbf16>
    %cst_30 = arith.constant dense<0.000000e+00> : vector<64x32xf32>
    %67 = tpu.matmul %66, %54, %cst_30 {dimension_numbers = #tpu.dot_dimension_numbers<[1], [0], [0], [1], [0, 0, 1, 1], [], []>} : vector<64x128xbf16>, vector<128x32xbf16>, vector<64x32xf32> -> vector<64x32xf32>
    %68 = arith.truncf %67 : vector<64x32xf32> to vector<64x32xbf16>
    %69 = vector.extract_strided_slice %51 {offsets = [0, 32], sizes = [64, 32], strides = [1, 1]} : vector<64x128xbf16> to vector<64x32xbf16>
    %70 = vector.extract_strided_slice %47 {offsets = [0, 32], sizes = [128, 32], strides = [1, 1]} : vector<128x128xbf16> to vector<128x32xbf16>
    %71 = vector.extract_strided_slice %48 {offsets = [0, 32], sizes = [128, 32], strides = [1, 1]} : vector<128x128xbf16> to vector<128x32xbf16>
    %cst_31 = arith.constant dense<0.000000e+00> : vector<64x128xf32>
    %72 = tpu.matmul %69, %70, %cst_31 {dimension_numbers = #tpu.dot_dimension_numbers<[1], [1], [0], [0], [0, 0, 1, 0], [], []>} : vector<64x32xbf16>, vector<128x32xbf16>, vector<64x128xf32> -> vector<64x128xf32>
    %cst_32 = arith.constant dense<0xFF800000> : vector<64xf32>
    %73 = vector.multi_reduction <maximumf>, %72, %cst_32 [1] : vector<64x128xf32> to vector<64xf32>
    %74 = vector.shape_cast %73 : vector<64xf32> to vector<64x1xf32>
    %75 = vector.broadcast %74 : vector<64x1xf32> to vector<64x128xf32>
    %76 = arith.subf %72, %75 : vector<64x128xf32>
    %77 = math.exp %76 : vector<64x128xf32>
    %cst_33 = arith.constant dense<0.000000e+00> : vector<64xf32>
    %78 = vector.multi_reduction <add>, %77, %cst_33 [1] : vector<64x128xf32> to vector<64xf32>
    %79 = vector.shape_cast %78 : vector<64xf32> to vector<64x1xf32>
    %80 = tpu.reciprocal %79 {approx = true} : vector<64x1xf32> -> vector<64x1xf32>
    %81 = vector.broadcast %80 : vector<64x1xf32> to vector<64x128xf32>
    %82 = arith.mulf %77, %81 : vector<64x128xf32>
    %83 = arith.truncf %82 : vector<64x128xf32> to vector<64x128xbf16>
    %cst_34 = arith.constant dense<0.000000e+00> : vector<64x32xf32>
    %84 = tpu.matmul %83, %71, %cst_34 {dimension_numbers = #tpu.dot_dimension_numbers<[1], [0], [0], [1], [0, 0, 1, 1], [], []>} : vector<64x128xbf16>, vector<128x32xbf16>, vector<64x32xf32> -> vector<64x32xf32>
    %85 = arith.truncf %84 : vector<64x32xf32> to vector<64x32xbf16>
    %86 = vector.extract_strided_slice %51 {offsets = [0, 64], sizes = [64, 32], strides = [1, 1]} : vector<64x128xbf16> to vector<64x32xbf16>
    %87 = vector.extract_strided_slice %47 {offsets = [0, 64], sizes = [128, 32], strides = [1, 1]} : vector<128x128xbf16> to vector<128x32xbf16>
    %88 = vector.extract_strided_slice %48 {offsets = [0, 64], sizes = [128, 32], strides = [1, 1]} : vector<128x128xbf16> to vector<128x32xbf16>
    %cst_35 = arith.constant dense<0.000000e+00> : vector<64x128xf32>
    %89 = tpu.matmul %86, %87, %cst_35 {dimension_numbers = #tpu.dot_dimension_numbers<[1], [1], [0], [0], [0, 0, 1, 0], [], []>} : vector<64x32xbf16>, vector<128x32xbf16>, vector<64x128xf32> -> vector<64x128xf32>
    %cst_36 = arith.constant dense<0xFF800000> : vector<64xf32>
    %90 = vector.multi_reduction <maximumf>, %89, %cst_36 [1] : vector<64x128xf32> to vector<64xf32>
    %91 = vector.shape_cast %90 : vector<64xf32> to vector<64x1xf32>
    %92 = vector.broadcast %91 : vector<64x1xf32> to vector<64x128xf32>
    %93 = arith.subf %89, %92 : vector<64x128xf32>
    %94 = math.exp %93 : vector<64x128xf32>
    %cst_37 = arith.constant dense<0.000000e+00> : vector<64xf32>
    %95 = vector.multi_reduction <add>, %94, %cst_37 [1] : vector<64x128xf32> to vector<64xf32>
    %96 = vector.shape_cast %95 : vector<64xf32> to vector<64x1xf32>
    %97 = tpu.reciprocal %96 {approx = true} : vector<64x1xf32> -> vector<64x1xf32>
    %98 = vector.broadcast %97 : vector<64x1xf32> to vector<64x128xf32>
    %99 = arith.mulf %94, %98 : vector<64x128xf32>
    %100 = arith.truncf %99 : vector<64x128xf32> to vector<64x128xbf16>
    %cst_38 = arith.constant dense<0.000000e+00> : vector<64x32xf32>
    %101 = tpu.matmul %100, %88, %cst_38 {dimension_numbers = #tpu.dot_dimension_numbers<[1], [0], [0], [1], [0, 0, 1, 1], [], []>} : vector<64x128xbf16>, vector<128x32xbf16>, vector<64x32xf32> -> vector<64x32xf32>
    %102 = arith.truncf %101 : vector<64x32xf32> to vector<64x32xbf16>
    %103 = vector.extract_strided_slice %51 {offsets = [0, 96], sizes = [64, 32], strides = [1, 1]} : vector<64x128xbf16> to vector<64x32xbf16>
    %104 = vector.extract_strided_slice %47 {offsets = [0, 96], sizes = [128, 32], strides = [1, 1]} : vector<128x128xbf16> to vector<128x32xbf16>
    %105 = vector.extract_strided_slice %48 {offsets = [0, 96], sizes = [128, 32], strides = [1, 1]} : vector<128x128xbf16> to vector<128x32xbf16>
    %cst_39 = arith.constant dense<0.000000e+00> : vector<64x128xf32>
    %106 = tpu.matmul %103, %104, %cst_39 {dimension_numbers = #tpu.dot_dimension_numbers<[1], [1], [0], [0], [0, 0, 1, 0], [], []>} : vector<64x32xbf16>, vector<128x32xbf16>, vector<64x128xf32> -> vector<64x128xf32>
    %cst_40 = arith.constant dense<0xFF800000> : vector<64xf32>
    %107 = vector.multi_reduction <maximumf>, %106, %cst_40 [1] : vector<64x128xf32> to vector<64xf32>
    %108 = vector.shape_cast %107 : vector<64xf32> to vector<64x1xf32>
    %109 = vector.broadcast %108 : vector<64x1xf32> to vector<64x128xf32>
    %110 = arith.subf %106, %109 : vector<64x128xf32>
    %111 = math.exp %110 : vector<64x128xf32>
    %cst_41 = arith.constant dense<0.000000e+00> : vector<64xf32>
    %112 = vector.multi_reduction <add>, %111, %cst_41 [1] : vector<64x128xf32> to vector<64xf32>
    %113 = vector.shape_cast %112 : vector<64xf32> to vector<64x1xf32>
    %114 = tpu.reciprocal %113 {approx = true} : vector<64x1xf32> -> vector<64x1xf32>
    %115 = vector.broadcast %114 : vector<64x1xf32> to vector<64x128xf32>
    %116 = arith.mulf %111, %115 : vector<64x128xf32>
    %117 = arith.truncf %116 : vector<64x128xf32> to vector<64x128xbf16>
    %cst_42 = arith.constant dense<0.000000e+00> : vector<64x32xf32>
    %118 = tpu.matmul %117, %105, %cst_42 {dimension_numbers = #tpu.dot_dimension_numbers<[1], [0], [0], [1], [0, 0, 1, 1], [], []>} : vector<64x128xbf16>, vector<128x32xbf16>, vector<64x32xf32> -> vector<64x32xf32>
    %119 = arith.truncf %118 : vector<64x32xf32> to vector<64x32xbf16>
    %120 = tpu.concatenate %68, %85, %102, %119 in 1 : vector<64x32xbf16>, vector<64x32xbf16>, vector<64x32xbf16>, vector<64x32xbf16> -> vector<64x128xbf16>
    %cst_43 = arith.constant dense<0.000000e+00> : vector<64x128xf32>
    %121 = tpu.matmul %120, %49, %cst_43 {dimension_numbers = #tpu.dot_dimension_numbers<[1], [0], [0], [1], [0, 0, 1, 1], [], []>} : vector<64x128xbf16>, vector<128x128xbf16>, vector<64x128xf32> -> vector<64x128xf32>
    %122 = vector.broadcast %50 : vector<1x128xf32> to vector<64x128xf32>
    %123 = arith.addf %121, %122 : vector<64x128xf32>
    %124 = vector.broadcast %6 : vector<1x128xf32> to vector<64x128xf32>
    %125 = arith.mulf %124, %123 : vector<64x128xf32>
    %126 = arith.addf %14, %125 : vector<64x128xf32>
    %127 = arith.truncf %126 : vector<64x128xf32> to vector<64x128xbf16>
    %c0_44 = arith.constant 0 : index
    %c0_45 = arith.constant 0 : index
    %128 = vector.load %arg13[%c0_44, %c0_45] : memref<128x128xbf16, #tpu.memory_space<vmem>>, vector<128x128xbf16>
    %cst_46 = arith.constant dense<0.000000e+00> : vector<64x128xf32>
    %129 = tpu.matmul %127, %128, %cst_46 {dimension_numbers = #tpu.dot_dimension_numbers<[1], [0], [0], [1], [0, 0, 1, 1], [], []>} : vector<64x128xbf16>, vector<128x128xbf16>, vector<64x128xf32> -> vector<64x128xf32>
    %c0_47 = arith.constant 0 : index
    %c0_48 = arith.constant 0 : index
    %130 = vector.load %arg14[%c0_47, %c0_48] : memref<1x128xf32, #tpu.memory_space<vmem>>, vector<1x128xf32>
    %131 = vector.broadcast %130 : vector<1x128xf32> to vector<64x128xf32>
    %132 = arith.addf %129, %131 : vector<64x128xf32>
    %cst_49 = arith.constant 0.176776692 : f32
    %133 = vector.broadcast %cst_49 : f32 to vector<64x128xf32>
    %134 = arith.mulf %132, %133 : vector<64x128xf32>
    %c0_50 = arith.constant 0 : index
    %c0_51 = arith.constant 0 : index
    %135 = vector.load %arg26[%c0_50, %c0_51] : memref<64x128xbf16, #tpu.memory_space<vmem>>, vector<64x128xbf16>
    %c0_52 = arith.constant 0 : index
    %c0_53 = arith.constant 0 : index
    %136 = vector.load %arg27[%c0_52, %c0_53] : memref<64x128xbf16, #tpu.memory_space<vmem>>, vector<64x128xbf16>
    %c0_54 = arith.constant 0 : index
    %c0_55 = arith.constant 0 : index
    %137 = vector.load %arg17[%c0_54, %c0_55] : memref<128x128xbf16, #tpu.memory_space<vmem>>, vector<128x128xbf16>
    %c0_56 = arith.constant 0 : index
    %c0_57 = arith.constant 0 : index
    %138 = vector.load %arg18[%c0_56, %c0_57] : memref<1x128xf32, #tpu.memory_space<vmem>>, vector<1x128xf32>
    %139 = arith.truncf %134 : vector<64x128xf32> to vector<64x128xbf16>
    %140 = vector.extract_strided_slice %139 {offsets = [0, 0], sizes = [64, 32], strides = [1, 1]} : vector<64x128xbf16> to vector<64x32xbf16>
    %141 = vector.extract_strided_slice %135 {offsets = [0, 0], sizes = [64, 32], strides = [1, 1]} : vector<64x128xbf16> to vector<64x32xbf16>
    %142 = vector.extract_strided_slice %136 {offsets = [0, 0], sizes = [64, 32], strides = [1, 1]} : vector<64x128xbf16> to vector<64x32xbf16>
    %cst_58 = arith.constant dense<0.000000e+00> : vector<64x64xf32>
    %143 = tpu.matmul %140, %141, %cst_58 {dimension_numbers = #tpu.dot_dimension_numbers<[1], [1], [0], [0], [0, 0, 1, 0], [], []>} : vector<64x32xbf16>, vector<64x32xbf16>, vector<64x64xf32> -> vector<64x64xf32>
    %cst_59 = arith.constant dense<0xFF800000> : vector<64xf32>
    %144 = vector.multi_reduction <maximumf>, %143, %cst_59 [1] : vector<64x64xf32> to vector<64xf32>
    %145 = vector.shape_cast %144 : vector<64xf32> to vector<64x1xf32>
    %146 = vector.broadcast %145 : vector<64x1xf32> to vector<64x64xf32>
    %147 = arith.subf %143, %146 : vector<64x64xf32>
    %148 = math.exp %147 : vector<64x64xf32>
    %cst_60 = arith.constant dense<0.000000e+00> : vector<64xf32>
    %149 = vector.multi_reduction <add>, %148, %cst_60 [1] : vector<64x64xf32> to vector<64xf32>
    %150 = vector.shape_cast %149 : vector<64xf32> to vector<64x1xf32>
    %151 = tpu.reciprocal %150 {approx = true} : vector<64x1xf32> -> vector<64x1xf32>
    %152 = vector.broadcast %151 : vector<64x1xf32> to vector<64x64xf32>
    %153 = arith.mulf %148, %152 : vector<64x64xf32>
    %154 = arith.truncf %153 : vector<64x64xf32> to vector<64x64xbf16>
    %cst_61 = arith.constant dense<0.000000e+00> : vector<64x32xf32>
    %155 = tpu.matmul %154, %142, %cst_61 {dimension_numbers = #tpu.dot_dimension_numbers<[1], [0], [0], [1], [0, 0, 1, 1], [], []>} : vector<64x64xbf16>, vector<64x32xbf16>, vector<64x32xf32> -> vector<64x32xf32>
    %156 = arith.truncf %155 : vector<64x32xf32> to vector<64x32xbf16>
    %157 = vector.extract_strided_slice %139 {offsets = [0, 32], sizes = [64, 32], strides = [1, 1]} : vector<64x128xbf16> to vector<64x32xbf16>
    %158 = vector.extract_strided_slice %135 {offsets = [0, 32], sizes = [64, 32], strides = [1, 1]} : vector<64x128xbf16> to vector<64x32xbf16>
    %159 = vector.extract_strided_slice %136 {offsets = [0, 32], sizes = [64, 32], strides = [1, 1]} : vector<64x128xbf16> to vector<64x32xbf16>
    %cst_62 = arith.constant dense<0.000000e+00> : vector<64x64xf32>
    %160 = tpu.matmul %157, %158, %cst_62 {dimension_numbers = #tpu.dot_dimension_numbers<[1], [1], [0], [0], [0, 0, 1, 0], [], []>} : vector<64x32xbf16>, vector<64x32xbf16>, vector<64x64xf32> -> vector<64x64xf32>
    %cst_63 = arith.constant dense<0xFF800000> : vector<64xf32>
    %161 = vector.multi_reduction <maximumf>, %160, %cst_63 [1] : vector<64x64xf32> to vector<64xf32>
    %162 = vector.shape_cast %161 : vector<64xf32> to vector<64x1xf32>
    %163 = vector.broadcast %162 : vector<64x1xf32> to vector<64x64xf32>
    %164 = arith.subf %160, %163 : vector<64x64xf32>
    %165 = math.exp %164 : vector<64x64xf32>
    %cst_64 = arith.constant dense<0.000000e+00> : vector<64xf32>
    %166 = vector.multi_reduction <add>, %165, %cst_64 [1] : vector<64x64xf32> to vector<64xf32>
    %167 = vector.shape_cast %166 : vector<64xf32> to vector<64x1xf32>
    %168 = tpu.reciprocal %167 {approx = true} : vector<64x1xf32> -> vector<64x1xf32>
    %169 = vector.broadcast %168 : vector<64x1xf32> to vector<64x64xf32>
    %170 = arith.mulf %165, %169 : vector<64x64xf32>
    %171 = arith.truncf %170 : vector<64x64xf32> to vector<64x64xbf16>
    %cst_65 = arith.constant dense<0.000000e+00> : vector<64x32xf32>
    %172 = tpu.matmul %171, %159, %cst_65 {dimension_numbers = #tpu.dot_dimension_numbers<[1], [0], [0], [1], [0, 0, 1, 1], [], []>} : vector<64x64xbf16>, vector<64x32xbf16>, vector<64x32xf32> -> vector<64x32xf32>
    %173 = arith.truncf %172 : vector<64x32xf32> to vector<64x32xbf16>
    %174 = vector.extract_strided_slice %139 {offsets = [0, 64], sizes = [64, 32], strides = [1, 1]} : vector<64x128xbf16> to vector<64x32xbf16>
    %175 = vector.extract_strided_slice %135 {offsets = [0, 64], sizes = [64, 32], strides = [1, 1]} : vector<64x128xbf16> to vector<64x32xbf16>
    %176 = vector.extract_strided_slice %136 {offsets = [0, 64], sizes = [64, 32], strides = [1, 1]} : vector<64x128xbf16> to vector<64x32xbf16>
    %cst_66 = arith.constant dense<0.000000e+00> : vector<64x64xf32>
    %177 = tpu.matmul %174, %175, %cst_66 {dimension_numbers = #tpu.dot_dimension_numbers<[1], [1], [0], [0], [0, 0, 1, 0], [], []>} : vector<64x32xbf16>, vector<64x32xbf16>, vector<64x64xf32> -> vector<64x64xf32>
    %cst_67 = arith.constant dense<0xFF800000> : vector<64xf32>
    %178 = vector.multi_reduction <maximumf>, %177, %cst_67 [1] : vector<64x64xf32> to vector<64xf32>
    %179 = vector.shape_cast %178 : vector<64xf32> to vector<64x1xf32>
    %180 = vector.broadcast %179 : vector<64x1xf32> to vector<64x64xf32>
    %181 = arith.subf %177, %180 : vector<64x64xf32>
    %182 = math.exp %181 : vector<64x64xf32>
    %cst_68 = arith.constant dense<0.000000e+00> : vector<64xf32>
    %183 = vector.multi_reduction <add>, %182, %cst_68 [1] : vector<64x64xf32> to vector<64xf32>
    %184 = vector.shape_cast %183 : vector<64xf32> to vector<64x1xf32>
    %185 = tpu.reciprocal %184 {approx = true} : vector<64x1xf32> -> vector<64x1xf32>
    %186 = vector.broadcast %185 : vector<64x1xf32> to vector<64x64xf32>
    %187 = arith.mulf %182, %186 : vector<64x64xf32>
    %188 = arith.truncf %187 : vector<64x64xf32> to vector<64x64xbf16>
    %cst_69 = arith.constant dense<0.000000e+00> : vector<64x32xf32>
    %189 = tpu.matmul %188, %176, %cst_69 {dimension_numbers = #tpu.dot_dimension_numbers<[1], [0], [0], [1], [0, 0, 1, 1], [], []>} : vector<64x64xbf16>, vector<64x32xbf16>, vector<64x32xf32> -> vector<64x32xf32>
    %190 = arith.truncf %189 : vector<64x32xf32> to vector<64x32xbf16>
    %191 = vector.extract_strided_slice %139 {offsets = [0, 96], sizes = [64, 32], strides = [1, 1]} : vector<64x128xbf16> to vector<64x32xbf16>
    %192 = vector.extract_strided_slice %135 {offsets = [0, 96], sizes = [64, 32], strides = [1, 1]} : vector<64x128xbf16> to vector<64x32xbf16>
    %193 = vector.extract_strided_slice %136 {offsets = [0, 96], sizes = [64, 32], strides = [1, 1]} : vector<64x128xbf16> to vector<64x32xbf16>
    %cst_70 = arith.constant dense<0.000000e+00> : vector<64x64xf32>
    %194 = tpu.matmul %191, %192, %cst_70 {dimension_numbers = #tpu.dot_dimension_numbers<[1], [1], [0], [0], [0, 0, 1, 0], [], []>} : vector<64x32xbf16>, vector<64x32xbf16>, vector<64x64xf32> -> vector<64x64xf32>
    %cst_71 = arith.constant dense<0xFF800000> : vector<64xf32>
    %195 = vector.multi_reduction <maximumf>, %194, %cst_71 [1] : vector<64x64xf32> to vector<64xf32>
    %196 = vector.shape_cast %195 : vector<64xf32> to vector<64x1xf32>
    %197 = vector.broadcast %196 : vector<64x1xf32> to vector<64x64xf32>
    %198 = arith.subf %194, %197 : vector<64x64xf32>
    %199 = math.exp %198 : vector<64x64xf32>
    %cst_72 = arith.constant dense<0.000000e+00> : vector<64xf32>
    %200 = vector.multi_reduction <add>, %199, %cst_72 [1] : vector<64x64xf32> to vector<64xf32>
    %201 = vector.shape_cast %200 : vector<64xf32> to vector<64x1xf32>
    %202 = tpu.reciprocal %201 {approx = true} : vector<64x1xf32> -> vector<64x1xf32>
    %203 = vector.broadcast %202 : vector<64x1xf32> to vector<64x64xf32>
    %204 = arith.mulf %199, %203 : vector<64x64xf32>
    %205 = arith.truncf %204 : vector<64x64xf32> to vector<64x64xbf16>
    %cst_73 = arith.constant dense<0.000000e+00> : vector<64x32xf32>
    %206 = tpu.matmul %205, %193, %cst_73 {dimension_numbers = #tpu.dot_dimension_numbers<[1], [0], [0], [1], [0, 0, 1, 1], [], []>} : vector<64x64xbf16>, vector<64x32xbf16>, vector<64x32xf32> -> vector<64x32xf32>
    %207 = arith.truncf %206 : vector<64x32xf32> to vector<64x32xbf16>
    %208 = tpu.concatenate %156, %173, %190, %207 in 1 : vector<64x32xbf16>, vector<64x32xbf16>, vector<64x32xbf16>, vector<64x32xbf16> -> vector<64x128xbf16>
    %cst_74 = arith.constant dense<0.000000e+00> : vector<64x128xf32>
    %209 = tpu.matmul %208, %137, %cst_74 {dimension_numbers = #tpu.dot_dimension_numbers<[1], [0], [0], [1], [0, 0, 1, 1], [], []>} : vector<64x128xbf16>, vector<128x128xbf16>, vector<64x128xf32> -> vector<64x128xf32>
    %210 = vector.broadcast %138 : vector<1x128xf32> to vector<64x128xf32>
    %211 = arith.addf %209, %210 : vector<64x128xf32>
    %212 = arith.addf %126, %211 : vector<64x128xf32>
    %cst_75 = arith.constant dense<0.000000e+00> : vector<64xf32>
    %213 = vector.multi_reduction <add>, %212, %cst_75 [1] : vector<64x128xf32> to vector<64xf32>
    %214 = vector.shape_cast %213 : vector<64xf32> to vector<64x1xf32>
    %cst_76 = arith.constant 1.280000e+02 : f32
    %215 = vector.broadcast %cst_76 : f32 to vector<64x1xf32>
    %216 = arith.divf %214, %215 : vector<64x1xf32>
    %217 = vector.broadcast %216 : vector<64x1xf32> to vector<64x128xf32>
    %218 = arith.subf %212, %217 : vector<64x128xf32>
    %219 = arith.mulf %218, %218 : vector<64x128xf32>
    %cst_77 = arith.constant dense<0.000000e+00> : vector<64xf32>
    %220 = vector.multi_reduction <add>, %219, %cst_77 [1] : vector<64x128xf32> to vector<64xf32>
    %221 = vector.shape_cast %220 : vector<64xf32> to vector<64x1xf32>
    %cst_78 = arith.constant 1.280000e+02 : f32
    %222 = vector.broadcast %cst_78 : f32 to vector<64x1xf32>
    %223 = arith.divf %221, %222 : vector<64x1xf32>
    %224 = vector.broadcast %216 : vector<64x1xf32> to vector<64x128xf32>
    %225 = arith.subf %212, %224 : vector<64x128xf32>
    %cst_79 = arith.constant 9.99999997E-7 : f32
    %226 = vector.broadcast %cst_79 : f32 to vector<64x1xf32>
    %227 = arith.addf %223, %226 : vector<64x1xf32>
    %228 = math.rsqrt %227 : vector<64x1xf32>
    %229 = vector.broadcast %228 : vector<64x1xf32> to vector<64x128xf32>
    %230 = arith.mulf %225, %229 : vector<64x128xf32>
    %cst_80 = arith.constant 1.000000e+00 : f32
    %231 = vector.broadcast %cst_80 : f32 to vector<1x128xf32>
    %232 = arith.addf %231, %8 : vector<1x128xf32>
    %233 = vector.broadcast %232 : vector<1x128xf32> to vector<64x128xf32>
    %234 = arith.mulf %230, %233 : vector<64x128xf32>
    %235 = vector.broadcast %7 : vector<1x128xf32> to vector<64x128xf32>
    %236 = arith.addf %234, %235 : vector<64x128xf32>
    %237 = arith.truncf %236 : vector<64x128xf32> to vector<64x128xbf16>
    %c0_81 = arith.constant 0 : index
    %c0_82 = arith.constant 0 : index
    %238 = vector.load %arg19[%c0_81, %c0_82] : memref<128x512xbf16, #tpu.memory_space<vmem>>, vector<128x512xbf16>
    %cst_83 = arith.constant dense<0.000000e+00> : vector<64x512xf32>
    %239 = tpu.matmul %237, %238, %cst_83 {dimension_numbers = #tpu.dot_dimension_numbers<[1], [0], [0], [1], [0, 0, 1, 1], [], []>} : vector<64x128xbf16>, vector<128x512xbf16>, vector<64x512xf32> -> vector<64x512xf32>
    %c0_84 = arith.constant 0 : index
    %c0_85 = arith.constant 0 : index
    %240 = vector.load %arg20[%c0_84, %c0_85] : memref<1x512xf32, #tpu.memory_space<vmem>>, vector<1x512xf32>
    %241 = vector.broadcast %240 : vector<1x512xf32> to vector<64x512xf32>
    %242 = arith.addf %239, %241 : vector<64x512xf32>
    %cst_86 = arith.constant 5.000000e-01 : f32
    %243 = vector.broadcast %cst_86 : f32 to vector<64x512xf32>
    %244 = arith.mulf %243, %242 : vector<64x512xf32>
    %cst_87 = arith.constant 4.471500e-02 : f32
    %245 = vector.broadcast %cst_87 : f32 to vector<64x512xf32>
    %246 = arith.mulf %245, %242 : vector<64x512xf32>
    %247 = arith.mulf %246, %242 : vector<64x512xf32>
    %248 = arith.mulf %247, %242 : vector<64x512xf32>
    %249 = arith.addf %242, %248 : vector<64x512xf32>
    %cst_88 = arith.constant 0.797884583 : f32
    %250 = vector.broadcast %cst_88 : f32 to vector<64x512xf32>
    %251 = arith.mulf %250, %249 : vector<64x512xf32>
    %252 = math.tanh %251 : vector<64x512xf32>
    %cst_89 = arith.constant 1.000000e+00 : f32
    %253 = vector.broadcast %cst_89 : f32 to vector<64x512xf32>
    %254 = arith.addf %253, %252 : vector<64x512xf32>
    %255 = arith.mulf %244, %254 : vector<64x512xf32>
    %256 = arith.truncf %255 : vector<64x512xf32> to vector<64x512xbf16>
    %c0_90 = arith.constant 0 : index
    %c0_91 = arith.constant 0 : index
    %257 = vector.load %arg21[%c0_90, %c0_91] : memref<512x128xbf16, #tpu.memory_space<vmem>>, vector<512x128xbf16>
    %cst_92 = arith.constant dense<0.000000e+00> : vector<64x128xf32>
    %258 = tpu.matmul %256, %257, %cst_92 {dimension_numbers = #tpu.dot_dimension_numbers<[1], [0], [0], [1], [0, 0, 1, 1], [], []>} : vector<64x512xbf16>, vector<512x128xbf16>, vector<64x128xf32> -> vector<64x128xf32>
    %c0_93 = arith.constant 0 : index
    %c0_94 = arith.constant 0 : index
    %259 = vector.load %arg22[%c0_93, %c0_94] : memref<1x128xf32, #tpu.memory_space<vmem>>, vector<1x128xf32>
    %260 = vector.broadcast %259 : vector<1x128xf32> to vector<64x128xf32>
    %261 = arith.addf %258, %260 : vector<64x128xf32>
    %262 = vector.broadcast %9 : vector<1x128xf32> to vector<64x128xf32>
    %263 = arith.mulf %262, %261 : vector<64x128xf32>
    %264 = arith.addf %212, %263 : vector<64x128xf32>
    %c0_95 = arith.constant 0 : index
    %c0_96 = arith.constant 0 : index
    %c0_97 = arith.constant 0 : index
    %265 = vector.load %arg23[%c0_95, %c0_96, %c0_97] : memref<1x64x128xf32, #tpu.memory_space<vmem>>, vector<1x64x128xf32>
    %266 = vector.shape_cast %265 : vector<1x64x128xf32> to vector<64x128xf32>
    %267 = vector.shape_cast %264 : vector<64x128xf32> to vector<1x64x128xf32>
    tpu.vector_store %arg23[%c0_95, %c0_96, %c0_97], %267 {strides = array<i32>} : memref<1x64x128xf32, #tpu.memory_space<vmem>>, vector<1x64x128xf32>,
    return
  }
  func.func @transform_0(%arg0: i32, %arg1: i32) -> (i32, i32, i32) {
    %c0_i32 = arith.constant 0 : i32
    %c0_i32_0 = arith.constant 0 : i32
    return %arg0, %arg1, %c0_i32 : i32, i32, i32
  }
  func.func @transform_1(%arg0: i32, %arg1: i32) -> (i32, i32, i32) {
    %c0_i32 = arith.constant 0 : i32
    %c0_i32_0 = arith.constant 0 : i32
    %c0_i32_1 = arith.constant 0 : i32
    return %arg0, %c0_i32, %c0_i32_0 : i32, i32, i32
  }
  func.func @transform_2(%arg0: i32, %arg1: i32) -> (i32, i32, i32) {
    %c0_i32 = arith.constant 0 : i32
    %c0_i32_0 = arith.constant 0 : i32
    %c0_i32_1 = arith.constant 0 : i32
    return %arg0, %c0_i32, %c0_i32_0 : i32, i32, i32
  }
  func.func @transform_3(%arg0: i32, %arg1: i32) -> (i32, i32, i32) {
    %c0_i32 = arith.constant 0 : i32
    %c0_i32_0 = arith.constant 0 : i32
    %c0_i32_1 = arith.constant 0 : i32
    return %arg0, %c0_i32, %c0_i32_0 : i32, i32, i32
  }
  func.func @transform_4(%arg0: i32, %arg1: i32) -> (i32, i32) {
    %c0_i32 = arith.constant 0 : i32
    %c0_i32_0 = arith.constant 0 : i32
    %c0_i32_1 = arith.constant 0 : i32
    return %c0_i32, %c0_i32_0 : i32, i32
  }
  func.func @transform_5(%arg0: i32, %arg1: i32) -> (i32, i32) {
    %c0_i32 = arith.constant 0 : i32
    %c0_i32_0 = arith.constant 0 : i32
    %c0_i32_1 = arith.constant 0 : i32
    return %c0_i32, %c0_i32_0 : i32, i32
  }
  func.func @transform_6(%arg0: i32, %arg1: i32) -> (i32, i32) {
    %c0_i32 = arith.constant 0 : i32
    %c0_i32_0 = arith.constant 0 : i32
    %c0_i32_1 = arith.constant 0 : i32
    return %c0_i32, %c0_i32_0 : i32, i32
  }
  func.func @transform_7(%arg0: i32, %arg1: i32) -> (i32, i32) {
    %c0_i32 = arith.constant 0 : i32
    %c0_i32_0 = arith.constant 0 : i32
    %c0_i32_1 = arith.constant 0 : i32
    return %c0_i32, %c0_i32_0 : i32, i32
  }
  func.func @transform_8(%arg0: i32, %arg1: i32) -> (i32, i32) {
    %c0_i32 = arith.constant 0 : i32
    %c0_i32_0 = arith.constant 0 : i32
    %c0_i32_1 = arith.constant 0 : i32
    return %c0_i32, %c0_i32_0 : i32, i32
  }
  func.func @transform_9(%arg0: i32, %arg1: i32) -> (i32, i32) {
    %c0_i32 = arith.constant 0 : i32
    %c0_i32_0 = arith.constant 0 : i32
    %c0_i32_1 = arith.constant 0 : i32
    return %c0_i32, %c0_i32_0 : i32, i32
  }
  func.func @transform_10(%arg0: i32, %arg1: i32) -> (i32, i32) {
    %c0_i32 = arith.constant 0 : i32
    %c0_i32_0 = arith.constant 0 : i32
    %c0_i32_1 = arith.constant 0 : i32
    return %c0_i32, %c0_i32_0 : i32, i32
  }
  func.func @transform_11(%arg0: i32, %arg1: i32) -> (i32, i32) {
    %c0_i32 = arith.constant 0 : i32
    %c0_i32_0 = arith.constant 0 : i32
    %c0_i32_1 = arith.constant 0 : i32
    return %c0_i32, %c0_i32_0 : i32, i32
  }
  func.func @transform_12(%arg0: i32, %arg1: i32) -> (i32, i32) {
    %c0_i32 = arith.constant 0 : i32
    %c0_i32_0 = arith.constant 0 : i32
    %c0_i32_1 = arith.constant 0 : i32
    return %c0_i32, %c0_i32_0 : i32, i32
  }
  func.func @transform_13(%arg0: i32, %arg1: i32) -> (i32, i32) {
    %c0_i32 = arith.constant 0 : i32
    %c0_i32_0 = arith.constant 0 : i32
    %c0_i32_1 = arith.constant 0 : i32
    return %c0_i32, %c0_i32_0 : i32, i32
  }
  func.func @transform_14(%arg0: i32, %arg1: i32) -> (i32, i32) {
    %c0_i32 = arith.constant 0 : i32
    %c0_i32_0 = arith.constant 0 : i32
    %c0_i32_1 = arith.constant 0 : i32
    return %c0_i32, %c0_i32_0 : i32, i32
  }
  func.func @transform_15(%arg0: i32, %arg1: i32) -> (i32, i32) {
    %c0_i32 = arith.constant 0 : i32
    %c0_i32_0 = arith.constant 0 : i32
    %c0_i32_1 = arith.constant 0 : i32
    return %c0_i32, %c0_i32_0 : i32, i32
  }
  func.func @transform_16(%arg0: i32, %arg1: i32) -> (i32, i32) {
    %c0_i32 = arith.constant 0 : i32
    %c0_i32_0 = arith.constant 0 : i32
    %c0_i32_1 = arith.constant 0 : i32
    return %c0_i32, %c0_i32_0 : i32, i32
  }
  func.func @transform_17(%arg0: i32, %arg1: i32) -> (i32, i32) {
    %c0_i32 = arith.constant 0 : i32
    %c0_i32_0 = arith.constant 0 : i32
    %c0_i32_1 = arith.constant 0 : i32
    return %c0_i32, %c0_i32_0 : i32, i32
  }
  func.func @transform_18(%arg0: i32, %arg1: i32) -> (i32, i32) {
    %c0_i32 = arith.constant 0 : i32
    %c0_i32_0 = arith.constant 0 : i32
    %c0_i32_1 = arith.constant 0 : i32
    return %c0_i32, %c0_i32_0 : i32, i32
  }
  func.func @transform_19(%arg0: i32, %arg1: i32) -> (i32, i32) {
    %c0_i32 = arith.constant 0 : i32
    %c0_i32_0 = arith.constant 0 : i32
    %c0_i32_1 = arith.constant 0 : i32
    return %c0_i32, %c0_i32_0 : i32, i32
  }
  func.func @transform_20(%arg0: i32, %arg1: i32) -> (i32, i32) {
    %c0_i32 = arith.constant 0 : i32
    %c0_i32_0 = arith.constant 0 : i32
    %c0_i32_1 = arith.constant 0 : i32
    return %c0_i32, %c0_i32_0 : i32, i32
  }
  func.func @transform_21(%arg0: i32, %arg1: i32) -> (i32, i32, i32) {
    %c0_i32 = arith.constant 0 : i32
    %c0_i32_0 = arith.constant 0 : i32
    return %arg0, %arg1, %c0_i32 : i32, i32, i32
  }
}

</mosaic_0001>

<llo_original>
// kernel: tpu_custom_call.1
$region0: #{tpu_custom_call.1}
  #allocation0 [shape = 'u32[]', space=smem, size = 0x4, offset = 0x4, fixed_abs, tag = 'smem constant byte address 0x4 - core index']
  #allocation1 [shape = 'u32[144,128]{1,0:T(1,128)}', space=vmem, size = 0x12000, scoped, tag = 'internal scratch']
  #allocation2 [shape = 'bf16[128,128]{1,0:T(8,128)(2,1)}', space=vmem, size = 0x8000, scoped, tag = 'scratch operand']
  #allocation3 [shape = 'bf16[128,128]{1,0:T(8,128)(2,1)}', space=vmem, size = 0x8000, scoped, tag = 'scratch operand']
  #allocation4 [shape = 'bf16[64,128]{1,0:T(8,128)(2,1)}', space=vmem, size = 0x4000, scoped, tag = 'scratch operand']
  #allocation5 [shape = 'bf16[64,128]{1,0:T(8,128)(2,1)}', space=vmem, size = 0x4000, scoped, tag = 'scratch operand']
  %s0 = inlined_call_operand.hbm [shape: f32[2,128,128], index: 0, kind: input, shape index: {}]
  %s1 = inlined_call_operand.hbm [shape: f32[2,128,128], index: 1, kind: input, shape index: {}]
  %s2 = inlined_call_operand.hbm [shape: f32[2,64,128], index: 2, kind: input, shape index: {}]
  %s3 = inlined_call_operand.vmem [shape: f32[2,6,128], index: 3, kind: input, shape index: {}]
  %s4 = inlined_call_operand.vmem [shape: f32[6,128], index: 4, kind: input, shape index: {}]
  %s5 = inlined_call_operand.hbm [shape: bf16[128,128], index: 5, kind: input, shape index: {}]
  %s6 = inlined_call_operand.vmem [shape: f32[1,128], index: 6, kind: input, shape index: {}]
  %s7 = inlined_call_operand.hbm [shape: bf16[128,256], index: 7, kind: input, shape index: {}]
  %s8 = inlined_call_operand.vmem [shape: f32[1,256], index: 8, kind: input, shape index: {}]
  %s9 = inlined_call_operand.hbm [shape: bf16[128,128], index: 9, kind: input, shape index: {}]
  %s10 = inlined_call_operand.vmem [shape: f32[1,128], index: 10, kind: input, shape index: {}]
  %s11 = inlined_call_operand.hbm [shape: bf16[128,128], index: 11, kind: input, shape index: {}]
  %s12 = inlined_call_operand.vmem [shape: f32[1,128], index: 12, kind: input, shape index: {}]
  %s13 = inlined_call_operand.hbm [shape: bf16[128,256], index: 13, kind: input, shape index: {}]
  %s14 = inlined_call_operand.vmem [shape: f32[1,256], index: 14, kind: input, shape index: {}]
  %s15 = inlined_call_operand.hbm [shape: bf16[128,128], index: 15, kind: input, shape index: {}]
  %s16 = inlined_call_operand.vmem [shape: f32[1,128], index: 16, kind: input, shape index: {}]
  %s17 = inlined_call_operand.hbm [shape: bf16[128,512], index: 17, kind: input, shape index: {}]
  %s18 = inlined_call_operand.vmem [shape: f32[1,512], index: 18, kind: input, shape index: {}]
  %s19 = inlined_call_operand.hbm [shape: bf16[512,128], index: 19, kind: input, shape index: {}]
  %s20 = inlined_call_operand.vmem [shape: f32[1,128], index: 20, kind: input, shape index: {}]
  %s21 = inlined_call_operand.hbm [shape: f32[2,128,128], index: 21, kind: output, shape index: {}]
  %s22 = sld [smem:[#allocation0]]
  $region165: #{tpu_custom_call.1} parent=0
    _
  %s24 = ssub.s32 1, %s22
  %s25 = scalar_select 0, %s24, %s22
  $region1: #{tpu_custom_call.1} parent=0
    #allocation6 [shape = 'u8[65536]{0}', space=vmem, size = 0x10000, scoped, tag = 'input window, operand 0']
    #allocation7 [shape = 's32[2]{0}', space=sflag, size = 0x8, scoped, tag = 'scoped memory for tpu_custom_call.1']
    #allocation8 [shape = 's32[2]{0}', space=sflag, size = 0x8, scoped, tag = 'scoped memory for tpu_custom_call.1']
    #allocation9 [shape = 'u8[131072]{0}', space=vmem, size = 0x20000, scoped, tag = 'input window, operand 1']
    #allocation10 [shape = 's32[2]{0}', space=sflag, size = 0x8, scoped, tag = 'scoped memory for tpu_custom_call.1']
    #allocation11 [shape = 'u8[65536]{0}', space=vmem, size = 0x10000, scoped, tag = 'input window, operand 2']
    #allocation12 [shape = 'u8[32768]{0}', space=vmem, size = 0x8000, scoped, tag = 'input window, operand 5, single buffered']
    #allocation13 [shape = 's32[1]{0}', space=sflag, size = 0x4, scoped, tag = 'scoped memory for tpu_custom_call.1']
    #allocation14 [shape = 'u8[65536]{0}', space=vmem, size = 0x10000, scoped, tag = 'input window, operand 7, single buffered']
    #allocation15 [shape = 'u8[32768]{0}', space=vmem, size = 0x8000, scoped, tag = 'input window, operand 9, single buffered']
    #allocation16 [shape = 's32[1]{0}', space=sflag, size = 0x4, scoped, tag = 'scoped memory for tpu_custom_call.1']
    #allocation17 [shape = 'u8[32768]{0}', space=vmem, size = 0x8000, scoped, tag = 'input window, operand 11, single buffered']
    #allocation18 [shape = 'u8[65536]{0}', space=vmem, size = 0x10000, scoped, tag = 'input window, operand 13, single buffered']
    #allocation19 [shape = 's32[1]{0}', space=sflag, size = 0x4, scoped, tag = 'scoped memory for tpu_custom_call.1']
    #allocation20 [shape = 'u8[32768]{0}', space=vmem, size = 0x8000, scoped, tag = 'input window, operand 15, single buffered']
    #allocation21 [shape = 'u8[131072]{0}', space=vmem, size = 0x20000, scoped, tag = 'input window, operand 17, single buffered']
    #allocation22 [shape = 's32[1]{0}', space=sflag, size = 0x4, scoped, tag = 'scoped memory for tpu_custom_call.1']
    #allocation23 [shape = 'u8[131072]{0}', space=vmem, size = 0x20000, scoped, tag = 'input window, operand 19, single buffered']
    #allocation24 [shape = 'u8[65536]{0}', space=vmem, size = 0x10000, scoped, tag = 'output window, operand 0']
    %26 = vsyncpa [#allocation7], 0
    %s27 = scalar_lea.sflag [#allocation7], 1
    %28 = vsyncpa %s27, 0
    %29 = vsyncpa [#allocation10], 0
    %s30 = scalar_lea.sflag [#allocation10], 1
    %31 = vsyncpa %s30, 0
    %32 = vsyncpa [#allocation13], 0
    %33 = vsyncpa [#allocation16], 0
    %34 = vsyncpa [#allocation19], 0
    %35 = vsyncpa [#allocation22], 0
    %36 = vsyncpa [#allocation8], 0
    %s37 = scalar_lea.sflag [#allocation8], 1
    %38 = vsyncpa %s37, 0
    loop: start=0, step=1, limit=6
    $region2: #{tpu_custom_call.1} parent=1 // loop_pre_header
      _
    $region3: #{tpu_custom_call.1} parent=1 // loop_header
      %s40 = sphi 0, %s44
      %p41 = scmp.ge.s32.totalorder %s40, 6
      %s47 = sphi 0, %s59
      %s48 = sphi 0, %s55
      %s49 = sphi 0, %s47
      %s50 = sphi 0, %s48
      %s51 = sphi 0, %s49
      %s52 = sphi 0, %s50
      %s64 = sphi 0, %s66
      %s67 = sphi 0, %s64
      %s68 = sphi 0, %s67
      %s84 = sphi 0, %s68
      %s90 = sphi 0, %s92
      %s93 = sphi 0, %s90
      %s94 = sphi 0, %s93
      %s110 = sphi 0, %s94
      %s116 = sphi 0, %s118
      %s119 = sphi 0, %s116
      %s120 = sphi 0, %s119
      %s136 = sphi 0, %s120
      %s142 = sphi 0, %s144
      %s145 = sphi 0, %s142
      %s146 = sphi 0, %s145
      %s162 = sphi 0, %s146
      %s166 = sphi 0, %s166
      %s168 = sphi 0, %s166
      %s169 = sphi 0, %s168
      %s183 = sphi 0, %s169
      %s187 = sphi 0, %s187
      %s189 = sphi 0, %s187
      %s190 = sphi 0, %s189
      %s204 = sphi 0, %s190
      %s208 = sphi 0, %s208
      %s210 = sphi 0, %s208
      %s211 = sphi 0, %s210
      %s225 = sphi 0, %s211
      %s229 = sphi 0, %s229
      %s231 = sphi 0, %s229
      %s232 = sphi 0, %s231
      %s246 = sphi 0, %s232
      %s250 = sphi 0, %s250
      %s252 = sphi 0, %s250
      %s253 = sphi 0, %s252
      %s267 = sphi 0, %s253
      %s271 = sphi 0, %s271
      %s273 = sphi 0, %s271
      %s274 = sphi 0, %s273
      %s288 = sphi 0, %s274
      %s292 = sphi 0, %s292
      %s294 = sphi 0, %s292
      %s295 = sphi 0, %s294
      %s309 = sphi 0, %s295
      %s313 = sphi 0, %s313
      %s315 = sphi 0, %s313
      %s316 = sphi 0, %s315
      %s330 = sphi 0, %s316
      %s334 = sphi 0, %s334
      %s336 = sphi 0, %s334
      %s337 = sphi 0, %s336
      %s351 = sphi 0, %s337
      %s355 = sphi 0, %s355
      %s357 = sphi 0, %s355
      %s358 = sphi 0, %s357
      %s372 = sphi 0, %s358
      %s376 = sphi 0, %s376
      %s378 = sphi 0, %s376
      %s379 = sphi 0, %s378
      %s393 = sphi 0, %s379
      %s397 = sphi 0, %s397
      %s399 = sphi 0, %s397
      %s400 = sphi 0, %s399
      %s414 = sphi 0, %s400
      %s418 = sphi 0, %s418
      %s420 = sphi 0, %s418
      %s421 = sphi 0, %s420
      %s435 = sphi 0, %s421
      %s439 = sphi 0, %s439
      %s441 = sphi 0, %s439
      %s442 = sphi 0, %s441
      %s456 = sphi 0, %s442
      %s460 = sphi 0, %s460
      %s462 = sphi 0, %s460
      %s463 = sphi 0, %s462
      %s477 = sphi 0, %s463
      %s481 = sphi 0, %s481
      %s483 = sphi 0, %s481
      %s484 = sphi 0, %s483
      %s498 = sphi 0, %s484
      %s502 = sphi 0, %s502
      %s504 = sphi 0, %s502
      %s505 = sphi 0, %s504
      %s519 = sphi 0, %s505
      %s527 = sphi 0, %s529
      %s530 = sphi 0, %s527
      %s531 = sphi 0, %s530
      %s547 = sphi 0, %s531
    $region4: #{tpu_custom_call.1} parent=1 // loop_header_branch
      %43 = sbr.rel (%p41) target = $region8
    $region5: #{tpu_custom_call.1} parent=1 // loop_body
      %s45 = ssub.s32 %s40, 1
      %s46 = ssub.s32 %s40, 2
      %s53 = sadd.s32 1, %s48
      %p54 = scmp.ge.s32.totalorder %s53, 2
      %s55 = scalar_select %p54, 0, %s53
      %s56 = sadd.s32 1, %s47
      %s57 = scalar_select %p54, %s56, %s47
      %p58 = scmp.ge.s32.totalorder %s57, 2
      %s59 = scalar_select %p58, 0, %s57
      %s60 = ssub.s32 %s47, %s59
      %s61 = ssub.s32 %s48, %s55
      %s62 = sor.u32 %s60, %s61
      %p63 = scmp.eq.s32.totalorder %s62, 0
      %s65 = sadd.s32 %s64, 1
      %s66 = scalar_select %p63, %s64, %s65
      %p69 = pneg %p63
      %p70 = scmp.eq.s32.totalorder %s40, 3
      %p71 = por %p69, %p70
      %p72 = scmp.ne.s32.totalorder %s64, %s67
      %p73 = scmp.eq.s32.totalorder %s40, 0
      %p74 = por %p72, %p73
      %p75 = scmp.ne.s32.totalorder %s64, %s67
      %p76 = scmp.eq.s32.totalorder %s45, 3
      %p77 = por %p75, %p76
      %p78 = scmp.ne.s32.totalorder %s67, %s68
      %p79 = scmp.eq.s32.totalorder %s45, 0
      %p80 = por %p78, %p79
      %p81 = scmp.ne.s32.totalorder %s67, %s68
      %p82 = scmp.eq.s32.totalorder %s46, 3
      %p83 = por %p81, %p82
      %p85 = scmp.ne.s32.totalorder %s68, %s84
      %p86 = scmp.eq.s32.totalorder %s46, 0
      %p87 = por %p85, %p86
      %s88 = ssub.s32 %s47, %s59
      %p89 = scmp.eq.s32.totalorder %s88, 0
      %s91 = sadd.s32 %s90, 1
      %s92 = scalar_select %p89, %s90, %s91
      %p95 = pneg %p89
      %p96 = scmp.eq.s32.totalorder %s40, 3
      %p97 = por %p95, %p96
      %p98 = scmp.ne.s32.totalorder %s90, %s93
      %p99 = scmp.eq.s32.totalorder %s40, 0
      %p100 = por %p98, %p99
      %p101 = scmp.ne.s32.totalorder %s90, %s93
      %p102 = scmp.eq.s32.totalorder %s45, 3
      %p103 = por %p101, %p102
      %p104 = scmp.ne.s32.totalorder %s93, %s94
      %p105 = scmp.eq.s32.totalorder %s45, 0
      %p106 = por %p104, %p105
      %p107 = scmp.ne.s32.totalorder %s93, %s94
      %p108 = scmp.eq.s32.totalorder %s46, 3
      %p109 = por %p107, %p108
      %p111 = scmp.ne.s32.totalorder %s94, %s110
      %p112 = scmp.eq.s32.totalorder %s46, 0
      %p113 = por %p111, %p112
      %s114 = ssub.s32 %s47, %s59
      %p115 = scmp.eq.s32.totalorder %s114, 0
      %s117 = sadd.s32 %s116, 1
      %s118 = scalar_select %p115, %s116, %s117
      %p121 = pneg %p115
      %p122 = scmp.eq.s32.totalorder %s40, 3
      %p123 = por %p121, %p122
      %p124 = scmp.ne.s32.totalorder %s116, %s119
      %p125 = scmp.eq.s32.totalorder %s40, 0
      %p126 = por %p124, %p125
      %p127 = scmp.ne.s32.totalorder %s116, %s119
      %p128 = scmp.eq.s32.totalorder %s45, 3
      %p129 = por %p127, %p128
      %p130 = scmp.ne.s32.totalorder %s119, %s120
      %p131 = scmp.eq.s32.totalorder %s45, 0
      %p132 = por %p130, %p131
      %p133 = scmp.ne.s32.totalorder %s119, %s120
      %p134 = scmp.eq.s32.totalorder %s46, 3
      %p135 = por %p133, %p134
      %p137 = scmp.ne.s32.totalorder %s120, %s136
      %p138 = scmp.eq.s32.totalorder %s46, 0
      %p139 = por %p137, %p138
      %s140 = ssub.s32 %s47, %s59
      %p141 = scmp.eq.s32.totalorder %s140, 0
      %s143 = sadd.s32 %s142, 1
      %s144 = scalar_select %p141, %s142, %s143
      %p147 = pneg %p141
      %p148 = scmp.eq.s32.totalorder %s40, 3
      %p149 = por %p147, %p148
      %p150 = scmp.ne.s32.totalorder %s142, %s145
      %p151 = scmp.eq.s32.totalorder %s40, 0
      %p152 = por %p150, %p151
      %p153 = scmp.ne.s32.totalorder %s142, %s145
      %p154 = scmp.eq.s32.totalorder %s45, 3
      %p155 = por %p153, %p154
      %p156 = scmp.ne.s32.totalorder %s145, %s146
      %p157 = scmp.eq.s32.totalorder %s45, 0
      %p158 = por %p156, %p157
      %p159 = scmp.ne.s32.totalorder %s145, %s146
      %p160 = scmp.eq.s32.totalorder %s46, 3
      %p161 = por %p159, %p160
      %p163 = scmp.ne.s32.totalorder %s146, %s162
      %p164 = scmp.eq.s32.totalorder %s46, 0
      %p165 = por %p163, %p164
      %s167 = sadd.s32 %s166, 1
      %p170 = scmp.eq.s32.totalorder %s40, 3
      %p171 = scmp.ne.s32.totalorder %s166, %s168
      %p172 = scmp.eq.s32.totalorder %s40, 0
      %p173 = por %p171, %p172
      %p174 = scmp.ne.s32.totalorder %s166, %s168
      %p175 = scmp.eq.s32.totalorder %s45, 3
      %p176 = por %p174, %p175
      %p177 = scmp.ne.s32.totalorder %s168, %s169
      %p178 = scmp.eq.s32.totalorder %s45, 0
      %p179 = por %p177, %p178
      %p180 = scmp.ne.s32.totalorder %s168, %s169
      %p181 = scmp.eq.s32.totalorder %s46, 3
      %p182 = por %p180, %p181
      %p184 = scmp.ne.s32.totalorder %s169, %s183
      %p185 = scmp.eq.s32.totalorder %s46, 0
      %p186 = por %p184, %p185
      %s188 = sadd.s32 %s187, 1
      %p191 = scmp.eq.s32.totalorder %s40, 3
      %p192 = scmp.ne.s32.totalorder %s187, %s189
      %p193 = scmp.eq.s32.totalorder %s40, 0
      %p194 = por %p192, %p193
      %p195 = scmp.ne.s32.totalorder %s187, %s189
      %p196 = scmp.eq.s32.totalorder %s45, 3
      %p197 = por %p195, %p196
      %p198 = scmp.ne.s32.totalorder %s189, %s190
      %p199 = scmp.eq.s32.totalorder %s45, 0
      %p200 = por %p198, %p199
      %p201 = scmp.ne.s32.totalorder %s189, %s190
      %p202 = scmp.eq.s32.totalorder %s46, 3
      %p203 = por %p201, %p202
      %p205 = scmp.ne.s32.totalorder %s190, %s204
      %p206 = scmp.eq.s32.totalorder %s46, 0
      %p207 = por %p205, %p206
      %s209 = sadd.s32 %s208, 1
      %p212 = scmp.eq.s32.totalorder %s40, 3
      %p213 = scmp.ne.s32.totalorder %s208, %s210
      %p214 = scmp.eq.s32.totalorder %s40, 0
      %p215 = por %p213, %p214
      %p216 = scmp.ne.s32.totalorder %s208, %s210
      %p217 = scmp.eq.s32.totalorder %s45, 3
      %p218 = por %p216, %p217
      %p219 = scmp.ne.s32.totalorder %s210, %s211
      %p220 = scmp.eq.s32.totalorder %s45, 0
      %p221 = por %p219, %p220
      %p222 = scmp.ne.s32.totalorder %s210, %s211
      %p223 = scmp.eq.s32.totalorder %s46, 3
      %p224 = por %p222, %p223
      %p226 = scmp.ne.s32.totalorder %s211, %s225
      %p227 = scmp.eq.s32.totalorder %s46, 0
      %p228 = por %p226, %p227
      %s230 = sadd.s32 %s229, 1
      %p233 = scmp.eq.s32.totalorder %s40, 3
      %p234 = scmp.ne.s32.totalorder %s229, %s231
      %p235 = scmp.eq.s32.totalorder %s40, 0
      %p236 = por %p234, %p235
      %p237 = scmp.ne.s32.totalorder %s229, %s231
      %p238 = scmp.eq.s32.totalorder %s45, 3
      %p239 = por %p237, %p238
      %p240 = scmp.ne.s32.totalorder %s231, %s232
      %p241 = scmp.eq.s32.totalorder %s45, 0
      %p242 = por %p240, %p241
      %p243 = scmp.ne.s32.totalorder %s231, %s232
      %p244 = scmp.eq.s32.totalorder %s46, 3
      %p245 = por %p243, %p244
      %p247 = scmp.ne.s32.totalorder %s232, %s246
      %p248 = scmp.eq.s32.totalorder %s46, 0
      %p249 = por %p247, %p248
      %s251 = sadd.s32 %s250, 1
      %p254 = scmp.eq.s32.totalorder %s40, 3
      %p255 = scmp.ne.s32.totalorder %s250, %s252
      %p256 = scmp.eq.s32.totalorder %s40, 0
      %p257 = por %p255, %p256
      %p258 = scmp.ne.s32.totalorder %s250, %s252
      %p259 = scmp.eq.s32.totalorder %s45, 3
      %p260 = por %p258, %p259
      %p261 = scmp.ne.s32.totalorder %s252, %s253
      %p262 = scmp.eq.s32.totalorder %s45, 0
      %p263 = por %p261, %p262
      %p264 = scmp.ne.s32.totalorder %s252, %s253
      %p265 = scmp.eq.s32.totalorder %s46, 3
      %p266 = por %p264, %p265
      %p268 = scmp.ne.s32.totalorder %s253, %s267
      %p269 = scmp.eq.s32.totalorder %s46, 0
      %p270 = por %p268, %p269
      %s272 = sadd.s32 %s271, 1
      %p275 = scmp.eq.s32.totalorder %s40, 3
      %p276 = scmp.ne.s32.totalorder %s271, %s273
      %p277 = scmp.eq.s32.totalorder %s40, 0
      %p278 = por %p276, %p277
      %p279 = scmp.ne.s32.totalorder %s271, %s273
      %p280 = scmp.eq.s32.totalorder %s45, 3
      %p281 = por %p279, %p280
      %p282 = scmp.ne.s32.totalorder %s273, %s274
      %p283 = scmp.eq.s32.totalorder %s45, 0
      %p284 = por %p282, %p283
      %p285 = scmp.ne.s32.totalorder %s273, %s274
      %p286 = scmp.eq.s32.totalorder %s46, 3
      %p287 = por %p285, %p286
      %p289 = scmp.ne.s32.totalorder %s274, %s288
      %p290 = scmp.eq.s32.totalorder %s46, 0
      %p291 = por %p289, %p290
      %s293 = sadd.s32 %s292, 1
      %p296 = scmp.eq.s32.totalorder %s40, 3
      %p297 = scmp.ne.s32.totalorder %s292, %s294
      %p298 = scmp.eq.s32.totalorder %s40, 0
      %p299 = por %p297, %p298
      %p300 = scmp.ne.s32.totalorder %s292, %s294
      %p301 = scmp.eq.s32.totalorder %s45, 3
      %p302 = por %p300, %p301
      %p303 = scmp.ne.s32.totalorder %s294, %s295
      %p304 = scmp.eq.s32.totalorder %s45, 0
      %p305 = por %p303, %p304
      %p306 = scmp.ne.s32.totalorder %s294, %s295
      %p307 = scmp.eq.s32.totalorder %s46, 3
      %p308 = por %p306, %p307
      %p310 = scmp.ne.s32.totalorder %s295, %s309
      %p311 = scmp.eq.s32.totalorder %s46, 0
      %p312 = por %p310, %p311
      %s314 = sadd.s32 %s313, 1
      %p317 = scmp.eq.s32.totalorder %s40, 3
      %p318 = scmp.ne.s32.totalorder %s313, %s315
      %p319 = scmp.eq.s32.totalorder %s40, 0
      %p320 = por %p318, %p319
      %p321 = scmp.ne.s32.totalorder %s313, %s315
      %p322 = scmp.eq.s32.totalorder %s45, 3
      %p323 = por %p321, %p322
      %p324 = scmp.ne.s32.totalorder %s315, %s316
      %p325 = scmp.eq.s32.totalorder %s45, 0
      %p326 = por %p324, %p325
      %p327 = scmp.ne.s32.totalorder %s315, %s316
      %p328 = scmp.eq.s32.totalorder %s46, 3
      %p329 = por %p327, %p328
      %p331 = scmp.ne.s32.totalorder %s316, %s330
      %p332 = scmp.eq.s32.totalorder %s46, 0
      %p333 = por %p331, %p332
      %s335 = sadd.s32 %s334, 1
      %p338 = scmp.eq.s32.totalorder %s40, 3
      %p339 = scmp.ne.s32.totalorder %s334, %s336
      %p340 = scmp.eq.s32.totalorder %s40, 0
      %p341 = por %p339, %p340
      %p342 = scmp.ne.s32.totalorder %s334, %s336
      %p343 = scmp.eq.s32.totalorder %s45, 3
      %p344 = por %p342, %p343
      %p345 = scmp.ne.s32.totalorder %s336, %s337
      %p346 = scmp.eq.s32.totalorder %s45, 0
      %p347 = por %p345, %p346
      %p348 = scmp.ne.s32.totalorder %s336, %s337
      %p349 = scmp.eq.s32.totalorder %s46, 3
      %p350 = por %p348, %p349
      %p352 = scmp.ne.s32.totalorder %s337, %s351
      %p353 = scmp.eq.s32.totalorder %s46, 0
      %p354 = por %p352, %p353
      %s356 = sadd.s32 %s355, 1
      %p359 = scmp.eq.s32.totalorder %s40, 3
      %p360 = scmp.ne.s32.totalorder %s355, %s357
      %p361 = scmp.eq.s32.totalorder %s40, 0
      %p362 = por %p360, %p361
      %p363 = scmp.ne.s32.totalorder %s355, %s357
      %p364 = scmp.eq.s32.totalorder %s45, 3
      %p365 = por %p363, %p364
      %p366 = scmp.ne.s32.totalorder %s357, %s358
      %p367 = scmp.eq.s32.totalorder %s45, 0
      %p368 = por %p366, %p367
      %p369 = scmp.ne.s32.totalorder %s357, %s358
      %p370 = scmp.eq.s32.totalorder %s46, 3
      %p371 = por %p369, %p370
      %p373 = scmp.ne.s32.totalorder %s358, %s372
      %p374 = scmp.eq.s32.totalorder %s46, 0
      %p375 = por %p373, %p374
      %s377 = sadd.s32 %s376, 1
      %p380 = scmp.eq.s32.totalorder %s40, 3
      %p381 = scmp.ne.s32.totalorder %s376, %s378
      %p382 = scmp.eq.s32.totalorder %s40, 0
      %p383 = por %p381, %p382
      %p384 = scmp.ne.s32.totalorder %s376, %s378
      %p385 = scmp.eq.s32.totalorder %s45, 3
      %p386 = por %p384, %p385
      %p387 = scmp.ne.s32.totalorder %s378, %s379
      %p388 = scmp.eq.s32.totalorder %s45, 0
      %p389 = por %p387, %p388
      %p390 = scmp.ne.s32.totalorder %s378, %s379
      %p391 = scmp.eq.s32.totalorder %s46, 3
      %p392 = por %p390, %p391
      %p394 = scmp.ne.s32.totalorder %s379, %s393
      %p395 = scmp.eq.s32.totalorder %s46, 0
      %p396 = por %p394, %p395
      %s398 = sadd.s32 %s397, 1
      %p401 = scmp.eq.s32.totalorder %s40, 3
      %p402 = scmp.ne.s32.totalorder %s397, %s399
      %p403 = scmp.eq.s32.totalorder %s40, 0
      %p404 = por %p402, %p403
      %p405 = scmp.ne.s32.totalorder %s397, %s399
      %p406 = scmp.eq.s32.totalorder %s45, 3
      %p407 = por %p405, %p406
      %p408 = scmp.ne.s32.totalorder %s399, %s400
      %p409 = scmp.eq.s32.totalorder %s45, 0
      %p410 = por %p408, %p409
      %p411 = scmp.ne.s32.totalorder %s399, %s400
      %p412 = scmp.eq.s32.totalorder %s46, 3
      %p413 = por %p411, %p412
      %p415 = scmp.ne.s32.totalorder %s400, %s414
      %p416 = scmp.eq.s32.totalorder %s46, 0
      %p417 = por %p415, %p416
      %s419 = sadd.s32 %s418, 1
      %p422 = scmp.eq.s32.totalorder %s40, 3
      %p423 = scmp.ne.s32.totalorder %s418, %s420
      %p424 = scmp.eq.s32.totalorder %s40, 0
      %p425 = por %p423, %p424
      %p426 = scmp.ne.s32.totalorder %s418, %s420
      %p427 = scmp.eq.s32.totalorder %s45, 3
      %p428 = por %p426, %p427
      %p429 = scmp.ne.s32.totalorder %s420, %s421
      %p430 = scmp.eq.s32.totalorder %s45, 0
      %p431 = por %p429, %p430
      %p432 = scmp.ne.s32.totalorder %s420, %s421
      %p433 = scmp.eq.s32.totalorder %s46, 3
      %p434 = por %p432, %p433
      %p436 = scmp.ne.s32.totalorder %s421, %s435
      %p437 = scmp.eq.s32.totalorder %s46, 0
      %p438 = por %p436, %p437
      %s440 = sadd.s32 %s439, 1
      %p443 = scmp.eq.s32.totalorder %s40, 3
      %p444 = scmp.ne.s32.totalorder %s439, %s441
      %p445 = scmp.eq.s32.totalorder %s40, 0
      %p446 = por %p444, %p445
      %p447 = scmp.ne.s32.totalorder %s439, %s441
      %p448 = scmp.eq.s32.totalorder %s45, 3
      %p449 = por %p447, %p448
      %p450 = scmp.ne.s32.totalorder %s441, %s442
      %p451 = scmp.eq.s32.totalorder %s45, 0
      %p452 = por %p450, %p451
      %p453 = scmp.ne.s32.totalorder %s441, %s442
      %p454 = scmp.eq.s32.totalorder %s46, 3
      %p455 = por %p453, %p454
      %p457 = scmp.ne.s32.totalorder %s442, %s456
      %p458 = scmp.eq.s32.totalorder %s46, 0
      %p459 = por %p457, %p458
      %s461 = sadd.s32 %s460, 1
      %p464 = scmp.eq.s32.totalorder %s40, 3
      %p465 = scmp.ne.s32.totalorder %s460, %s462
      %p466 = scmp.eq.s32.totalorder %s40, 0
      %p467 = por %p465, %p466
      %p468 = scmp.ne.s32.totalorder %s460, %s462
      %p469 = scmp.eq.s32.totalorder %s45, 3
      %p470 = por %p468, %p469
      %p471 = scmp.ne.s32.totalorder %s462, %s463
      %p472 = scmp.eq.s32.totalorder %s45, 0
      %p473 = por %p471, %p472
      %p474 = scmp.ne.s32.totalorder %s462, %s463
      %p475 = scmp.eq.s32.totalorder %s46, 3
      %p476 = por %p474, %p475
      %p478 = scmp.ne.s32.totalorder %s463, %s477
      %p479 = scmp.eq.s32.totalorder %s46, 0
      %p480 = por %p478, %p479
      %s482 = sadd.s32 %s481, 1
      %p485 = scmp.eq.s32.totalorder %s40, 3
      %p486 = scmp.ne.s32.totalorder %s481, %s483
      %p487 = scmp.eq.s32.totalorder %s40, 0
      %p488 = por %p486, %p487
      %p489 = scmp.ne.s32.totalorder %s481, %s483
      %p490 = scmp.eq.s32.totalorder %s45, 3
      %p491 = por %p489, %p490
      %p492 = scmp.ne.s32.totalorder %s483, %s484
      %p493 = scmp.eq.s32.totalorder %s45, 0
      %p494 = por %p492, %p493
      %p495 = scmp.ne.s32.totalorder %s483, %s484
      %p496 = scmp.eq.s32.totalorder %s46, 3
      %p497 = por %p495, %p496
      %p499 = scmp.ne.s32.totalorder %s484, %s498
      %p500 = scmp.eq.s32.totalorder %s46, 0
      %p501 = por %p499, %p500
      %s503 = sadd.s32 %s502, 1
      %p506 = scmp.eq.s32.totalorder %s40, 3
      %p507 = scmp.ne.s32.totalorder %s502, %s504
      %p508 = scmp.eq.s32.totalorder %s40, 0
      %p509 = por %p507, %p508
      %p510 = scmp.ne.s32.totalorder %s502, %s504
      %p511 = scmp.eq.s32.totalorder %s45, 3
      %p512 = por %p510, %p511
      %p513 = scmp.ne.s32.totalorder %s504, %s505
      %p514 = scmp.eq.s32.totalorder %s45, 0
      %p515 = por %p513, %p514
      %p516 = scmp.ne.s32.totalorder %s504, %s505
      %p517 = scmp.eq.s32.totalorder %s46, 3
      %p518 = por %p516, %p517
      %p520 = scmp.ne.s32.totalorder %s505, %s519
      %p521 = scmp.eq.s32.totalorder %s46, 0
      %p522 = por %p520, %p521
      %s523 = ssub.s32 %s47, %s59
      %s524 = ssub.s32 %s48, %s55
      %s525 = sor.u32 %s523, %s524
      %p526 = scmp.eq.s32.totalorder %s525, 0
      %s528 = sadd.s32 %s527, 1
      %s529 = scalar_select %p526, %s527, %s528
      %p532 = pneg %p526
      %p533 = scmp.eq.s32.totalorder %s40, 3
      %p534 = por %p532, %p533
      %p535 = scmp.ne.s32.totalorder %s527, %s530
      %p536 = scmp.eq.s32.totalorder %s40, 0
      %p537 = por %p535, %p536
      %p538 = scmp.ne.s32.totalorder %s527, %s530
      %p539 = scmp.eq.s32.totalorder %s45, 3
      %p540 = por %p538, %p539
      %p541 = scmp.ne.s32.totalorder %s530, %s531
      %p542 = scmp.eq.s32.totalorder %s45, 0
      %p543 = por %p541, %p542
      %p544 = scmp.ne.s32.totalorder %s530, %s531
      %p545 = scmp.eq.s32.totalorder %s46, 3
      %p546 = por %p544, %p545
      %p548 = scmp.ne.s32.totalorder %s531, %s547
      %p549 = scmp.eq.s32.totalorder %s46, 0
      %p550 = por %p548, %p549
      %p551 = scmp.le.s32.totalorder 1, %s40
      %p552 = scmp.lt.s32.totalorder %s40, 5
      %p553 = pnand %p551, %p552
      %p554 = pneg %p553
      // Predicated region
      $region9: #{tpu_custom_call.1} parent=5 // pred_check
        _
      $region10: #{tpu_custom_call.1} parent=5 // pred_check_branch
        %556 = sbr.rel (%p553) target = $region12
      $region11: #{tpu_custom_call.1} parent=5 // pred_region
        %s557 = ssub.s32 %s40, 1
        // Predicated region
        $region13: #{tpu_custom_call.1} parent=11 // pred_check
          %p558 = pneg %p179
        $region14: #{tpu_custom_call.1} parent=11 // pred_check_branch
          %560 = sbr.rel (%p558) target = $region16
        $region15: #{tpu_custom_call.1} parent=11 // pred_region
          _
        $region16: #{tpu_custom_call.1} parent=11 // pred_fallthru
          _
        // Predicated region
        $region17: #{tpu_custom_call.1} parent=11 // pred_check
          %p561 = pneg %p200
        $region18: #{tpu_custom_call.1} parent=11 // pred_check_branch
          %563 = sbr.rel (%p561) target = $region20
        $region19: #{tpu_custom_call.1} parent=11 // pred_region
          %s565 = ssub.s32 1024, 1024
          %566 = vsyncadd [#allocation13], %s565
          %s567 = sshll.u32 [#allocation12], 4
          %s568 = int_to_ptr.vmem [resolvable:$true] %s567
          %573 = dma.hbm_to_vmem [thread:$0]  %s5, 1024, %s568, [#allocation13], 64, 64, 4
        $region20: #{tpu_custom_call.1} parent=11 // pred_fallthru
          _
        // Predicated region
        $region21: #{tpu_custom_call.1} parent=11 // pred_check
          %p574 = pneg %p221
        $region22: #{tpu_custom_call.1} parent=11 // pred_check_branch
          %576 = sbr.rel (%p574) target = $region24
        $region23: #{tpu_custom_call.1} parent=11 // pred_region
          _
        $region24: #{tpu_custom_call.1} parent=11 // pred_fallthru
          _
        // Predicated region
        $region25: #{tpu_custom_call.1} parent=11 // pred_check
          %p577 = pneg %p242
        $region26: #{tpu_custom_call.1} parent=11 // pred_check_branch
          %579 = sbr.rel (%p577) target = $region28
        $region27: #{tpu_custom_call.1} parent=11 // pred_region
          %s581 = ssub.s32 2048, 2048
          %582 = vsyncadd [#allocation13], %s581
          %s583 = sshll.u32 [#allocation14], 4
          %s584 = int_to_ptr.vmem [resolvable:$true] %s583
          %589 = dma.hbm_to_vmem [thread:$0]  %s7, 2048, %s584, [#allocation13], 128, 128, 8
        $region28: #{tpu_custom_call.1} parent=11 // pred_fallthru
          _
        // Predicated region
        $region29: #{tpu_custom_call.1} parent=11 // pred_check
          %p590 = pneg %p263
        $region30: #{tpu_custom_call.1} parent=11 // pred_check_branch
          %592 = sbr.rel (%p590) target = $region32
        $region31: #{tpu_custom_call.1} parent=11 // pred_region
          _
        $region32: #{tpu_custom_call.1} parent=11 // pred_fallthru
          _
        // Predicated region
        $region33: #{tpu_custom_call.1} parent=11 // pred_check
          %p593 = pneg %p284
        $region34: #{tpu_custom_call.1} parent=11 // pred_check_branch
          %595 = sbr.rel (%p593) target = $region36
        $region35: #{tpu_custom_call.1} parent=11 // pred_region
          %s597 = ssub.s32 1024, 1024
          %598 = vsyncadd [#allocation16], %s597
          %s599 = sshll.u32 [#allocation15], 4
          %s600 = int_to_ptr.vmem [resolvable:$true] %s599
          %605 = dma.hbm_to_vmem [thread:$0]  %s9, 1024, %s600, [#allocation16], 64, 64, 4
        $region36: #{tpu_custom_call.1} parent=11 // pred_fallthru
          _
        // Predicated region
        $region37: #{tpu_custom_call.1} parent=11 // pred_check
          %p606 = pneg %p305
        $region38: #{tpu_custom_call.1} parent=11 // pred_check_branch
          %608 = sbr.rel (%p606) target = $region40
        $region39: #{tpu_custom_call.1} parent=11 // pred_region
          _
        $region40: #{tpu_custom_call.1} parent=11 // pred_fallthru
          _
        // Predicated region
        $region41: #{tpu_custom_call.1} parent=11 // pred_check
          %p609 = pneg %p326
        $region42: #{tpu_custom_call.1} parent=11 // pred_check_branch
          %611 = sbr.rel (%p609) target = $region44
        $region43: #{tpu_custom_call.1} parent=11 // pred_region
          %s613 = ssub.s32 1024, 1024
          %614 = vsyncadd [#allocation16], %s613
          %s615 = sshll.u32 [#allocation17], 4
          %s616 = int_to_ptr.vmem [resolvable:$true] %s615
          %621 = dma.hbm_to_vmem [thread:$0]  %s11, 1024, %s616, [#allocation16], 64, 64, 4
        $region44: #{tpu_custom_call.1} parent=11 // pred_fallthru
          _
        // Predicated region
        $region45: #{tpu_custom_call.1} parent=11 // pred_check
          %p622 = pneg %p347
        $region46: #{tpu_custom_call.1} parent=11 // pred_check_branch
          %624 = sbr.rel (%p622) target = $region48
        $region47: #{tpu_custom_call.1} parent=11 // pred_region
          _
        $region48: #{tpu_custom_call.1} parent=11 // pred_fallthru
          _
        // Predicated region
        $region49: #{tpu_custom_call.1} parent=11 // pred_check
          %p625 = pneg %p368
        $region50: #{tpu_custom_call.1} parent=11 // pred_check_branch
          %627 = sbr.rel (%p625) target = $region52
        $region51: #{tpu_custom_call.1} parent=11 // pred_region
          %s629 = ssub.s32 2048, 2048
          %630 = vsyncadd [#allocation19], %s629
          %s631 = sshll.u32 [#allocation18], 4
          %s632 = int_to_ptr.vmem [resolvable:$true] %s631
          %637 = dma.hbm_to_vmem [thread:$0]  %s13, 2048, %s632, [#allocation19], 128, 128, 8
        $region52: #{tpu_custom_call.1} parent=11 // pred_fallthru
          _
        // Predicated region
        $region53: #{tpu_custom_call.1} parent=11 // pred_check
          %p638 = pneg %p389
        $region54: #{tpu_custom_call.1} parent=11 // pred_check_branch
          %640 = sbr.rel (%p638) target = $region56
        $region55: #{tpu_custom_call.1} parent=11 // pred_region
          _
        $region56: #{tpu_custom_call.1} parent=11 // pred_fallthru
          _
        // Predicated region
        $region57: #{tpu_custom_call.1} parent=11 // pred_check
          %p641 = pneg %p410
        $region58: #{tpu_custom_call.1} parent=11 // pred_check_branch
          %643 = sbr.rel (%p641) target = $region60
        $region59: #{tpu_custom_call.1} parent=11 // pred_region
          %s645 = ssub.s32 1024, 1024
          %646 = vsyncadd [#allocation19], %s645
          %s647 = sshll.u32 [#allocation20], 4
          %s648 = int_to_ptr.vmem [resolvable:$true] %s647
          %653 = dma.hbm_to_vmem [thread:$0]  %s15, 1024, %s648, [#allocation19], 64, 64, 4
        $region60: #{tpu_custom_call.1} parent=11 // pred_fallthru
          _
        // Predicated region
        $region61: #{tpu_custom_call.1} parent=11 // pred_check
          %p654 = pneg %p431
        $region62: #{tpu_custom_call.1} parent=11 // pred_check_branch
          %656 = sbr.rel (%p654) target = $region64
        $region63: #{tpu_custom_call.1} parent=11 // pred_region
          _
        $region64: #{tpu_custom_call.1} parent=11 // pred_fallthru
          _
        // Predicated region
        $region65: #{tpu_custom_call.1} parent=11 // pred_check
          %p657 = pneg %p452
        $region66: #{tpu_custom_call.1} parent=11 // pred_check_branch
          %659 = sbr.rel (%p657) target = $region68
        $region67: #{tpu_custom_call.1} parent=11 // pred_region
          %s661 = ssub.s32 4096, 4096
          %662 = vsyncadd [#allocation22], %s661
          %s663 = sshll.u32 [#allocation21], 4
          %s664 = int_to_ptr.vmem [resolvable:$true] %s663
          %669 = dma.hbm_to_vmem [thread:$0]  %s17, 4096, %s664, [#allocation22], 256, 256, 16
        $region68: #{tpu_custom_call.1} parent=11 // pred_fallthru
          _
        // Predicated region
        $region69: #{tpu_custom_call.1} parent=11 // pred_check
          %p670 = pneg %p473
        $region70: #{tpu_custom_call.1} parent=11 // pred_check_branch
          %672 = sbr.rel (%p670) target = $region72
        $region71: #{tpu_custom_call.1} parent=11 // pred_region
          _
        $region72: #{tpu_custom_call.1} parent=11 // pred_fallthru
          _
        // Predicated region
        $region73: #{tpu_custom_call.1} parent=11 // pred_check
          %p673 = pneg %p494
        $region74: #{tpu_custom_call.1} parent=11 // pred_check_branch
          %675 = sbr.rel (%p673) target = $region76
        $region75: #{tpu_custom_call.1} parent=11 // pred_region
          %s677 = ssub.s32 4096, 4096
          %678 = vsyncadd [#allocation22], %s677
          %s679 = sshll.u32 [#allocation23], 4
          %s680 = int_to_ptr.vmem [resolvable:$true] %s679
          %685 = dma.hbm_to_vmem [thread:$0]  %s19, 4096, %s680, [#allocation22], 64, 64, 4
        $region76: #{tpu_custom_call.1} parent=11 // pred_fallthru
          _
        // Predicated region
        $region77: #{tpu_custom_call.1} parent=11 // pred_check
          %p686 = pneg %p515
        $region78: #{tpu_custom_call.1} parent=11 // pred_check_branch
          %688 = sbr.rel (%p686) target = $region80
        $region79: #{tpu_custom_call.1} parent=11 // pred_region
          _
        $region80: #{tpu_custom_call.1} parent=11 // pred_fallthru
          _
      $region12: #{tpu_custom_call.1} parent=5 // pred_fallthru
        _
      %p689 = scmp.lt.s32.totalorder %s40, 4
      // Predicated region
      $region81: #{tpu_custom_call.1} parent=5 // pred_check
        %p690 = pneg %p689
      $region82: #{tpu_custom_call.1} parent=5 // pred_check_branch
        %692 = sbr.rel (%p690) target = $region84
      $region83: #{tpu_custom_call.1} parent=5 // pred_region
        // Predicated region
        $region85: #{tpu_custom_call.1} parent=83 // pred_check
          %p693 = pneg %p74
        $region86: #{tpu_custom_call.1} parent=83 // pred_check_branch
          %695 = sbr.rel (%p693) target = $region88
        $region87: #{tpu_custom_call.1} parent=83 // pred_region
          %s696 = sand.u32 %s64, 1
          %s697 = scalar_lea.sflag [#allocation7], %s696
          %s698 = sand.u32 %s64, 1
          %s699 = smul.addr %s698, 64
          %s700 = scalar_lea.vmem [#allocation6], %s699
          %s701 = smul.u32 8, %s48
          %s703 = ssub.s32 1024, 1024
          %704 = vsyncadd %s697, %s703
          %s705 = smul.addr %s47, 16
          %s706 = sadd.s32 %s701, %s705
          %s707 = smul.addr %s706, 128
          %s708 = scalar_lea.hbm %s0, %s707
          %s709 = sshll.u32 %s700, 4
          %s710 = int_to_ptr.vmem [resolvable:$true] %s709
          %715 = dma.hbm_to_vmem [thread:$0]  %s708, 1024, %s710, %s697, 128, 128, 8
        $region88: #{tpu_custom_call.1} parent=83 // pred_fallthru
          _
        // Predicated region
        $region89: #{tpu_custom_call.1} parent=83 // pred_check
          %p716 = pneg %p100
        $region90: #{tpu_custom_call.1} parent=83 // pred_check_branch
          %718 = sbr.rel (%p716) target = $region92
        $region91: #{tpu_custom_call.1} parent=83 // pred_region
          %s719 = sand.u32 %s40, 1
          %s720 = scalar_lea.sflag [#allocation10], %s719
          %s721 = sand.u32 %s90, 1
          %s722 = smul.addr %s721, 128
          %s723 = scalar_lea.vmem [#allocation9], %s722
          %s725 = ssub.s32 2048, 2048
          %726 = vsyncadd %s720, %s725
          %s727 = smul.addr %s47, 16
          %s728 = smul.addr %s727, 128
          %s729 = scalar_lea.hbm %s1, %s728
          %s730 = sshll.u32 %s723, 4
          %s731 = int_to_ptr.vmem [resolvable:$true] %s730
          %736 = dma.hbm_to_vmem [thread:$0]  %s729, 2048, %s731, %s720, 128, 128, 8
        $region92: #{tpu_custom_call.1} parent=83 // pred_fallthru
          _
        // Predicated region
        $region93: #{tpu_custom_call.1} parent=83 // pred_check
          %p737 = pneg %p126
        $region94: #{tpu_custom_call.1} parent=83 // pred_check_branch
          %739 = sbr.rel (%p737) target = $region96
        $region95: #{tpu_custom_call.1} parent=83 // pred_region
          %s740 = sand.u32 %s40, 1
          %s741 = scalar_lea.sflag [#allocation10], %s740
          %s742 = sand.u32 %s116, 1
          %s743 = smul.addr %s742, 64
          %s744 = scalar_lea.vmem [#allocation11], %s743
          %s746 = ssub.s32 1024, 1024
          %747 = vsyncadd %s741, %s746
          %s748 = smul.addr %s47, 8
          %s749 = smul.addr %s748, 128
          %s750 = scalar_lea.hbm %s2, %s749
          %s751 = sshll.u32 %s744, 4
          %s752 = int_to_ptr.vmem [resolvable:$true] %s751
          %757 = dma.hbm_to_vmem [thread:$0]  %s750, 1024, %s752, %s741, 128, 128, 8
        $region96: #{tpu_custom_call.1} parent=83 // pred_fallthru
          _
        // Predicated region
        $region97: #{tpu_custom_call.1} parent=83 // pred_check
          %p758 = pneg %p152
        $region98: #{tpu_custom_call.1} parent=83 // pred_check_branch
          %760 = sbr.rel (%p758) target = $region100
        $region99: #{tpu_custom_call.1} parent=83 // pred_region
          %p761 = scmp.lt.s32.totalorder %s47, 1
          %s762 = scalar_select %p761, %s47, 1
          %s763 = smul.addr %s762, 8
          %s764 = scalar_lea.vmem %s3, %s763
        $region100: #{tpu_custom_call.1} parent=83 // pred_fallthru
          _
      $region84: #{tpu_custom_call.1} parent=5 // pred_fallthru
        _
      %p765 = scmp.le.s32.totalorder 1, %s40
      %p766 = scmp.lt.s32.totalorder %s40, 5
      %p767 = pnand %p765, %p766
      %p768 = pneg %p767
      // Predicated region
      $region101: #{tpu_custom_call.1} parent=5 // pred_check
        _
      $region102: #{tpu_custom_call.1} parent=5 // pred_check_branch
        %770 = sbr.rel (%p767) target = $region104
      $region103: #{tpu_custom_call.1} parent=5 // pred_region
        %s771 = ssub.s32 %s40, 1
        %s772 = sand.u32 %s67, 1
        %s773 = scalar_lea.sflag [#allocation7], %s772
        %s774 = sand.u32 %s67, 1
        %s775 = smul.addr %s774, 64
        %s776 = scalar_lea.vmem [#allocation6], %s775
        // Predicated region
        $region105: #{tpu_custom_call.1} parent=103 // pred_check
          %p777 = pneg %p80
        $region106: #{tpu_custom_call.1} parent=103 // pred_check_branch
          %779 = sbr.rel (%p777) target = $region108
        $region107: #{tpu_custom_call.1} parent=103 // pred_region
          %780 = dma.done %s773, 1024
        $region108: #{tpu_custom_call.1} parent=103 // pred_fallthru
          _
        %s781 = sand.u32 %s45, 1
        %s782 = scalar_lea.sflag [#allocation10], %s781
        %s783 = sand.u32 %s93, 1
        %s784 = smul.addr %s783, 128
        %s785 = scalar_lea.vmem [#allocation9], %s784
        // Predicated region
        $region109: #{tpu_custom_call.1} parent=103 // pred_check
          %p786 = pneg %p106
        $region110: #{tpu_custom_call.1} parent=103 // pred_check_branch
          %788 = sbr.rel (%p786) target = $region112
        $region111: #{tpu_custom_call.1} parent=103 // pred_region
          %789 = dma.done %s782, 2048
        $region112: #{tpu_custom_call.1} parent=103 // pred_fallthru
          _
        %s790 = sand.u32 %s45, 1
        %s791 = scalar_lea.sflag [#allocation10], %s790
        %s792 = sand.u32 %s119, 1
        %s793 = smul.addr %s792, 64
        %s794 = scalar_lea.vmem [#allocation11], %s793
        // Predicated region
        $region113: #{tpu_custom_call.1} parent=103 // pred_check
          %p795 = pneg %p132
        $region114: #{tpu_custom_call.1} parent=103 // pred_check_branch
          %797 = sbr.rel (%p795) target = $region116
        $region115: #{tpu_custom_call.1} parent=103 // pred_region
          %798 = dma.done %s791, 1024
        $region116: #{tpu_custom_call.1} parent=103 // pred_fallthru
          _
        // Predicated region
        $region117: #{tpu_custom_call.1} parent=103 // pred_check
          %p799 = pneg %p200
        $region118: #{tpu_custom_call.1} parent=103 // pred_check_branch
          %801 = sbr.rel (%p799) target = $region120
        $region119: #{tpu_custom_call.1} parent=103 // pred_region
          %802 = dma.done [#allocation13], 1024
        $region120: #{tpu_custom_call.1} parent=103 // pred_fallthru
          _
        // Predicated region
        $region121: #{tpu_custom_call.1} parent=103 // pred_check
          %p803 = pneg %p242
        $region122: #{tpu_custom_call.1} parent=103 // pred_check_branch
          %805 = sbr.rel (%p803) target = $region124
        $region123: #{tpu_custom_call.1} parent=103 // pred_region
          %806 = dma.done [#allocation13], 2048
        $region124: #{tpu_custom_call.1} parent=103 // pred_fallthru
          _
        // Predicated region
        $region125: #{tpu_custom_call.1} parent=103 // pred_check
          %p807 = pneg %p284
        $region126: #{tpu_custom_call.1} parent=103 // pred_check_branch
          %809 = sbr.rel (%p807) target = $region128
        $region127: #{tpu_custom_call.1} parent=103 // pred_region
          %810 = dma.done [#allocation16], 1024
        $region128: #{tpu_custom_call.1} parent=103 // pred_fallthru
          _
        // Predicated region
        $region129: #{tpu_custom_call.1} parent=103 // pred_check
          %p811 = pneg %p326
        $region130: #{tpu_custom_call.1} parent=103 // pred_check_branch
          %813 = sbr.rel (%p811) target = $region132
        $region131: #{tpu_custom_call.1} parent=103 // pred_region
          %814 = dma.done [#allocation16], 1024
        $region132: #{tpu_custom_call.1} parent=103 // pred_fallthru
          _
        // Predicated region
        $region133: #{tpu_custom_call.1} parent=103 // pred_check
          %p815 = pneg %p368
        $region134: #{tpu_custom_call.1} parent=103 // pred_check_branch
          %817 = sbr.rel (%p815) target = $region136
        $region135: #{tpu_custom_call.1} parent=103 // pred_region
          %818 = dma.done [#allocation19], 2048
        $region136: #{tpu_custom_call.1} parent=103 // pred_fallthru
          _
        // Predicated region
        $region137: #{tpu_custom_call.1} parent=103 // pred_check
          %p819 = pneg %p410
        $region138: #{tpu_custom_call.1} parent=103 // pred_check_branch
          %821 = sbr.rel (%p819) target = $region140
        $region139: #{tpu_custom_call.1} parent=103 // pred_region
          %822 = dma.done [#allocation19], 1024
        $region140: #{tpu_custom_call.1} parent=103 // pred_fallthru
          _
        // Predicated region
        $region141: #{tpu_custom_call.1} parent=103 // pred_check
          %p823 = pneg %p452
        $region142: #{tpu_custom_call.1} parent=103 // pred_check_branch
          %825 = sbr.rel (%p823) target = $region144
        $region143: #{tpu_custom_call.1} parent=103 // pred_region
          %826 = dma.done [#allocation22], 4096
        $region144: #{tpu_custom_call.1} parent=103 // pred_fallthru
          _
        // Predicated region
        $region145: #{tpu_custom_call.1} parent=103 // pred_check
          %p827 = pneg %p494
        $region146: #{tpu_custom_call.1} parent=103 // pred_check_branch
          %829 = sbr.rel (%p827) target = $region148
        $region147: #{tpu_custom_call.1} parent=103 // pred_region
          %830 = dma.done [#allocation22], 4096
        $region148: #{tpu_custom_call.1} parent=103 // pred_fallthru
          _
        %s831 = sand.u32 %s67, 1
        %s832 = scalar_lea.sflag [#allocation7], %s831
        %s833 = sand.u32 %s67, 1
        %s834 = smul.addr %s833, 64
        %s835 = scalar_lea.vmem [#allocation6], %s834
        %p836 = pneg %p80
        %p837 = pneg %p77
        %s838 = sand.u32 %s45, 1
        %s839 = scalar_lea.sflag [#allocation10], %s838
        %s840 = sand.u32 %s93, 1
        %s841 = smul.addr %s840, 128
        %s842 = scalar_lea.vmem [#allocation9], %s841
        %p843 = pneg %p106
        %p844 = pneg %p103
        %s845 = sand.u32 %s45, 1
        %s846 = scalar_lea.sflag [#allocation10], %s845
        %s847 = sand.u32 %s119, 1
        %s848 = smul.addr %s847, 64
        %s849 = scalar_lea.vmem [#allocation11], %s848
        %p850 = pneg %p132
        %p851 = pneg %p129
        %p852 = scmp.lt.s32.totalorder %s49, 1
        %s853 = scalar_select %p852, %s49, 1
        %s854 = smul.addr %s853, 8
        %s855 = scalar_lea.vmem %s3, %s854
        %p856 = pneg %p158
        %p857 = pneg %p155
        %p858 = pneg %p179
        %p859 = pneg %p176
        %p860 = pneg %p200
        %p861 = pneg %p197
        %p862 = pneg %p221
        %p863 = pneg %p218
        %p864 = pneg %p242
        %p865 = pneg %p239
        %p866 = pneg %p263
        %p867 = pneg %p260
        %p868 = pneg %p284
        %p869 = pneg %p281
        %p870 = pneg %p305
        %p871 = pneg %p302
        %p872 = pneg %p326
        %p873 = pneg %p323
        %p874 = pneg %p347
        %p875 = pneg %p344
        %p876 = pneg %p368
        %p877 = pneg %p365
        %p878 = pneg %p389
        %p879 = pneg %p386
        %p880 = pneg %p410
        %p881 = pneg %p407
        %p882 = pneg %p431
        %p883 = pneg %p428
        %p884 = pneg %p452
        %p885 = pneg %p449
        %p886 = pneg %p473
        %p887 = pneg %p470
        %p888 = pneg %p494
        %p889 = pneg %p491
        %p890 = pneg %p515
        %p891 = pneg %p512
        %p892 = pneg %p543
        %p893 = pneg %p540
        %s894 = sand.u32 %s530, 1
        %s895 = scalar_lea.sflag [#allocation8], %s894
        %s896 = sand.u32 %s530, 1
        %s897 = smul.addr %s896, 64
        %s898 = scalar_lea.vmem [#allocation24], %s897
        %s899 = smul.u32 8, %s50
        %p900 = scmp.lt.s32.totalorder %s49, 1
        %s901 = scalar_select %p900, %s49, 1
        %s902 = smul.addr %s901, 8
        %s903 = scalar_lea.vmem %s3, %s902
        %s904 = smul.u32 8, %s50
        %v906 = vld [vmem:[%s4] sm:$0x3f]
        %v907 = vld [vmem:[%s903] sm:$0x3f]
        %v908 = vadd.f32 %v906, %v907
        %p909 = scmp.eq.s32.totalorder %s50, 0
        // Predicated region
        $region149: #{tpu_custom_call.1} parent=103 // pred_check
          %p910 = pneg %p909
        $region150: #{tpu_custom_call.1} parent=103 // pred_check_branch
          %912 = sbr.rel (%p910) target = $region152
        $region151: #{tpu_custom_call.1} parent=103 // pred_region
          %v913 = vld [vmem:[%s785] sm:$0xff]
          %v914 = vld [vmem:[%s785 + $0x8] sm:$0xff]
          %v915 = vld [vmem:[%s785 + $0x10] sm:$0xff]
          %v916 = vld [vmem:[%s785 + $0x18] sm:$0xff]
          %v917 = vld [vmem:[%s785 + $0x20] sm:$0xff]
          %v918 = vld [vmem:[%s785 + $0x28] sm:$0xff]
          %v919 = vld [vmem:[%s785 + $0x30] sm:$0xff]
          %v920 = vld [vmem:[%s785 + $0x38] sm:$0xff]
          %v921 = vld [vmem:[%s785 + $0x40] sm:$0xff]
          %v922 = vld [vmem:[%s785 + $0x48] sm:$0xff]
          %v923 = vld [vmem:[%s785 + $0x50] sm:$0xff]
          %v924 = vld [vmem:[%s785 + $0x58] sm:$0xff]
          %v925 = vld [vmem:[%s785 + $0x60] sm:$0xff]
          %v926 = vld [vmem:[%s785 + $0x68] sm:$0xff]
          %v927 = vld [vmem:[%s785 + $0x70] sm:$0xff]
          %v928 = vld [vmem:[%s785 + $0x78] sm:$0xff]
          %929 = vadd.xlane.f32.xlu0 %v913
          %v930 = vpop.xlane.xlu0 %929
          %931 = vadd.xlane.f32.xlu0 %v914
          %v932 = vpop.xlane.xlu0 %931
          %933 = vadd.xlane.f32.xlu0 %v915
          %v934 = vpop.xlane.xlu0 %933
          %935 = vadd.xlane.f32.xlu0 %v916
          %v936 = vpop.xlane.xlu0 %935
          %937 = vadd.xlane.f32.xlu0 %v917
          %v938 = vpop.xlane.xlu0 %937
          %939 = vadd.xlane.f32.xlu0 %v918
          %v940 = vpop.xlane.xlu0 %939
          %941 = vadd.xlane.f32.xlu0 %v919
          %v942 = vpop.xlane.xlu0 %941
          %943 = vadd.xlane.f32.xlu0 %v920
          %v944 = vpop.xlane.xlu0 %943
          %945 = vadd.xlane.f32.xlu0 %v921
          %v946 = vpop.xlane.xlu0 %945
          %947 = vadd.xlane.f32.xlu0 %v922
          %v948 = vpop.xlane.xlu0 %947
          %949 = vadd.xlane.f32.xlu0 %v923
          %v950 = vpop.xlane.xlu0 %949
          %951 = vadd.xlane.f32.xlu0 %v924
          %v952 = vpop.xlane.xlu0 %951
          %953 = vadd.xlane.f32.xlu0 %v925
          %v954 = vpop.xlane.xlu0 %953
          %955 = vadd.xlane.f32.xlu0 %v926
          %v956 = vpop.xlane.xlu0 %955
          %957 = vadd.xlane.f32.xlu0 %v927
          %v958 = vpop.xlane.xlu0 %957
          %959 = vadd.xlane.f32.xlu0 %v928
          %v960 = vpop.xlane.xlu0 %959
          %v961 = vrcp.pop 128.0
          %v962 = vmul.f32 %v930, %v961
          %v963 = vmul.f32 %v932, %v961
          %v964 = vmul.f32 %v934, %v961
          %v965 = vmul.f32 %v936, %v961
          %v966 = vmul.f32 %v938, %v961
          %v967 = vmul.f32 %v940, %v961
          %v968 = vmul.f32 %v942, %v961
          %v969 = vmul.f32 %v944, %v961
          %v970 = vmul.f32 %v946, %v961
          %v971 = vmul.f32 %v948, %v961
          %v972 = vmul.f32 %v950, %v961
          %v973 = vmul.f32 %v952, %v961
          %v974 = vmul.f32 %v954, %v961
          %v975 = vmul.f32 %v956, %v961
          %v976 = vmul.f32 %v958, %v961
          %v977 = vmul.f32 %v960, %v961
          %v978 = vsub.f32 %v913, %v962
          %v979 = vsub.f32 %v914, %v963
          %v980 = vsub.f32 %v915, %v964
          %v981 = vsub.f32 %v916, %v965
          %v982 = vsub.f32 %v917, %v966
          %v983 = vsub.f32 %v918, %v967
          %v984 = vsub.f32 %v919, %v968
          %v985 = vsub.f32 %v920, %v969
          %v986 = vsub.f32 %v921, %v970
          %v987 = vsub.f32 %v922, %v971
          %v988 = vsub.f32 %v923, %v972
          %v989 = vsub.f32 %v924, %v973
          %v990 = vsub.f32 %v925, %v974
          %v991 = vsub.f32 %v926, %v975
          %v992 = vsub.f32 %v927, %v976
          %v993 = vsub.f32 %v928, %v977
          %v994 = vmul.f32 %v978, %v978
          %v995 = vmul.f32 %v979, %v979
          %v996 = vmul.f32 %v980, %v980
          %v997 = vmul.f32 %v981, %v981
          %v998 = vmul.f32 %v982, %v982
          %v999 = vmul.f32 %v983, %v983
          %v1000 = vmul.f32 %v984, %v984
          %v1001 = vmul.f32 %v985, %v985
          %v1002 = vmul.f32 %v986, %v986
          %v1003 = vmul.f32 %v987, %v987
          %v1004 = vmul.f32 %v988, %v988
          %v1005 = vmul.f32 %v989, %v989
          %v1006 = vmul.f32 %v990, %v990
          %v1007 = vmul.f32 %v991, %v991
          %v1008 = vmul.f32 %v992, %v992
          %v1009 = vmul.f32 %v993, %v993
          %1010 = vadd.xlane.f32.xlu0 %v994
          %v1011 = vpop.xlane.xlu0 %1010
          %1012 = vadd.xlane.f32.xlu0 %v995
          %v1013 = vpop.xlane.xlu0 %1012
          %1014 = vadd.xlane.f32.xlu0 %v996
          %v1015 = vpop.xlane.xlu0 %1014
          %1016 = vadd.xlane.f32.xlu0 %v997
          %v1017 = vpop.xlane.xlu0 %1016
          %1018 = vadd.xlane.f32.xlu0 %v998
          %v1019 = vpop.xlane.xlu0 %1018
          %1020 = vadd.xlane.f32.xlu0 %v999
          %v1021 = vpop.xlane.xlu0 %1020
          %1022 = vadd.xlane.f32.xlu0 %v1000
          %v1023 = vpop.xlane.xlu0 %1022
          %1024 = vadd.xlane.f32.xlu0 %v1001
          %v1025 = vpop.xlane.xlu0 %1024
          %1026 = vadd.xlane.f32.xlu0 %v1002
          %v1027 = vpop.xlane.xlu0 %1026
          %1028 = vadd.xlane.f32.xlu0 %v1003
          %v1029 = vpop.xlane.xlu0 %1028
          %1030 = vadd.xlane.f32.xlu0 %v1004
          %v1031 = vpop.xlane.xlu0 %1030
          %1032 = vadd.xlane.f32.xlu0 %v1005
          %v1033 = vpop.xlane.xlu0 %1032
          %1034 = vadd.xlane.f32.xlu0 %v1006
          %v1035 = vpop.xlane.xlu0 %1034
          %1036 = vadd.xlane.f32.xlu0 %v1007
          %v1037 = vpop.xlane.xlu0 %1036
          %1038 = vadd.xlane.f32.xlu0 %v1008
          %v1039 = vpop.xlane.xlu0 %1038
          %1040 = vadd.xlane.f32.xlu0 %v1009
          %v1041 = vpop.xlane.xlu0 %1040
          %v1042 = vmul.f32 %v1011, %v961
          %v1043 = vmul.f32 %v1013, %v961
          %v1044 = vmul.f32 %v1015, %v961
          %v1045 = vmul.f32 %v1017, %v961
          %v1046 = vmul.f32 %v1019, %v961
          %v1047 = vmul.f32 %v1021, %v961
          %v1048 = vmul.f32 %v1023, %v961
          %v1049 = vmul.f32 %v1025, %v961
          %v1050 = vmul.f32 %v1027, %v961
          %v1051 = vmul.f32 %v1029, %v961
          %v1052 = vmul.f32 %v1031, %v961
          %v1053 = vmul.f32 %v1033, %v961
          %v1054 = vmul.f32 %v1035, %v961
          %v1055 = vmul.f32 %v1037, %v961
          %v1056 = vmul.f32 %v1039, %v961
          %v1057 = vmul.f32 %v1041, %v961
          %v1058 = vadd.f32 %v1042, 1e-06
          %v1059 = vadd.f32 %v1043, 1e-06
          %v1060 = vadd.f32 %v1044, 1e-06
          %v1061 = vadd.f32 %v1045, 1e-06
          %v1062 = vadd.f32 %v1046, 1e-06
          %v1063 = vadd.f32 %v1047, 1e-06
          %v1064 = vadd.f32 %v1048, 1e-06
          %v1065 = vadd.f32 %v1049, 1e-06
          %v1066 = vadd.f32 %v1050, 1e-06
          %v1067 = vadd.f32 %v1051, 1e-06
          %v1068 = vadd.f32 %v1052, 1e-06
          %v1069 = vadd.f32 %v1053, 1e-06
          %v1070 = vadd.f32 %v1054, 1e-06
          %v1071 = vadd.f32 %v1055, 1e-06
          %v1072 = vadd.f32 %v1056, 1e-06
          %v1073 = vadd.f32 %v1057, 1e-06
          %v1074 = vrsqrt.pop %v1058
          %v1075 = vrsqrt.pop %v1059
          %v1076 = vrsqrt.pop %v1060
          %v1077 = vrsqrt.pop %v1061
          %v1078 = vrsqrt.pop %v1062
          %v1079 = vrsqrt.pop %v1063
          %v1080 = vrsqrt.pop %v1064
          %v1081 = vrsqrt.pop %v1065
          %v1082 = vrsqrt.pop %v1066
          %v1083 = vrsqrt.pop %v1067
          %v1084 = vrsqrt.pop %v1068
          %v1085 = vrsqrt.pop %v1069
          %v1086 = vrsqrt.pop %v1070
          %v1087 = vrsqrt.pop %v1071
          %v1088 = vrsqrt.pop %v1072
          %v1089 = vrsqrt.pop %v1073
          %v1090 = vmul.f32 %v978, %v1074
          %v1091 = vmul.f32 %v979, %v1075
          %v1092 = vmul.f32 %v980, %v1076
          %v1093 = vmul.f32 %v981, %v1077
          %v1094 = vmul.f32 %v982, %v1078
          %v1095 = vmul.f32 %v983, %v1079
          %v1096 = vmul.f32 %v984, %v1080
          %v1097 = vmul.f32 %v985, %v1081
          %v1098 = vmul.f32 %v986, %v1082
          %v1099 = vmul.f32 %v987, %v1083
          %v1100 = vmul.f32 %v988, %v1084
          %v1101 = vmul.f32 %v989, %v1085
          %v1102 = vmul.f32 %v990, %v1086
          %v1103 = vmul.f32 %v991, %v1087
          %v1104 = vmul.f32 %v992, %v1088
          %v1105 = vmul.f32 %v993, %v1089
          %v1106 = vadd.f32 %v908, 1.0
          %v1107 = vlaneseq
          %v1108 = vshrl.u32 %v1107, 7
          %v1109 = vsub.s32 1, %v1108
          %v1110 = vrot.slane %v1106, %v1109
          %v1111 = vmul.f32 %v1090, %v1110
          %v1112 = vmul.f32 %v1091, %v1110
          %v1113 = vmul.f32 %v1092, %v1110
          %v1114 = vmul.f32 %v1093, %v1110
          %v1115 = vmul.f32 %v1094, %v1110
          %v1116 = vmul.f32 %v1095, %v1110
          %v1117 = vmul.f32 %v1096, %v1110
          %v1118 = vmul.f32 %v1097, %v1110
          %v1119 = vmul.f32 %v1098, %v1110
          %v1120 = vmul.f32 %v1099, %v1110
          %v1121 = vmul.f32 %v1100, %v1110
          %v1122 = vmul.f32 %v1101, %v1110
          %v1123 = vmul.f32 %v1102, %v1110
          %v1124 = vmul.f32 %v1103, %v1110
          %v1125 = vmul.f32 %v1104, %v1110
          %v1126 = vmul.f32 %v1105, %v1110
          %v1127 = vlaneseq
          %v1128 = vshrl.u32 %v1127, 7
          %v1129 = vsub.s32 0, %v1128
          %v1130 = vrot.slane %v908, %v1129
          %v1131 = vadd.f32 %v1111, %v1130
          %v1132 = vadd.f32 %v1112, %v1130
          %v1133 = vadd.f32 %v1113, %v1130
          %v1134 = vadd.f32 %v1114, %v1130
          %v1135 = vadd.f32 %v1115, %v1130
          %v1136 = vadd.f32 %v1116, %v1130
          %v1137 = vadd.f32 %v1117, %v1130
          %v1138 = vadd.f32 %v1118, %v1130
          %v1139 = vadd.f32 %v1119, %v1130
          %v1140 = vadd.f32 %v1120, %v1130
          %v1141 = vadd.f32 %v1121, %v1130
          %v1142 = vadd.f32 %v1122, %v1130
          %v1143 = vadd.f32 %v1123, %v1130
          %v1144 = vadd.f32 %v1124, %v1130
          %v1145 = vadd.f32 %v1125, %v1130
          %v1146 = vadd.f32 %v1126, %v1130
          %v1147 = vpack.c.bf16 %v1132, %v1131
          %v1148 = vpack.c.bf16 %v1134, %v1133
          %v1149 = vpack.c.bf16 %v1136, %v1135
          %v1150 = vpack.c.bf16 %v1138, %v1137
          %v1151 = vpack.c.bf16 %v1140, %v1139
          %v1152 = vpack.c.bf16 %v1142, %v1141
          %v1153 = vpack.c.bf16 %v1144, %v1143
          %v1154 = vpack.c.bf16 %v1146, %v1145
          %v1155 = vld [vmem:[#allocation14] sm:$0xff]
          %v1156 = vld [vmem:[#allocation14 + $0x8] sm:$0xff]
          %v1157 = vld [vmem:[#allocation14 + $0x10] sm:$0xff]
          %v1158 = vld [vmem:[#allocation14 + $0x18] sm:$0xff]
          %v1159 = vld [vmem:[#allocation14 + $0x20] sm:$0xff]
          %v1160 = vld [vmem:[#allocation14 + $0x28] sm:$0xff]
          %v1161 = vld [vmem:[#allocation14 + $0x30] sm:$0xff]
          %v1162 = vld [vmem:[#allocation14 + $0x38] sm:$0xff]
          %v1163 = vld [vmem:[#allocation14 + $0x40] sm:$0xff]
          %v1164 = vld [vmem:[#allocation14 + $0x48] sm:$0xff]
          %v1165 = vld [vmem:[#allocation14 + $0x50] sm:$0xff]
          %v1166 = vld [vmem:[#allocation14 + $0x58] sm:$0xff]
          %v1167 = vld [vmem:[#allocation14 + $0x60] sm:$0xff]
          %v1168 = vld [vmem:[#allocation14 + $0x68] sm:$0xff]
          %v1169 = vld [vmem:[#allocation14 + $0x70] sm:$0xff]
          %v1170 = vld [vmem:[#allocation14 + $0x78] sm:$0xff]
          %v1171 = vld [vmem:[%s8] sm:$0x3]
          %v1173 = vlaneseq
          %v1174 = vshrl.u32 %v1173, 7
          %v1175 = vsub.s32 0, %v1174
          %v1176 = vrot.slane %v1171, %v1175
          %v1177 = vlaneseq
          %v1178 = vshrl.u32 %v1177, 7
          %v1179 = vsub.s32 1, %v1178
          %v1180 = vrot.slane %v1171, %v1179
          %v1199 = vunpack.c.l.b16 %v1155
          %v1200 = vunpack.c.h.b16 %v1155
          %v1201 = vunpack.c.l.b16 %v1156
          %v1202 = vunpack.c.h.b16 %v1156
          %v1203 = vunpack.c.l.b16 %v1157
          %v1204 = vunpack.c.h.b16 %v1157
          %v1205 = vunpack.c.l.b16 %v1158
          %v1206 = vunpack.c.h.b16 %v1158
          %v1207 = vunpack.c.l.b16 %v1159
          %v1208 = vunpack.c.h.b16 %v1159
          %v1209 = vunpack.c.l.b16 %v1160
          %v1210 = vunpack.c.h.b16 %v1160
          %v1211 = vunpack.c.l.b16 %v1161
          %v1212 = vunpack.c.h.b16 %v1161
          %v1213 = vunpack.c.l.b16 %v1162
          %v1214 = vunpack.c.h.b16 %v1162
          %v1215 = vunpack.c.l.b16 %v1163
          %v1216 = vunpack.c.h.b16 %v1163
          %v1217 = vunpack.c.l.b16 %v1164
          %v1218 = vunpack.c.h.b16 %v1164
          %v1219 = vunpack.c.l.b16 %v1165
          %v1220 = vunpack.c.h.b16 %v1165
          %v1221 = vunpack.c.l.b16 %v1166
          %v1222 = vunpack.c.h.b16 %v1166
          %v1223 = vunpack.c.l.b16 %v1167
          %v1224 = vunpack.c.h.b16 %v1167
          %v1225 = vunpack.c.l.b16 %v1168
          %v1226 = vunpack.c.h.b16 %v1168
          %v1227 = vunpack.c.l.b16 %v1169
          %v1228 = vunpack.c.h.b16 %v1169
          %v1229 = vunpack.c.l.b16 %v1170
          %v1230 = vunpack.c.h.b16 %v1170
          %v1231 = vpack.c.b16 %v1201, %v1199
          %v1232 = vpack.c.b16 %v1202, %v1200
          %v1233 = vpack.c.b16 %v1205, %v1203
          %v1234 = vpack.c.b16 %v1206, %v1204
          %v1235 = vpack.c.b16 %v1209, %v1207
          %v1236 = vpack.c.b16 %v1210, %v1208
          %v1237 = vpack.c.b16 %v1213, %v1211
          %v1238 = vpack.c.b16 %v1214, %v1212
          %v1239 = vpack.c.b16 %v1217, %v1215
          %v1240 = vpack.c.b16 %v1218, %v1216
          %v1241 = vpack.c.b16 %v1221, %v1219
          %v1242 = vpack.c.b16 %v1222, %v1220
          %v1243 = vpack.c.b16 %v1225, %v1223
          %v1244 = vpack.c.b16 %v1226, %v1224
          %v1245 = vpack.c.b16 %v1229, %v1227
          %v1246 = vpack.c.b16 %v1230, %v1228
          %1263 = vmatprep.subr.bf16.mxu0 %v1246
          %1264 = vmatpush1.bf16.msra.mxu0 %v1245
          %1265 = vmatprep.subr.bf16.mxu0 %v1244
          %1266 = vmatpush1.bf16.msra.mxu0 %v1243
          %1267 = vmatprep.subr.bf16.mxu0 %v1242
          %1268 = vmatpush1.bf16.msra.mxu0 %v1241
          %1269 = vmatprep.subr.bf16.mxu0 %v1240
          %1270 = vmatpush1.bf16.msra.mxu0 %v1239
          %1271 = vmatprep.subr.bf16.mxu0 %v1238
          %1272 = vmatpush1.bf16.msra.mxu0 %v1237
          %1273 = vmatprep.subr.bf16.mxu0 %v1236
          %1274 = vmatpush1.bf16.msra.mxu0 %v1235
          %1275 = vmatprep.subr.bf16.mxu0 %v1234
          %1276 = vmatpush1.bf16.msra.mxu0 %v1233
          %1277 = vmatprep.subr.bf16.mxu0 %v1232
          %1278 = vmatpush1.bf16.msra.mxu0 %v1231
          %1279 = vmatprep.subr.bf16.mxu0 0
          %1280 = vmatpush2.bf16.msra.mxu0 0
          %1281 = vmatprep.subr.bf16.mxu0 0
          %1282 = vmatpush2.bf16.msra.mxu0 0
          %1283 = vmatprep.subr.bf16.mxu0 0
          %1284 = vmatpush2.bf16.msra.mxu0 0
          %1285 = vmatprep.subr.bf16.mxu0 0
          %1286 = vmatpush2.bf16.msra.mxu0 0
          %1287 = vmatprep.subr.bf16.mxu0 0
          %1288 = vmatpush2.bf16.msra.mxu0 0
          %1289 = vmatprep.subr.bf16.mxu0 0
          %1290 = vmatpush2.bf16.msra.mxu0 0
          %1291 = vmatprep.subr.bf16.mxu0 0
          %1292 = vmatpush2.bf16.msra.mxu0 0
          %1293 = vmatprep.subr.bf16.mxu0 0
          %1294 = vmatpush2.bf16.msra.mxu0 0
          %1295 = vmatprep.mubr.bf16.mxu0 0
          %1296 = vmatmul.mubr.bf16.gmra.mxu0 %v1147
          %v1297 = vpop.f32.mrf.mxu0
          %v1298 = vadd.f32 %v1176, %v1297
          %v1299 = vpop.f32.mrf.mxu0
          %v1300 = vadd.f32 %v1180, %v1299
          %v1301 = vpop.f32.mrf.mxu0
          %v1302 = vadd.f32 %v1176, %v1301
          %v1303 = vpop.f32.mrf.mxu0
          %v1304 = vadd.f32 %v1180, %v1303
          %1305 = vmatprep.mubr.bf16.mxu0 0
          %1306 = vmatmul.mubr.bf16.gmra.mxu0 %v1148
          %v1307 = vpop.f32.mrf.mxu0
          %v1308 = vadd.f32 %v1176, %v1307
          %v1309 = vpop.f32.mrf.mxu0
          %v1310 = vadd.f32 %v1180, %v1309
          %v1311 = vpop.f32.mrf.mxu0
          %v1312 = vadd.f32 %v1176, %v1311
          %v1313 = vpop.f32.mrf.mxu0
          %v1314 = vadd.f32 %v1180, %v1313
          %1315 = vmatprep.mubr.bf16.mxu0 0
          %1316 = vmatmul.mubr.bf16.gmra.mxu0 %v1149
          %v1317 = vpop.f32.mrf.mxu0
          %v1318 = vadd.f32 %v1176, %v1317
          %v1319 = vpop.f32.mrf.mxu0
          %v1320 = vadd.f32 %v1180, %v1319
          %v1321 = vpop.f32.mrf.mxu0
          %v1322 = vadd.f32 %v1176, %v1321
          %v1323 = vpop.f32.mrf.mxu0
          %v1324 = vadd.f32 %v1180, %v1323
          %1325 = vmatprep.mubr.bf16.mxu0 0
          %1326 = vmatmul.mubr.bf16.gmra.mxu0 %v1150
          %v1327 = vpop.f32.mrf.mxu0
          %v1328 = vadd.f32 %v1176, %v1327
          %v1329 = vpop.f32.mrf.mxu0
          %v1330 = vadd.f32 %v1180, %v1329
          %v1331 = vpop.f32.mrf.mxu0
          %v1332 = vadd.f32 %v1176, %v1331
          %v1333 = vpop.f32.mrf.mxu0
          %v1334 = vadd.f32 %v1180, %v1333
          %1335 = vmatprep.mubr.bf16.mxu0 0
          %1336 = vmatmul.mubr.bf16.gmra.mxu0 %v1151
          %v1337 = vpop.f32.mrf.mxu0
          %v1338 = vadd.f32 %v1176, %v1337
          %v1339 = vpop.f32.mrf.mxu0
          %v1340 = vadd.f32 %v1180, %v1339
          %v1341 = vpop.f32.mrf.mxu0
          %v1342 = vadd.f32 %v1176, %v1341
          %v1343 = vpop.f32.mrf.mxu0
          %v1344 = vadd.f32 %v1180, %v1343
          %1345 = vmatprep.mubr.bf16.mxu0 0
          %1346 = vmatmul.mubr.bf16.gmra.mxu0 %v1152
          %v1347 = vpop.f32.mrf.mxu0
          %v1348 = vadd.f32 %v1176, %v1347
          %v1349 = vpop.f32.mrf.mxu0
          %v1350 = vadd.f32 %v1180, %v1349
          %v1351 = vpop.f32.mrf.mxu0
          %v1352 = vadd.f32 %v1176, %v1351
          %v1353 = vpop.f32.mrf.mxu0
          %v1354 = vadd.f32 %v1180, %v1353
          %1355 = vmatprep.mubr.bf16.mxu0 0
          %1356 = vmatmul.mubr.bf16.gmra.mxu0 %v1153
          %v1357 = vpop.f32.mrf.mxu0
          %v1358 = vadd.f32 %v1176, %v1357
          %v1359 = vpop.f32.mrf.mxu0
          %v1360 = vadd.f32 %v1180, %v1359
          %v1361 = vpop.f32.mrf.mxu0
          %v1362 = vadd.f32 %v1176, %v1361
          %v1363 = vpop.f32.mrf.mxu0
          %v1364 = vadd.f32 %v1180, %v1363
          %1365 = vmatprep.mubr.bf16.mxu0 0
          %1366 = vmatmul.mubr.bf16.gmra.mxu0 %v1154
          %v1367 = vpop.f32.mrf.mxu0
          %v1368 = vadd.f32 %v1176, %v1367
          %v1369 = vpop.f32.mrf.mxu0
          %v1370 = vadd.f32 %v1180, %v1369
          %v1371 = vpop.f32.mrf.mxu0
          %v1372 = vadd.f32 %v1176, %v1371
          %v1373 = vpop.f32.mrf.mxu0
          %v1374 = vadd.f32 %v1180, %v1373
          %1375 = vdwg.mxu0
          %v1376 = vpack.c.bf16 %v1302, %v1298
          %v1377 = vpack.c.bf16 %v1312, %v1308
          %v1378 = vpack.c.bf16 %v1322, %v1318
          %v1379 = vpack.c.bf16 %v1332, %v1328
          %v1380 = vpack.c.bf16 %v1342, %v1338
          %v1381 = vpack.c.bf16 %v1352, %v1348
          %v1382 = vpack.c.bf16 %v1362, %v1358
          %v1383 = vpack.c.bf16 %v1372, %v1368
          %v1392 = vunpack.c.l.b16 %v1376
          %v1393 = vunpack.c.h.b16 %v1376
          %v1394 = vunpack.c.l.b16 %v1377
          %v1395 = vunpack.c.h.b16 %v1377
          %v1396 = vunpack.c.l.b16 %v1378
          %v1397 = vunpack.c.h.b16 %v1378
          %v1398 = vunpack.c.l.b16 %v1379
          %v1399 = vunpack.c.h.b16 %v1379
          %v1400 = vunpack.c.l.b16 %v1380
          %v1401 = vunpack.c.h.b16 %v1380
          %v1402 = vunpack.c.l.b16 %v1381
          %v1403 = vunpack.c.h.b16 %v1381
          %v1404 = vunpack.c.l.b16 %v1382
          %v1405 = vunpack.c.h.b16 %v1382
          %v1406 = vunpack.c.l.b16 %v1383
          %v1407 = vunpack.c.h.b16 %v1383
          %v1408 = vpack.c.b16 %v1392, %v1392
          %v1409 = vpack.c.b16 %v1393, %v1393
          %v1410 = vpack.c.b16 %v1394, %v1394
          %v1411 = vpack.c.b16 %v1395, %v1395
          %v1412 = vpack.c.b16 %v1396, %v1396
          %v1413 = vpack.c.b16 %v1397, %v1397
          %v1414 = vpack.c.b16 %v1398, %v1398
          %v1415 = vpack.c.b16 %v1399, %v1399
          %v1416 = vpack.c.b16 %v1400, %v1400
          %v1417 = vpack.c.b16 %v1401, %v1401
          %v1418 = vpack.c.b16 %v1402, %v1402
          %v1419 = vpack.c.b16 %v1403, %v1403
          %v1420 = vpack.c.b16 %v1404, %v1404
          %v1421 = vpack.c.b16 %v1405, %v1405
          %v1422 = vpack.c.b16 %v1406, %v1406
          %v1423 = vpack.c.b16 %v1407, %v1407
          %1440 = vst [vmem:[#allocation2] sm:$0xf] %v1408
          %1441 = vst [vmem:[#allocation2 + $0x4] sm:$0xf] %v1409
          %1442 = vst [vmem:[#allocation2 + $0x8] sm:$0xf] %v1410
          %1443 = vst [vmem:[#allocation2 + $0xc] sm:$0xf] %v1411
          %1444 = vst [vmem:[#allocation2 + $0x10] sm:$0xf] %v1412
          %1445 = vst [vmem:[#allocation2 + $0x14] sm:$0xf] %v1413
          %1446 = vst [vmem:[#allocation2 + $0x18] sm:$0xf] %v1414
          %1447 = vst [vmem:[#allocation2 + $0x1c] sm:$0xf] %v1415
          %1448 = vst [vmem:[#allocation2 + $0x20] sm:$0xf] %v1416
          %1449 = vst [vmem:[#allocation2 + $0x24] sm:$0xf] %v1417
          %1450 = vst [vmem:[#allocation2 + $0x28] sm:$0xf] %v1418
          %1451 = vst [vmem:[#allocation2 + $0x2c] sm:$0xf] %v1419
          %1452 = vst [vmem:[#allocation2 + $0x30] sm:$0xf] %v1420
          %1453 = vst [vmem:[#allocation2 + $0x34] sm:$0xf] %v1421
          %1454 = vst [vmem:[#allocation2 + $0x38] sm:$0xf] %v1422
          %1455 = vst [vmem:[#allocation2 + $0x3c] sm:$0xf] %v1423
          %v1456 = vpack.c.bf16 %v1304, %v1300
          %v1457 = vpack.c.bf16 %v1314, %v1310
          %v1458 = vpack.c.bf16 %v1324, %v1320
          %v1459 = vpack.c.bf16 %v1334, %v1330
          %v1460 = vpack.c.bf16 %v1344, %v1340
          %v1461 = vpack.c.bf16 %v1354, %v1350
          %v1462 = vpack.c.bf16 %v1364, %v1360
          %v1463 = vpack.c.bf16 %v1374, %v1370
          %v1472 = vunpack.c.l.b16 %v1456
          %v1473 = vunpack.c.h.b16 %v1456
          %v1474 = vunpack.c.l.b16 %v1457
          %v1475 = vunpack.c.h.b16 %v1457
          %v1476 = vunpack.c.l.b16 %v1458
          %v1477 = vunpack.c.h.b16 %v1458
          %v1478 = vunpack.c.l.b16 %v1459
          %v1479 = vunpack.c.h.b16 %v1459
          %v1480 = vunpack.c.l.b16 %v1460
          %v1481 = vunpack.c.h.b16 %v1460
          %v1482 = vunpack.c.l.b16 %v1461
          %v1483 = vunpack.c.h.b16 %v1461
          %v1484 = vunpack.c.l.b16 %v1462
          %v1485 = vunpack.c.h.b16 %v1462
          %v1486 = vunpack.c.l.b16 %v1463
          %v1487 = vunpack.c.h.b16 %v1463
          %v1488 = vpack.c.b16 %v1472, %v1472
          %v1489 = vpack.c.b16 %v1473, %v1473
          %v1490 = vpack.c.b16 %v1474, %v1474
          %v1491 = vpack.c.b16 %v1475, %v1475
          %v1492 = vpack.c.b16 %v1476, %v1476
          %v1493 = vpack.c.b16 %v1477, %v1477
          %v1494 = vpack.c.b16 %v1478, %v1478
          %v1495 = vpack.c.b16 %v1479, %v1479
          %v1496 = vpack.c.b16 %v1480, %v1480
          %v1497 = vpack.c.b16 %v1481, %v1481
          %v1498 = vpack.c.b16 %v1482, %v1482
          %v1499 = vpack.c.b16 %v1483, %v1483
          %v1500 = vpack.c.b16 %v1484, %v1484
          %v1501 = vpack.c.b16 %v1485, %v1485
          %v1502 = vpack.c.b16 %v1486, %v1486
          %v1503 = vpack.c.b16 %v1487, %v1487
          %1520 = vst [vmem:[#allocation3] sm:$0xf] %v1488
          %1521 = vst [vmem:[#allocation3 + $0x4] sm:$0xf] %v1489
          %1522 = vst [vmem:[#allocation3 + $0x8] sm:$0xf] %v1490
          %1523 = vst [vmem:[#allocation3 + $0xc] sm:$0xf] %v1491
          %1524 = vst [vmem:[#allocation3 + $0x10] sm:$0xf] %v1492
          %1525 = vst [vmem:[#allocation3 + $0x14] sm:$0xf] %v1493
          %1526 = vst [vmem:[#allocation3 + $0x18] sm:$0xf] %v1494
          %1527 = vst [vmem:[#allocation3 + $0x1c] sm:$0xf] %v1495
          %1528 = vst [vmem:[#allocation3 + $0x20] sm:$0xf] %v1496
          %1529 = vst [vmem:[#allocation3 + $0x24] sm:$0xf] %v1497
          %1530 = vst [vmem:[#allocation3 + $0x28] sm:$0xf] %v1498
          %1531 = vst [vmem:[#allocation3 + $0x2c] sm:$0xf] %v1499
          %1532 = vst [vmem:[#allocation3 + $0x30] sm:$0xf] %v1500
          %1533 = vst [vmem:[#allocation3 + $0x34] sm:$0xf] %v1501
          %1534 = vst [vmem:[#allocation3 + $0x38] sm:$0xf] %v1502
          %1535 = vst [vmem:[#allocation3 + $0x3c] sm:$0xf] %v1503
          %v1536 = vld [vmem:[%s794] sm:$0xff]
          %v1537 = vld [vmem:[%s794 + $0x8] sm:$0xff]
          %v1538 = vld [vmem:[%s794 + $0x10] sm:$0xff]
          %v1539 = vld [vmem:[%s794 + $0x18] sm:$0xff]
          %v1540 = vld [vmem:[%s794 + $0x20] sm:$0xff]
          %v1541 = vld [vmem:[%s794 + $0x28] sm:$0xff]
          %v1542 = vld [vmem:[%s794 + $0x30] sm:$0xff]
          %v1543 = vld [vmem:[%s794 + $0x38] sm:$0xff]
          %v1544 = vpack.c.bf16 %v1537, %v1536
          %v1545 = vpack.c.bf16 %v1539, %v1538
          %v1546 = vpack.c.bf16 %v1541, %v1540
          %v1547 = vpack.c.bf16 %v1543, %v1542
          %v1548 = vld [vmem:[#allocation18] sm:$0xff]
          %v1549 = vld [vmem:[#allocation18 + $0x8] sm:$0xff]
          %v1550 = vld [vmem:[#allocation18 + $0x10] sm:$0xff]
          %v1551 = vld [vmem:[#allocation18 + $0x18] sm:$0xff]
          %v1552 = vld [vmem:[#allocation18 + $0x20] sm:$0xff]
          %v1553 = vld [vmem:[#allocation18 + $0x28] sm:$0xff]
          %v1554 = vld [vmem:[#allocation18 + $0x30] sm:$0xff]
          %v1555 = vld [vmem:[#allocation18 + $0x38] sm:$0xff]
          %v1556 = vld [vmem:[#allocation18 + $0x40] sm:$0xff]
          %v1557 = vld [vmem:[#allocation18 + $0x48] sm:$0xff]
          %v1558 = vld [vmem:[#allocation18 + $0x50] sm:$0xff]
          %v1559 = vld [vmem:[#allocation18 + $0x58] sm:$0xff]
          %v1560 = vld [vmem:[#allocation18 + $0x60] sm:$0xff]
          %v1561 = vld [vmem:[#allocation18 + $0x68] sm:$0xff]
          %v1562 = vld [vmem:[#allocation18 + $0x70] sm:$0xff]
          %v1563 = vld [vmem:[#allocation18 + $0x78] sm:$0xff]
          %v1564 = vld [vmem:[%s14] sm:$0x3]
          %v1566 = vlaneseq
          %v1567 = vshrl.u32 %v1566, 7
          %v1568 = vsub.s32 0, %v1567
          %v1569 = vrot.slane %v1564, %v1568
          %v1570 = vlaneseq
          %v1571 = vshrl.u32 %v1570, 7
          %v1572 = vsub.s32 1, %v1571
          %v1573 = vrot.slane %v1564, %v1572
          %v1592 = vunpack.c.l.b16 %v1548
          %v1593 = vunpack.c.h.b16 %v1548
          %v1594 = vunpack.c.l.b16 %v1549
          %v1595 = vunpack.c.h.b16 %v1549
          %v1596 = vunpack.c.l.b16 %v1550
          %v1597 = vunpack.c.h.b16 %v1550
          %v1598 = vunpack.c.l.b16 %v1551
          %v1599 = vunpack.c.h.b16 %v1551
          %v1600 = vunpack.c.l.b16 %v1552
          %v1601 = vunpack.c.h.b16 %v1552
          %v1602 = vunpack.c.l.b16 %v1553
          %v1603 = vunpack.c.h.b16 %v1553
          %v1604 = vunpack.c.l.b16 %v1554
          %v1605 = vunpack.c.h.b16 %v1554
          %v1606 = vunpack.c.l.b16 %v1555
          %v1607 = vunpack.c.h.b16 %v1555
          %v1608 = vunpack.c.l.b16 %v1556
          %v1609 = vunpack.c.h.b16 %v1556
          %v1610 = vunpack.c.l.b16 %v1557
          %v1611 = vunpack.c.h.b16 %v1557
          %v1612 = vunpack.c.l.b16 %v1558
          %v1613 = vunpack.c.h.b16 %v1558
          %v1614 = vunpack.c.l.b16 %v1559
          %v1615 = vunpack.c.h.b16 %v1559
          %v1616 = vunpack.c.l.b16 %v1560
          %v1617 = vunpack.c.h.b16 %v1560
          %v1618 = vunpack.c.l.b16 %v1561
          %v1619 = vunpack.c.h.b16 %v1561
          %v1620 = vunpack.c.l.b16 %v1562
          %v1621 = vunpack.c.h.b16 %v1562
          %v1622 = vunpack.c.l.b16 %v1563
          %v1623 = vunpack.c.h.b16 %v1563
          %v1624 = vpack.c.b16 %v1594, %v1592
          %v1625 = vpack.c.b16 %v1595, %v1593
          %v1626 = vpack.c.b16 %v1598, %v1596
          %v1627 = vpack.c.b16 %v1599, %v1597
          %v1628 = vpack.c.b16 %v1602, %v1600
          %v1629 = vpack.c.b16 %v1603, %v1601
          %v1630 = vpack.c.b16 %v1606, %v1604
          %v1631 = vpack.c.b16 %v1607, %v1605
          %v1632 = vpack.c.b16 %v1610, %v1608
          %v1633 = vpack.c.b16 %v1611, %v1609
          %v1634 = vpack.c.b16 %v1614, %v1612
          %v1635 = vpack.c.b16 %v1615, %v1613
          %v1636 = vpack.c.b16 %v1618, %v1616
          %v1637 = vpack.c.b16 %v1619, %v1617
          %v1638 = vpack.c.b16 %v1622, %v1620
          %v1639 = vpack.c.b16 %v1623, %v1621
          %1656 = vmatprep.subr.bf16.mxu0 %v1639
          %1657 = vmatpush1.bf16.msra.mxu0 %v1638
          %1658 = vmatprep.subr.bf16.mxu0 %v1637
          %1659 = vmatpush1.bf16.msra.mxu0 %v1636
          %1660 = vmatprep.subr.bf16.mxu0 %v1635
          %1661 = vmatpush1.bf16.msra.mxu0 %v1634
          %1662 = vmatprep.subr.bf16.mxu0 %v1633
          %1663 = vmatpush1.bf16.msra.mxu0 %v1632
          %1664 = vmatprep.subr.bf16.mxu0 %v1631
          %1665 = vmatpush1.bf16.msra.mxu0 %v1630
          %1666 = vmatprep.subr.bf16.mxu0 %v1629
          %1667 = vmatpush1.bf16.msra.mxu0 %v1628
          %1668 = vmatprep.subr.bf16.mxu0 %v1627
          %1669 = vmatpush1.bf16.msra.mxu0 %v1626
          %1670 = vmatprep.subr.bf16.mxu0 %v1625
          %1671 = vmatpush1.bf16.msra.mxu0 %v1624
          %1672 = vmatprep.subr.bf16.mxu0 0
          %1673 = vmatpush2.bf16.msra.mxu0 0
          %1674 = vmatprep.subr.bf16.mxu0 0
          %1675 = vmatpush2.bf16.msra.mxu0 0
          %1676 = vmatprep.subr.bf16.mxu0 0
          %1677 = vmatpush2.bf16.msra.mxu0 0
          %1678 = vmatprep.subr.bf16.mxu0 0
          %1679 = vmatpush2.bf16.msra.mxu0 0
          %1680 = vmatprep.subr.bf16.mxu0 0
          %1681 = vmatpush2.bf16.msra.mxu0 0
          %1682 = vmatprep.subr.bf16.mxu0 0
          %1683 = vmatpush2.bf16.msra.mxu0 0
          %1684 = vmatprep.subr.bf16.mxu0 0
          %1685 = vmatpush2.bf16.msra.mxu0 0
          %1686 = vmatprep.subr.bf16.mxu0 0
          %1687 = vmatpush2.bf16.msra.mxu0 0
          %1688 = vmatprep.mubr.bf16.mxu0 0
          %1689 = vmatmul.mubr.bf16.gmra.mxu0 %v1544
          %v1690 = vpop.f32.mrf.mxu0
          %v1691 = vadd.f32 %v1569, %v1690
          %v1692 = vpop.f32.mrf.mxu0
          %v1693 = vadd.f32 %v1573, %v1692
          %v1694 = vpop.f32.mrf.mxu0
          %v1695 = vadd.f32 %v1569, %v1694
          %v1696 = vpop.f32.mrf.mxu0
          %v1697 = vadd.f32 %v1573, %v1696
          %1698 = vmatprep.mubr.bf16.mxu0 0
          %1699 = vmatmul.mubr.bf16.gmra.mxu0 %v1545
          %v1700 = vpop.f32.mrf.mxu0
          %v1701 = vadd.f32 %v1569, %v1700
          %v1702 = vpop.f32.mrf.mxu0
          %v1703 = vadd.f32 %v1573, %v1702
          %v1704 = vpop.f32.mrf.mxu0
          %v1705 = vadd.f32 %v1569, %v1704
          %v1706 = vpop.f32.mrf.mxu0
          %v1707 = vadd.f32 %v1573, %v1706
          %1708 = vmatprep.mubr.bf16.mxu0 0
          %1709 = vmatmul.mubr.bf16.gmra.mxu0 %v1546
          %v1710 = vpop.f32.mrf.mxu0
          %v1711 = vadd.f32 %v1569, %v1710
          %v1712 = vpop.f32.mrf.mxu0
          %v1713 = vadd.f32 %v1573, %v1712
          %v1714 = vpop.f32.mrf.mxu0
          %v1715 = vadd.f32 %v1569, %v1714
          %v1716 = vpop.f32.mrf.mxu0
          %v1717 = vadd.f32 %v1573, %v1716
          %1718 = vmatprep.mubr.bf16.mxu0 0
          %1719 = vmatmul.mubr.bf16.gmra.mxu0 %v1547
          %v1720 = vpop.f32.mrf.mxu0
          %v1721 = vadd.f32 %v1569, %v1720
          %v1722 = vpop.f32.mrf.mxu0
          %v1723 = vadd.f32 %v1573, %v1722
          %v1724 = vpop.f32.mrf.mxu0
          %v1725 = vadd.f32 %v1569, %v1724
          %v1726 = vpop.f32.mrf.mxu0
          %v1727 = vadd.f32 %v1573, %v1726
          %1728 = vdwg.mxu0
          %v1729 = vpack.c.bf16 %v1695, %v1691
          %v1730 = vpack.c.bf16 %v1705, %v1701
          %v1731 = vpack.c.bf16 %v1715, %v1711
          %v1732 = vpack.c.bf16 %v1725, %v1721
          %v1737 = vunpack.c.l.b16 %v1729
          %v1738 = vunpack.c.h.b16 %v1729
          %v1739 = vunpack.c.l.b16 %v1730
          %v1740 = vunpack.c.h.b16 %v1730
          %v1741 = vunpack.c.l.b16 %v1731
          %v1742 = vunpack.c.h.b16 %v1731
          %v1743 = vunpack.c.l.b16 %v1732
          %v1744 = vunpack.c.h.b16 %v1732
          %v1745 = vpack.c.b16 %v1737, %v1737
          %v1746 = vpack.c.b16 %v1738, %v1738
          %v1747 = vpack.c.b16 %v1739, %v1739
          %v1748 = vpack.c.b16 %v1740, %v1740
          %v1749 = vpack.c.b16 %v1741, %v1741
          %v1750 = vpack.c.b16 %v1742, %v1742
          %v1751 = vpack.c.b16 %v1743, %v1743
          %v1752 = vpack.c.b16 %v1744, %v1744
          %1761 = vst [vmem:[#allocation4] sm:$0xf] %v1745
          %1762 = vst [vmem:[#allocation4 + $0x4] sm:$0xf] %v1746
          %1763 = vst [vmem:[#allocation4 + $0x8] sm:$0xf] %v1747
          %1764 = vst [vmem:[#allocation4 + $0xc] sm:$0xf] %v1748
          %1765 = vst [vmem:[#allocation4 + $0x10] sm:$0xf] %v1749
          %1766 = vst [vmem:[#allocation4 + $0x14] sm:$0xf] %v1750
          %1767 = vst [vmem:[#allocation4 + $0x18] sm:$0xf] %v1751
          %1768 = vst [vmem:[#allocation4 + $0x1c] sm:$0xf] %v1752
          %v1769 = vpack.c.bf16 %v1697, %v1693
          %v1770 = vpack.c.bf16 %v1707, %v1703
          %v1771 = vpack.c.bf16 %v1717, %v1713
          %v1772 = vpack.c.bf16 %v1727, %v1723
          %v1777 = vunpack.c.l.b16 %v1769
          %v1778 = vunpack.c.h.b16 %v1769
          %v1779 = vunpack.c.l.b16 %v1770
          %v1780 = vunpack.c.h.b16 %v1770
          %v1781 = vunpack.c.l.b16 %v1771
          %v1782 = vunpack.c.h.b16 %v1771
          %v1783 = vunpack.c.l.b16 %v1772
          %v1784 = vunpack.c.h.b16 %v1772
          %v1785 = vpack.c.b16 %v1777, %v1777
          %v1786 = vpack.c.b16 %v1778, %v1778
          %v1787 = vpack.c.b16 %v1779, %v1779
          %v1788 = vpack.c.b16 %v1780, %v1780
          %v1789 = vpack.c.b16 %v1781, %v1781
          %v1790 = vpack.c.b16 %v1782, %v1782
          %v1791 = vpack.c.b16 %v1783, %v1783
          %v1792 = vpack.c.b16 %v1784, %v1784
          %1801 = vst [vmem:[#allocation5] sm:$0xf] %v1785
          %1802 = vst [vmem:[#allocation5 + $0x4] sm:$0xf] %v1786
          %1803 = vst [vmem:[#allocation5 + $0x8] sm:$0xf] %v1787
          %1804 = vst [vmem:[#allocation5 + $0xc] sm:$0xf] %v1788
          %1805 = vst [vmem:[#allocation5 + $0x10] sm:$0xf] %v1789
          %1806 = vst [vmem:[#allocation5 + $0x14] sm:$0xf] %v1790
          %1807 = vst [vmem:[#allocation5 + $0x18] sm:$0xf] %v1791
          %1808 = vst [vmem:[#allocation5 + $0x1c] sm:$0xf] %v1792
        $region152: #{tpu_custom_call.1} parent=103 // pred_fallthru
          _
        %v1809 = vld [vmem:[%s776] sm:$0xff]
        %v1810 = vld [vmem:[%s776 + $0x8] sm:$0xff]
        %v1811 = vld [vmem:[%s776 + $0x10] sm:$0xff]
        %v1812 = vld [vmem:[%s776 + $0x18] sm:$0xff]
        %v1813 = vld [vmem:[%s776 + $0x20] sm:$0xff]
        %v1814 = vld [vmem:[%s776 + $0x28] sm:$0xff]
        %v1815 = vld [vmem:[%s776 + $0x30] sm:$0xff]
        %v1816 = vld [vmem:[%s776 + $0x38] sm:$0xff]
        %1817 = vadd.xlane.f32.xlu0 %v1809
        %v1818 = vpop.xlane.xlu0 %1817
        %1819 = vadd.xlane.f32.xlu0 %v1810
        %v1820 = vpop.xlane.xlu0 %1819
        %1821 = vadd.xlane.f32.xlu0 %v1811
        %v1822 = vpop.xlane.xlu0 %1821
        %1823 = vadd.xlane.f32.xlu0 %v1812
        %v1824 = vpop.xlane.xlu0 %1823
        %1825 = vadd.xlane.f32.xlu0 %v1813
        %v1826 = vpop.xlane.xlu0 %1825
        %1827 = vadd.xlane.f32.xlu0 %v1814
        %v1828 = vpop.xlane.xlu0 %1827
        %1829 = vadd.xlane.f32.xlu0 %v1815
        %v1830 = vpop.xlane.xlu0 %1829
        %1831 = vadd.xlane.f32.xlu0 %v1816
        %v1832 = vpop.xlane.xlu0 %1831
        %v1833 = vrcp.pop 128.0
        %v1834 = vmul.f32 %v1818, %v1833
        %v1835 = vmul.f32 %v1820, %v1833
        %v1836 = vmul.f32 %v1822, %v1833
        %v1837 = vmul.f32 %v1824, %v1833
        %v1838 = vmul.f32 %v1826, %v1833
        %v1839 = vmul.f32 %v1828, %v1833
        %v1840 = vmul.f32 %v1830, %v1833
        %v1841 = vmul.f32 %v1832, %v1833
        %v1842 = vsub.f32 %v1809, %v1834
        %v1843 = vsub.f32 %v1810, %v1835
        %v1844 = vsub.f32 %v1811, %v1836
        %v1845 = vsub.f32 %v1812, %v1837
        %v1846 = vsub.f32 %v1813, %v1838
        %v1847 = vsub.f32 %v1814, %v1839
        %v1848 = vsub.f32 %v1815, %v1840
        %v1849 = vsub.f32 %v1816, %v1841
        %v1850 = vmul.f32 %v1842, %v1842
        %v1851 = vmul.f32 %v1843, %v1843
        %v1852 = vmul.f32 %v1844, %v1844
        %v1853 = vmul.f32 %v1845, %v1845
        %v1854 = vmul.f32 %v1846, %v1846
        %v1855 = vmul.f32 %v1847, %v1847
        %v1856 = vmul.f32 %v1848, %v1848
        %v1857 = vmul.f32 %v1849, %v1849
        %1858 = vadd.xlane.f32.xlu0 %v1850
        %v1859 = vpop.xlane.xlu0 %1858
        %1860 = vadd.xlane.f32.xlu0 %v1851
        %v1861 = vpop.xlane.xlu0 %1860
        %1862 = vadd.xlane.f32.xlu0 %v1852
        %v1863 = vpop.xlane.xlu0 %1862
        %1864 = vadd.xlane.f32.xlu0 %v1853
        %v1865 = vpop.xlane.xlu0 %1864
        %1866 = vadd.xlane.f32.xlu0 %v1854
        %v1867 = vpop.xlane.xlu0 %1866
        %1868 = vadd.xlane.f32.xlu0 %v1855
        %v1869 = vpop.xlane.xlu0 %1868
        %1870 = vadd.xlane.f32.xlu0 %v1856
        %v1871 = vpop.xlane.xlu0 %1870
        %1872 = vadd.xlane.f32.xlu0 %v1857
        %v1873 = vpop.xlane.xlu0 %1872
        %v1874 = vmul.f32 %v1859, %v1833
        %v1875 = vmul.f32 %v1861, %v1833
        %v1876 = vmul.f32 %v1863, %v1833
        %v1877 = vmul.f32 %v1865, %v1833
        %v1878 = vmul.f32 %v1867, %v1833
        %v1879 = vmul.f32 %v1869, %v1833
        %v1880 = vmul.f32 %v1871, %v1833
        %v1881 = vmul.f32 %v1873, %v1833
        %v1882 = vadd.f32 %v1874, 1e-06
        %v1883 = vadd.f32 %v1875, 1e-06
        %v1884 = vadd.f32 %v1876, 1e-06
        %v1885 = vadd.f32 %v1877, 1e-06
        %v1886 = vadd.f32 %v1878, 1e-06
        %v1887 = vadd.f32 %v1879, 1e-06
        %v1888 = vadd.f32 %v1880, 1e-06
        %v1889 = vadd.f32 %v1881, 1e-06
        %v1890 = vrsqrt.pop %v1882
        %v1891 = vrsqrt.pop %v1883
        %v1892 = vrsqrt.pop %v1884
        %v1893 = vrsqrt.pop %v1885
        %v1894 = vrsqrt.pop %v1886
        %v1895 = vrsqrt.pop %v1887
        %v1896 = vrsqrt.pop %v1888
        %v1897 = vrsqrt.pop %v1889
        %v1898 = vmul.f32 %v1842, %v1890
        %v1899 = vmul.f32 %v1843, %v1891
        %v1900 = vmul.f32 %v1844, %v1892
        %v1901 = vmul.f32 %v1845, %v1893
        %v1902 = vmul.f32 %v1846, %v1894
        %v1903 = vmul.f32 %v1847, %v1895
        %v1904 = vmul.f32 %v1848, %v1896
        %v1905 = vmul.f32 %v1849, %v1897
        %v1906 = vadd.f32 %v908, 1.0
        %v1907 = vlaneseq
        %v1908 = vshrl.u32 %v1907, 7
        %v1909 = vsub.s32 1, %v1908
        %v1910 = vrot.slane %v1906, %v1909
        %v1911 = vmul.f32 %v1898, %v1910
        %v1912 = vmul.f32 %v1899, %v1910
        %v1913 = vmul.f32 %v1900, %v1910
        %v1914 = vmul.f32 %v1901, %v1910
        %v1915 = vmul.f32 %v1902, %v1910
        %v1916 = vmul.f32 %v1903, %v1910
        %v1917 = vmul.f32 %v1904, %v1910
        %v1918 = vmul.f32 %v1905, %v1910
        %v1919 = vlaneseq
        %v1920 = vshrl.u32 %v1919, 7
        %v1921 = vsub.s32 0, %v1920
        %v1922 = vrot.slane %v908, %v1921
        %v1923 = vadd.f32 %v1911, %v1922
        %v1924 = vadd.f32 %v1912, %v1922
        %v1925 = vadd.f32 %v1913, %v1922
        %v1926 = vadd.f32 %v1914, %v1922
        %v1927 = vadd.f32 %v1915, %v1922
        %v1928 = vadd.f32 %v1916, %v1922
        %v1929 = vadd.f32 %v1917, %v1922
        %v1930 = vadd.f32 %v1918, %v1922
        %v1931 = vpack.c.bf16 %v1924, %v1923
        %v1932 = vpack.c.bf16 %v1926, %v1925
        %v1933 = vpack.c.bf16 %v1928, %v1927
        %v1934 = vpack.c.bf16 %v1930, %v1929
        %v1935 = vld [vmem:[#allocation12] sm:$0xf]
        %v1936 = vld [vmem:[#allocation12 + $0x4] sm:$0xf]
        %v1937 = vld [vmem:[#allocation12 + $0x8] sm:$0xf]
        %v1938 = vld [vmem:[#allocation12 + $0xc] sm:$0xf]
        %v1939 = vld [vmem:[#allocation12 + $0x10] sm:$0xf]
        %v1940 = vld [vmem:[#allocation12 + $0x14] sm:$0xf]
        %v1941 = vld [vmem:[#allocation12 + $0x18] sm:$0xf]
        %v1942 = vld [vmem:[#allocation12 + $0x1c] sm:$0xf]
        %v1943 = vld [vmem:[#allocation12 + $0x20] sm:$0xf]
        %v1944 = vld [vmem:[#allocation12 + $0x24] sm:$0xf]
        %v1945 = vld [vmem:[#allocation12 + $0x28] sm:$0xf]
        %v1946 = vld [vmem:[#allocation12 + $0x2c] sm:$0xf]
        %v1947 = vld [vmem:[#allocation12 + $0x30] sm:$0xf]
        %v1948 = vld [vmem:[#allocation12 + $0x34] sm:$0xf]
        %v1949 = vld [vmem:[#allocation12 + $0x38] sm:$0xf]
        %v1950 = vld [vmem:[#allocation12 + $0x3c] sm:$0xf]
        %v1951 = vld [vmem:[%s6] sm:$0x1]
        %v1953 = vlaneseq
        %v1954 = vshrl.u32 %v1953, 7
        %v1955 = vsub.s32 0, %v1954
        %v1956 = vrot.slane %v1951, %v1955
        %v1974 = vunpack.c.l.b16 %v1935
        %v1975 = vunpack.c.l.b16 %v1936
        %v1976 = vunpack.c.l.b16 %v1937
        %v1977 = vunpack.c.l.b16 %v1938
        %v1978 = vunpack.c.l.b16 %v1939
        %v1979 = vunpack.c.l.b16 %v1940
        %v1980 = vunpack.c.l.b16 %v1941
        %v1981 = vunpack.c.l.b16 %v1942
        %v1982 = vunpack.c.l.b16 %v1943
        %v1983 = vunpack.c.l.b16 %v1944
        %v1984 = vunpack.c.l.b16 %v1945
        %v1985 = vunpack.c.l.b16 %v1946
        %v1986 = vunpack.c.l.b16 %v1947
        %v1987 = vunpack.c.l.b16 %v1948
        %v1988 = vunpack.c.l.b16 %v1949
        %v1989 = vunpack.c.l.b16 %v1950
        %v1990 = vpack.c.b16 %v1975, %v1974
        %v1991 = vpack.c.b16 %v1977, %v1976
        %v1992 = vpack.c.b16 %v1979, %v1978
        %v1993 = vpack.c.b16 %v1981, %v1980
        %v1994 = vpack.c.b16 %v1983, %v1982
        %v1995 = vpack.c.b16 %v1985, %v1984
        %v1996 = vpack.c.b16 %v1987, %v1986
        %v1997 = vpack.c.b16 %v1989, %v1988
        %2006 = vmatprep.subr.bf16.mxu0 0
        %2007 = vmatpush1.bf16.msra.mxu0 %v1997
        %2008 = vmatprep.subr.bf16.mxu0 0
        %2009 = vmatpush1.bf16.msra.mxu0 %v1996
        %2010 = vmatprep.subr.bf16.mxu0 0
        %2011 = vmatpush1.bf16.msra.mxu0 %v1995
        %2012 = vmatprep.subr.bf16.mxu0 0
        %2013 = vmatpush1.bf16.msra.mxu0 %v1994
        %2014 = vmatprep.subr.bf16.mxu0 0
        %2015 = vmatpush1.bf16.msra.mxu0 %v1993
        %2016 = vmatprep.subr.bf16.mxu0 0
        %2017 = vmatpush1.bf16.msra.mxu0 %v1992
        %2018 = vmatprep.subr.bf16.mxu0 0
        %2019 = vmatpush1.bf16.msra.mxu0 %v1991
        %2020 = vmatprep.subr.bf16.mxu0 0
        %2021 = vmatpush1.bf16.msra.mxu0 %v1990
        %2022 = vmatprep.subr.bf16.mxu0 0
        %2023 = vmatpush2.bf16.msra.mxu0 0
        %2024 = vmatprep.subr.bf16.mxu0 0
        %2025 = vmatpush2.bf16.msra.mxu0 0
        %2026 = vmatprep.subr.bf16.mxu0 0
        %2027 = vmatpush2.bf16.msra.mxu0 0
        %2028 = vmatprep.subr.bf16.mxu0 0
        %2029 = vmatpush2.bf16.msra.mxu0 0
        %2030 = vmatprep.subr.bf16.mxu0 0
        %2031 = vmatpush2.bf16.msra.mxu0 0
        %2032 = vmatprep.subr.bf16.mxu0 0
        %2033 = vmatpush2.bf16.msra.mxu0 0
        %2034 = vmatprep.subr.bf16.mxu0 0
        %2035 = vmatpush2.bf16.msra.mxu0 0
        %2036 = vmatprep.subr.bf16.mxu0 0
        %2037 = vmatpush2.bf16.msra.mxu0 0
        %2038 = vmatprep.mubr.bf16.mxu0 0
        %2039 = vmatmul.mubr.bf16.gmra.mxu0 %v1931
        %v2040 = vpop.f32.mrf.mxu0
        %v2041 = vadd.f32 %v1956, %v2040
        %v2042 = vpop.f32.mrf.mxu0
        %v2043 = vpop.f32.mrf.mxu0
        %v2044 = vadd.f32 %v1956, %v2043
        %v2045 = vpop.f32.mrf.mxu0
        %2046 = vmatprep.mubr.bf16.mxu0 0
        %2047 = vmatmul.mubr.bf16.gmra.mxu0 %v1932
        %v2048 = vpop.f32.mrf.mxu0
        %v2049 = vadd.f32 %v1956, %v2048
        %v2050 = vpop.f32.mrf.mxu0
        %v2051 = vpop.f32.mrf.mxu0
        %v2052 = vadd.f32 %v1956, %v2051
        %v2053 = vpop.f32.mrf.mxu0
        %2054 = vmatprep.mubr.bf16.mxu0 0
        %2055 = vmatmul.mubr.bf16.gmra.mxu0 %v1933
        %v2056 = vpop.f32.mrf.mxu0
        %v2057 = vadd.f32 %v1956, %v2056
        %v2058 = vpop.f32.mrf.mxu0
        %v2059 = vpop.f32.mrf.mxu0
        %v2060 = vadd.f32 %v1956, %v2059
        %v2061 = vpop.f32.mrf.mxu0
        %2062 = vmatprep.mubr.bf16.mxu0 0
        %2063 = vmatmul.mubr.bf16.gmra.mxu0 %v1934
        %v2064 = vpop.f32.mrf.mxu0
        %v2065 = vadd.f32 %v1956, %v2064
        %v2066 = vpop.f32.mrf.mxu0
        %v2067 = vpop.f32.mrf.mxu0
        %v2068 = vadd.f32 %v1956, %v2067
        %v2069 = vpop.f32.mrf.mxu0
        %2070 = vdwg.mxu0
        %v2071 = vmul.f32 %v2041, 0.17677669
        %v2072 = vmul.f32 %v2044, 0.17677669
        %v2073 = vmul.f32 %v2049, 0.17677669
        %v2074 = vmul.f32 %v2052, 0.17677669
        %v2075 = vmul.f32 %v2057, 0.17677669
        %v2076 = vmul.f32 %v2060, 0.17677669
        %v2077 = vmul.f32 %v2065, 0.17677669
        %v2078 = vmul.f32 %v2068, 0.17677669
        %v2079 = vld [vmem:[#allocation2] sm:$0xf]
        %v2080 = vld [vmem:[#allocation2 + $0x4] sm:$0xf]
        %v2081 = vld [vmem:[#allocation2 + $0x8] sm:$0xf]
        %v2082 = vld [vmem:[#allocation2 + $0xc] sm:$0xf]
        %v2083 = vld [vmem:[#allocation2 + $0x10] sm:$0xf]
        %v2084 = vld [vmem:[#allocation2 + $0x14] sm:$0xf]
        %v2085 = vld [vmem:[#allocation2 + $0x18] sm:$0xf]
        %v2086 = vld [vmem:[#allocation2 + $0x1c] sm:$0xf]
        %v2087 = vld [vmem:[#allocation2 + $0x20] sm:$0xf]
        %v2088 = vld [vmem:[#allocation2 + $0x24] sm:$0xf]
        %v2089 = vld [vmem:[#allocation2 + $0x28] sm:$0xf]
        %v2090 = vld [vmem:[#allocation2 + $0x2c] sm:$0xf]
        %v2091 = vld [vmem:[#allocation2 + $0x30] sm:$0xf]
        %v2092 = vld [vmem:[#allocation2 + $0x34] sm:$0xf]
        %v2093 = vld [vmem:[#allocation2 + $0x38] sm:$0xf]
        %v2094 = vld [vmem:[#allocation2 + $0x3c] sm:$0xf]
        %v2095 = vld [vmem:[#allocation3] sm:$0xf]
        %v2096 = vld [vmem:[#allocation3 + $0x4] sm:$0xf]
        %v2097 = vld [vmem:[#allocation3 + $0x8] sm:$0xf]
        %v2098 = vld [vmem:[#allocation3 + $0xc] sm:$0xf]
        %v2099 = vld [vmem:[#allocation3 + $0x10] sm:$0xf]
        %v2100 = vld [vmem:[#allocation3 + $0x14] sm:$0xf]
        %v2101 = vld [vmem:[#allocation3 + $0x18] sm:$0xf]
        %v2102 = vld [vmem:[#allocation3 + $0x1c] sm:$0xf]
        %v2103 = vld [vmem:[#allocation3 + $0x20] sm:$0xf]
        %v2104 = vld [vmem:[#allocation3 + $0x24] sm:$0xf]
        %v2105 = vld [vmem:[#allocation3 + $0x28] sm:$0xf]
        %v2106 = vld [vmem:[#allocation3 + $0x2c] sm:$0xf]
        %v2107 = vld [vmem:[#allocation3 + $0x30] sm:$0xf]
        %v2108 = vld [vmem:[#allocation3 + $0x34] sm:$0xf]
        %v2109 = vld [vmem:[#allocation3 + $0x38] sm:$0xf]
        %v2110 = vld [vmem:[#allocation3 + $0x3c] sm:$0xf]
        %v2111 = vld [vmem:[#allocation15] sm:$0xf]
        %v2112 = vld [vmem:[#allocation15 + $0x4] sm:$0xf]
        %v2113 = vld [vmem:[#allocation15 + $0x8] sm:$0xf]
        %v2114 = vld [vmem:[#allocation15 + $0xc] sm:$0xf]
        %v2115 = vld [vmem:[#allocation15 + $0x10] sm:$0xf]
        %v2116 = vld [vmem:[#allocation15 + $0x14] sm:$0xf]
        %v2117 = vld [vmem:[#allocation15 + $0x18] sm:$0xf]
        %v2118 = vld [vmem:[#allocation15 + $0x1c] sm:$0xf]
        %v2119 = vld [vmem:[#allocation15 + $0x20] sm:$0xf]
        %v2120 = vld [vmem:[#allocation15 + $0x24] sm:$0xf]
        %v2121 = vld [vmem:[#allocation15 + $0x28] sm:$0xf]
        %v2122 = vld [vmem:[#allocation15 + $0x2c] sm:$0xf]
        %v2123 = vld [vmem:[#allocation15 + $0x30] sm:$0xf]
        %v2124 = vld [vmem:[#allocation15 + $0x34] sm:$0xf]
        %v2125 = vld [vmem:[#allocation15 + $0x38] sm:$0xf]
        %v2126 = vld [vmem:[#allocation15 + $0x3c] sm:$0xf]
        %v2127 = vld [vmem:[%s10] sm:$0x1]
        %v2128 = vpack.c.bf16 %v2072, %v2071
        %v2129 = vpack.c.bf16 %v2074, %v2073
        %v2130 = vpack.c.bf16 %v2076, %v2075
        %v2131 = vpack.c.bf16 %v2078, %v2077
        %v2148 = vunpack.c.l.b16 %v2079
        %v2149 = vunpack.c.l.b16 %v2080
        %v2150 = vunpack.c.l.b16 %v2081
        %v2151 = vunpack.c.l.b16 %v2082
        %v2152 = vunpack.c.l.b16 %v2083
        %v2153 = vunpack.c.l.b16 %v2084
        %v2154 = vunpack.c.l.b16 %v2085
        %v2155 = vunpack.c.l.b16 %v2086
        %v2156 = vunpack.c.l.b16 %v2087
        %v2157 = vunpack.c.l.b16 %v2088
        %v2158 = vunpack.c.l.b16 %v2089
        %v2159 = vunpack.c.l.b16 %v2090
        %v2160 = vunpack.c.l.b16 %v2091
        %v2161 = vunpack.c.l.b16 %v2092
        %v2162 = vunpack.c.l.b16 %v2093
        %v2163 = vunpack.c.l.b16 %v2094
        %v2164 = vpack.c.b16 %v2149, %v2148
        %v2165 = vpack.c.b16 %v2151, %v2150
        %v2166 = vpack.c.b16 %v2153, %v2152
        %v2167 = vpack.c.b16 %v2155, %v2154
        %v2168 = vpack.c.b16 %v2157, %v2156
        %v2169 = vpack.c.b16 %v2159, %v2158
        %v2170 = vpack.c.b16 %v2161, %v2160
        %v2171 = vpack.c.b16 %v2163, %v2162
        %vm2172 = vcmask 261120
        %v2174 = vsel %vm2172, %v2128, 0
        %v2177 = vsel %vm2172, %v2129, 0
        %v2180 = vsel %vm2172, %v2130, 0
        %v2183 = vsel %vm2172, %v2131, 0
        %v2186 = vsel %vm2172, %v2164, 0
        %v2189 = vsel %vm2172, %v2165, 0
        %v2192 = vsel %vm2172, %v2166, 0
        %v2195 = vsel %vm2172, %v2167, 0
        %v2198 = vsel %vm2172, %v2168, 0
        %v2201 = vsel %vm2172, %v2169, 0
        %v2204 = vsel %vm2172, %v2170, 0
        %v2207 = vsel %vm2172, %v2171, 0
        %2209 = vmatprep.subr.bf16.mxu0 0
        %2210 = vmatpush1.bf16.xpose.msra.mxu0 %v2207
        %2211 = vmatprep.subr.bf16.mxu0 0
        %2212 = vmatpush1.bf16.xpose.msra.mxu0 %v2204
        %2213 = vmatprep.subr.bf16.mxu0 0
        %2214 = vmatpush1.bf16.xpose.msra.mxu0 %v2201
        %2215 = vmatprep.subr.bf16.mxu0 0
        %2216 = vmatpush1.bf16.xpose.msra.mxu0 %v2198
        %2217 = vmatprep.subr.bf16.mxu0 0
        %2218 = vmatpush1.bf16.xpose.msra.mxu0 %v2195
        %2219 = vmatprep.subr.bf16.mxu0 0
        %2220 = vmatpush1.bf16.xpose.msra.mxu0 %v2192
        %2221 = vmatprep.subr.bf16.mxu0 0
        %2222 = vmatpush1.bf16.xpose.msra.mxu0 %v2189
        %2223 = vmatprep.subr.bf16.mxu0 0
        %2224 = vmatpush1.bf16.xpose.msra.mxu0 %v2186
        %2225 = vmatprep.subr.bf16.mxu0 0
        %2226 = vmatpush2.bf16.xpose.msra.mxu0 0
        %2227 = vmatprep.subr.bf16.mxu0 0
        %2228 = vmatpush2.bf16.xpose.msra.mxu0 0
        %2229 = vmatprep.subr.bf16.mxu0 0
        %2230 = vmatpush2.bf16.xpose.msra.mxu0 0
        %2231 = vmatprep.subr.bf16.mxu0 0
        %2232 = vmatpush2.bf16.xpose.msra.mxu0 0
        %2233 = vmatprep.subr.bf16.mxu0 0
        %2234 = vmatpush2.bf16.xpose.msra.mxu0 0
        %2235 = vmatprep.subr.bf16.mxu0 0
        %2236 = vmatpush2.bf16.xpose.msra.mxu0 0
        %2237 = vmatprep.subr.bf16.mxu0 0
        %2238 = vmatpush2.bf16.xpose.msra.mxu0 0
        %2239 = vmatprep.subr.bf16.mxu0 0
        %2240 = vmatpush2.bf16.xpose.msra.mxu0 0
        %2241 = vmatprep.mubr.bf16.mxu0 0
        %2242 = vmatmul.mubr.bf16.gmra.mxu0 %v2174
        %v2243 = vpop.f32.mrf.mxu0
        %v2244 = vadd.f32 0.0, %v2243
        %v2245 = vpop.f32.mrf.mxu0
        %v2246 = vpop.f32.mrf.mxu0
        %v2247 = vadd.f32 0.0, %v2246
        %v2248 = vpop.f32.mrf.mxu0
        %2249 = vmatprep.mubr.bf16.mxu0 0
        %2250 = vmatmul.mubr.bf16.gmra.mxu0 %v2177
        %v2251 = vpop.f32.mrf.mxu0
        %v2252 = vadd.f32 0.0, %v2251
        %v2253 = vpop.f32.mrf.mxu0
        %v2254 = vpop.f32.mrf.mxu0
        %v2255 = vadd.f32 0.0, %v2254
        %v2256 = vpop.f32.mrf.mxu0
        %2257 = vmatprep.mubr.bf16.mxu0 0
        %2258 = vmatmul.mubr.bf16.gmra.mxu0 %v2180
        %v2259 = vpop.f32.mrf.mxu0
        %v2260 = vadd.f32 0.0, %v2259
        %v2261 = vpop.f32.mrf.mxu0
        %v2262 = vpop.f32.mrf.mxu0
        %v2263 = vadd.f32 0.0, %v2262
        %v2264 = vpop.f32.mrf.mxu0
        %2265 = vmatprep.mubr.bf16.mxu0 0
        %2266 = vmatmul.mubr.bf16.gmra.mxu0 %v2183
        %v2267 = vpop.f32.mrf.mxu0
        %v2268 = vadd.f32 0.0, %v2267
        %v2269 = vpop.f32.mrf.mxu0
        %v2270 = vpop.f32.mrf.mxu0
        %v2271 = vadd.f32 0.0, %v2270
        %v2272 = vpop.f32.mrf.mxu0
        %2273 = vdwg.mxu0
        %2274 = vmax.xlane.f32.xlu0 %v2244
        %v2275 = vpop.xlane.xlu0 %2274
        %2276 = vmax.xlane.f32.xlu0 %v2247
        %v2277 = vpop.xlane.xlu0 %2276
        %2278 = vmax.xlane.f32.xlu0 %v2252
        %v2279 = vpop.xlane.xlu0 %2278
        %2280 = vmax.xlane.f32.xlu0 %v2255
        %v2281 = vpop.xlane.xlu0 %2280
        %2282 = vmax.xlane.f32.xlu0 %v2260
        %v2283 = vpop.xlane.xlu0 %2282
        %2284 = vmax.xlane.f32.xlu0 %v2263
        %v2285 = vpop.xlane.xlu0 %2284
        %2286 = vmax.xlane.f32.xlu0 %v2268
        %v2287 = vpop.xlane.xlu0 %2286
        %2288 = vmax.xlane.f32.xlu0 %v2271
        %v2289 = vpop.xlane.xlu0 %2288
        %v2290 = vsub.f32 %v2244, %v2275
        %v2291 = vsub.f32 %v2247, %v2277
        %v2292 = vsub.f32 %v2252, %v2279
        %v2293 = vsub.f32 %v2255, %v2281
        %v2294 = vsub.f32 %v2260, %v2283
        %v2295 = vsub.f32 %v2263, %v2285
        %v2296 = vsub.f32 %v2268, %v2287
        %v2297 = vsub.f32 %v2271, %v2289
        %v2298 = vmul.f32 %v2290, 1.442695
        %v2299 = vpow.pop %v2298
        %v2300 = vmul.f32 %v2291, 1.442695
        %v2301 = vpow.pop %v2300
        %v2302 = vmul.f32 %v2292, 1.442695
        %v2303 = vpow.pop %v2302
        %v2304 = vmul.f32 %v2293, 1.442695
        %v2305 = vpow.pop %v2304
        %v2306 = vmul.f32 %v2294, 1.442695
        %v2307 = vpow.pop %v2306
        %v2308 = vmul.f32 %v2295, 1.442695
        %v2309 = vpow.pop %v2308
        %v2310 = vmul.f32 %v2296, 1.442695
        %v2311 = vpow.pop %v2310
        %v2312 = vmul.f32 %v2297, 1.442695
        %v2313 = vpow.pop %v2312
        %2314 = vadd.xlane.f32.xlu0 %v2299
        %v2315 = vpop.xlane.xlu0 %2314
        %2316 = vadd.xlane.f32.xlu0 %v2301
        %v2317 = vpop.xlane.xlu0 %2316
        %2318 = vadd.xlane.f32.xlu0 %v2303
        %v2319 = vpop.xlane.xlu0 %2318
        %2320 = vadd.xlane.f32.xlu0 %v2305
        %v2321 = vpop.xlane.xlu0 %2320
        %2322 = vadd.xlane.f32.xlu0 %v2307
        %v2323 = vpop.xlane.xlu0 %2322
        %2324 = vadd.xlane.f32.xlu0 %v2309
        %v2325 = vpop.xlane.xlu0 %2324
        %2326 = vadd.xlane.f32.xlu0 %v2311
        %v2327 = vpop.xlane.xlu0 %2326
        %2328 = vadd.xlane.f32.xlu0 %v2313
        %v2329 = vpop.xlane.xlu0 %2328
        %v2330 = vrcp.pop %v2315
        %v2331 = vrcp.pop %v2317
        %v2332 = vrcp.pop %v2319
        %v2333 = vrcp.pop %v2321
        %v2334 = vrcp.pop %v2323
        %v2335 = vrcp.pop %v2325
        %v2336 = vrcp.pop %v2327
        %v2337 = vrcp.pop %v2329
        %v2338 = vmul.f32 %v2299, %v2330
        %v2339 = vmul.f32 %v2301, %v2331
        %v2340 = vmul.f32 %v2303, %v2332
        %v2341 = vmul.f32 %v2305, %v2333
        %v2342 = vmul.f32 %v2307, %v2334
        %v2343 = vmul.f32 %v2309, %v2335
        %v2344 = vmul.f32 %v2311, %v2336
        %v2345 = vmul.f32 %v2313, %v2337
        %v2346 = vpack.c.bf16 %v2339, %v2338
        %v2347 = vpack.c.bf16 %v2341, %v2340
        %v2348 = vpack.c.bf16 %v2343, %v2342
        %v2349 = vpack.c.bf16 %v2345, %v2344
        %v2366 = vunpack.c.l.b16 %v2095
        %v2367 = vunpack.c.l.b16 %v2096
        %v2368 = vunpack.c.l.b16 %v2097
        %v2369 = vunpack.c.l.b16 %v2098
        %v2370 = vunpack.c.l.b16 %v2099
        %v2371 = vunpack.c.l.b16 %v2100
        %v2372 = vunpack.c.l.b16 %v2101
        %v2373 = vunpack.c.l.b16 %v2102
        %v2374 = vunpack.c.l.b16 %v2103
        %v2375 = vunpack.c.l.b16 %v2104
        %v2376 = vunpack.c.l.b16 %v2105
        %v2377 = vunpack.c.l.b16 %v2106
        %v2378 = vunpack.c.l.b16 %v2107
        %v2379 = vunpack.c.l.b16 %v2108
        %v2380 = vunpack.c.l.b16 %v2109
        %v2381 = vunpack.c.l.b16 %v2110
        %v2382 = vpack.c.b16 %v2367, %v2366
        %v2383 = vpack.c.b16 %v2369, %v2368
        %v2384 = vpack.c.b16 %v2371, %v2370
        %v2385 = vpack.c.b16 %v2373, %v2372
        %v2386 = vpack.c.b16 %v2375, %v2374
        %v2387 = vpack.c.b16 %v2377, %v2376
        %v2388 = vpack.c.b16 %v2379, %v2378
        %v2389 = vpack.c.b16 %v2381, %v2380
        %2398 = vmatprep.subr.bf16.mxu0 0
        %2399 = vmatpush1.bf16.msra.mxu0 %v2389
        %2400 = vmatprep.subr.bf16.mxu0 0
        %2401 = vmatpush1.bf16.msra.mxu0 %v2388
        %2402 = vmatprep.subr.bf16.mxu0 0
        %2403 = vmatpush1.bf16.msra.mxu0 %v2387
        %2404 = vmatprep.subr.bf16.mxu0 0
        %2405 = vmatpush1.bf16.msra.mxu0 %v2386
        %2406 = vmatprep.subr.bf16.mxu0 0
        %2407 = vmatpush1.bf16.msra.mxu0 %v2385
        %2408 = vmatprep.subr.bf16.mxu0 0
        %2409 = vmatpush1.bf16.msra.mxu0 %v2384
        %2410 = vmatprep.subr.bf16.mxu0 0
        %2411 = vmatpush1.bf16.msra.mxu0 %v2383
        %2412 = vmatprep.subr.bf16.mxu0 0
        %2413 = vmatpush1.bf16.msra.mxu0 %v2382
        %2414 = vmatprep.subr.bf16.mxu0 0
        %2415 = vmatpush2.bf16.msra.mxu0 0
        %2416 = vmatprep.subr.bf16.mxu0 0
        %2417 = vmatpush2.bf16.msra.mxu0 0
        %2418 = vmatprep.subr.bf16.mxu0 0
        %2419 = vmatpush2.bf16.msra.mxu0 0
        %2420 = vmatprep.subr.bf16.mxu0 0
        %2421 = vmatpush2.bf16.msra.mxu0 0
        %2422 = vmatprep.subr.bf16.mxu0 0
        %2423 = vmatpush2.bf16.msra.mxu0 0
        %2424 = vmatprep.subr.bf16.mxu0 0
        %2425 = vmatpush2.bf16.msra.mxu0 0
        %2426 = vmatprep.subr.bf16.mxu0 0
        %2427 = vmatpush2.bf16.msra.mxu0 0
        %2428 = vmatprep.subr.bf16.mxu0 0
        %2429 = vmatpush2.bf16.msra.mxu0 0
        %2430 = vmatprep.mubr.bf16.mxu0 0
        %2431 = vmatmul.mubr.bf16.gmra.mxu0 %v2346
        %v2432 = vpop.f32.mrf.mxu0
        %v2433 = vadd.f32 0.0, %v2432
        %v2434 = vpop.f32.mrf.mxu0
        %v2435 = vpop.f32.mrf.mxu0
        %v2436 = vadd.f32 0.0, %v2435
        %v2437 = vpop.f32.mrf.mxu0
        %2438 = vmatprep.mubr.bf16.mxu0 0
        %2439 = vmatmul.mubr.bf16.gmra.mxu0 %v2347
        %v2440 = vpop.f32.mrf.mxu0
        %v2441 = vadd.f32 0.0, %v2440
        %v2442 = vpop.f32.mrf.mxu0
        %v2443 = vpop.f32.mrf.mxu0
        %v2444 = vadd.f32 0.0, %v2443
        %v2445 = vpop.f32.mrf.mxu0
        %2446 = vmatprep.mubr.bf16.mxu0 0
        %2447 = vmatmul.mubr.bf16.gmra.mxu0 %v2348
        %v2448 = vpop.f32.mrf.mxu0
        %v2449 = vadd.f32 0.0, %v2448
        %v2450 = vpop.f32.mrf.mxu0
        %v2451 = vpop.f32.mrf.mxu0
        %v2452 = vadd.f32 0.0, %v2451
        %v2453 = vpop.f32.mrf.mxu0
        %2454 = vmatprep.mubr.bf16.mxu0 0
        %2455 = vmatmul.mubr.bf16.gmra.mxu0 %v2349
        %v2456 = vpop.f32.mrf.mxu0
        %v2457 = vadd.f32 0.0, %v2456
        %v2458 = vpop.f32.mrf.mxu0
        %v2459 = vpop.f32.mrf.mxu0
        %v2460 = vadd.f32 0.0, %v2459
        %v2461 = vpop.f32.mrf.mxu0
        %2462 = vdwg.mxu0
        %v2463 = vpack.c.bf16 %v2436, %v2433
        %v2464 = vpack.c.bf16 %v2444, %v2441
        %v2465 = vpack.c.bf16 %v2452, %v2449
        %v2466 = vpack.c.bf16 %v2460, %v2457
        %2471 = vrot.lane.b32.xlu0 %v2128, 96
        %v2472 = vpop.permute.xlu0 %2471
        %2473 = vrot.lane.b32.xlu0 %v2129, 96
        %v2474 = vpop.permute.xlu0 %2473
        %2475 = vrot.lane.b32.xlu0 %v2130, 96
        %v2476 = vpop.permute.xlu0 %2475
        %2477 = vrot.lane.b32.xlu0 %v2131, 96
        %v2478 = vpop.permute.xlu0 %2477
        %2479 = vrot.lane.b32.xlu0 %v2164, 96
        %v2480 = vpop.permute.xlu0 %2479
        %2481 = vrot.lane.b32.xlu0 %v2165, 96
        %v2482 = vpop.permute.xlu0 %2481
        %2483 = vrot.lane.b32.xlu0 %v2166, 96
        %v2484 = vpop.permute.xlu0 %2483
        %2485 = vrot.lane.b32.xlu0 %v2167, 96
        %v2486 = vpop.permute.xlu0 %2485
        %2487 = vrot.lane.b32.xlu0 %v2168, 96
        %v2488 = vpop.permute.xlu0 %2487
        %2489 = vrot.lane.b32.xlu0 %v2169, 96
        %v2490 = vpop.permute.xlu0 %2489
        %2491 = vrot.lane.b32.xlu0 %v2170, 96
        %v2492 = vpop.permute.xlu0 %2491
        %2493 = vrot.lane.b32.xlu0 %v2171, 96
        %v2494 = vpop.permute.xlu0 %2493
        %v2496 = vsel %vm2172, %v2472, 0
        %v2499 = vsel %vm2172, %v2474, 0
        %v2502 = vsel %vm2172, %v2476, 0
        %v2505 = vsel %vm2172, %v2478, 0
        %v2508 = vsel %vm2172, %v2480, 0
        %v2511 = vsel %vm2172, %v2482, 0
        %v2514 = vsel %vm2172, %v2484, 0
        %v2517 = vsel %vm2172, %v2486, 0
        %v2520 = vsel %vm2172, %v2488, 0
        %v2523 = vsel %vm2172, %v2490, 0
        %v2526 = vsel %vm2172, %v2492, 0
        %v2529 = vsel %vm2172, %v2494, 0
        %2531 = vmatprep.subr.bf16.mxu0 0
        %2532 = vmatpush1.bf16.xpose.msra.mxu0 %v2529
        %2533 = vmatprep.subr.bf16.mxu0 0
        %2534 = vmatpush1.bf16.xpose.msra.mxu0 %v2526
        %2535 = vmatprep.subr.bf16.mxu0 0
        %2536 = vmatpush1.bf16.xpose.msra.mxu0 %v2523
        %2537 = vmatprep.subr.bf16.mxu0 0
        %2538 = vmatpush1.bf16.xpose.msra.mxu0 %v2520
        %2539 = vmatprep.subr.bf16.mxu0 0
        %2540 = vmatpush1.bf16.xpose.msra.mxu0 %v2517
        %2541 = vmatprep.subr.bf16.mxu0 0
        %2542 = vmatpush1.bf16.xpose.msra.mxu0 %v2514
        %2543 = vmatprep.subr.bf16.mxu0 0
        %2544 = vmatpush1.bf16.xpose.msra.mxu0 %v2511
        %2545 = vmatprep.subr.bf16.mxu0 0
        %2546 = vmatpush1.bf16.xpose.msra.mxu0 %v2508
        %2547 = vmatprep.subr.bf16.mxu0 0
        %2548 = vmatpush2.bf16.xpose.msra.mxu0 0
        %2549 = vmatprep.subr.bf16.mxu0 0
        %2550 = vmatpush2.bf16.xpose.msra.mxu0 0
        %2551 = vmatprep.subr.bf16.mxu0 0
        %2552 = vmatpush2.bf16.xpose.msra.mxu0 0
        %2553 = vmatprep.subr.bf16.mxu0 0
        %2554 = vmatpush2.bf16.xpose.msra.mxu0 0
        %2555 = vmatprep.subr.bf16.mxu0 0
        %2556 = vmatpush2.bf16.xpose.msra.mxu0 0
        %2557 = vmatprep.subr.bf16.mxu0 0
        %2558 = vmatpush2.bf16.xpose.msra.mxu0 0
        %2559 = vmatprep.subr.bf16.mxu0 0
        %2560 = vmatpush2.bf16.xpose.msra.mxu0 0
        %2561 = vmatprep.subr.bf16.mxu0 0
        %2562 = vmatpush2.bf16.xpose.msra.mxu0 0
        %2563 = vmatprep.mubr.bf16.mxu0 0
        %2564 = vmatmul.mubr.bf16.gmra.mxu0 %v2496
        %v2565 = vpop.f32.mrf.mxu0
        %v2566 = vadd.f32 0.0, %v2565
        %v2567 = vpop.f32.mrf.mxu0
        %v2568 = vpop.f32.mrf.mxu0
        %v2569 = vadd.f32 0.0, %v2568
        %v2570 = vpop.f32.mrf.mxu0
        %2571 = vmatprep.mubr.bf16.mxu0 0
        %2572 = vmatmul.mubr.bf16.gmra.mxu0 %v2499
        %v2573 = vpop.f32.mrf.mxu0
        %v2574 = vadd.f32 0.0, %v2573
        %v2575 = vpop.f32.mrf.mxu0
        %v2576 = vpop.f32.mrf.mxu0
        %v2577 = vadd.f32 0.0, %v2576
        %v2578 = vpop.f32.mrf.mxu0
        %2579 = vmatprep.mubr.bf16.mxu0 0
        %2580 = vmatmul.mubr.bf16.gmra.mxu0 %v2502
        %v2581 = vpop.f32.mrf.mxu0
        %v2582 = vadd.f32 0.0, %v2581
        %v2583 = vpop.f32.mrf.mxu0
        %v2584 = vpop.f32.mrf.mxu0
        %v2585 = vadd.f32 0.0, %v2584
        %v2586 = vpop.f32.mrf.mxu0
        %2587 = vmatprep.mubr.bf16.mxu0 0
        %2588 = vmatmul.mubr.bf16.gmra.mxu0 %v2505
        %v2589 = vpop.f32.mrf.mxu0
        %v2590 = vadd.f32 0.0, %v2589
        %v2591 = vpop.f32.mrf.mxu0
        %v2592 = vpop.f32.mrf.mxu0
        %v2593 = vadd.f32 0.0, %v2592
        %v2594 = vpop.f32.mrf.mxu0
        %2595 = vdwg.mxu0
        %2596 = vmax.xlane.f32.xlu0 %v2566
        %v2597 = vpop.xlane.xlu0 %2596
        %2598 = vmax.xlane.f32.xlu0 %v2569
        %v2599 = vpop.xlane.xlu0 %2598
        %2600 = vmax.xlane.f32.xlu0 %v2574
        %v2601 = vpop.xlane.xlu0 %2600
        %2602 = vmax.xlane.f32.xlu0 %v2577
        %v2603 = vpop.xlane.xlu0 %2602
        %2604 = vmax.xlane.f32.xlu0 %v2582
        %v2605 = vpop.xlane.xlu0 %2604
        %2606 = vmax.xlane.f32.xlu0 %v2585
        %v2607 = vpop.xlane.xlu0 %2606
        %2608 = vmax.xlane.f32.xlu0 %v2590
        %v2609 = vpop.xlane.xlu0 %2608
        %2610 = vmax.xlane.f32.xlu0 %v2593
        %v2611 = vpop.xlane.xlu0 %2610
        %v2612 = vsub.f32 %v2566, %v2597
        %v2613 = vsub.f32 %v2569, %v2599
        %v2614 = vsub.f32 %v2574, %v2601
        %v2615 = vsub.f32 %v2577, %v2603
        %v2616 = vsub.f32 %v2582, %v2605
        %v2617 = vsub.f32 %v2585, %v2607
        %v2618 = vsub.f32 %v2590, %v2609
        %v2619 = vsub.f32 %v2593, %v2611
        %v2620 = vmul.f32 %v2612, 1.442695
        %v2621 = vpow.pop %v2620
        %v2622 = vmul.f32 %v2613, 1.442695
        %v2623 = vpow.pop %v2622
        %v2624 = vmul.f32 %v2614, 1.442695
        %v2625 = vpow.pop %v2624
        %v2626 = vmul.f32 %v2615, 1.442695
        %v2627 = vpow.pop %v2626
        %v2628 = vmul.f32 %v2616, 1.442695
        %v2629 = vpow.pop %v2628
        %v2630 = vmul.f32 %v2617, 1.442695
        %v2631 = vpow.pop %v2630
        %v2632 = vmul.f32 %v2618, 1.442695
        %v2633 = vpow.pop %v2632
        %v2634 = vmul.f32 %v2619, 1.442695
        %v2635 = vpow.pop %v2634
        %2636 = vadd.xlane.f32.xlu0 %v2621
        %v2637 = vpop.xlane.xlu0 %2636
        %2638 = vadd.xlane.f32.xlu0 %v2623
        %v2639 = vpop.xlane.xlu0 %2638
        %2640 = vadd.xlane.f32.xlu0 %v2625
        %v2641 = vpop.xlane.xlu0 %2640
        %2642 = vadd.xlane.f32.xlu0 %v2627
        %v2643 = vpop.xlane.xlu0 %2642
        %2644 = vadd.xlane.f32.xlu0 %v2629
        %v2645 = vpop.xlane.xlu0 %2644
        %2646 = vadd.xlane.f32.xlu0 %v2631
        %v2647 = vpop.xlane.xlu0 %2646
        %2648 = vadd.xlane.f32.xlu0 %v2633
        %v2649 = vpop.xlane.xlu0 %2648
        %2650 = vadd.xlane.f32.xlu0 %v2635
        %v2651 = vpop.xlane.xlu0 %2650
        %v2652 = vrcp.pop %v2637
        %v2653 = vrcp.pop %v2639
        %v2654 = vrcp.pop %v2641
        %v2655 = vrcp.pop %v2643
        %v2656 = vrcp.pop %v2645
        %v2657 = vrcp.pop %v2647
        %v2658 = vrcp.pop %v2649
        %v2659 = vrcp.pop %v2651
        %v2660 = vmul.f32 %v2621, %v2652
        %v2661 = vmul.f32 %v2623, %v2653
        %v2662 = vmul.f32 %v2625, %v2654
        %v2663 = vmul.f32 %v2627, %v2655
        %v2664 = vmul.f32 %v2629, %v2656
        %v2665 = vmul.f32 %v2631, %v2657
        %v2666 = vmul.f32 %v2633, %v2658
        %v2667 = vmul.f32 %v2635, %v2659
        %v2668 = vpack.c.bf16 %v2661, %v2660
        %v2669 = vpack.c.bf16 %v2663, %v2662
        %v2670 = vpack.c.bf16 %v2665, %v2664
        %v2671 = vpack.c.bf16 %v2667, %v2666
        %2672 = vrot.lane.b32.xlu0 %v2382, 96
        %v2673 = vpop.permute.xlu0 %2672
        %2674 = vrot.lane.b32.xlu0 %v2383, 96
        %v2675 = vpop.permute.xlu0 %2674
        %2676 = vrot.lane.b32.xlu0 %v2384, 96
        %v2677 = vpop.permute.xlu0 %2676
        %2678 = vrot.lane.b32.xlu0 %v2385, 96
        %v2679 = vpop.permute.xlu0 %2678
        %2680 = vrot.lane.b32.xlu0 %v2386, 96
        %v2681 = vpop.permute.xlu0 %2680
        %2682 = vrot.lane.b32.xlu0 %v2387, 96
        %v2683 = vpop.permute.xlu0 %2682
        %2684 = vrot.lane.b32.xlu0 %v2388, 96
        %v2685 = vpop.permute.xlu0 %2684
        %2686 = vrot.lane.b32.xlu0 %v2389, 96
        %v2687 = vpop.permute.xlu0 %2686
        %2696 = vmatprep.subr.bf16.mxu0 0
        %2697 = vmatpush1.bf16.msra.mxu0 %v2687
        %2698 = vmatprep.subr.bf16.mxu0 0
        %2699 = vmatpush1.bf16.msra.mxu0 %v2685
        %2700 = vmatprep.subr.bf16.mxu0 0
        %2701 = vmatpush1.bf16.msra.mxu0 %v2683
        %2702 = vmatprep.subr.bf16.mxu0 0
        %2703 = vmatpush1.bf16.msra.mxu0 %v2681
        %2704 = vmatprep.subr.bf16.mxu0 0
        %2705 = vmatpush1.bf16.msra.mxu0 %v2679
        %2706 = vmatprep.subr.bf16.mxu0 0
        %2707 = vmatpush1.bf16.msra.mxu0 %v2677
        %2708 = vmatprep.subr.bf16.mxu0 0
        %2709 = vmatpush1.bf16.msra.mxu0 %v2675
        %2710 = vmatprep.subr.bf16.mxu0 0
        %2711 = vmatpush1.bf16.msra.mxu0 %v2673
        %2712 = vmatprep.subr.bf16.mxu0 0
        %2713 = vmatpush2.bf16.msra.mxu0 0
        %2714 = vmatprep.subr.bf16.mxu0 0
        %2715 = vmatpush2.bf16.msra.mxu0 0
        %2716 = vmatprep.subr.bf16.mxu0 0
        %2717 = vmatpush2.bf16.msra.mxu0 0
        %2718 = vmatprep.subr.bf16.mxu0 0
        %2719 = vmatpush2.bf16.msra.mxu0 0
        %2720 = vmatprep.subr.bf16.mxu0 0
        %2721 = vmatpush2.bf16.msra.mxu0 0
        %2722 = vmatprep.subr.bf16.mxu0 0
        %2723 = vmatpush2.bf16.msra.mxu0 0
        %2724 = vmatprep.subr.bf16.mxu0 0
        %2725 = vmatpush2.bf16.msra.mxu0 0
        %2726 = vmatprep.subr.bf16.mxu0 0
        %2727 = vmatpush2.bf16.msra.mxu0 0
        %2728 = vmatprep.mubr.bf16.mxu0 0
        %2729 = vmatmul.mubr.bf16.gmra.mxu0 %v2668
        %v2730 = vpop.f32.mrf.mxu0
        %v2731 = vadd.f32 0.0, %v2730
        %v2732 = vpop.f32.mrf.mxu0
        %v2733 = vpop.f32.mrf.mxu0
        %v2734 = vadd.f32 0.0, %v2733
        %v2735 = vpop.f32.mrf.mxu0
        %2736 = vmatprep.mubr.bf16.mxu0 0
        %2737 = vmatmul.mubr.bf16.gmra.mxu0 %v2669
        %v2738 = vpop.f32.mrf.mxu0
        %v2739 = vadd.f32 0.0, %v2738
        %v2740 = vpop.f32.mrf.mxu0
        %v2741 = vpop.f32.mrf.mxu0
        %v2742 = vadd.f32 0.0, %v2741
        %v2743 = vpop.f32.mrf.mxu0
        %2744 = vmatprep.mubr.bf16.mxu0 0
        %2745 = vmatmul.mubr.bf16.gmra.mxu0 %v2670
        %v2746 = vpop.f32.mrf.mxu0
        %v2747 = vadd.f32 0.0, %v2746
        %v2748 = vpop.f32.mrf.mxu0
        %v2749 = vpop.f32.mrf.mxu0
        %v2750 = vadd.f32 0.0, %v2749
        %v2751 = vpop.f32.mrf.mxu0
        %2752 = vmatprep.mubr.bf16.mxu0 0
        %2753 = vmatmul.mubr.bf16.gmra.mxu0 %v2671
        %v2754 = vpop.f32.mrf.mxu0
        %v2755 = vadd.f32 0.0, %v2754
        %v2756 = vpop.f32.mrf.mxu0
        %v2757 = vpop.f32.mrf.mxu0
        %v2758 = vadd.f32 0.0, %v2757
        %v2759 = vpop.f32.mrf.mxu0
        %2760 = vdwg.mxu0
        %v2761 = vpack.c.bf16 %v2734, %v2731
        %v2762 = vpack.c.bf16 %v2742, %v2739
        %v2763 = vpack.c.bf16 %v2750, %v2747
        %v2764 = vpack.c.bf16 %v2758, %v2755
        %2765 = vrot.lane.b32.xlu0 %v2128, 64
        %v2766 = vpop.permute.xlu0 %2765
        %2767 = vrot.lane.b32.xlu0 %v2129, 64
        %v2768 = vpop.permute.xlu0 %2767
        %2769 = vrot.lane.b32.xlu0 %v2130, 64
        %v2770 = vpop.permute.xlu0 %2769
        %2771 = vrot.lane.b32.xlu0 %v2131, 64
        %v2772 = vpop.permute.xlu0 %2771
        %2773 = vrot.lane.b32.xlu0 %v2164, 64
        %v2774 = vpop.permute.xlu0 %2773
        %2775 = vrot.lane.b32.xlu0 %v2165, 64
        %v2776 = vpop.permute.xlu0 %2775
        %2777 = vrot.lane.b32.xlu0 %v2166, 64
        %v2778 = vpop.permute.xlu0 %2777
        %2779 = vrot.lane.b32.xlu0 %v2167, 64
        %v2780 = vpop.permute.xlu0 %2779
        %2781 = vrot.lane.b32.xlu0 %v2168, 64
        %v2782 = vpop.permute.xlu0 %2781
        %2783 = vrot.lane.b32.xlu0 %v2169, 64
        %v2784 = vpop.permute.xlu0 %2783
        %2785 = vrot.lane.b32.xlu0 %v2170, 64
        %v2786 = vpop.permute.xlu0 %2785
        %2787 = vrot.lane.b32.xlu0 %v2171, 64
        %v2788 = vpop.permute.xlu0 %2787
        %v2790 = vsel %vm2172, %v2766, 0
        %v2793 = vsel %vm2172, %v2768, 0
        %v2796 = vsel %vm2172, %v2770, 0
        %v2799 = vsel %vm2172, %v2772, 0
        %v2802 = vsel %vm2172, %v2774, 0
        %v2805 = vsel %vm2172, %v2776, 0
        %v2808 = vsel %vm2172, %v2778, 0
        %v2811 = vsel %vm2172, %v2780, 0
        %v2814 = vsel %vm2172, %v2782, 0
        %v2817 = vsel %vm2172, %v2784, 0
        %v2820 = vsel %vm2172, %v2786, 0
        %v2823 = vsel %vm2172, %v2788, 0
        %2825 = vmatprep.subr.bf16.mxu0 0
        %2826 = vmatpush1.bf16.xpose.msra.mxu0 %v2823
        %2827 = vmatprep.subr.bf16.mxu0 0
        %2828 = vmatpush1.bf16.xpose.msra.mxu0 %v2820
        %2829 = vmatprep.subr.bf16.mxu0 0
        %2830 = vmatpush1.bf16.xpose.msra.mxu0 %v2817
        %2831 = vmatprep.subr.bf16.mxu0 0
        %2832 = vmatpush1.bf16.xpose.msra.mxu0 %v2814
        %2833 = vmatprep.subr.bf16.mxu0 0
        %2834 = vmatpush1.bf16.xpose.msra.mxu0 %v2811
        %2835 = vmatprep.subr.bf16.mxu0 0
        %2836 = vmatpush1.bf16.xpose.msra.mxu0 %v2808
        %2837 = vmatprep.subr.bf16.mxu0 0
        %2838 = vmatpush1.bf16.xpose.msra.mxu0 %v2805
        %2839 = vmatprep.subr.bf16.mxu0 0
        %2840 = vmatpush1.bf16.xpose.msra.mxu0 %v2802
        %2841 = vmatprep.subr.bf16.mxu0 0
        %2842 = vmatpush2.bf16.xpose.msra.mxu0 0
        %2843 = vmatprep.subr.bf16.mxu0 0
        %2844 = vmatpush2.bf16.xpose.msra.mxu0 0
        %2845 = vmatprep.subr.bf16.mxu0 0
        %2846 = vmatpush2.bf16.xpose.msra.mxu0 0
        %2847 = vmatprep.subr.bf16.mxu0 0
        %2848 = vmatpush2.bf16.xpose.msra.mxu0 0
        %2849 = vmatprep.subr.bf16.mxu0 0
        %2850 = vmatpush2.bf16.xpose.msra.mxu0 0
        %2851 = vmatprep.subr.bf16.mxu0 0
        %2852 = vmatpush2.bf16.xpose.msra.mxu0 0
        %2853 = vmatprep.subr.bf16.mxu0 0
        %2854 = vmatpush2.bf16.xpose.msra.mxu0 0
        %2855 = vmatprep.subr.bf16.mxu0 0
        %2856 = vmatpush2.bf16.xpose.msra.mxu0 0
        %2857 = vmatprep.mubr.bf16.mxu0 0
        %2858 = vmatmul.mubr.bf16.gmra.mxu0 %v2790
        %v2859 = vpop.f32.mrf.mxu0
        %v2860 = vadd.f32 0.0, %v2859
        %v2861 = vpop.f32.mrf.mxu0
        %v2862 = vpop.f32.mrf.mxu0
        %v2863 = vadd.f32 0.0, %v2862
        %v2864 = vpop.f32.mrf.mxu0
        %2865 = vmatprep.mubr.bf16.mxu0 0
        %2866 = vmatmul.mubr.bf16.gmra.mxu0 %v2793
        %v2867 = vpop.f32.mrf.mxu0
        %v2868 = vadd.f32 0.0, %v2867
        %v2869 = vpop.f32.mrf.mxu0
        %v2870 = vpop.f32.mrf.mxu0
        %v2871 = vadd.f32 0.0, %v2870
        %v2872 = vpop.f32.mrf.mxu0
        %2873 = vmatprep.mubr.bf16.mxu0 0
        %2874 = vmatmul.mubr.bf16.gmra.mxu0 %v2796
        %v2875 = vpop.f32.mrf.mxu0
        %v2876 = vadd.f32 0.0, %v2875
        %v2877 = vpop.f32.mrf.mxu0
        %v2878 = vpop.f32.mrf.mxu0
        %v2879 = vadd.f32 0.0, %v2878
        %v2880 = vpop.f32.mrf.mxu0
        %2881 = vmatprep.mubr.bf16.mxu0 0
        %2882 = vmatmul.mubr.bf16.gmra.mxu0 %v2799
        %v2883 = vpop.f32.mrf.mxu0
        %v2884 = vadd.f32 0.0, %v2883
        %v2885 = vpop.f32.mrf.mxu0
        %v2886 = vpop.f32.mrf.mxu0
        %v2887 = vadd.f32 0.0, %v2886
        %v2888 = vpop.f32.mrf.mxu0
        %2889 = vdwg.mxu0
        %2890 = vmax.xlane.f32.xlu0 %v2860
        %v2891 = vpop.xlane.xlu0 %2890
        %2892 = vmax.xlane.f32.xlu0 %v2863
        %v2893 = vpop.xlane.xlu0 %2892
        %2894 = vmax.xlane.f32.xlu0 %v2868
        %v2895 = vpop.xlane.xlu0 %2894
        %2896 = vmax.xlane.f32.xlu0 %v2871
        %v2897 = vpop.xlane.xlu0 %2896
        %2898 = vmax.xlane.f32.xlu0 %v2876
        %v2899 = vpop.xlane.xlu0 %2898
        %2900 = vmax.xlane.f32.xlu0 %v2879
        %v2901 = vpop.xlane.xlu0 %2900
        %2902 = vmax.xlane.f32.xlu0 %v2884
        %v2903 = vpop.xlane.xlu0 %2902
        %2904 = vmax.xlane.f32.xlu0 %v2887
        %v2905 = vpop.xlane.xlu0 %2904
        %v2906 = vsub.f32 %v2860, %v2891
        %v2907 = vsub.f32 %v2863, %v2893
        %v2908 = vsub.f32 %v2868, %v2895
        %v2909 = vsub.f32 %v2871, %v2897
        %v2910 = vsub.f32 %v2876, %v2899
        %v2911 = vsub.f32 %v2879, %v2901
        %v2912 = vsub.f32 %v2884, %v2903
        %v2913 = vsub.f32 %v2887, %v2905
        %v2914 = vmul.f32 %v2906, 1.442695
        %v2915 = vpow.pop %v2914
        %v2916 = vmul.f32 %v2907, 1.442695
        %v2917 = vpow.pop %v2916
        %v2918 = vmul.f32 %v2908, 1.442695
        %v2919 = vpow.pop %v2918
        %v2920 = vmul.f32 %v2909, 1.442695
        %v2921 = vpow.pop %v2920
        %v2922 = vmul.f32 %v2910, 1.442695
        %v2923 = vpow.pop %v2922
        %v2924 = vmul.f32 %v2911, 1.442695
        %v2925 = vpow.pop %v2924
        %v2926 = vmul.f32 %v2912, 1.442695
        %v2927 = vpow.pop %v2926
        %v2928 = vmul.f32 %v2913, 1.442695
        %v2929 = vpow.pop %v2928
        %2930 = vadd.xlane.f32.xlu0 %v2915
        %v2931 = vpop.xlane.xlu0 %2930
        %2932 = vadd.xlane.f32.xlu0 %v2917
        %v2933 = vpop.xlane.xlu0 %2932
        %2934 = vadd.xlane.f32.xlu0 %v2919
        %v2935 = vpop.xlane.xlu0 %2934
        %2936 = vadd.xlane.f32.xlu0 %v2921
        %v2937 = vpop.xlane.xlu0 %2936
        %2938 = vadd.xlane.f32.xlu0 %v2923
        %v2939 = vpop.xlane.xlu0 %2938
        %2940 = vadd.xlane.f32.xlu0 %v2925
        %v2941 = vpop.xlane.xlu0 %2940
        %2942 = vadd.xlane.f32.xlu0 %v2927
        %v2943 = vpop.xlane.xlu0 %2942
        %2944 = vadd.xlane.f32.xlu0 %v2929
        %v2945 = vpop.xlane.xlu0 %2944
        %v2946 = vrcp.pop %v2931
        %v2947 = vrcp.pop %v2933
        %v2948 = vrcp.pop %v2935
        %v2949 = vrcp.pop %v2937
        %v2950 = vrcp.pop %v2939
        %v2951 = vrcp.pop %v2941
        %v2952 = vrcp.pop %v2943
        %v2953 = vrcp.pop %v2945
        %v2954 = vmul.f32 %v2915, %v2946
        %v2955 = vmul.f32 %v2917, %v2947
        %v2956 = vmul.f32 %v2919, %v2948
        %v2957 = vmul.f32 %v2921, %v2949
        %v2958 = vmul.f32 %v2923, %v2950
        %v2959 = vmul.f32 %v2925, %v2951
        %v2960 = vmul.f32 %v2927, %v2952
        %v2961 = vmul.f32 %v2929, %v2953
        %v2962 = vpack.c.bf16 %v2955, %v2954
        %v2963 = vpack.c.bf16 %v2957, %v2956
        %v2964 = vpack.c.bf16 %v2959, %v2958
        %v2965 = vpack.c.bf16 %v2961, %v2960
        %2966 = vrot.lane.b32.xlu0 %v2382, 64
        %v2967 = vpop.permute.xlu0 %2966
        %2968 = vrot.lane.b32.xlu0 %v2383, 64
        %v2969 = vpop.permute.xlu0 %2968
        %2970 = vrot.lane.b32.xlu0 %v2384, 64
        %v2971 = vpop.permute.xlu0 %2970
        %2972 = vrot.lane.b32.xlu0 %v2385, 64
        %v2973 = vpop.permute.xlu0 %2972
        %2974 = vrot.lane.b32.xlu0 %v2386, 64
        %v2975 = vpop.permute.xlu0 %2974
        %2976 = vrot.lane.b32.xlu0 %v2387, 64
        %v2977 = vpop.permute.xlu0 %2976
        %2978 = vrot.lane.b32.xlu0 %v2388, 64
        %v2979 = vpop.permute.xlu0 %2978
        %2980 = vrot.lane.b32.xlu0 %v2389, 64
        %v2981 = vpop.permute.xlu0 %2980
        %2990 = vmatprep.subr.bf16.mxu0 0
        %2991 = vmatpush1.bf16.msra.mxu0 %v2981
        %2992 = vmatprep.subr.bf16.mxu0 0
        %2993 = vmatpush1.bf16.msra.mxu0 %v2979
        %2994 = vmatprep.subr.bf16.mxu0 0
        %2995 = vmatpush1.bf16.msra.mxu0 %v2977
        %2996 = vmatprep.subr.bf16.mxu0 0
        %2997 = vmatpush1.bf16.msra.mxu0 %v2975
        %2998 = vmatprep.subr.bf16.mxu0 0
        %2999 = vmatpush1.bf16.msra.mxu0 %v2973
        %3000 = vmatprep.subr.bf16.mxu0 0
        %3001 = vmatpush1.bf16.msra.mxu0 %v2971
        %3002 = vmatprep.subr.bf16.mxu0 0
        %3003 = vmatpush1.bf16.msra.mxu0 %v2969
        %3004 = vmatprep.subr.bf16.mxu0 0
        %3005 = vmatpush1.bf16.msra.mxu0 %v2967
        %3006 = vmatprep.subr.bf16.mxu0 0
        %3007 = vmatpush2.bf16.msra.mxu0 0
        %3008 = vmatprep.subr.bf16.mxu0 0
        %3009 = vmatpush2.bf16.msra.mxu0 0
        %3010 = vmatprep.subr.bf16.mxu0 0
        %3011 = vmatpush2.bf16.msra.mxu0 0
        %3012 = vmatprep.subr.bf16.mxu0 0
        %3013 = vmatpush2.bf16.msra.mxu0 0
        %3014 = vmatprep.subr.bf16.mxu0 0
        %3015 = vmatpush2.bf16.msra.mxu0 0
        %3016 = vmatprep.subr.bf16.mxu0 0
        %3017 = vmatpush2.bf16.msra.mxu0 0
        %3018 = vmatprep.subr.bf16.mxu0 0
        %3019 = vmatpush2.bf16.msra.mxu0 0
        %3020 = vmatprep.subr.bf16.mxu0 0
        %3021 = vmatpush2.bf16.msra.mxu0 0
        %3022 = vmatprep.mubr.bf16.mxu0 0
        %3023 = vmatmul.mubr.bf16.gmra.mxu0 %v2962
        %v3024 = vpop.f32.mrf.mxu0
        %v3025 = vadd.f32 0.0, %v3024
        %v3026 = vpop.f32.mrf.mxu0
        %v3027 = vpop.f32.mrf.mxu0
        %v3028 = vadd.f32 0.0, %v3027
        %v3029 = vpop.f32.mrf.mxu0
        %3030 = vmatprep.mubr.bf16.mxu0 0
        %3031 = vmatmul.mubr.bf16.gmra.mxu0 %v2963
        %v3032 = vpop.f32.mrf.mxu0
        %v3033 = vadd.f32 0.0, %v3032
        %v3034 = vpop.f32.mrf.mxu0
        %v3035 = vpop.f32.mrf.mxu0
        %v3036 = vadd.f32 0.0, %v3035
        %v3037 = vpop.f32.mrf.mxu0
        %3038 = vmatprep.mubr.bf16.mxu0 0
        %3039 = vmatmul.mubr.bf16.gmra.mxu0 %v2964
        %v3040 = vpop.f32.mrf.mxu0
        %v3041 = vadd.f32 0.0, %v3040
        %v3042 = vpop.f32.mrf.mxu0
        %v3043 = vpop.f32.mrf.mxu0
        %v3044 = vadd.f32 0.0, %v3043
        %v3045 = vpop.f32.mrf.mxu0
        %3046 = vmatprep.mubr.bf16.mxu0 0
        %3047 = vmatmul.mubr.bf16.gmra.mxu0 %v2965
        %v3048 = vpop.f32.mrf.mxu0
        %v3049 = vadd.f32 0.0, %v3048
        %v3050 = vpop.f32.mrf.mxu0
        %v3051 = vpop.f32.mrf.mxu0
        %v3052 = vadd.f32 0.0, %v3051
        %v3053 = vpop.f32.mrf.mxu0
        %3054 = vdwg.mxu0
        %v3055 = vpack.c.bf16 %v3028, %v3025
        %v3056 = vpack.c.bf16 %v3036, %v3033
        %v3057 = vpack.c.bf16 %v3044, %v3041
        %v3058 = vpack.c.bf16 %v3052, %v3049
        %3059 = vrot.lane.b32.xlu0 %v2128, 32
        %v3060 = vpop.permute.xlu0 %3059
        %3061 = vrot.lane.b32.xlu0 %v2129, 32
        %v3062 = vpop.permute.xlu0 %3061
        %3063 = vrot.lane.b32.xlu0 %v2130, 32
        %v3064 = vpop.permute.xlu0 %3063
        %3065 = vrot.lane.b32.xlu0 %v2131, 32
        %v3066 = vpop.permute.xlu0 %3065
        %3067 = vrot.lane.b32.xlu0 %v2164, 32
        %v3068 = vpop.permute.xlu0 %3067
        %3069 = vrot.lane.b32.xlu0 %v2165, 32
        %v3070 = vpop.permute.xlu0 %3069
        %3071 = vrot.lane.b32.xlu0 %v2166, 32
        %v3072 = vpop.permute.xlu0 %3071
        %3073 = vrot.lane.b32.xlu0 %v2167, 32
        %v3074 = vpop.permute.xlu0 %3073
        %3075 = vrot.lane.b32.xlu0 %v2168, 32
        %v3076 = vpop.permute.xlu0 %3075
        %3077 = vrot.lane.b32.xlu0 %v2169, 32
        %v3078 = vpop.permute.xlu0 %3077
        %3079 = vrot.lane.b32.xlu0 %v2170, 32
        %v3080 = vpop.permute.xlu0 %3079
        %3081 = vrot.lane.b32.xlu0 %v2171, 32
        %v3082 = vpop.permute.xlu0 %3081
        %v3084 = vsel %vm2172, %v3060, 0
        %v3087 = vsel %vm2172, %v3062, 0
        %v3090 = vsel %vm2172, %v3064, 0
        %v3093 = vsel %vm2172, %v3066, 0
        %v3096 = vsel %vm2172, %v3068, 0
        %v3099 = vsel %vm2172, %v3070, 0
        %v3102 = vsel %vm2172, %v3072, 0
        %v3105 = vsel %vm2172, %v3074, 0
        %v3108 = vsel %vm2172, %v3076, 0
        %v3111 = vsel %vm2172, %v3078, 0
        %v3114 = vsel %vm2172, %v3080, 0
        %v3117 = vsel %vm2172, %v3082, 0
        %3119 = vmatprep.subr.bf16.mxu0 0
        %3120 = vmatpush1.bf16.xpose.msra.mxu0 %v3117
        %3121 = vmatprep.subr.bf16.mxu0 0
        %3122 = vmatpush1.bf16.xpose.msra.mxu0 %v3114
        %3123 = vmatprep.subr.bf16.mxu0 0
        %3124 = vmatpush1.bf16.xpose.msra.mxu0 %v3111
        %3125 = vmatprep.subr.bf16.mxu0 0
        %3126 = vmatpush1.bf16.xpose.msra.mxu0 %v3108
        %3127 = vmatprep.subr.bf16.mxu0 0
        %3128 = vmatpush1.bf16.xpose.msra.mxu0 %v3105
        %3129 = vmatprep.subr.bf16.mxu0 0
        %3130 = vmatpush1.bf16.xpose.msra.mxu0 %v3102
        %3131 = vmatprep.subr.bf16.mxu0 0
        %3132 = vmatpush1.bf16.xpose.msra.mxu0 %v3099
        %3133 = vmatprep.subr.bf16.mxu0 0
        %3134 = vmatpush1.bf16.xpose.msra.mxu0 %v3096
        %3135 = vmatprep.subr.bf16.mxu0 0
        %3136 = vmatpush2.bf16.xpose.msra.mxu0 0
        %3137 = vmatprep.subr.bf16.mxu0 0
        %3138 = vmatpush2.bf16.xpose.msra.mxu0 0
        %3139 = vmatprep.subr.bf16.mxu0 0
        %3140 = vmatpush2.bf16.xpose.msra.mxu0 0
        %3141 = vmatprep.subr.bf16.mxu0 0
        %3142 = vmatpush2.bf16.xpose.msra.mxu0 0
        %3143 = vmatprep.subr.bf16.mxu0 0
        %3144 = vmatpush2.bf16.xpose.msra.mxu0 0
        %3145 = vmatprep.subr.bf16.mxu0 0
        %3146 = vmatpush2.bf16.xpose.msra.mxu0 0
        %3147 = vmatprep.subr.bf16.mxu0 0
        %3148 = vmatpush2.bf16.xpose.msra.mxu0 0
        %3149 = vmatprep.subr.bf16.mxu0 0
        %3150 = vmatpush2.bf16.xpose.msra.mxu0 0
        %3151 = vmatprep.mubr.bf16.mxu0 0
        %3152 = vmatmul.mubr.bf16.gmra.mxu0 %v3084
        %v3153 = vpop.f32.mrf.mxu0
        %v3154 = vadd.f32 0.0, %v3153
        %v3155 = vpop.f32.mrf.mxu0
        %v3156 = vpop.f32.mrf.mxu0
        %v3157 = vadd.f32 0.0, %v3156
        %v3158 = vpop.f32.mrf.mxu0
        %3159 = vmatprep.mubr.bf16.mxu0 0
        %3160 = vmatmul.mubr.bf16.gmra.mxu0 %v3087
        %v3161 = vpop.f32.mrf.mxu0
        %v3162 = vadd.f32 0.0, %v3161
        %v3163 = vpop.f32.mrf.mxu0
        %v3164 = vpop.f32.mrf.mxu0
        %v3165 = vadd.f32 0.0, %v3164
        %v3166 = vpop.f32.mrf.mxu0
        %3167 = vmatprep.mubr.bf16.mxu0 0
        %3168 = vmatmul.mubr.bf16.gmra.mxu0 %v3090
        %v3169 = vpop.f32.mrf.mxu0
        %v3170 = vadd.f32 0.0, %v3169
        %v3171 = vpop.f32.mrf.mxu0
        %v3172 = vpop.f32.mrf.mxu0
        %v3173 = vadd.f32 0.0, %v3172
        %v3174 = vpop.f32.mrf.mxu0
        %3175 = vmatprep.mubr.bf16.mxu0 0
        %3176 = vmatmul.mubr.bf16.gmra.mxu0 %v3093
        %v3177 = vpop.f32.mrf.mxu0
        %v3178 = vadd.f32 0.0, %v3177
        %v3179 = vpop.f32.mrf.mxu0
        %v3180 = vpop.f32.mrf.mxu0
        %v3181 = vadd.f32 0.0, %v3180
        %v3182 = vpop.f32.mrf.mxu0
        %3183 = vdwg.mxu0
        %3184 = vmax.xlane.f32.xlu0 %v3154
        %v3185 = vpop.xlane.xlu0 %3184
        %3186 = vmax.xlane.f32.xlu0 %v3157
        %v3187 = vpop.xlane.xlu0 %3186
        %3188 = vmax.xlane.f32.xlu0 %v3162
        %v3189 = vpop.xlane.xlu0 %3188
        %3190 = vmax.xlane.f32.xlu0 %v3165
        %v3191 = vpop.xlane.xlu0 %3190
        %3192 = vmax.xlane.f32.xlu0 %v3170
        %v3193 = vpop.xlane.xlu0 %3192
        %3194 = vmax.xlane.f32.xlu0 %v3173
        %v3195 = vpop.xlane.xlu0 %3194
        %3196 = vmax.xlane.f32.xlu0 %v3178
        %v3197 = vpop.xlane.xlu0 %3196
        %3198 = vmax.xlane.f32.xlu0 %v3181
        %v3199 = vpop.xlane.xlu0 %3198
        %v3200 = vsub.f32 %v3154, %v3185
        %v3201 = vsub.f32 %v3157, %v3187
        %v3202 = vsub.f32 %v3162, %v3189
        %v3203 = vsub.f32 %v3165, %v3191
        %v3204 = vsub.f32 %v3170, %v3193
        %v3205 = vsub.f32 %v3173, %v3195
        %v3206 = vsub.f32 %v3178, %v3197
        %v3207 = vsub.f32 %v3181, %v3199
        %v3208 = vmul.f32 %v3200, 1.442695
        %v3209 = vpow.pop %v3208
        %v3210 = vmul.f32 %v3201, 1.442695
        %v3211 = vpow.pop %v3210
        %v3212 = vmul.f32 %v3202, 1.442695
        %v3213 = vpow.pop %v3212
        %v3214 = vmul.f32 %v3203, 1.442695
        %v3215 = vpow.pop %v3214
        %v3216 = vmul.f32 %v3204, 1.442695
        %v3217 = vpow.pop %v3216
        %v3218 = vmul.f32 %v3205, 1.442695
        %v3219 = vpow.pop %v3218
        %v3220 = vmul.f32 %v3206, 1.442695
        %v3221 = vpow.pop %v3220
        %v3222 = vmul.f32 %v3207, 1.442695
        %v3223 = vpow.pop %v3222
        %3224 = vadd.xlane.f32.xlu0 %v3209
        %v3225 = vpop.xlane.xlu0 %3224
        %3226 = vadd.xlane.f32.xlu0 %v3211
        %v3227 = vpop.xlane.xlu0 %3226
        %3228 = vadd.xlane.f32.xlu0 %v3213
        %v3229 = vpop.xlane.xlu0 %3228
        %3230 = vadd.xlane.f32.xlu0 %v3215
        %v3231 = vpop.xlane.xlu0 %3230
        %3232 = vadd.xlane.f32.xlu0 %v3217
        %v3233 = vpop.xlane.xlu0 %3232
        %3234 = vadd.xlane.f32.xlu0 %v3219
        %v3235 = vpop.xlane.xlu0 %3234
        %3236 = vadd.xlane.f32.xlu0 %v3221
        %v3237 = vpop.xlane.xlu0 %3236
        %3238 = vadd.xlane.f32.xlu0 %v3223
        %v3239 = vpop.xlane.xlu0 %3238
        %v3240 = vrcp.pop %v3225
        %v3241 = vrcp.pop %v3227
        %v3242 = vrcp.pop %v3229
        %v3243 = vrcp.pop %v3231
        %v3244 = vrcp.pop %v3233
        %v3245 = vrcp.pop %v3235
        %v3246 = vrcp.pop %v3237
        %v3247 = vrcp.pop %v3239
        %v3248 = vmul.f32 %v3209, %v3240
        %v3249 = vmul.f32 %v3211, %v3241
        %v3250 = vmul.f32 %v3213, %v3242
        %v3251 = vmul.f32 %v3215, %v3243
        %v3252 = vmul.f32 %v3217, %v3244
        %v3253 = vmul.f32 %v3219, %v3245
        %v3254 = vmul.f32 %v3221, %v3246
        %v3255 = vmul.f32 %v3223, %v3247
        %v3256 = vpack.c.bf16 %v3249, %v3248
        %v3257 = vpack.c.bf16 %v3251, %v3250
        %v3258 = vpack.c.bf16 %v3253, %v3252
        %v3259 = vpack.c.bf16 %v3255, %v3254
        %3260 = vrot.lane.b32.xlu0 %v2382, 32
        %v3261 = vpop.permute.xlu0 %3260
        %3262 = vrot.lane.b32.xlu0 %v2383, 32
        %v3263 = vpop.permute.xlu0 %3262
        %3264 = vrot.lane.b32.xlu0 %v2384, 32
        %v3265 = vpop.permute.xlu0 %3264
        %3266 = vrot.lane.b32.xlu0 %v2385, 32
        %v3267 = vpop.permute.xlu0 %3266
        %3268 = vrot.lane.b32.xlu0 %v2386, 32
        %v3269 = vpop.permute.xlu0 %3268
        %3270 = vrot.lane.b32.xlu0 %v2387, 32
        %v3271 = vpop.permute.xlu0 %3270
        %3272 = vrot.lane.b32.xlu0 %v2388, 32
        %v3273 = vpop.permute.xlu0 %3272
        %3274 = vrot.lane.b32.xlu0 %v2389, 32
        %v3275 = vpop.permute.xlu0 %3274
        %3284 = vmatprep.subr.bf16.mxu0 0
        %3285 = vmatpush1.bf16.msra.mxu0 %v3275
        %3286 = vmatprep.subr.bf16.mxu0 0
        %3287 = vmatpush1.bf16.msra.mxu0 %v3273
        %3288 = vmatprep.subr.bf16.mxu0 0
        %3289 = vmatpush1.bf16.msra.mxu0 %v3271
        %3290 = vmatprep.subr.bf16.mxu0 0
        %3291 = vmatpush1.bf16.msra.mxu0 %v3269
        %3292 = vmatprep.subr.bf16.mxu0 0
        %3293 = vmatpush1.bf16.msra.mxu0 %v3267
        %3294 = vmatprep.subr.bf16.mxu0 0
        %3295 = vmatpush1.bf16.msra.mxu0 %v3265
        %3296 = vmatprep.subr.bf16.mxu0 0
        %3297 = vmatpush1.bf16.msra.mxu0 %v3263
        %3298 = vmatprep.subr.bf16.mxu0 0
        %3299 = vmatpush1.bf16.msra.mxu0 %v3261
        %3300 = vmatprep.subr.bf16.mxu0 0
        %3301 = vmatpush2.bf16.msra.mxu0 0
        %3302 = vmatprep.subr.bf16.mxu0 0
        %3303 = vmatpush2.bf16.msra.mxu0 0
        %3304 = vmatprep.subr.bf16.mxu0 0
        %3305 = vmatpush2.bf16.msra.mxu0 0
        %3306 = vmatprep.subr.bf16.mxu0 0
        %3307 = vmatpush2.bf16.msra.mxu0 0
        %3308 = vmatprep.subr.bf16.mxu0 0
        %3309 = vmatpush2.bf16.msra.mxu0 0
        %3310 = vmatprep.subr.bf16.mxu0 0
        %3311 = vmatpush2.bf16.msra.mxu0 0
        %3312 = vmatprep.subr.bf16.mxu0 0
        %3313 = vmatpush2.bf16.msra.mxu0 0
        %3314 = vmatprep.subr.bf16.mxu0 0
        %3315 = vmatpush2.bf16.msra.mxu0 0
        %3316 = vmatprep.mubr.bf16.mxu0 0
        %3317 = vmatmul.mubr.bf16.gmra.mxu0 %v3256
        %v3318 = vpop.f32.mrf.mxu0
        %v3319 = vadd.f32 0.0, %v3318
        %v3320 = vpop.f32.mrf.mxu0
        %v3321 = vpop.f32.mrf.mxu0
        %v3322 = vadd.f32 0.0, %v3321
        %v3323 = vpop.f32.mrf.mxu0
        %3324 = vmatprep.mubr.bf16.mxu0 0
        %3325 = vmatmul.mubr.bf16.gmra.mxu0 %v3257
        %v3326 = vpop.f32.mrf.mxu0
        %v3327 = vadd.f32 0.0, %v3326
        %v3328 = vpop.f32.mrf.mxu0
        %v3329 = vpop.f32.mrf.mxu0
        %v3330 = vadd.f32 0.0, %v3329
        %v3331 = vpop.f32.mrf.mxu0
        %3332 = vmatprep.mubr.bf16.mxu0 0
        %3333 = vmatmul.mubr.bf16.gmra.mxu0 %v3258
        %v3334 = vpop.f32.mrf.mxu0
        %v3335 = vadd.f32 0.0, %v3334
        %v3336 = vpop.f32.mrf.mxu0
        %v3337 = vpop.f32.mrf.mxu0
        %v3338 = vadd.f32 0.0, %v3337
        %v3339 = vpop.f32.mrf.mxu0
        %3340 = vmatprep.mubr.bf16.mxu0 0
        %3341 = vmatmul.mubr.bf16.gmra.mxu0 %v3259
        %v3342 = vpop.f32.mrf.mxu0
        %v3343 = vadd.f32 0.0, %v3342
        %v3344 = vpop.f32.mrf.mxu0
        %v3345 = vpop.f32.mrf.mxu0
        %v3346 = vadd.f32 0.0, %v3345
        %v3347 = vpop.f32.mrf.mxu0
        %3348 = vdwg.mxu0
        %v3349 = vpack.c.bf16 %v3322, %v3319
        %v3350 = vpack.c.bf16 %v3330, %v3327
        %v3351 = vpack.c.bf16 %v3338, %v3335
        %v3352 = vpack.c.bf16 %v3346, %v3343
        %3357 = vrot.lane.b32.xlu0 %v2761, 32
        %v3358 = vpop.permute.xlu0 %3357
        %3359 = vrot.lane.b32.xlu0 %v2762, 32
        %v3360 = vpop.permute.xlu0 %3359
        %3361 = vrot.lane.b32.xlu0 %v2763, 32
        %v3362 = vpop.permute.xlu0 %3361
        %3363 = vrot.lane.b32.xlu0 %v2764, 32
        %v3364 = vpop.permute.xlu0 %3363
        %3369 = vrot.lane.b32.xlu0 %v3055, 64
        %v3370 = vpop.permute.xlu0 %3369
        %3371 = vrot.lane.b32.xlu0 %v3056, 64
        %v3372 = vpop.permute.xlu0 %3371
        %3373 = vrot.lane.b32.xlu0 %v3057, 64
        %v3374 = vpop.permute.xlu0 %3373
        %3375 = vrot.lane.b32.xlu0 %v3058, 64
        %v3376 = vpop.permute.xlu0 %3375
        %3381 = vrot.lane.b32.xlu0 %v3349, 96
        %v3382 = vpop.permute.xlu0 %3381
        %3383 = vrot.lane.b32.xlu0 %v3350, 96
        %v3384 = vpop.permute.xlu0 %3383
        %3385 = vrot.lane.b32.xlu0 %v3351, 96
        %v3386 = vpop.permute.xlu0 %3385
        %3387 = vrot.lane.b32.xlu0 %v3352, 96
        %v3388 = vpop.permute.xlu0 %3387
        %v3391 = vsel %vm2172, %v2463, %v3358
        %v3394 = vsel %vm2172, %v2464, %v3360
        %v3397 = vsel %vm2172, %v2465, %v3362
        %v3400 = vsel %vm2172, %v2466, %v3364
        %vm3401 = vcmask 523264
        %v3403 = vsel %vm3401, %v3391, %v3370
        %v3405 = vsel %vm3401, %v3394, %v3372
        %v3407 = vsel %vm3401, %v3397, %v3374
        %v3409 = vsel %vm3401, %v3400, %v3376
        %vm3410 = vcmask 785408
        %v3412 = vsel %vm3410, %v3403, %v3382
        %v3415 = vsel %vm3410, %v3405, %v3384
        %v3418 = vsel %vm3410, %v3407, %v3386
        %v3421 = vsel %vm3410, %v3409, %v3388
        %v3424 = vlaneseq
        %v3425 = vshrl.u32 %v3424, 7
        %v3426 = vsub.s32 0, %v3425
        %v3427 = vrot.slane %v2127, %v3426
        %v3445 = vunpack.c.l.b16 %v2111
        %v3446 = vunpack.c.l.b16 %v2112
        %v3447 = vunpack.c.l.b16 %v2113
        %v3448 = vunpack.c.l.b16 %v2114
        %v3449 = vunpack.c.l.b16 %v2115
        %v3450 = vunpack.c.l.b16 %v2116
        %v3451 = vunpack.c.l.b16 %v2117
        %v3452 = vunpack.c.l.b16 %v2118
        %v3453 = vunpack.c.l.b16 %v2119
        %v3454 = vunpack.c.l.b16 %v2120
        %v3455 = vunpack.c.l.b16 %v2121
        %v3456 = vunpack.c.l.b16 %v2122
        %v3457 = vunpack.c.l.b16 %v2123
        %v3458 = vunpack.c.l.b16 %v2124
        %v3459 = vunpack.c.l.b16 %v2125
        %v3460 = vunpack.c.l.b16 %v2126
        %v3461 = vpack.c.b16 %v3446, %v3445
        %v3462 = vpack.c.b16 %v3448, %v3447
        %v3463 = vpack.c.b16 %v3450, %v3449
        %v3464 = vpack.c.b16 %v3452, %v3451
        %v3465 = vpack.c.b16 %v3454, %v3453
        %v3466 = vpack.c.b16 %v3456, %v3455
        %v3467 = vpack.c.b16 %v3458, %v3457
        %v3468 = vpack.c.b16 %v3460, %v3459
        %3477 = vmatprep.subr.bf16.mxu0 0
        %3478 = vmatpush1.bf16.msra.mxu0 %v3468
        %3479 = vmatprep.subr.bf16.mxu0 0
        %3480 = vmatpush1.bf16.msra.mxu0 %v3467
        %3481 = vmatprep.subr.bf16.mxu0 0
        %3482 = vmatpush1.bf16.msra.mxu0 %v3466
        %3483 = vmatprep.subr.bf16.mxu0 0
        %3484 = vmatpush1.bf16.msra.mxu0 %v3465
        %3485 = vmatprep.subr.bf16.mxu0 0
        %3486 = vmatpush1.bf16.msra.mxu0 %v3464
        %3487 = vmatprep.subr.bf16.mxu0 0
        %3488 = vmatpush1.bf16.msra.mxu0 %v3463
        %3489 = vmatprep.subr.bf16.mxu0 0
        %3490 = vmatpush1.bf16.msra.mxu0 %v3462
        %3491 = vmatprep.subr.bf16.mxu0 0
        %3492 = vmatpush1.bf16.msra.mxu0 %v3461
        %3493 = vmatprep.subr.bf16.mxu0 0
        %3494 = vmatpush2.bf16.msra.mxu0 0
        %3495 = vmatprep.subr.bf16.mxu0 0
        %3496 = vmatpush2.bf16.msra.mxu0 0
        %3497 = vmatprep.subr.bf16.mxu0 0
        %3498 = vmatpush2.bf16.msra.mxu0 0
        %3499 = vmatprep.subr.bf16.mxu0 0
        %3500 = vmatpush2.bf16.msra.mxu0 0
        %3501 = vmatprep.subr.bf16.mxu0 0
        %3502 = vmatpush2.bf16.msra.mxu0 0
        %3503 = vmatprep.subr.bf16.mxu0 0
        %3504 = vmatpush2.bf16.msra.mxu0 0
        %3505 = vmatprep.subr.bf16.mxu0 0
        %3506 = vmatpush2.bf16.msra.mxu0 0
        %3507 = vmatprep.subr.bf16.mxu0 0
        %3508 = vmatpush2.bf16.msra.mxu0 0
        %3509 = vmatprep.mubr.bf16.mxu0 0
        %3510 = vmatmul.mubr.bf16.gmra.mxu0 %v3412
        %v3511 = vpop.f32.mrf.mxu0
        %v3512 = vadd.f32 %v3427, %v3511
        %v3513 = vpop.f32.mrf.mxu0
        %v3514 = vpop.f32.mrf.mxu0
        %v3515 = vadd.f32 %v3427, %v3514
        %v3516 = vpop.f32.mrf.mxu0
        %3517 = vmatprep.mubr.bf16.mxu0 0
        %3518 = vmatmul.mubr.bf16.gmra.mxu0 %v3415
        %v3519 = vpop.f32.mrf.mxu0
        %v3520 = vadd.f32 %v3427, %v3519
        %v3521 = vpop.f32.mrf.mxu0
        %v3522 = vpop.f32.mrf.mxu0
        %v3523 = vadd.f32 %v3427, %v3522
        %v3524 = vpop.f32.mrf.mxu0
        %3525 = vmatprep.mubr.bf16.mxu0 0
        %3526 = vmatmul.mubr.bf16.gmra.mxu0 %v3418
        %v3527 = vpop.f32.mrf.mxu0
        %v3528 = vadd.f32 %v3427, %v3527
        %v3529 = vpop.f32.mrf.mxu0
        %v3530 = vpop.f32.mrf.mxu0
        %v3531 = vadd.f32 %v3427, %v3530
        %v3532 = vpop.f32.mrf.mxu0
        %3533 = vmatprep.mubr.bf16.mxu0 0
        %3534 = vmatmul.mubr.bf16.gmra.mxu0 %v3421
        %v3535 = vpop.f32.mrf.mxu0
        %v3536 = vadd.f32 %v3427, %v3535
        %v3537 = vpop.f32.mrf.mxu0
        %v3538 = vpop.f32.mrf.mxu0
        %v3539 = vadd.f32 %v3427, %v3538
        %v3540 = vpop.f32.mrf.mxu0
        %3541 = vdwg.mxu0
        %v3542 = vlaneseq
        %v3543 = vshrl.u32 %v3542, 7
        %v3544 = vsub.s32 2, %v3543
        %v3545 = vrot.slane %v908, %v3544
        %v3546 = vmul.f32 %v3545, %v3512
        %v3547 = vmul.f32 %v3545, %v3515
        %v3548 = vmul.f32 %v3545, %v3520
        %v3549 = vmul.f32 %v3545, %v3523
        %v3550 = vmul.f32 %v3545, %v3528
        %v3551 = vmul.f32 %v3545, %v3531
        %v3552 = vmul.f32 %v3545, %v3536
        %v3553 = vmul.f32 %v3545, %v3539
        %v3554 = vadd.f32 %v1809, %v3546
        %v3555 = vadd.f32 %v1810, %v3547
        %v3556 = vadd.f32 %v1811, %v3548
        %v3557 = vadd.f32 %v1812, %v3549
        %v3558 = vadd.f32 %v1813, %v3550
        %v3559 = vadd.f32 %v1814, %v3551
        %v3560 = vadd.f32 %v1815, %v3552
        %v3561 = vadd.f32 %v1816, %v3553
        %v3562 = vpack.c.bf16 %v3555, %v3554
        %v3563 = vpack.c.bf16 %v3557, %v3556
        %v3564 = vpack.c.bf16 %v3559, %v3558
        %v3565 = vpack.c.bf16 %v3561, %v3560
        %v3566 = vld [vmem:[#allocation17] sm:$0xf]
        %v3567 = vld [vmem:[#allocation17 + $0x4] sm:$0xf]
        %v3568 = vld [vmem:[#allocation17 + $0x8] sm:$0xf]
        %v3569 = vld [vmem:[#allocation17 + $0xc] sm:$0xf]
        %v3570 = vld [vmem:[#allocation17 + $0x10] sm:$0xf]
        %v3571 = vld [vmem:[#allocation17 + $0x14] sm:$0xf]
        %v3572 = vld [vmem:[#allocation17 + $0x18] sm:$0xf]
        %v3573 = vld [vmem:[#allocation17 + $0x1c] sm:$0xf]
        %v3574 = vld [vmem:[#allocation17 + $0x20] sm:$0xf]
        %v3575 = vld [vmem:[#allocation17 + $0x24] sm:$0xf]
        %v3576 = vld [vmem:[#allocation17 + $0x28] sm:$0xf]
        %v3577 = vld [vmem:[#allocation17 + $0x2c] sm:$0xf]
        %v3578 = vld [vmem:[#allocation17 + $0x30] sm:$0xf]
        %v3579 = vld [vmem:[#allocation17 + $0x34] sm:$0xf]
        %v3580 = vld [vmem:[#allocation17 + $0x38] sm:$0xf]
        %v3581 = vld [vmem:[#allocation17 + $0x3c] sm:$0xf]
        %v3582 = vld [vmem:[%s12] sm:$0x1]
        %v3584 = vlaneseq
        %v3585 = vshrl.u32 %v3584, 7
        %v3586 = vsub.s32 0, %v3585
        %v3587 = vrot.slane %v3582, %v3586
        %v3605 = vunpack.c.l.b16 %v3566
        %v3606 = vunpack.c.l.b16 %v3567
        %v3607 = vunpack.c.l.b16 %v3568
        %v3608 = vunpack.c.l.b16 %v3569
        %v3609 = vunpack.c.l.b16 %v3570
        %v3610 = vunpack.c.l.b16 %v3571
        %v3611 = vunpack.c.l.b16 %v3572
        %v3612 = vunpack.c.l.b16 %v3573
        %v3613 = vunpack.c.l.b16 %v3574
        %v3614 = vunpack.c.l.b16 %v3575
        %v3615 = vunpack.c.l.b16 %v3576
        %v3616 = vunpack.c.l.b16 %v3577
        %v3617 = vunpack.c.l.b16 %v3578
        %v3618 = vunpack.c.l.b16 %v3579
        %v3619 = vunpack.c.l.b16 %v3580
        %v3620 = vunpack.c.l.b16 %v3581
        %v3621 = vpack.c.b16 %v3606, %v3605
        %v3622 = vpack.c.b16 %v3608, %v3607
        %v3623 = vpack.c.b16 %v3610, %v3609
        %v3624 = vpack.c.b16 %v3612, %v3611
        %v3625 = vpack.c.b16 %v3614, %v3613
        %v3626 = vpack.c.b16 %v3616, %v3615
        %v3627 = vpack.c.b16 %v3618, %v3617
        %v3628 = vpack.c.b16 %v3620, %v3619
        %3637 = vmatprep.subr.bf16.mxu0 0
        %3638 = vmatpush1.bf16.msra.mxu0 %v3628
        %3639 = vmatprep.subr.bf16.mxu0 0
        %3640 = vmatpush1.bf16.msra.mxu0 %v3627
        %3641 = vmatprep.subr.bf16.mxu0 0
        %3642 = vmatpush1.bf16.msra.mxu0 %v3626
        %3643 = vmatprep.subr.bf16.mxu0 0
        %3644 = vmatpush1.bf16.msra.mxu0 %v3625
        %3645 = vmatprep.subr.bf16.mxu0 0
        %3646 = vmatpush1.bf16.msra.mxu0 %v3624
        %3647 = vmatprep.subr.bf16.mxu0 0
        %3648 = vmatpush1.bf16.msra.mxu0 %v3623
        %3649 = vmatprep.subr.bf16.mxu0 0
        %3650 = vmatpush1.bf16.msra.mxu0 %v3622
        %3651 = vmatprep.subr.bf16.mxu0 0
        %3652 = vmatpush1.bf16.msra.mxu0 %v3621
        %3653 = vmatprep.subr.bf16.mxu0 0
        %3654 = vmatpush2.bf16.msra.mxu0 0
        %3655 = vmatprep.subr.bf16.mxu0 0
        %3656 = vmatpush2.bf16.msra.mxu0 0
        %3657 = vmatprep.subr.bf16.mxu0 0
        %3658 = vmatpush2.bf16.msra.mxu0 0
        %3659 = vmatprep.subr.bf16.mxu0 0
        %3660 = vmatpush2.bf16.msra.mxu0 0
        %3661 = vmatprep.subr.bf16.mxu0 0
        %3662 = vmatpush2.bf16.msra.mxu0 0
        %3663 = vmatprep.subr.bf16.mxu0 0
        %3664 = vmatpush2.bf16.msra.mxu0 0
        %3665 = vmatprep.subr.bf16.mxu0 0
        %3666 = vmatpush2.bf16.msra.mxu0 0
        %3667 = vmatprep.subr.bf16.mxu0 0
        %3668 = vmatpush2.bf16.msra.mxu0 0
        %3669 = vmatprep.mubr.bf16.mxu0 0
        %3670 = vmatmul.mubr.bf16.gmra.mxu0 %v3562
        %v3671 = vpop.f32.mrf.mxu0
        %v3672 = vadd.f32 %v3587, %v3671
        %v3673 = vpop.f32.mrf.mxu0
        %v3674 = vpop.f32.mrf.mxu0
        %v3675 = vadd.f32 %v3587, %v3674
        %v3676 = vpop.f32.mrf.mxu0
        %3677 = vmatprep.mubr.bf16.mxu0 0
        %3678 = vmatmul.mubr.bf16.gmra.mxu0 %v3563
        %v3679 = vpop.f32.mrf.mxu0
        %v3680 = vadd.f32 %v3587, %v3679
        %v3681 = vpop.f32.mrf.mxu0
        %v3682 = vpop.f32.mrf.mxu0
        %v3683 = vadd.f32 %v3587, %v3682
        %v3684 = vpop.f32.mrf.mxu0
        %3685 = vmatprep.mubr.bf16.mxu0 0
        %3686 = vmatmul.mubr.bf16.gmra.mxu0 %v3564
        %v3687 = vpop.f32.mrf.mxu0
        %v3688 = vadd.f32 %v3587, %v3687
        %v3689 = vpop.f32.mrf.mxu0
        %v3690 = vpop.f32.mrf.mxu0
        %v3691 = vadd.f32 %v3587, %v3690
        %v3692 = vpop.f32.mrf.mxu0
        %3693 = vmatprep.mubr.bf16.mxu0 0
        %3694 = vmatmul.mubr.bf16.gmra.mxu0 %v3565
        %v3695 = vpop.f32.mrf.mxu0
        %v3696 = vadd.f32 %v3587, %v3695
        %v3697 = vpop.f32.mrf.mxu0
        %v3698 = vpop.f32.mrf.mxu0
        %v3699 = vadd.f32 %v3587, %v3698
        %v3700 = vpop.f32.mrf.mxu0
        %3701 = vdwg.mxu0
        %v3702 = vmul.f32 %v3672, 0.17677669
        %v3703 = vmul.f32 %v3675, 0.17677669
        %v3704 = vmul.f32 %v3680, 0.17677669
        %v3705 = vmul.f32 %v3683, 0.17677669
        %v3706 = vmul.f32 %v3688, 0.17677669
        %v3707 = vmul.f32 %v3691, 0.17677669
        %v3708 = vmul.f32 %v3696, 0.17677669
        %v3709 = vmul.f32 %v3699, 0.17677669
        %v3710 = vld [vmem:[#allocation4] sm:$0xf]
        %v3711 = vld [vmem:[#allocation4 + $0x4] sm:$0xf]
        %v3712 = vld [vmem:[#allocation4 + $0x8] sm:$0xf]
        %v3713 = vld [vmem:[#allocation4 + $0xc] sm:$0xf]
        %v3714 = vld [vmem:[#allocation4 + $0x10] sm:$0xf]
        %v3715 = vld [vmem:[#allocation4 + $0x14] sm:$0xf]
        %v3716 = vld [vmem:[#allocation4 + $0x18] sm:$0xf]
        %v3717 = vld [vmem:[#allocation4 + $0x1c] sm:$0xf]
        %v3718 = vld [vmem:[#allocation5] sm:$0xf]
        %v3719 = vld [vmem:[#allocation5 + $0x4] sm:$0xf]
        %v3720 = vld [vmem:[#allocation5 + $0x8] sm:$0xf]
        %v3721 = vld [vmem:[#allocation5 + $0xc] sm:$0xf]
        %v3722 = vld [vmem:[#allocation5 + $0x10] sm:$0xf]
        %v3723 = vld [vmem:[#allocation5 + $0x14] sm:$0xf]
        %v3724 = vld [vmem:[#allocation5 + $0x18] sm:$0xf]
        %v3725 = vld [vmem:[#allocation5 + $0x1c] sm:$0xf]
        %v3726 = vld [vmem:[#allocation20] sm:$0xf]
        %v3727 = vld [vmem:[#allocation20 + $0x4] sm:$0xf]
        %v3728 = vld [vmem:[#allocation20 + $0x8] sm:$0xf]
        %v3729 = vld [vmem:[#allocation20 + $0xc] sm:$0xf]
        %v3730 = vld [vmem:[#allocation20 + $0x10] sm:$0xf]
        %v3731 = vld [vmem:[#allocation20 + $0x14] sm:$0xf]
        %v3732 = vld [vmem:[#allocation20 + $0x18] sm:$0xf]
        %v3733 = vld [vmem:[#allocation20 + $0x1c] sm:$0xf]
        %v3734 = vld [vmem:[#allocation20 + $0x20] sm:$0xf]
        %v3735 = vld [vmem:[#allocation20 + $0x24] sm:$0xf]
        %v3736 = vld [vmem:[#allocation20 + $0x28] sm:$0xf]
        %v3737 = vld [vmem:[#allocation20 + $0x2c] sm:$0xf]
        %v3738 = vld [vmem:[#allocation20 + $0x30] sm:$0xf]
        %v3739 = vld [vmem:[#allocation20 + $0x34] sm:$0xf]
        %v3740 = vld [vmem:[#allocation20 + $0x38] sm:$0xf]
        %v3741 = vld [vmem:[#allocation20 + $0x3c] sm:$0xf]
        %v3742 = vld [vmem:[%s16] sm:$0x1]
        %v3743 = vpack.c.bf16 %v3703, %v3702
        %v3744 = vpack.c.bf16 %v3705, %v3704
        %v3745 = vpack.c.bf16 %v3707, %v3706
        %v3746 = vpack.c.bf16 %v3709, %v3708
        %v3755 = vunpack.c.l.b16 %v3710
        %v3756 = vunpack.c.l.b16 %v3711
        %v3757 = vunpack.c.l.b16 %v3712
        %v3758 = vunpack.c.l.b16 %v3713
        %v3759 = vunpack.c.l.b16 %v3714
        %v3760 = vunpack.c.l.b16 %v3715
        %v3761 = vunpack.c.l.b16 %v3716
        %v3762 = vunpack.c.l.b16 %v3717
        %v3763 = vpack.c.b16 %v3756, %v3755
        %v3764 = vpack.c.b16 %v3758, %v3757
        %v3765 = vpack.c.b16 %v3760, %v3759
        %v3766 = vpack.c.b16 %v3762, %v3761
        %v3768 = vsel %vm2172, %v3743, 0
        %v3771 = vsel %vm2172, %v3744, 0
        %v3774 = vsel %vm2172, %v3745, 0
        %v3777 = vsel %vm2172, %v3746, 0
        %v3780 = vsel %vm2172, %v3763, 0
        %v3783 = vsel %vm2172, %v3764, 0
        %v3786 = vsel %vm2172, %v3765, 0
        %v3789 = vsel %vm2172, %v3766, 0
        %3791 = vmatprep.subr.bf16.mxu0 0
        %3792 = vmatpush1.bf16.xpose.msra.mxu0 0
        %3793 = vmatprep.subr.bf16.mxu0 0
        %3794 = vmatpush1.bf16.xpose.msra.mxu0 0
        %3795 = vmatprep.subr.bf16.mxu0 0
        %3796 = vmatpush1.bf16.xpose.msra.mxu0 0
        %3797 = vmatprep.subr.bf16.mxu0 0
        %3798 = vmatpush1.bf16.xpose.msra.mxu0 0
        %3799 = vmatprep.subr.bf16.mxu0 0
        %3800 = vmatpush1.bf16.xpose.msra.mxu0 %v3789
        %3801 = vmatprep.subr.bf16.mxu0 0
        %3802 = vmatpush1.bf16.xpose.msra.mxu0 %v3786
        %3803 = vmatprep.subr.bf16.mxu0 0
        %3804 = vmatpush1.bf16.xpose.msra.mxu0 %v3783
        %3805 = vmatprep.subr.bf16.mxu0 0
        %3806 = vmatpush1.bf16.xpose.msra.mxu0 %v3780
        %3807 = vmatprep.subr.bf16.mxu0 0
        %3808 = vmatpush2.bf16.xpose.msra.mxu0 0
        %3809 = vmatprep.subr.bf16.mxu0 0
        %3810 = vmatpush2.bf16.xpose.msra.mxu0 0
        %3811 = vmatprep.subr.bf16.mxu0 0
        %3812 = vmatpush2.bf16.xpose.msra.mxu0 0
        %3813 = vmatprep.subr.bf16.mxu0 0
        %3814 = vmatpush2.bf16.xpose.msra.mxu0 0
        %3815 = vmatprep.subr.bf16.mxu0 0
        %3816 = vmatpush2.bf16.xpose.msra.mxu0 0
        %3817 = vmatprep.subr.bf16.mxu0 0
        %3818 = vmatpush2.bf16.xpose.msra.mxu0 0
        %3819 = vmatprep.subr.bf16.mxu0 0
        %3820 = vmatpush2.bf16.xpose.msra.mxu0 0
        %3821 = vmatprep.subr.bf16.mxu0 0
        %3822 = vmatpush2.bf16.xpose.msra.mxu0 0
        %3823 = vmatprep.mubr.bf16.mxu0 0
        %3824 = vmatmul.mubr.bf16.gmra.mxu0 %v3768
        %v3825 = vpop.f32.mrf.mxu0
        %v3826 = vadd.f32 0.0, %v3825
        %v3827 = vpop.f32.mrf.mxu0
        %v3828 = vpop.f32.mrf.mxu0
        %v3829 = vadd.f32 0.0, %v3828
        %v3830 = vpop.f32.mrf.mxu0
        %3831 = vmatprep.mubr.bf16.mxu0 0
        %3832 = vmatmul.mubr.bf16.gmra.mxu0 %v3771
        %v3833 = vpop.f32.mrf.mxu0
        %v3834 = vadd.f32 0.0, %v3833
        %v3835 = vpop.f32.mrf.mxu0
        %v3836 = vpop.f32.mrf.mxu0
        %v3837 = vadd.f32 0.0, %v3836
        %v3838 = vpop.f32.mrf.mxu0
        %3839 = vmatprep.mubr.bf16.mxu0 0
        %3840 = vmatmul.mubr.bf16.gmra.mxu0 %v3774
        %v3841 = vpop.f32.mrf.mxu0
        %v3842 = vadd.f32 0.0, %v3841
        %v3843 = vpop.f32.mrf.mxu0
        %v3844 = vpop.f32.mrf.mxu0
        %v3845 = vadd.f32 0.0, %v3844
        %v3846 = vpop.f32.mrf.mxu0
        %3847 = vmatprep.mubr.bf16.mxu0 0
        %3848 = vmatmul.mubr.bf16.gmra.mxu0 %v3777
        %v3849 = vpop.f32.mrf.mxu0
        %v3850 = vadd.f32 0.0, %v3849
        %v3851 = vpop.f32.mrf.mxu0
        %v3852 = vpop.f32.mrf.mxu0
        %v3853 = vadd.f32 0.0, %v3852
        %v3854 = vpop.f32.mrf.mxu0
        %3855 = vdwg.mxu0
        %v3856 = vsel %vm3401, %v3826, -inf
        %3857 = vmax.xlane.f32.xlu0 %v3856
        %v3858 = vpop.xlane.xlu0 %3857
        %v3859 = vsel %vm3401, %v3829, -inf
        %3860 = vmax.xlane.f32.xlu0 %v3859
        %v3861 = vpop.xlane.xlu0 %3860
        %v3862 = vsel %vm3401, %v3834, -inf
        %3863 = vmax.xlane.f32.xlu0 %v3862
        %v3864 = vpop.xlane.xlu0 %3863
        %v3865 = vsel %vm3401, %v3837, -inf
        %3866 = vmax.xlane.f32.xlu0 %v3865
        %v3867 = vpop.xlane.xlu0 %3866
        %v3868 = vsel %vm3401, %v3842, -inf
        %3869 = vmax.xlane.f32.xlu0 %v3868
        %v3870 = vpop.xlane.xlu0 %3869
        %v3871 = vsel %vm3401, %v3845, -inf
        %3872 = vmax.xlane.f32.xlu0 %v3871
        %v3873 = vpop.xlane.xlu0 %3872
        %v3874 = vsel %vm3401, %v3850, -inf
        %3875 = vmax.xlane.f32.xlu0 %v3874
        %v3876 = vpop.xlane.xlu0 %3875
        %v3877 = vsel %vm3401, %v3853, -inf
        %3878 = vmax.xlane.f32.xlu0 %v3877
        %v3879 = vpop.xlane.xlu0 %3878
        %v3880 = vsub.f32 %v3826, %v3858
        %v3881 = vsub.f32 %v3829, %v3861
        %v3882 = vsub.f32 %v3834, %v3864
        %v3883 = vsub.f32 %v3837, %v3867
        %v3884 = vsub.f32 %v3842, %v3870
        %v3885 = vsub.f32 %v3845, %v3873
        %v3886 = vsub.f32 %v3850, %v3876
        %v3887 = vsub.f32 %v3853, %v3879
        %v3888 = vmul.f32 %v3880, 1.442695
        %v3889 = vpow.pop %v3888
        %v3890 = vmul.f32 %v3881, 1.442695
        %v3891 = vpow.pop %v3890
        %v3892 = vmul.f32 %v3882, 1.442695
        %v3893 = vpow.pop %v3892
        %v3894 = vmul.f32 %v3883, 1.442695
        %v3895 = vpow.pop %v3894
        %v3896 = vmul.f32 %v3884, 1.442695
        %v3897 = vpow.pop %v3896
        %v3898 = vmul.f32 %v3885, 1.442695
        %v3899 = vpow.pop %v3898
        %v3900 = vmul.f32 %v3886, 1.442695
        %v3901 = vpow.pop %v3900
        %v3902 = vmul.f32 %v3887, 1.442695
        %v3903 = vpow.pop %v3902
        %v3904 = vsel %vm3401, %v3889, 0.0
        %3905 = vadd.xlane.f32.xlu0 %v3904
        %v3906 = vpop.xlane.xlu0 %3905
        %v3907 = vsel %vm3401, %v3891, 0.0
        %3908 = vadd.xlane.f32.xlu0 %v3907
        %v3909 = vpop.xlane.xlu0 %3908
        %v3910 = vsel %vm3401, %v3893, 0.0
        %3911 = vadd.xlane.f32.xlu0 %v3910
        %v3912 = vpop.xlane.xlu0 %3911
        %v3913 = vsel %vm3401, %v3895, 0.0
        %3914 = vadd.xlane.f32.xlu0 %v3913
        %v3915 = vpop.xlane.xlu0 %3914
        %v3916 = vsel %vm3401, %v3897, 0.0
        %3917 = vadd.xlane.f32.xlu0 %v3916
        %v3918 = vpop.xlane.xlu0 %3917
        %v3919 = vsel %vm3401, %v3899, 0.0
        %3920 = vadd.xlane.f32.xlu0 %v3919
        %v3921 = vpop.xlane.xlu0 %3920
        %v3922 = vsel %vm3401, %v3901, 0.0
        %3923 = vadd.xlane.f32.xlu0 %v3922
        %v3924 = vpop.xlane.xlu0 %3923
        %v3925 = vsel %vm3401, %v3903, 0.0
        %3926 = vadd.xlane.f32.xlu0 %v3925
        %v3927 = vpop.xlane.xlu0 %3926
        %v3928 = vrcp.pop %v3906
        %v3929 = vrcp.pop %v3909
        %v3930 = vrcp.pop %v3912
        %v3931 = vrcp.pop %v3915
        %v3932 = vrcp.pop %v3918
        %v3933 = vrcp.pop %v3921
        %v3934 = vrcp.pop %v3924
        %v3935 = vrcp.pop %v3927
        %v3936 = vmul.f32 %v3889, %v3928
        %v3937 = vmul.f32 %v3891, %v3929
        %v3938 = vmul.f32 %v3893, %v3930
        %v3939 = vmul.f32 %v3895, %v3931
        %v3940 = vmul.f32 %v3897, %v3932
        %v3941 = vmul.f32 %v3899, %v3933
        %v3942 = vmul.f32 %v3901, %v3934
        %v3943 = vmul.f32 %v3903, %v3935
        %v3944 = vpack.c.bf16 %v3937, %v3936
        %v3945 = vpack.c.bf16 %v3939, %v3938
        %v3946 = vpack.c.bf16 %v3941, %v3940
        %v3947 = vpack.c.bf16 %v3943, %v3942
        %v3956 = vunpack.c.l.b16 %v3718
        %v3957 = vunpack.c.l.b16 %v3719
        %v3958 = vunpack.c.l.b16 %v3720
        %v3959 = vunpack.c.l.b16 %v3721
        %v3960 = vunpack.c.l.b16 %v3722
        %v3961 = vunpack.c.l.b16 %v3723
        %v3962 = vunpack.c.l.b16 %v3724
        %v3963 = vunpack.c.l.b16 %v3725
        %v3964 = vpack.c.b16 %v3957, %v3956
        %v3965 = vpack.c.b16 %v3959, %v3958
        %v3966 = vpack.c.b16 %v3961, %v3960
        %v3967 = vpack.c.b16 %v3963, %v3962
        %v3973 = vsel %vm3401, %v3944, 0
        %v3976 = vsel %vm3401, %v3945, 0
        %v3979 = vsel %vm3401, %v3946, 0
        %v3982 = vsel %vm3401, %v3947, 0
        %3984 = vmatprep.subr.bf16.mxu0 0
        %3985 = vmatpush1.bf16.msra.mxu0 0
        %3986 = vmatprep.subr.bf16.mxu0 0
        %3987 = vmatpush1.bf16.msra.mxu0 0
        %3988 = vmatprep.subr.bf16.mxu0 0
        %3989 = vmatpush1.bf16.msra.mxu0 0
        %3990 = vmatprep.subr.bf16.mxu0 0
        %3991 = vmatpush1.bf16.msra.mxu0 0
        %3992 = vmatprep.subr.bf16.mxu0 0
        %3993 = vmatpush1.bf16.msra.mxu0 %v3967
        %3994 = vmatprep.subr.bf16.mxu0 0
        %3995 = vmatpush1.bf16.msra.mxu0 %v3966
        %3996 = vmatprep.subr.bf16.mxu0 0
        %3997 = vmatpush1.bf16.msra.mxu0 %v3965
        %3998 = vmatprep.subr.bf16.mxu0 0
        %3999 = vmatpush1.bf16.msra.mxu0 %v3964
        %4000 = vmatprep.subr.bf16.mxu0 0
        %4001 = vmatpush2.bf16.msra.mxu0 0
        %4002 = vmatprep.subr.bf16.mxu0 0
        %4003 = vmatpush2.bf16.msra.mxu0 0
        %4004 = vmatprep.subr.bf16.mxu0 0
        %4005 = vmatpush2.bf16.msra.mxu0 0
        %4006 = vmatprep.subr.bf16.mxu0 0
        %4007 = vmatpush2.bf16.msra.mxu0 0
        %4008 = vmatprep.subr.bf16.mxu0 0
        %4009 = vmatpush2.bf16.msra.mxu0 0
        %4010 = vmatprep.subr.bf16.mxu0 0
        %4011 = vmatpush2.bf16.msra.mxu0 0
        %4012 = vmatprep.subr.bf16.mxu0 0
        %4013 = vmatpush2.bf16.msra.mxu0 0
        %4014 = vmatprep.subr.bf16.mxu0 0
        %4015 = vmatpush2.bf16.msra.mxu0 0
        %4016 = vmatprep.mubr.bf16.mxu0 0
        %4017 = vmatmul.mubr.bf16.gmra.mxu0 %v3973
        %v4018 = vpop.f32.mrf.mxu0
        %v4019 = vadd.f32 0.0, %v4018
        %v4020 = vpop.f32.mrf.mxu0
        %v4021 = vpop.f32.mrf.mxu0
        %v4022 = vadd.f32 0.0, %v4021
        %v4023 = vpop.f32.mrf.mxu0
        %4024 = vmatprep.mubr.bf16.mxu0 0
        %4025 = vmatmul.mubr.bf16.gmra.mxu0 %v3976
        %v4026 = vpop.f32.mrf.mxu0
        %v4027 = vadd.f32 0.0, %v4026
        %v4028 = vpop.f32.mrf.mxu0
        %v4029 = vpop.f32.mrf.mxu0
        %v4030 = vadd.f32 0.0, %v4029
        %v4031 = vpop.f32.mrf.mxu0
        %4032 = vmatprep.mubr.bf16.mxu0 0
        %4033 = vmatmul.mubr.bf16.gmra.mxu0 %v3979
        %v4034 = vpop.f32.mrf.mxu0
        %v4035 = vadd.f32 0.0, %v4034
        %v4036 = vpop.f32.mrf.mxu0
        %v4037 = vpop.f32.mrf.mxu0
        %v4038 = vadd.f32 0.0, %v4037
        %v4039 = vpop.f32.mrf.mxu0
        %4040 = vmatprep.mubr.bf16.mxu0 0
        %4041 = vmatmul.mubr.bf16.gmra.mxu0 %v3982
        %v4042 = vpop.f32.mrf.mxu0
        %v4043 = vadd.f32 0.0, %v4042
        %v4044 = vpop.f32.mrf.mxu0
        %v4045 = vpop.f32.mrf.mxu0
        %v4046 = vadd.f32 0.0, %v4045
        %v4047 = vpop.f32.mrf.mxu0
        %4048 = vdwg.mxu0
        %v4049 = vpack.c.bf16 %v4022, %v4019
        %v4050 = vpack.c.bf16 %v4030, %v4027
        %v4051 = vpack.c.bf16 %v4038, %v4035
        %v4052 = vpack.c.bf16 %v4046, %v4043
        %4057 = vrot.lane.b32.xlu0 %v3743, 96
        %v4058 = vpop.permute.xlu0 %4057
        %4059 = vrot.lane.b32.xlu0 %v3744, 96
        %v4060 = vpop.permute.xlu0 %4059
        %4061 = vrot.lane.b32.xlu0 %v3745, 96
        %v4062 = vpop.permute.xlu0 %4061
        %4063 = vrot.lane.b32.xlu0 %v3746, 96
        %v4064 = vpop.permute.xlu0 %4063
        %4065 = vrot.lane.b32.xlu0 %v3763, 96
        %v4066 = vpop.permute.xlu0 %4065
        %4067 = vrot.lane.b32.xlu0 %v3764, 96
        %v4068 = vpop.permute.xlu0 %4067
        %4069 = vrot.lane.b32.xlu0 %v3765, 96
        %v4070 = vpop.permute.xlu0 %4069
        %4071 = vrot.lane.b32.xlu0 %v3766, 96
        %v4072 = vpop.permute.xlu0 %4071
        %v4074 = vsel %vm2172, %v4058, 0
        %v4077 = vsel %vm2172, %v4060, 0
        %v4080 = vsel %vm2172, %v4062, 0
        %v4083 = vsel %vm2172, %v4064, 0
        %v4086 = vsel %vm2172, %v4066, 0
        %v4089 = vsel %vm2172, %v4068, 0
        %v4092 = vsel %vm2172, %v4070, 0
        %v4095 = vsel %vm2172, %v4072, 0
        %4097 = vmatprep.subr.bf16.mxu0 0
        %4098 = vmatpush1.bf16.xpose.msra.mxu0 0
        %4099 = vmatprep.subr.bf16.mxu0 0
        %4100 = vmatpush1.bf16.xpose.msra.mxu0 0
        %4101 = vmatprep.subr.bf16.mxu0 0
        %4102 = vmatpush1.bf16.xpose.msra.mxu0 0
        %4103 = vmatprep.subr.bf16.mxu0 0
        %4104 = vmatpush1.bf16.xpose.msra.mxu0 0
        %4105 = vmatprep.subr.bf16.mxu0 0
        %4106 = vmatpush1.bf16.xpose.msra.mxu0 %v4095
        %4107 = vmatprep.subr.bf16.mxu0 0
        %4108 = vmatpush1.bf16.xpose.msra.mxu0 %v4092
        %4109 = vmatprep.subr.bf16.mxu0 0
        %4110 = vmatpush1.bf16.xpose.msra.mxu0 %v4089
        %4111 = vmatprep.subr.bf16.mxu0 0
        %4112 = vmatpush1.bf16.xpose.msra.mxu0 %v4086
        %4113 = vmatprep.subr.bf16.mxu0 0
        %4114 = vmatpush2.bf16.xpose.msra.mxu0 0
        %4115 = vmatprep.subr.bf16.mxu0 0
        %4116 = vmatpush2.bf16.xpose.msra.mxu0 0
        %4117 = vmatprep.subr.bf16.mxu0 0
        %4118 = vmatpush2.bf16.xpose.msra.mxu0 0
        %4119 = vmatprep.subr.bf16.mxu0 0
        %4120 = vmatpush2.bf16.xpose.msra.mxu0 0
        %4121 = vmatprep.subr.bf16.mxu0 0
        %4122 = vmatpush2.bf16.xpose.msra.mxu0 0
        %4123 = vmatprep.subr.bf16.mxu0 0
        %4124 = vmatpush2.bf16.xpose.msra.mxu0 0
        %4125 = vmatprep.subr.bf16.mxu0 0
        %4126 = vmatpush2.bf16.xpose.msra.mxu0 0
        %4127 = vmatprep.subr.bf16.mxu0 0
        %4128 = vmatpush2.bf16.xpose.msra.mxu0 0
        %4129 = vmatprep.mubr.bf16.mxu0 0
        %4130 = vmatmul.mubr.bf16.gmra.mxu0 %v4074
        %v4131 = vpop.f32.mrf.mxu0
        %v4132 = vadd.f32 0.0, %v4131
        %v4133 = vpop.f32.mrf.mxu0
        %v4134 = vpop.f32.mrf.mxu0
        %v4135 = vadd.f32 0.0, %v4134
        %v4136 = vpop.f32.mrf.mxu0
        %4137 = vmatprep.mubr.bf16.mxu0 0
        %4138 = vmatmul.mubr.bf16.gmra.mxu0 %v4077
        %v4139 = vpop.f32.mrf.mxu0
        %v4140 = vadd.f32 0.0, %v4139
        %v4141 = vpop.f32.mrf.mxu0
        %v4142 = vpop.f32.mrf.mxu0
        %v4143 = vadd.f32 0.0, %v4142
        %v4144 = vpop.f32.mrf.mxu0
        %4145 = vmatprep.mubr.bf16.mxu0 0
        %4146 = vmatmul.mubr.bf16.gmra.mxu0 %v4080
        %v4147 = vpop.f32.mrf.mxu0
        %v4148 = vadd.f32 0.0, %v4147
        %v4149 = vpop.f32.mrf.mxu0
        %v4150 = vpop.f32.mrf.mxu0
        %v4151 = vadd.f32 0.0, %v4150
        %v4152 = vpop.f32.mrf.mxu0
        %4153 = vmatprep.mubr.bf16.mxu0 0
        %4154 = vmatmul.mubr.bf16.gmra.mxu0 %v4083
        %v4155 = vpop.f32.mrf.mxu0
        %v4156 = vadd.f32 0.0, %v4155
        %v4157 = vpop.f32.mrf.mxu0
        %v4158 = vpop.f32.mrf.mxu0
        %v4159 = vadd.f32 0.0, %v4158
        %v4160 = vpop.f32.mrf.mxu0
        %4161 = vdwg.mxu0
        %v4162 = vsel %vm3401, %v4132, -inf
        %4163 = vmax.xlane.f32.xlu0 %v4162
        %v4164 = vpop.xlane.xlu0 %4163
        %v4165 = vsel %vm3401, %v4135, -inf
        %4166 = vmax.xlane.f32.xlu0 %v4165
        %v4167 = vpop.xlane.xlu0 %4166
        %v4168 = vsel %vm3401, %v4140, -inf
        %4169 = vmax.xlane.f32.xlu0 %v4168
        %v4170 = vpop.xlane.xlu0 %4169
        %v4171 = vsel %vm3401, %v4143, -inf
        %4172 = vmax.xlane.f32.xlu0 %v4171
        %v4173 = vpop.xlane.xlu0 %4172
        %v4174 = vsel %vm3401, %v4148, -inf
        %4175 = vmax.xlane.f32.xlu0 %v4174
        %v4176 = vpop.xlane.xlu0 %4175
        %v4177 = vsel %vm3401, %v4151, -inf
        %4178 = vmax.xlane.f32.xlu0 %v4177
        %v4179 = vpop.xlane.xlu0 %4178
        %v4180 = vsel %vm3401, %v4156, -inf
        %4181 = vmax.xlane.f32.xlu0 %v4180
        %v4182 = vpop.xlane.xlu0 %4181
        %v4183 = vsel %vm3401, %v4159, -inf
        %4184 = vmax.xlane.f32.xlu0 %v4183
        %v4185 = vpop.xlane.xlu0 %4184
        %v4186 = vsub.f32 %v4132, %v4164
        %v4187 = vsub.f32 %v4135, %v4167
        %v4188 = vsub.f32 %v4140, %v4170
        %v4189 = vsub.f32 %v4143, %v4173
        %v4190 = vsub.f32 %v4148, %v4176
        %v4191 = vsub.f32 %v4151, %v4179
        %v4192 = vsub.f32 %v4156, %v4182
        %v4193 = vsub.f32 %v4159, %v4185
        %v4194 = vmul.f32 %v4186, 1.442695
        %v4195 = vpow.pop %v4194
        %v4196 = vmul.f32 %v4187, 1.442695
        %v4197 = vpow.pop %v4196
        %v4198 = vmul.f32 %v4188, 1.442695
        %v4199 = vpow.pop %v4198
        %v4200 = vmul.f32 %v4189, 1.442695
        %v4201 = vpow.pop %v4200
        %v4202 = vmul.f32 %v4190, 1.442695
        %v4203 = vpow.pop %v4202
        %v4204 = vmul.f32 %v4191, 1.442695
        %v4205 = vpow.pop %v4204
        %v4206 = vmul.f32 %v4192, 1.442695
        %v4207 = vpow.pop %v4206
        %v4208 = vmul.f32 %v4193, 1.442695
        %v4209 = vpow.pop %v4208
        %v4210 = vsel %vm3401, %v4195, 0.0
        %4211 = vadd.xlane.f32.xlu0 %v4210
        %v4212 = vpop.xlane.xlu0 %4211
        %v4213 = vsel %vm3401, %v4197, 0.0
        %4214 = vadd.xlane.f32.xlu0 %v4213
        %v4215 = vpop.xlane.xlu0 %4214
        %v4216 = vsel %vm3401, %v4199, 0.0
        %4217 = vadd.xlane.f32.xlu0 %v4216
        %v4218 = vpop.xlane.xlu0 %4217
        %v4219 = vsel %vm3401, %v4201, 0.0
        %4220 = vadd.xlane.f32.xlu0 %v4219
        %v4221 = vpop.xlane.xlu0 %4220
        %v4222 = vsel %vm3401, %v4203, 0.0
        %4223 = vadd.xlane.f32.xlu0 %v4222
        %v4224 = vpop.xlane.xlu0 %4223
        %v4225 = vsel %vm3401, %v4205, 0.0
        %4226 = vadd.xlane.f32.xlu0 %v4225
        %v4227 = vpop.xlane.xlu0 %4226
        %v4228 = vsel %vm3401, %v4207, 0.0
        %4229 = vadd.xlane.f32.xlu0 %v4228
        %v4230 = vpop.xlane.xlu0 %4229
        %v4231 = vsel %vm3401, %v4209, 0.0
        %4232 = vadd.xlane.f32.xlu0 %v4231
        %v4233 = vpop.xlane.xlu0 %4232
        %v4234 = vrcp.pop %v4212
        %v4235 = vrcp.pop %v4215
        %v4236 = vrcp.pop %v4218
        %v4237 = vrcp.pop %v4221
        %v4238 = vrcp.pop %v4224
        %v4239 = vrcp.pop %v4227
        %v4240 = vrcp.pop %v4230
        %v4241 = vrcp.pop %v4233
        %v4242 = vmul.f32 %v4195, %v4234
        %v4243 = vmul.f32 %v4197, %v4235
        %v4244 = vmul.f32 %v4199, %v4236
        %v4245 = vmul.f32 %v4201, %v4237
        %v4246 = vmul.f32 %v4203, %v4238
        %v4247 = vmul.f32 %v4205, %v4239
        %v4248 = vmul.f32 %v4207, %v4240
        %v4249 = vmul.f32 %v4209, %v4241
        %v4250 = vpack.c.bf16 %v4243, %v4242
        %v4251 = vpack.c.bf16 %v4245, %v4244
        %v4252 = vpack.c.bf16 %v4247, %v4246
        %v4253 = vpack.c.bf16 %v4249, %v4248
        %4254 = vrot.lane.b32.xlu0 %v3964, 96
        %v4255 = vpop.permute.xlu0 %4254
        %4256 = vrot.lane.b32.xlu0 %v3965, 96
        %v4257 = vpop.permute.xlu0 %4256
        %4258 = vrot.lane.b32.xlu0 %v3966, 96
        %v4259 = vpop.permute.xlu0 %4258
        %4260 = vrot.lane.b32.xlu0 %v3967, 96
        %v4261 = vpop.permute.xlu0 %4260
        %v4267 = vsel %vm3401, %v4250, 0
        %v4270 = vsel %vm3401, %v4251, 0
        %v4273 = vsel %vm3401, %v4252, 0
        %v4276 = vsel %vm3401, %v4253, 0
        %4278 = vmatprep.subr.bf16.mxu0 0
        %4279 = vmatpush1.bf16.msra.mxu0 0
        %4280 = vmatprep.subr.bf16.mxu0 0
        %4281 = vmatpush1.bf16.msra.mxu0 0
        %4282 = vmatprep.subr.bf16.mxu0 0
        %4283 = vmatpush1.bf16.msra.mxu0 0
        %4284 = vmatprep.subr.bf16.mxu0 0
        %4285 = vmatpush1.bf16.msra.mxu0 0
        %4286 = vmatprep.subr.bf16.mxu0 0
        %4287 = vmatpush1.bf16.msra.mxu0 %v4261
        %4288 = vmatprep.subr.bf16.mxu0 0
        %4289 = vmatpush1.bf16.msra.mxu0 %v4259
        %4290 = vmatprep.subr.bf16.mxu0 0
        %4291 = vmatpush1.bf16.msra.mxu0 %v4257
        %4292 = vmatprep.subr.bf16.mxu0 0
        %4293 = vmatpush1.bf16.msra.mxu0 %v4255
        %4294 = vmatprep.subr.bf16.mxu0 0
        %4295 = vmatpush2.bf16.msra.mxu0 0
        %4296 = vmatprep.subr.bf16.mxu0 0
        %4297 = vmatpush2.bf16.msra.mxu0 0
        %4298 = vmatprep.subr.bf16.mxu0 0
        %4299 = vmatpush2.bf16.msra.mxu0 0
        %4300 = vmatprep.subr.bf16.mxu0 0
        %4301 = vmatpush2.bf16.msra.mxu0 0
        %4302 = vmatprep.subr.bf16.mxu0 0
        %4303 = vmatpush2.bf16.msra.mxu0 0
        %4304 = vmatprep.subr.bf16.mxu0 0
        %4305 = vmatpush2.bf16.msra.mxu0 0
        %4306 = vmatprep.subr.bf16.mxu0 0
        %4307 = vmatpush2.bf16.msra.mxu0 0
        %4308 = vmatprep.subr.bf16.mxu0 0
        %4309 = vmatpush2.bf16.msra.mxu0 0
        %4310 = vmatprep.mubr.bf16.mxu0 0
        %4311 = vmatmul.mubr.bf16.gmra.mxu0 %v4267
        %v4312 = vpop.f32.mrf.mxu0
        %v4313 = vadd.f32 0.0, %v4312
        %v4314 = vpop.f32.mrf.mxu0
        %v4315 = vpop.f32.mrf.mxu0
        %v4316 = vadd.f32 0.0, %v4315
        %v4317 = vpop.f32.mrf.mxu0
        %4318 = vmatprep.mubr.bf16.mxu0 0
        %4319 = vmatmul.mubr.bf16.gmra.mxu0 %v4270
        %v4320 = vpop.f32.mrf.mxu0
        %v4321 = vadd.f32 0.0, %v4320
        %v4322 = vpop.f32.mrf.mxu0
        %v4323 = vpop.f32.mrf.mxu0
        %v4324 = vadd.f32 0.0, %v4323
        %v4325 = vpop.f32.mrf.mxu0
        %4326 = vmatprep.mubr.bf16.mxu0 0
        %4327 = vmatmul.mubr.bf16.gmra.mxu0 %v4273
        %v4328 = vpop.f32.mrf.mxu0
        %v4329 = vadd.f32 0.0, %v4328
        %v4330 = vpop.f32.mrf.mxu0
        %v4331 = vpop.f32.mrf.mxu0
        %v4332 = vadd.f32 0.0, %v4331
        %v4333 = vpop.f32.mrf.mxu0
        %4334 = vmatprep.mubr.bf16.mxu0 0
        %4335 = vmatmul.mubr.bf16.gmra.mxu0 %v4276
        %v4336 = vpop.f32.mrf.mxu0
        %v4337 = vadd.f32 0.0, %v4336
        %v4338 = vpop.f32.mrf.mxu0
        %v4339 = vpop.f32.mrf.mxu0
        %v4340 = vadd.f32 0.0, %v4339
        %v4341 = vpop.f32.mrf.mxu0
        %4342 = vdwg.mxu0
        %v4343 = vpack.c.bf16 %v4316, %v4313
        %v4344 = vpack.c.bf16 %v4324, %v4321
        %v4345 = vpack.c.bf16 %v4332, %v4329
        %v4346 = vpack.c.bf16 %v4340, %v4337
        %4347 = vrot.lane.b32.xlu0 %v3743, 64
        %v4348 = vpop.permute.xlu0 %4347
        %4349 = vrot.lane.b32.xlu0 %v3744, 64
        %v4350 = vpop.permute.xlu0 %4349
        %4351 = vrot.lane.b32.xlu0 %v3745, 64
        %v4352 = vpop.permute.xlu0 %4351
        %4353 = vrot.lane.b32.xlu0 %v3746, 64
        %v4354 = vpop.permute.xlu0 %4353
        %4355 = vrot.lane.b32.xlu0 %v3763, 64
        %v4356 = vpop.permute.xlu0 %4355
        %4357 = vrot.lane.b32.xlu0 %v3764, 64
        %v4358 = vpop.permute.xlu0 %4357
        %4359 = vrot.lane.b32.xlu0 %v3765, 64
        %v4360 = vpop.permute.xlu0 %4359
        %4361 = vrot.lane.b32.xlu0 %v3766, 64
        %v4362 = vpop.permute.xlu0 %4361
        %v4364 = vsel %vm2172, %v4348, 0
        %v4367 = vsel %vm2172, %v4350, 0
        %v4370 = vsel %vm2172, %v4352, 0
        %v4373 = vsel %vm2172, %v4354, 0
        %v4376 = vsel %vm2172, %v4356, 0
        %v4379 = vsel %vm2172, %v4358, 0
        %v4382 = vsel %vm2172, %v4360, 0
        %v4385 = vsel %vm2172, %v4362, 0
        %4387 = vmatprep.subr.bf16.mxu0 0
        %4388 = vmatpush1.bf16.xpose.msra.mxu0 0
        %4389 = vmatprep.subr.bf16.mxu0 0
        %4390 = vmatpush1.bf16.xpose.msra.mxu0 0
        %4391 = vmatprep.subr.bf16.mxu0 0
        %4392 = vmatpush1.bf16.xpose.msra.mxu0 0
        %4393 = vmatprep.subr.bf16.mxu0 0
        %4394 = vmatpush1.bf16.xpose.msra.mxu0 0
        %4395 = vmatprep.subr.bf16.mxu0 0
        %4396 = vmatpush1.bf16.xpose.msra.mxu0 %v4385
        %4397 = vmatprep.subr.bf16.mxu0 0
        %4398 = vmatpush1.bf16.xpose.msra.mxu0 %v4382
        %4399 = vmatprep.subr.bf16.mxu0 0
        %4400 = vmatpush1.bf16.xpose.msra.mxu0 %v4379
        %4401 = vmatprep.subr.bf16.mxu0 0
        %4402 = vmatpush1.bf16.xpose.msra.mxu0 %v4376
        %4403 = vmatprep.subr.bf16.mxu0 0
        %4404 = vmatpush2.bf16.xpose.msra.mxu0 0
        %4405 = vmatprep.subr.bf16.mxu0 0
        %4406 = vmatpush2.bf16.xpose.msra.mxu0 0
        %4407 = vmatprep.subr.bf16.mxu0 0
        %4408 = vmatpush2.bf16.xpose.msra.mxu0 0
        %4409 = vmatprep.subr.bf16.mxu0 0
        %4410 = vmatpush2.bf16.xpose.msra.mxu0 0
        %4411 = vmatprep.subr.bf16.mxu0 0
        %4412 = vmatpush2.bf16.xpose.msra.mxu0 0
        %4413 = vmatprep.subr.bf16.mxu0 0
        %4414 = vmatpush2.bf16.xpose.msra.mxu0 0
        %4415 = vmatprep.subr.bf16.mxu0 0
        %4416 = vmatpush2.bf16.xpose.msra.mxu0 0
        %4417 = vmatprep.subr.bf16.mxu0 0
        %4418 = vmatpush2.bf16.xpose.msra.mxu0 0
        %4419 = vmatprep.mubr.bf16.mxu0 0
        %4420 = vmatmul.mubr.bf16.gmra.mxu0 %v4364
        %v4421 = vpop.f32.mrf.mxu0
        %v4422 = vadd.f32 0.0, %v4421
        %v4423 = vpop.f32.mrf.mxu0
        %v4424 = vpop.f32.mrf.mxu0
        %v4425 = vadd.f32 0.0, %v4424
        %v4426 = vpop.f32.mrf.mxu0
        %4427 = vmatprep.mubr.bf16.mxu0 0
        %4428 = vmatmul.mubr.bf16.gmra.mxu0 %v4367
        %v4429 = vpop.f32.mrf.mxu0
        %v4430 = vadd.f32 0.0, %v4429
        %v4431 = vpop.f32.mrf.mxu0
        %v4432 = vpop.f32.mrf.mxu0
        %v4433 = vadd.f32 0.0, %v4432
        %v4434 = vpop.f32.mrf.mxu0
        %4435 = vmatprep.mubr.bf16.mxu0 0
        %4436 = vmatmul.mubr.bf16.gmra.mxu0 %v4370
        %v4437 = vpop.f32.mrf.mxu0
        %v4438 = vadd.f32 0.0, %v4437
        %v4439 = vpop.f32.mrf.mxu0
        %v4440 = vpop.f32.mrf.mxu0
        %v4441 = vadd.f32 0.0, %v4440
        %v4442 = vpop.f32.mrf.mxu0
        %4443 = vmatprep.mubr.bf16.mxu0 0
        %4444 = vmatmul.mubr.bf16.gmra.mxu0 %v4373
        %v4445 = vpop.f32.mrf.mxu0
        %v4446 = vadd.f32 0.0, %v4445
        %v4447 = vpop.f32.mrf.mxu0
        %v4448 = vpop.f32.mrf.mxu0
        %v4449 = vadd.f32 0.0, %v4448
        %v4450 = vpop.f32.mrf.mxu0
        %4451 = vdwg.mxu0
        %v4452 = vsel %vm3401, %v4422, -inf
        %4453 = vmax.xlane.f32.xlu0 %v4452
        %v4454 = vpop.xlane.xlu0 %4453
        %v4455 = vsel %vm3401, %v4425, -inf
        %4456 = vmax.xlane.f32.xlu0 %v4455
        %v4457 = vpop.xlane.xlu0 %4456
        %v4458 = vsel %vm3401, %v4430, -inf
        %4459 = vmax.xlane.f32.xlu0 %v4458
        %v4460 = vpop.xlane.xlu0 %4459
        %v4461 = vsel %vm3401, %v4433, -inf
        %4462 = vmax.xlane.f32.xlu0 %v4461
        %v4463 = vpop.xlane.xlu0 %4462
        %v4464 = vsel %vm3401, %v4438, -inf
        %4465 = vmax.xlane.f32.xlu0 %v4464
        %v4466 = vpop.xlane.xlu0 %4465
        %v4467 = vsel %vm3401, %v4441, -inf
        %4468 = vmax.xlane.f32.xlu0 %v4467
        %v4469 = vpop.xlane.xlu0 %4468
        %v4470 = vsel %vm3401, %v4446, -inf
        %4471 = vmax.xlane.f32.xlu0 %v4470
        %v4472 = vpop.xlane.xlu0 %4471
        %v4473 = vsel %vm3401, %v4449, -inf
        %4474 = vmax.xlane.f32.xlu0 %v4473
        %v4475 = vpop.xlane.xlu0 %4474
        %v4476 = vsub.f32 %v4422, %v4454
        %v4477 = vsub.f32 %v4425, %v4457
        %v4478 = vsub.f32 %v4430, %v4460
        %v4479 = vsub.f32 %v4433, %v4463
        %v4480 = vsub.f32 %v4438, %v4466
        %v4481 = vsub.f32 %v4441, %v4469
        %v4482 = vsub.f32 %v4446, %v4472
        %v4483 = vsub.f32 %v4449, %v4475
        %v4484 = vmul.f32 %v4476, 1.442695
        %v4485 = vpow.pop %v4484
        %v4486 = vmul.f32 %v4477, 1.442695
        %v4487 = vpow.pop %v4486
        %v4488 = vmul.f32 %v4478, 1.442695
        %v4489 = vpow.pop %v4488
        %v4490 = vmul.f32 %v4479, 1.442695
        %v4491 = vpow.pop %v4490
        %v4492 = vmul.f32 %v4480, 1.442695
        %v4493 = vpow.pop %v4492
        %v4494 = vmul.f32 %v4481, 1.442695
        %v4495 = vpow.pop %v4494
        %v4496 = vmul.f32 %v4482, 1.442695
        %v4497 = vpow.pop %v4496
        %v4498 = vmul.f32 %v4483, 1.442695
        %v4499 = vpow.pop %v4498
        %v4500 = vsel %vm3401, %v4485, 0.0
        %4501 = vadd.xlane.f32.xlu0 %v4500
        %v4502 = vpop.xlane.xlu0 %4501
        %v4503 = vsel %vm3401, %v4487, 0.0
        %4504 = vadd.xlane.f32.xlu0 %v4503
        %v4505 = vpop.xlane.xlu0 %4504
        %v4506 = vsel %vm3401, %v4489, 0.0
        %4507 = vadd.xlane.f32.xlu0 %v4506
        %v4508 = vpop.xlane.xlu0 %4507
        %v4509 = vsel %vm3401, %v4491, 0.0
        %4510 = vadd.xlane.f32.xlu0 %v4509
        %v4511 = vpop.xlane.xlu0 %4510
        %v4512 = vsel %vm3401, %v4493, 0.0
        %4513 = vadd.xlane.f32.xlu0 %v4512
        %v4514 = vpop.xlane.xlu0 %4513
        %v4515 = vsel %vm3401, %v4495, 0.0
        %4516 = vadd.xlane.f32.xlu0 %v4515
        %v4517 = vpop.xlane.xlu0 %4516
        %v4518 = vsel %vm3401, %v4497, 0.0
        %4519 = vadd.xlane.f32.xlu0 %v4518
        %v4520 = vpop.xlane.xlu0 %4519
        %v4521 = vsel %vm3401, %v4499, 0.0
        %4522 = vadd.xlane.f32.xlu0 %v4521
        %v4523 = vpop.xlane.xlu0 %4522
        %v4524 = vrcp.pop %v4502
        %v4525 = vrcp.pop %v4505
        %v4526 = vrcp.pop %v4508
        %v4527 = vrcp.pop %v4511
        %v4528 = vrcp.pop %v4514
        %v4529 = vrcp.pop %v4517
        %v4530 = vrcp.pop %v4520
        %v4531 = vrcp.pop %v4523
        %v4532 = vmul.f32 %v4485, %v4524
        %v4533 = vmul.f32 %v4487, %v4525
        %v4534 = vmul.f32 %v4489, %v4526
        %v4535 = vmul.f32 %v4491, %v4527
        %v4536 = vmul.f32 %v4493, %v4528
        %v4537 = vmul.f32 %v4495, %v4529
        %v4538 = vmul.f32 %v4497, %v4530
        %v4539 = vmul.f32 %v4499, %v4531
        %v4540 = vpack.c.bf16 %v4533, %v4532
        %v4541 = vpack.c.bf16 %v4535, %v4534
        %v4542 = vpack.c.bf16 %v4537, %v4536
        %v4543 = vpack.c.bf16 %v4539, %v4538
        %4544 = vrot.lane.b32.xlu0 %v3964, 64
        %v4545 = vpop.permute.xlu0 %4544
        %4546 = vrot.lane.b32.xlu0 %v3965, 64
        %v4547 = vpop.permute.xlu0 %4546
        %4548 = vrot.lane.b32.xlu0 %v3966, 64
        %v4549 = vpop.permute.xlu0 %4548
        %4550 = vrot.lane.b32.xlu0 %v3967, 64
        %v4551 = vpop.permute.xlu0 %4550
        %v4557 = vsel %vm3401, %v4540, 0
        %v4560 = vsel %vm3401, %v4541, 0
        %v4563 = vsel %vm3401, %v4542, 0
        %v4566 = vsel %vm3401, %v4543, 0
        %4568 = vmatprep.subr.bf16.mxu0 0
        %4569 = vmatpush1.bf16.msra.mxu0 0
        %4570 = vmatprep.subr.bf16.mxu0 0
        %4571 = vmatpush1.bf16.msra.mxu0 0
        %4572 = vmatprep.subr.bf16.mxu0 0
        %4573 = vmatpush1.bf16.msra.mxu0 0
        %4574 = vmatprep.subr.bf16.mxu0 0
        %4575 = vmatpush1.bf16.msra.mxu0 0
        %4576 = vmatprep.subr.bf16.mxu0 0
        %4577 = vmatpush1.bf16.msra.mxu0 %v4551
        %4578 = vmatprep.subr.bf16.mxu0 0
        %4579 = vmatpush1.bf16.msra.mxu0 %v4549
        %4580 = vmatprep.subr.bf16.mxu0 0
        %4581 = vmatpush1.bf16.msra.mxu0 %v4547
        %4582 = vmatprep.subr.bf16.mxu0 0
        %4583 = vmatpush1.bf16.msra.mxu0 %v4545
        %4584 = vmatprep.subr.bf16.mxu0 0
        %4585 = vmatpush2.bf16.msra.mxu0 0
        %4586 = vmatprep.subr.bf16.mxu0 0
        %4587 = vmatpush2.bf16.msra.mxu0 0
        %4588 = vmatprep.subr.bf16.mxu0 0
        %4589 = vmatpush2.bf16.msra.mxu0 0
        %4590 = vmatprep.subr.bf16.mxu0 0
        %4591 = vmatpush2.bf16.msra.mxu0 0
        %4592 = vmatprep.subr.bf16.mxu0 0
        %4593 = vmatpush2.bf16.msra.mxu0 0
        %4594 = vmatprep.subr.bf16.mxu0 0
        %4595 = vmatpush2.bf16.msra.mxu0 0
        %4596 = vmatprep.subr.bf16.mxu0 0
        %4597 = vmatpush2.bf16.msra.mxu0 0
        %4598 = vmatprep.subr.bf16.mxu0 0
        %4599 = vmatpush2.bf16.msra.mxu0 0
        %4600 = vmatprep.mubr.bf16.mxu0 0
        %4601 = vmatmul.mubr.bf16.gmra.mxu0 %v4557
        %v4602 = vpop.f32.mrf.mxu0
        %v4603 = vadd.f32 0.0, %v4602
        %v4604 = vpop.f32.mrf.mxu0
        %v4605 = vpop.f32.mrf.mxu0
        %v4606 = vadd.f32 0.0, %v4605
        %v4607 = vpop.f32.mrf.mxu0
        %4608 = vmatprep.mubr.bf16.mxu0 0
        %4609 = vmatmul.mubr.bf16.gmra.mxu0 %v4560
        %v4610 = vpop.f32.mrf.mxu0
        %v4611 = vadd.f32 0.0, %v4610
        %v4612 = vpop.f32.mrf.mxu0
        %v4613 = vpop.f32.mrf.mxu0
        %v4614 = vadd.f32 0.0, %v4613
        %v4615 = vpop.f32.mrf.mxu0
        %4616 = vmatprep.mubr.bf16.mxu0 0
        %4617 = vmatmul.mubr.bf16.gmra.mxu0 %v4563
        %v4618 = vpop.f32.mrf.mxu0
        %v4619 = vadd.f32 0.0, %v4618
        %v4620 = vpop.f32.mrf.mxu0
        %v4621 = vpop.f32.mrf.mxu0
        %v4622 = vadd.f32 0.0, %v4621
        %v4623 = vpop.f32.mrf.mxu0
        %4624 = vmatprep.mubr.bf16.mxu0 0
        %4625 = vmatmul.mubr.bf16.gmra.mxu0 %v4566
        %v4626 = vpop.f32.mrf.mxu0
        %v4627 = vadd.f32 0.0, %v4626
        %v4628 = vpop.f32.mrf.mxu0
        %v4629 = vpop.f32.mrf.mxu0
        %v4630 = vadd.f32 0.0, %v4629
        %v4631 = vpop.f32.mrf.mxu0
        %4632 = vdwg.mxu0
        %v4633 = vpack.c.bf16 %v4606, %v4603
        %v4634 = vpack.c.bf16 %v4614, %v4611
        %v4635 = vpack.c.bf16 %v4622, %v4619
        %v4636 = vpack.c.bf16 %v4630, %v4627
        %4637 = vrot.lane.b32.xlu0 %v3743, 32
        %v4638 = vpop.permute.xlu0 %4637
        %4639 = vrot.lane.b32.xlu0 %v3744, 32
        %v4640 = vpop.permute.xlu0 %4639
        %4641 = vrot.lane.b32.xlu0 %v3745, 32
        %v4642 = vpop.permute.xlu0 %4641
        %4643 = vrot.lane.b32.xlu0 %v3746, 32
        %v4644 = vpop.permute.xlu0 %4643
        %4645 = vrot.lane.b32.xlu0 %v3763, 32
        %v4646 = vpop.permute.xlu0 %4645
        %4647 = vrot.lane.b32.xlu0 %v3764, 32
        %v4648 = vpop.permute.xlu0 %4647
        %4649 = vrot.lane.b32.xlu0 %v3765, 32
        %v4650 = vpop.permute.xlu0 %4649
        %4651 = vrot.lane.b32.xlu0 %v3766, 32
        %v4652 = vpop.permute.xlu0 %4651
        %v4654 = vsel %vm2172, %v4638, 0
        %v4657 = vsel %vm2172, %v4640, 0
        %v4660 = vsel %vm2172, %v4642, 0
        %v4663 = vsel %vm2172, %v4644, 0
        %v4666 = vsel %vm2172, %v4646, 0
        %v4669 = vsel %vm2172, %v4648, 0
        %v4672 = vsel %vm2172, %v4650, 0
        %v4675 = vsel %vm2172, %v4652, 0
        %4677 = vmatprep.subr.bf16.mxu0 0
        %4678 = vmatpush1.bf16.xpose.msra.mxu0 0
        %4679 = vmatprep.subr.bf16.mxu0 0
        %4680 = vmatpush1.bf16.xpose.msra.mxu0 0
        %4681 = vmatprep.subr.bf16.mxu0 0
        %4682 = vmatpush1.bf16.xpose.msra.mxu0 0
        %4683 = vmatprep.subr.bf16.mxu0 0
        %4684 = vmatpush1.bf16.xpose.msra.mxu0 0
        %4685 = vmatprep.subr.bf16.mxu0 0
        %4686 = vmatpush1.bf16.xpose.msra.mxu0 %v4675
        %4687 = vmatprep.subr.bf16.mxu0 0
        %4688 = vmatpush1.bf16.xpose.msra.mxu0 %v4672
        %4689 = vmatprep.subr.bf16.mxu0 0
        %4690 = vmatpush1.bf16.xpose.msra.mxu0 %v4669
        %4691 = vmatprep.subr.bf16.mxu0 0
        %4692 = vmatpush1.bf16.xpose.msra.mxu0 %v4666
        %4693 = vmatprep.subr.bf16.mxu0 0
        %4694 = vmatpush2.bf16.xpose.msra.mxu0 0
        %4695 = vmatprep.subr.bf16.mxu0 0
        %4696 = vmatpush2.bf16.xpose.msra.mxu0 0
        %4697 = vmatprep.subr.bf16.mxu0 0
        %4698 = vmatpush2.bf16.xpose.msra.mxu0 0
        %4699 = vmatprep.subr.bf16.mxu0 0
        %4700 = vmatpush2.bf16.xpose.msra.mxu0 0
        %4701 = vmatprep.subr.bf16.mxu0 0
        %4702 = vmatpush2.bf16.xpose.msra.mxu0 0
        %4703 = vmatprep.subr.bf16.mxu0 0
        %4704 = vmatpush2.bf16.xpose.msra.mxu0 0
        %4705 = vmatprep.subr.bf16.mxu0 0
        %4706 = vmatpush2.bf16.xpose.msra.mxu0 0
        %4707 = vmatprep.subr.bf16.mxu0 0
        %4708 = vmatpush2.bf16.xpose.msra.mxu0 0
        %4709 = vmatprep.mubr.bf16.mxu0 0
        %4710 = vmatmul.mubr.bf16.gmra.mxu0 %v4654
        %v4711 = vpop.f32.mrf.mxu0
        %v4712 = vadd.f32 0.0, %v4711
        %v4713 = vpop.f32.mrf.mxu0
        %v4714 = vpop.f32.mrf.mxu0
        %v4715 = vadd.f32 0.0, %v4714
        %v4716 = vpop.f32.mrf.mxu0
        %4717 = vmatprep.mubr.bf16.mxu0 0
        %4718 = vmatmul.mubr.bf16.gmra.mxu0 %v4657
        %v4719 = vpop.f32.mrf.mxu0
        %v4720 = vadd.f32 0.0, %v4719
        %v4721 = vpop.f32.mrf.mxu0
        %v4722 = vpop.f32.mrf.mxu0
        %v4723 = vadd.f32 0.0, %v4722
        %v4724 = vpop.f32.mrf.mxu0
        %4725 = vmatprep.mubr.bf16.mxu0 0
        %4726 = vmatmul.mubr.bf16.gmra.mxu0 %v4660
        %v4727 = vpop.f32.mrf.mxu0
        %v4728 = vadd.f32 0.0, %v4727
        %v4729 = vpop.f32.mrf.mxu0
        %v4730 = vpop.f32.mrf.mxu0
        %v4731 = vadd.f32 0.0, %v4730
        %v4732 = vpop.f32.mrf.mxu0
        %4733 = vmatprep.mubr.bf16.mxu0 0
        %4734 = vmatmul.mubr.bf16.gmra.mxu0 %v4663
        %v4735 = vpop.f32.mrf.mxu0
        %v4736 = vadd.f32 0.0, %v4735
        %v4737 = vpop.f32.mrf.mxu0
        %v4738 = vpop.f32.mrf.mxu0
        %v4739 = vadd.f32 0.0, %v4738
        %v4740 = vpop.f32.mrf.mxu0
        %4741 = vdwg.mxu0
        %v4742 = vsel %vm3401, %v4712, -inf
        %4743 = vmax.xlane.f32.xlu0 %v4742
        %v4744 = vpop.xlane.xlu0 %4743
        %v4745 = vsel %vm3401, %v4715, -inf
        %4746 = vmax.xlane.f32.xlu0 %v4745
        %v4747 = vpop.xlane.xlu0 %4746
        %v4748 = vsel %vm3401, %v4720, -inf
        %4749 = vmax.xlane.f32.xlu0 %v4748
        %v4750 = vpop.xlane.xlu0 %4749
        %v4751 = vsel %vm3401, %v4723, -inf
        %4752 = vmax.xlane.f32.xlu0 %v4751
        %v4753 = vpop.xlane.xlu0 %4752
        %v4754 = vsel %vm3401, %v4728, -inf
        %4755 = vmax.xlane.f32.xlu0 %v4754
        %v4756 = vpop.xlane.xlu0 %4755
        %v4757 = vsel %vm3401, %v4731, -inf
        %4758 = vmax.xlane.f32.xlu0 %v4757
        %v4759 = vpop.xlane.xlu0 %4758
        %v4760 = vsel %vm3401, %v4736, -inf
        %4761 = vmax.xlane.f32.xlu0 %v4760
        %v4762 = vpop.xlane.xlu0 %4761
        %v4763 = vsel %vm3401, %v4739, -inf
        %4764 = vmax.xlane.f32.xlu0 %v4763
        %v4765 = vpop.xlane.xlu0 %4764
        %v4766 = vsub.f32 %v4712, %v4744
        %v4767 = vsub.f32 %v4715, %v4747
        %v4768 = vsub.f32 %v4720, %v4750
        %v4769 = vsub.f32 %v4723, %v4753
        %v4770 = vsub.f32 %v4728, %v4756
        %v4771 = vsub.f32 %v4731, %v4759
        %v4772 = vsub.f32 %v4736, %v4762
        %v4773 = vsub.f32 %v4739, %v4765
        %v4774 = vmul.f32 %v4766, 1.442695
        %v4775 = vpow.pop %v4774
        %v4776 = vmul.f32 %v4767, 1.442695
        %v4777 = vpow.pop %v4776
        %v4778 = vmul.f32 %v4768, 1.442695
        %v4779 = vpow.pop %v4778
        %v4780 = vmul.f32 %v4769, 1.442695
        %v4781 = vpow.pop %v4780
        %v4782 = vmul.f32 %v4770, 1.442695
        %v4783 = vpow.pop %v4782
        %v4784 = vmul.f32 %v4771, 1.442695
        %v4785 = vpow.pop %v4784
        %v4786 = vmul.f32 %v4772, 1.442695
        %v4787 = vpow.pop %v4786
        %v4788 = vmul.f32 %v4773, 1.442695
        %v4789 = vpow.pop %v4788
        %v4790 = vsel %vm3401, %v4775, 0.0
        %4791 = vadd.xlane.f32.xlu0 %v4790
        %v4792 = vpop.xlane.xlu0 %4791
        %v4793 = vsel %vm3401, %v4777, 0.0
        %4794 = vadd.xlane.f32.xlu0 %v4793
        %v4795 = vpop.xlane.xlu0 %4794
        %v4796 = vsel %vm3401, %v4779, 0.0
        %4797 = vadd.xlane.f32.xlu0 %v4796
        %v4798 = vpop.xlane.xlu0 %4797
        %v4799 = vsel %vm3401, %v4781, 0.0
        %4800 = vadd.xlane.f32.xlu0 %v4799
        %v4801 = vpop.xlane.xlu0 %4800
        %v4802 = vsel %vm3401, %v4783, 0.0
        %4803 = vadd.xlane.f32.xlu0 %v4802
        %v4804 = vpop.xlane.xlu0 %4803
        %v4805 = vsel %vm3401, %v4785, 0.0
        %4806 = vadd.xlane.f32.xlu0 %v4805
        %v4807 = vpop.xlane.xlu0 %4806
        %v4808 = vsel %vm3401, %v4787, 0.0
        %4809 = vadd.xlane.f32.xlu0 %v4808
        %v4810 = vpop.xlane.xlu0 %4809
        %v4811 = vsel %vm3401, %v4789, 0.0
        %4812 = vadd.xlane.f32.xlu0 %v4811
        %v4813 = vpop.xlane.xlu0 %4812
        %v4814 = vrcp.pop %v4792
        %v4815 = vrcp.pop %v4795
        %v4816 = vrcp.pop %v4798
        %v4817 = vrcp.pop %v4801
        %v4818 = vrcp.pop %v4804
        %v4819 = vrcp.pop %v4807
        %v4820 = vrcp.pop %v4810
        %v4821 = vrcp.pop %v4813
        %v4822 = vmul.f32 %v4775, %v4814
        %v4823 = vmul.f32 %v4777, %v4815
        %v4824 = vmul.f32 %v4779, %v4816
        %v4825 = vmul.f32 %v4781, %v4817
        %v4826 = vmul.f32 %v4783, %v4818
        %v4827 = vmul.f32 %v4785, %v4819
        %v4828 = vmul.f32 %v4787, %v4820
        %v4829 = vmul.f32 %v4789, %v4821
        %v4830 = vpack.c.bf16 %v4823, %v4822
        %v4831 = vpack.c.bf16 %v4825, %v4824
        %v4832 = vpack.c.bf16 %v4827, %v4826
        %v4833 = vpack.c.bf16 %v4829, %v4828
        %4834 = vrot.lane.b32.xlu0 %v3964, 32
        %v4835 = vpop.permute.xlu0 %4834
        %4836 = vrot.lane.b32.xlu0 %v3965, 32
        %v4837 = vpop.permute.xlu0 %4836
        %4838 = vrot.lane.b32.xlu0 %v3966, 32
        %v4839 = vpop.permute.xlu0 %4838
        %4840 = vrot.lane.b32.xlu0 %v3967, 32
        %v4841 = vpop.permute.xlu0 %4840
        %v4847 = vsel %vm3401, %v4830, 0
        %v4850 = vsel %vm3401, %v4831, 0
        %v4853 = vsel %vm3401, %v4832, 0
        %v4856 = vsel %vm3401, %v4833, 0
        %4858 = vmatprep.subr.bf16.mxu0 0
        %4859 = vmatpush1.bf16.msra.mxu0 0
        %4860 = vmatprep.subr.bf16.mxu0 0
        %4861 = vmatpush1.bf16.msra.mxu0 0
        %4862 = vmatprep.subr.bf16.mxu0 0
        %4863 = vmatpush1.bf16.msra.mxu0 0
        %4864 = vmatprep.subr.bf16.mxu0 0
        %4865 = vmatpush1.bf16.msra.mxu0 0
        %4866 = vmatprep.subr.bf16.mxu0 0
        %4867 = vmatpush1.bf16.msra.mxu0 %v4841
        %4868 = vmatprep.subr.bf16.mxu0 0
        %4869 = vmatpush1.bf16.msra.mxu0 %v4839
        %4870 = vmatprep.subr.bf16.mxu0 0
        %4871 = vmatpush1.bf16.msra.mxu0 %v4837
        %4872 = vmatprep.subr.bf16.mxu0 0
        %4873 = vmatpush1.bf16.msra.mxu0 %v4835
        %4874 = vmatprep.subr.bf16.mxu0 0
        %4875 = vmatpush2.bf16.msra.mxu0 0
        %4876 = vmatprep.subr.bf16.mxu0 0
        %4877 = vmatpush2.bf16.msra.mxu0 0
        %4878 = vmatprep.subr.bf16.mxu0 0
        %4879 = vmatpush2.bf16.msra.mxu0 0
        %4880 = vmatprep.subr.bf16.mxu0 0
        %4881 = vmatpush2.bf16.msra.mxu0 0
        %4882 = vmatprep.subr.bf16.mxu0 0
        %4883 = vmatpush2.bf16.msra.mxu0 0
        %4884 = vmatprep.subr.bf16.mxu0 0
        %4885 = vmatpush2.bf16.msra.mxu0 0
        %4886 = vmatprep.subr.bf16.mxu0 0
        %4887 = vmatpush2.bf16.msra.mxu0 0
        %4888 = vmatprep.subr.bf16.mxu0 0
        %4889 = vmatpush2.bf16.msra.mxu0 0
        %4890 = vmatprep.mubr.bf16.mxu0 0
        %4891 = vmatmul.mubr.bf16.gmra.mxu0 %v4847
        %v4892 = vpop.f32.mrf.mxu0
        %v4893 = vadd.f32 0.0, %v4892
        %v4894 = vpop.f32.mrf.mxu0
        %v4895 = vpop.f32.mrf.mxu0
        %v4896 = vadd.f32 0.0, %v4895
        %v4897 = vpop.f32.mrf.mxu0
        %4898 = vmatprep.mubr.bf16.mxu0 0
        %4899 = vmatmul.mubr.bf16.gmra.mxu0 %v4850
        %v4900 = vpop.f32.mrf.mxu0
        %v4901 = vadd.f32 0.0, %v4900
        %v4902 = vpop.f32.mrf.mxu0
        %v4903 = vpop.f32.mrf.mxu0
        %v4904 = vadd.f32 0.0, %v4903
        %v4905 = vpop.f32.mrf.mxu0
        %4906 = vmatprep.mubr.bf16.mxu0 0
        %4907 = vmatmul.mubr.bf16.gmra.mxu0 %v4853
        %v4908 = vpop.f32.mrf.mxu0
        %v4909 = vadd.f32 0.0, %v4908
        %v4910 = vpop.f32.mrf.mxu0
        %v4911 = vpop.f32.mrf.mxu0
        %v4912 = vadd.f32 0.0, %v4911
        %v4913 = vpop.f32.mrf.mxu0
        %4914 = vmatprep.mubr.bf16.mxu0 0
        %4915 = vmatmul.mubr.bf16.gmra.mxu0 %v4856
        %v4916 = vpop.f32.mrf.mxu0
        %v4917 = vadd.f32 0.0, %v4916
        %v4918 = vpop.f32.mrf.mxu0
        %v4919 = vpop.f32.mrf.mxu0
        %v4920 = vadd.f32 0.0, %v4919
        %v4921 = vpop.f32.mrf.mxu0
        %4922 = vdwg.mxu0
        %v4923 = vpack.c.bf16 %v4896, %v4893
        %v4924 = vpack.c.bf16 %v4904, %v4901
        %v4925 = vpack.c.bf16 %v4912, %v4909
        %v4926 = vpack.c.bf16 %v4920, %v4917
        %4931 = vrot.lane.b32.xlu0 %v4343, 32
        %v4932 = vpop.permute.xlu0 %4931
        %4933 = vrot.lane.b32.xlu0 %v4344, 32
        %v4934 = vpop.permute.xlu0 %4933
        %4935 = vrot.lane.b32.xlu0 %v4345, 32
        %v4936 = vpop.permute.xlu0 %4935
        %4937 = vrot.lane.b32.xlu0 %v4346, 32
        %v4938 = vpop.permute.xlu0 %4937
        %4943 = vrot.lane.b32.xlu0 %v4633, 64
        %v4944 = vpop.permute.xlu0 %4943
        %4945 = vrot.lane.b32.xlu0 %v4634, 64
        %v4946 = vpop.permute.xlu0 %4945
        %4947 = vrot.lane.b32.xlu0 %v4635, 64
        %v4948 = vpop.permute.xlu0 %4947
        %4949 = vrot.lane.b32.xlu0 %v4636, 64
        %v4950 = vpop.permute.xlu0 %4949
        %4955 = vrot.lane.b32.xlu0 %v4923, 96
        %v4956 = vpop.permute.xlu0 %4955
        %4957 = vrot.lane.b32.xlu0 %v4924, 96
        %v4958 = vpop.permute.xlu0 %4957
        %4959 = vrot.lane.b32.xlu0 %v4925, 96
        %v4960 = vpop.permute.xlu0 %4959
        %4961 = vrot.lane.b32.xlu0 %v4926, 96
        %v4962 = vpop.permute.xlu0 %4961
        %v4965 = vsel %vm2172, %v4049, %v4932
        %v4968 = vsel %vm2172, %v4050, %v4934
        %v4971 = vsel %vm2172, %v4051, %v4936
        %v4974 = vsel %vm2172, %v4052, %v4938
        %v4976 = vsel %vm3401, %v4965, %v4944
        %v4978 = vsel %vm3401, %v4968, %v4946
        %v4980 = vsel %vm3401, %v4971, %v4948
        %v4982 = vsel %vm3401, %v4974, %v4950
        %v4984 = vsel %vm3410, %v4976, %v4956
        %v4987 = vsel %vm3410, %v4978, %v4958
        %v4990 = vsel %vm3410, %v4980, %v4960
        %v4993 = vsel %vm3410, %v4982, %v4962
        %v4996 = vlaneseq
        %v4997 = vshrl.u32 %v4996, 7
        %v4998 = vsub.s32 0, %v4997
        %v4999 = vrot.slane %v3742, %v4998
        %v5017 = vunpack.c.l.b16 %v3726
        %v5018 = vunpack.c.l.b16 %v3727
        %v5019 = vunpack.c.l.b16 %v3728
        %v5020 = vunpack.c.l.b16 %v3729
        %v5021 = vunpack.c.l.b16 %v3730
        %v5022 = vunpack.c.l.b16 %v3731
        %v5023 = vunpack.c.l.b16 %v3732
        %v5024 = vunpack.c.l.b16 %v3733
        %v5025 = vunpack.c.l.b16 %v3734
        %v5026 = vunpack.c.l.b16 %v3735
        %v5027 = vunpack.c.l.b16 %v3736
        %v5028 = vunpack.c.l.b16 %v3737
        %v5029 = vunpack.c.l.b16 %v3738
        %v5030 = vunpack.c.l.b16 %v3739
        %v5031 = vunpack.c.l.b16 %v3740
        %v5032 = vunpack.c.l.b16 %v3741
        %v5033 = vpack.c.b16 %v5018, %v5017
        %v5034 = vpack.c.b16 %v5020, %v5019
        %v5035 = vpack.c.b16 %v5022, %v5021
        %v5036 = vpack.c.b16 %v5024, %v5023
        %v5037 = vpack.c.b16 %v5026, %v5025
        %v5038 = vpack.c.b16 %v5028, %v5027
        %v5039 = vpack.c.b16 %v5030, %v5029
        %v5040 = vpack.c.b16 %v5032, %v5031
        %5049 = vmatprep.subr.bf16.mxu0 0
        %5050 = vmatpush1.bf16.msra.mxu0 %v5040
        %5051 = vmatprep.subr.bf16.mxu0 0
        %5052 = vmatpush1.bf16.msra.mxu0 %v5039
        %5053 = vmatprep.subr.bf16.mxu0 0
        %5054 = vmatpush1.bf16.msra.mxu0 %v5038
        %5055 = vmatprep.subr.bf16.mxu0 0
        %5056 = vmatpush1.bf16.msra.mxu0 %v5037
        %5057 = vmatprep.subr.bf16.mxu0 0
        %5058 = vmatpush1.bf16.msra.mxu0 %v5036
        %5059 = vmatprep.subr.bf16.mxu0 0
        %5060 = vmatpush1.bf16.msra.mxu0 %v5035
        %5061 = vmatprep.subr.bf16.mxu0 0
        %5062 = vmatpush1.bf16.msra.mxu0 %v5034
        %5063 = vmatprep.subr.bf16.mxu0 0
        %5064 = vmatpush1.bf16.msra.mxu0 %v5033
        %5065 = vmatprep.subr.bf16.mxu0 0
        %5066 = vmatpush2.bf16.msra.mxu0 0
        %5067 = vmatprep.subr.bf16.mxu0 0
        %5068 = vmatpush2.bf16.msra.mxu0 0
        %5069 = vmatprep.subr.bf16.mxu0 0
        %5070 = vmatpush2.bf16.msra.mxu0 0
        %5071 = vmatprep.subr.bf16.mxu0 0
        %5072 = vmatpush2.bf16.msra.mxu0 0
        %5073 = vmatprep.subr.bf16.mxu0 0
        %5074 = vmatpush2.bf16.msra.mxu0 0
        %5075 = vmatprep.subr.bf16.mxu0 0
        %5076 = vmatpush2.bf16.msra.mxu0 0
        %5077 = vmatprep.subr.bf16.mxu0 0
        %5078 = vmatpush2.bf16.msra.mxu0 0
        %5079 = vmatprep.subr.bf16.mxu0 0
        %5080 = vmatpush2.bf16.msra.mxu0 0
        %5081 = vmatprep.mubr.bf16.mxu0 0
        %5082 = vmatmul.mubr.bf16.gmra.mxu0 %v4984
        %v5083 = vpop.f32.mrf.mxu0
        %v5084 = vadd.f32 %v4999, %v5083
        %v5085 = vpop.f32.mrf.mxu0
        %v5086 = vpop.f32.mrf.mxu0
        %v5087 = vadd.f32 %v4999, %v5086
        %v5088 = vpop.f32.mrf.mxu0
        %5089 = vmatprep.mubr.bf16.mxu0 0
        %5090 = vmatmul.mubr.bf16.gmra.mxu0 %v4987
        %v5091 = vpop.f32.mrf.mxu0
        %v5092 = vadd.f32 %v4999, %v5091
        %v5093 = vpop.f32.mrf.mxu0
        %v5094 = vpop.f32.mrf.mxu0
        %v5095 = vadd.f32 %v4999, %v5094
        %v5096 = vpop.f32.mrf.mxu0
        %5097 = vmatprep.mubr.bf16.mxu0 0
        %5098 = vmatmul.mubr.bf16.gmra.mxu0 %v4990
        %v5099 = vpop.f32.mrf.mxu0
        %v5100 = vadd.f32 %v4999, %v5099
        %v5101 = vpop.f32.mrf.mxu0
        %v5102 = vpop.f32.mrf.mxu0
        %v5103 = vadd.f32 %v4999, %v5102
        %v5104 = vpop.f32.mrf.mxu0
        %5105 = vmatprep.mubr.bf16.mxu0 0
        %5106 = vmatmul.mubr.bf16.gmra.mxu0 %v4993
        %v5107 = vpop.f32.mrf.mxu0
        %v5108 = vadd.f32 %v4999, %v5107
        %v5109 = vpop.f32.mrf.mxu0
        %v5110 = vpop.f32.mrf.mxu0
        %v5111 = vadd.f32 %v4999, %v5110
        %v5112 = vpop.f32.mrf.mxu0
        %5113 = vdwg.mxu0
        %v5114 = vadd.f32 %v3554, %v5084
        %v5115 = vadd.f32 %v3555, %v5087
        %v5116 = vadd.f32 %v3556, %v5092
        %v5117 = vadd.f32 %v3557, %v5095
        %v5118 = vadd.f32 %v3558, %v5100
        %v5119 = vadd.f32 %v3559, %v5103
        %v5120 = vadd.f32 %v3560, %v5108
        %v5121 = vadd.f32 %v3561, %v5111
        %5122 = vadd.xlane.f32.xlu0 %v5114
        %v5123 = vpop.xlane.xlu0 %5122
        %5124 = vadd.xlane.f32.xlu0 %v5115
        %v5125 = vpop.xlane.xlu0 %5124
        %5126 = vadd.xlane.f32.xlu0 %v5116
        %v5127 = vpop.xlane.xlu0 %5126
        %5128 = vadd.xlane.f32.xlu0 %v5117
        %v5129 = vpop.xlane.xlu0 %5128
        %5130 = vadd.xlane.f32.xlu0 %v5118
        %v5131 = vpop.xlane.xlu0 %5130
        %5132 = vadd.xlane.f32.xlu0 %v5119
        %v5133 = vpop.xlane.xlu0 %5132
        %5134 = vadd.xlane.f32.xlu0 %v5120
        %v5135 = vpop.xlane.xlu0 %5134
        %5136 = vadd.xlane.f32.xlu0 %v5121
        %v5137 = vpop.xlane.xlu0 %5136
        %v5138 = vmul.f32 %v5123, %v1833
        %v5139 = vmul.f32 %v5125, %v1833
        %v5140 = vmul.f32 %v5127, %v1833
        %v5141 = vmul.f32 %v5129, %v1833
        %v5142 = vmul.f32 %v5131, %v1833
        %v5143 = vmul.f32 %v5133, %v1833
        %v5144 = vmul.f32 %v5135, %v1833
        %v5145 = vmul.f32 %v5137, %v1833
        %v5146 = vsub.f32 %v5114, %v5138
        %v5147 = vsub.f32 %v5115, %v5139
        %v5148 = vsub.f32 %v5116, %v5140
        %v5149 = vsub.f32 %v5117, %v5141
        %v5150 = vsub.f32 %v5118, %v5142
        %v5151 = vsub.f32 %v5119, %v5143
        %v5152 = vsub.f32 %v5120, %v5144
        %v5153 = vsub.f32 %v5121, %v5145
        %v5154 = vmul.f32 %v5146, %v5146
        %v5155 = vmul.f32 %v5147, %v5147
        %v5156 = vmul.f32 %v5148, %v5148
        %v5157 = vmul.f32 %v5149, %v5149
        %v5158 = vmul.f32 %v5150, %v5150
        %v5159 = vmul.f32 %v5151, %v5151
        %v5160 = vmul.f32 %v5152, %v5152
        %v5161 = vmul.f32 %v5153, %v5153
        %5162 = vadd.xlane.f32.xlu0 %v5154
        %v5163 = vpop.xlane.xlu0 %5162
        %5164 = vadd.xlane.f32.xlu0 %v5155
        %v5165 = vpop.xlane.xlu0 %5164
        %5166 = vadd.xlane.f32.xlu0 %v5156
        %v5167 = vpop.xlane.xlu0 %5166
        %5168 = vadd.xlane.f32.xlu0 %v5157
        %v5169 = vpop.xlane.xlu0 %5168
        %5170 = vadd.xlane.f32.xlu0 %v5158
        %v5171 = vpop.xlane.xlu0 %5170
        %5172 = vadd.xlane.f32.xlu0 %v5159
        %v5173 = vpop.xlane.xlu0 %5172
        %5174 = vadd.xlane.f32.xlu0 %v5160
        %v5175 = vpop.xlane.xlu0 %5174
        %5176 = vadd.xlane.f32.xlu0 %v5161
        %v5177 = vpop.xlane.xlu0 %5176
        %v5178 = vmul.f32 %v5163, %v1833
        %v5179 = vmul.f32 %v5165, %v1833
        %v5180 = vmul.f32 %v5167, %v1833
        %v5181 = vmul.f32 %v5169, %v1833
        %v5182 = vmul.f32 %v5171, %v1833
        %v5183 = vmul.f32 %v5173, %v1833
        %v5184 = vmul.f32 %v5175, %v1833
        %v5185 = vmul.f32 %v5177, %v1833
        %v5186 = vadd.f32 %v5178, 1e-06
        %v5187 = vadd.f32 %v5179, 1e-06
        %v5188 = vadd.f32 %v5180, 1e-06
        %v5189 = vadd.f32 %v5181, 1e-06
        %v5190 = vadd.f32 %v5182, 1e-06
        %v5191 = vadd.f32 %v5183, 1e-06
        %v5192 = vadd.f32 %v5184, 1e-06
        %v5193 = vadd.f32 %v5185, 1e-06
        %v5194 = vrsqrt.pop %v5186
        %v5195 = vrsqrt.pop %v5187
        %v5196 = vrsqrt.pop %v5188
        %v5197 = vrsqrt.pop %v5189
        %v5198 = vrsqrt.pop %v5190
        %v5199 = vrsqrt.pop %v5191
        %v5200 = vrsqrt.pop %v5192
        %v5201 = vrsqrt.pop %v5193
        %v5202 = vmul.f32 %v5146, %v5194
        %v5203 = vmul.f32 %v5147, %v5195
        %v5204 = vmul.f32 %v5148, %v5196
        %v5205 = vmul.f32 %v5149, %v5197
        %v5206 = vmul.f32 %v5150, %v5198
        %v5207 = vmul.f32 %v5151, %v5199
        %v5208 = vmul.f32 %v5152, %v5200
        %v5209 = vmul.f32 %v5153, %v5201
        %v5210 = vlaneseq
        %v5211 = vshrl.u32 %v5210, 7
        %v5212 = vsub.s32 4, %v5211
        %v5213 = vrot.slane %v1906, %v5212
        %v5214 = vmul.f32 %v5202, %v5213
        %v5215 = vmul.f32 %v5203, %v5213
        %v5216 = vmul.f32 %v5204, %v5213
        %v5217 = vmul.f32 %v5205, %v5213
        %v5218 = vmul.f32 %v5206, %v5213
        %v5219 = vmul.f32 %v5207, %v5213
        %v5220 = vmul.f32 %v5208, %v5213
        %v5221 = vmul.f32 %v5209, %v5213
        %v5222 = vlaneseq
        %v5223 = vshrl.u32 %v5222, 7
        %v5224 = vsub.s32 3, %v5223
        %v5225 = vrot.slane %v908, %v5224
        %v5226 = vadd.f32 %v5214, %v5225
        %v5227 = vadd.f32 %v5215, %v5225
        %v5228 = vadd.f32 %v5216, %v5225
        %v5229 = vadd.f32 %v5217, %v5225
        %v5230 = vadd.f32 %v5218, %v5225
        %v5231 = vadd.f32 %v5219, %v5225
        %v5232 = vadd.f32 %v5220, %v5225
        %v5233 = vadd.f32 %v5221, %v5225
        %v5234 = vpack.c.bf16 %v5227, %v5226
        %v5235 = vpack.c.bf16 %v5229, %v5228
        %v5236 = vpack.c.bf16 %v5231, %v5230
        %v5237 = vpack.c.bf16 %v5233, %v5232
        %v5238 = vld [vmem:[#allocation21] sm:$0xff]
        %v5239 = vld [vmem:[#allocation21 + $0x8] sm:$0xff]
        %v5240 = vld [vmem:[#allocation21 + $0x10] sm:$0xff]
        %v5241 = vld [vmem:[#allocation21 + $0x18] sm:$0xff]
        %v5242 = vld [vmem:[#allocation21 + $0x20] sm:$0xff]
        %v5243 = vld [vmem:[#allocation21 + $0x28] sm:$0xff]
        %v5244 = vld [vmem:[#allocation21 + $0x30] sm:$0xff]
        %v5245 = vld [vmem:[#allocation21 + $0x38] sm:$0xff]
        %v5246 = vld [vmem:[#allocation21 + $0x40] sm:$0xff]
        %v5247 = vld [vmem:[#allocation21 + $0x48] sm:$0xff]
        %v5248 = vld [vmem:[#allocation21 + $0x50] sm:$0xff]
        %v5249 = vld [vmem:[#allocation21 + $0x58] sm:$0xff]
        %v5250 = vld [vmem:[#allocation21 + $0x60] sm:$0xff]
        %v5251 = vld [vmem:[#allocation21 + $0x68] sm:$0xff]
        %v5252 = vld [vmem:[#allocation21 + $0x70] sm:$0xff]
        %v5253 = vld [vmem:[#allocation21 + $0x78] sm:$0xff]
        %v5254 = vld [vmem:[#allocation21 + $0x80] sm:$0xff]
        %v5255 = vld [vmem:[#allocation21 + $0x88] sm:$0xff]
        %v5256 = vld [vmem:[#allocation21 + $0x90] sm:$0xff]
        %v5257 = vld [vmem:[#allocation21 + $0x98] sm:$0xff]
        %v5258 = vld [vmem:[#allocation21 + $0xa0] sm:$0xff]
        %v5259 = vld [vmem:[#allocation21 + $0xa8] sm:$0xff]
        %v5260 = vld [vmem:[#allocation21 + $0xb0] sm:$0xff]
        %v5261 = vld [vmem:[#allocation21 + $0xb8] sm:$0xff]
        %v5262 = vld [vmem:[#allocation21 + $0xc0] sm:$0xff]
        %v5263 = vld [vmem:[#allocation21 + $0xc8] sm:$0xff]
        %v5264 = vld [vmem:[#allocation21 + $0xd0] sm:$0xff]
        %v5265 = vld [vmem:[#allocation21 + $0xd8] sm:$0xff]
        %v5266 = vld [vmem:[#allocation21 + $0xe0] sm:$0xff]
        %v5267 = vld [vmem:[#allocation21 + $0xe8] sm:$0xff]
        %v5268 = vld [vmem:[#allocation21 + $0xf0] sm:$0xff]
        %v5269 = vld [vmem:[#allocation21 + $0xf8] sm:$0xff]
        %v5270 = vld [vmem:[%s18] sm:$0xf]
        %v5272 = vlaneseq
        %v5273 = vshrl.u32 %v5272, 7
        %v5274 = vsub.s32 0, %v5273
        %v5275 = vrot.slane %v5270, %v5274
        %v5276 = vlaneseq
        %v5277 = vshrl.u32 %v5276, 7
        %v5278 = vsub.s32 1, %v5277
        %v5279 = vrot.slane %v5270, %v5278
        %v5280 = vlaneseq
        %v5281 = vshrl.u32 %v5280, 7
        %v5282 = vsub.s32 2, %v5281
        %v5283 = vrot.slane %v5270, %v5282
        %v5284 = vlaneseq
        %v5285 = vshrl.u32 %v5284, 7
        %v5286 = vsub.s32 3, %v5285
        %v5287 = vrot.slane %v5270, %v5286
        %v5324 = vunpack.c.l.b16 %v5238
        %v5325 = vunpack.c.h.b16 %v5238
        %v5326 = vunpack.c.l.b16 %v5239
        %v5327 = vunpack.c.h.b16 %v5239
        %v5328 = vunpack.c.l.b16 %v5240
        %v5329 = vunpack.c.h.b16 %v5240
        %v5330 = vunpack.c.l.b16 %v5241
        %v5331 = vunpack.c.h.b16 %v5241
        %v5332 = vunpack.c.l.b16 %v5242
        %v5333 = vunpack.c.h.b16 %v5242
        %v5334 = vunpack.c.l.b16 %v5243
        %v5335 = vunpack.c.h.b16 %v5243
        %v5336 = vunpack.c.l.b16 %v5244
        %v5337 = vunpack.c.h.b16 %v5244
        %v5338 = vunpack.c.l.b16 %v5245
        %v5339 = vunpack.c.h.b16 %v5245
        %v5340 = vunpack.c.l.b16 %v5246
        %v5341 = vunpack.c.h.b16 %v5246
        %v5342 = vunpack.c.l.b16 %v5247
        %v5343 = vunpack.c.h.b16 %v5247
        %v5344 = vunpack.c.l.b16 %v5248
        %v5345 = vunpack.c.h.b16 %v5248
        %v5346 = vunpack.c.l.b16 %v5249
        %v5347 = vunpack.c.h.b16 %v5249
        %v5348 = vunpack.c.l.b16 %v5250
        %v5349 = vunpack.c.h.b16 %v5250
        %v5350 = vunpack.c.l.b16 %v5251
        %v5351 = vunpack.c.h.b16 %v5251
        %v5352 = vunpack.c.l.b16 %v5252
        %v5353 = vunpack.c.h.b16 %v5252
        %v5354 = vunpack.c.l.b16 %v5253
        %v5355 = vunpack.c.h.b16 %v5253
        %v5356 = vunpack.c.l.b16 %v5254
        %v5357 = vunpack.c.h.b16 %v5254
        %v5358 = vunpack.c.l.b16 %v5255
        %v5359 = vunpack.c.h.b16 %v5255
        %v5360 = vunpack.c.l.b16 %v5256
        %v5361 = vunpack.c.h.b16 %v5256
        %v5362 = vunpack.c.l.b16 %v5257
        %v5363 = vunpack.c.h.b16 %v5257
        %v5364 = vunpack.c.l.b16 %v5258
        %v5365 = vunpack.c.h.b16 %v5258
        %v5366 = vunpack.c.l.b16 %v5259
        %v5367 = vunpack.c.h.b16 %v5259
        %v5368 = vunpack.c.l.b16 %v5260
        %v5369 = vunpack.c.h.b16 %v5260
        %v5370 = vunpack.c.l.b16 %v5261
        %v5371 = vunpack.c.h.b16 %v5261
        %v5372 = vunpack.c.l.b16 %v5262
        %v5373 = vunpack.c.h.b16 %v5262
        %v5374 = vunpack.c.l.b16 %v5263
        %v5375 = vunpack.c.h.b16 %v5263
        %v5376 = vunpack.c.l.b16 %v5264
        %v5377 = vunpack.c.h.b16 %v5264
        %v5378 = vunpack.c.l.b16 %v5265
        %v5379 = vunpack.c.h.b16 %v5265
        %v5380 = vunpack.c.l.b16 %v5266
        %v5381 = vunpack.c.h.b16 %v5266
        %v5382 = vunpack.c.l.b16 %v5267
        %v5383 = vunpack.c.h.b16 %v5267
        %v5384 = vunpack.c.l.b16 %v5268
        %v5385 = vunpack.c.h.b16 %v5268
        %v5386 = vunpack.c.l.b16 %v5269
        %v5387 = vunpack.c.h.b16 %v5269
        %v5388 = vpack.c.b16 %v5328, %v5324
        %v5389 = vpack.c.b16 %v5329, %v5325
        %v5390 = vpack.c.b16 %v5330, %v5326
        %v5391 = vpack.c.b16 %v5331, %v5327
        %v5392 = vpack.c.b16 %v5336, %v5332
        %v5393 = vpack.c.b16 %v5337, %v5333
        %v5394 = vpack.c.b16 %v5338, %v5334
        %v5395 = vpack.c.b16 %v5339, %v5335
        %v5396 = vpack.c.b16 %v5344, %v5340
        %v5397 = vpack.c.b16 %v5345, %v5341
        %v5398 = vpack.c.b16 %v5346, %v5342
        %v5399 = vpack.c.b16 %v5347, %v5343
        %v5400 = vpack.c.b16 %v5352, %v5348
        %v5401 = vpack.c.b16 %v5353, %v5349
        %v5402 = vpack.c.b16 %v5354, %v5350
        %v5403 = vpack.c.b16 %v5355, %v5351
        %v5404 = vpack.c.b16 %v5360, %v5356
        %v5405 = vpack.c.b16 %v5361, %v5357
        %v5406 = vpack.c.b16 %v5362, %v5358
        %v5407 = vpack.c.b16 %v5363, %v5359
        %v5408 = vpack.c.b16 %v5368, %v5364
        %v5409 = vpack.c.b16 %v5369, %v5365
        %v5410 = vpack.c.b16 %v5370, %v5366
        %v5411 = vpack.c.b16 %v5371, %v5367
        %v5412 = vpack.c.b16 %v5376, %v5372
        %v5413 = vpack.c.b16 %v5377, %v5373
        %v5414 = vpack.c.b16 %v5378, %v5374
        %v5415 = vpack.c.b16 %v5379, %v5375
        %v5416 = vpack.c.b16 %v5384, %v5380
        %v5417 = vpack.c.b16 %v5385, %v5381
        %v5418 = vpack.c.b16 %v5386, %v5382
        %v5419 = vpack.c.b16 %v5387, %v5383
        %5452 = vmatprep.subr.bf16.mxu0 %v5417
        %5453 = vmatpush1.bf16.msra.mxu0 %v5416
        %5454 = vmatprep.subr.bf16.mxu0 %v5413
        %5455 = vmatpush1.bf16.msra.mxu0 %v5412
        %5456 = vmatprep.subr.bf16.mxu0 %v5409
        %5457 = vmatpush1.bf16.msra.mxu0 %v5408
        %5458 = vmatprep.subr.bf16.mxu0 %v5405
        %5459 = vmatpush1.bf16.msra.mxu0 %v5404
        %5460 = vmatprep.subr.bf16.mxu0 %v5401
        %5461 = vmatpush1.bf16.msra.mxu0 %v5400
        %5462 = vmatprep.subr.bf16.mxu0 %v5397
        %5463 = vmatpush1.bf16.msra.mxu0 %v5396
        %5464 = vmatprep.subr.bf16.mxu0 %v5393
        %5465 = vmatpush1.bf16.msra.mxu0 %v5392
        %5466 = vmatprep.subr.bf16.mxu0 %v5389
        %5467 = vmatpush1.bf16.msra.mxu0 %v5388
        %5468 = vmatprep.subr.bf16.mxu0 0
        %5469 = vmatpush2.bf16.msra.mxu0 0
        %5470 = vmatprep.subr.bf16.mxu0 0
        %5471 = vmatpush2.bf16.msra.mxu0 0
        %5472 = vmatprep.subr.bf16.mxu0 0
        %5473 = vmatpush2.bf16.msra.mxu0 0
        %5474 = vmatprep.subr.bf16.mxu0 0
        %5475 = vmatpush2.bf16.msra.mxu0 0
        %5476 = vmatprep.subr.bf16.mxu0 0
        %5477 = vmatpush2.bf16.msra.mxu0 0
        %5478 = vmatprep.subr.bf16.mxu0 0
        %5479 = vmatpush2.bf16.msra.mxu0 0
        %5480 = vmatprep.subr.bf16.mxu0 0
        %5481 = vmatpush2.bf16.msra.mxu0 0
        %5482 = vmatprep.subr.bf16.mxu0 0
        %5483 = vmatpush2.bf16.msra.mxu0 0
        %5484 = vmatprep.mubr.bf16.mxu0 0
        %5485 = vmatmul.mubr.bf16.gmra.mxu0 %v5234
        %v5486 = vpop.f32.mrf.mxu0
        %v5487 = vadd.f32 %v5275, %v5486
        %v5488 = vpop.f32.mrf.mxu0
        %v5489 = vadd.f32 %v5279, %v5488
        %v5490 = vpop.f32.mrf.mxu0
        %v5491 = vadd.f32 %v5275, %v5490
        %v5492 = vpop.f32.mrf.mxu0
        %v5493 = vadd.f32 %v5279, %v5492
        %5494 = vmatprep.mubr.bf16.mxu0 0
        %5495 = vmatmul.mubr.bf16.gmra.mxu0 %v5235
        %v5496 = vpop.f32.mrf.mxu0
        %v5497 = vadd.f32 %v5275, %v5496
        %v5498 = vpop.f32.mrf.mxu0
        %v5499 = vadd.f32 %v5279, %v5498
        %v5500 = vpop.f32.mrf.mxu0
        %v5501 = vadd.f32 %v5275, %v5500
        %v5502 = vpop.f32.mrf.mxu0
        %v5503 = vadd.f32 %v5279, %v5502
        %5504 = vmatprep.mubr.bf16.mxu0 0
        %5505 = vmatmul.mubr.bf16.gmra.mxu0 %v5236
        %v5506 = vpop.f32.mrf.mxu0
        %v5507 = vadd.f32 %v5275, %v5506
        %v5508 = vpop.f32.mrf.mxu0
        %v5509 = vadd.f32 %v5279, %v5508
        %v5510 = vpop.f32.mrf.mxu0
        %v5511 = vadd.f32 %v5275, %v5510
        %v5512 = vpop.f32.mrf.mxu0
        %v5513 = vadd.f32 %v5279, %v5512
        %5514 = vmatprep.mubr.bf16.mxu0 0
        %5515 = vmatmul.mubr.bf16.gmra.mxu0 %v5237
        %v5516 = vpop.f32.mrf.mxu0
        %v5517 = vadd.f32 %v5275, %v5516
        %v5518 = vpop.f32.mrf.mxu0
        %v5519 = vadd.f32 %v5279, %v5518
        %v5520 = vpop.f32.mrf.mxu0
        %v5521 = vadd.f32 %v5275, %v5520
        %v5522 = vpop.f32.mrf.mxu0
        %v5523 = vadd.f32 %v5279, %v5522
        %5524 = vdwg.mxu0
        %5525 = vmatprep.subr.bf16.mxu0 %v5419
        %5526 = vmatpush1.bf16.msra.mxu0 %v5418
        %5527 = vmatprep.subr.bf16.mxu0 %v5415
        %5528 = vmatpush1.bf16.msra.mxu0 %v5414
        %5529 = vmatprep.subr.bf16.mxu0 %v5411
        %5530 = vmatpush1.bf16.msra.mxu0 %v5410
        %5531 = vmatprep.subr.bf16.mxu0 %v5407
        %5532 = vmatpush1.bf16.msra.mxu0 %v5406
        %5533 = vmatprep.subr.bf16.mxu0 %v5403
        %5534 = vmatpush1.bf16.msra.mxu0 %v5402
        %5535 = vmatprep.subr.bf16.mxu0 %v5399
        %5536 = vmatpush1.bf16.msra.mxu0 %v5398
        %5537 = vmatprep.subr.bf16.mxu0 %v5395
        %5538 = vmatpush1.bf16.msra.mxu0 %v5394
        %5539 = vmatprep.subr.bf16.mxu0 %v5391
        %5540 = vmatpush1.bf16.msra.mxu0 %v5390
        %5541 = vmatprep.subr.bf16.mxu0 0
        %5542 = vmatpush2.bf16.msra.mxu0 0
        %5543 = vmatprep.subr.bf16.mxu0 0
        %5544 = vmatpush2.bf16.msra.mxu0 0
        %5545 = vmatprep.subr.bf16.mxu0 0
        %5546 = vmatpush2.bf16.msra.mxu0 0
        %5547 = vmatprep.subr.bf16.mxu0 0
        %5548 = vmatpush2.bf16.msra.mxu0 0
        %5549 = vmatprep.subr.bf16.mxu0 0
        %5550 = vmatpush2.bf16.msra.mxu0 0
        %5551 = vmatprep.subr.bf16.mxu0 0
        %5552 = vmatpush2.bf16.msra.mxu0 0
        %5553 = vmatprep.subr.bf16.mxu0 0
        %5554 = vmatpush2.bf16.msra.mxu0 0
        %5555 = vmatprep.subr.bf16.mxu0 0
        %5556 = vmatpush2.bf16.msra.mxu0 0
        %5557 = vmatprep.mubr.bf16.mxu0 0
        %5558 = vmatmul.mubr.bf16.gmra.mxu0 %v5234
        %v5559 = vpop.f32.mrf.mxu0
        %v5560 = vadd.f32 %v5283, %v5559
        %v5561 = vpop.f32.mrf.mxu0
        %v5562 = vadd.f32 %v5287, %v5561
        %v5563 = vpop.f32.mrf.mxu0
        %v5564 = vadd.f32 %v5283, %v5563
        %v5565 = vpop.f32.mrf.mxu0
        %v5566 = vadd.f32 %v5287, %v5565
        %5567 = vmatprep.mubr.bf16.mxu0 0
        %5568 = vmatmul.mubr.bf16.gmra.mxu0 %v5235
        %v5569 = vpop.f32.mrf.mxu0
        %v5570 = vadd.f32 %v5283, %v5569
        %v5571 = vpop.f32.mrf.mxu0
        %v5572 = vadd.f32 %v5287, %v5571
        %v5573 = vpop.f32.mrf.mxu0
        %v5574 = vadd.f32 %v5283, %v5573
        %v5575 = vpop.f32.mrf.mxu0
        %v5576 = vadd.f32 %v5287, %v5575
        %5577 = vmatprep.mubr.bf16.mxu0 0
        %5578 = vmatmul.mubr.bf16.gmra.mxu0 %v5236
        %v5579 = vpop.f32.mrf.mxu0
        %v5580 = vadd.f32 %v5283, %v5579
        %v5581 = vpop.f32.mrf.mxu0
        %v5582 = vadd.f32 %v5287, %v5581
        %v5583 = vpop.f32.mrf.mxu0
        %v5584 = vadd.f32 %v5283, %v5583
        %v5585 = vpop.f32.mrf.mxu0
        %v5586 = vadd.f32 %v5287, %v5585
        %5587 = vmatprep.mubr.bf16.mxu0 0
        %5588 = vmatmul.mubr.bf16.gmra.mxu0 %v5237
        %v5589 = vpop.f32.mrf.mxu0
        %v5590 = vadd.f32 %v5283, %v5589
        %v5591 = vpop.f32.mrf.mxu0
        %v5592 = vadd.f32 %v5287, %v5591
        %v5593 = vpop.f32.mrf.mxu0
        %v5594 = vadd.f32 %v5283, %v5593
        %v5595 = vpop.f32.mrf.mxu0
        %v5596 = vadd.f32 %v5287, %v5595
        %5597 = vdwg.mxu0
        %v5598 = vmul.f32 %v5487, 0.5
        %v5599 = vmul.f32 %v5489, 0.5
        %v5600 = vmul.f32 %v5560, 0.5
        %v5601 = vmul.f32 %v5562, 0.5
        %v5602 = vmul.f32 %v5491, 0.5
        %v5603 = vmul.f32 %v5493, 0.5
        %v5604 = vmul.f32 %v5564, 0.5
        %v5605 = vmul.f32 %v5566, 0.5
        %v5606 = vmul.f32 %v5497, 0.5
        %v5607 = vmul.f32 %v5499, 0.5
        %v5608 = vmul.f32 %v5570, 0.5
        %v5609 = vmul.f32 %v5572, 0.5
        %v5610 = vmul.f32 %v5501, 0.5
        %v5611 = vmul.f32 %v5503, 0.5
        %v5612 = vmul.f32 %v5574, 0.5
        %v5613 = vmul.f32 %v5576, 0.5
        %v5614 = vmul.f32 %v5507, 0.5
        %v5615 = vmul.f32 %v5509, 0.5
        %v5616 = vmul.f32 %v5580, 0.5
        %v5617 = vmul.f32 %v5582, 0.5
        %v5618 = vmul.f32 %v5511, 0.5
        %v5619 = vmul.f32 %v5513, 0.5
        %v5620 = vmul.f32 %v5584, 0.5
        %v5621 = vmul.f32 %v5586, 0.5
        %v5622 = vmul.f32 %v5517, 0.5
        %v5623 = vmul.f32 %v5519, 0.5
        %v5624 = vmul.f32 %v5590, 0.5
        %v5625 = vmul.f32 %v5592, 0.5
        %v5626 = vmul.f32 %v5521, 0.5
        %v5627 = vmul.f32 %v5523, 0.5
        %v5628 = vmul.f32 %v5594, 0.5
        %v5629 = vmul.f32 %v5596, 0.5
        %v5630 = vmul.f32 %v5487, 0.044715
        %v5631 = vmul.f32 %v5489, 0.044715
        %v5632 = vmul.f32 %v5560, 0.044715
        %v5633 = vmul.f32 %v5562, 0.044715
        %v5634 = vmul.f32 %v5491, 0.044715
        %v5635 = vmul.f32 %v5493, 0.044715
        %v5636 = vmul.f32 %v5564, 0.044715
        %v5637 = vmul.f32 %v5566, 0.044715
        %v5638 = vmul.f32 %v5497, 0.044715
        %v5639 = vmul.f32 %v5499, 0.044715
        %v5640 = vmul.f32 %v5570, 0.044715
        %v5641 = vmul.f32 %v5572, 0.044715
        %v5642 = vmul.f32 %v5501, 0.044715
        %v5643 = vmul.f32 %v5503, 0.044715
        %v5644 = vmul.f32 %v5574, 0.044715
        %v5645 = vmul.f32 %v5576, 0.044715
        %v5646 = vmul.f32 %v5507, 0.044715
        %v5647 = vmul.f32 %v5509, 0.044715
        %v5648 = vmul.f32 %v5580, 0.044715
        %v5649 = vmul.f32 %v5582, 0.044715
        %v5650 = vmul.f32 %v5511, 0.044715
        %v5651 = vmul.f32 %v5513, 0.044715
        %v5652 = vmul.f32 %v5584, 0.044715
        %v5653 = vmul.f32 %v5586, 0.044715
        %v5654 = vmul.f32 %v5517, 0.044715
        %v5655 = vmul.f32 %v5519, 0.044715
        %v5656 = vmul.f32 %v5590, 0.044715
        %v5657 = vmul.f32 %v5592, 0.044715
        %v5658 = vmul.f32 %v5521, 0.044715
        %v5659 = vmul.f32 %v5523, 0.044715
        %v5660 = vmul.f32 %v5594, 0.044715
        %v5661 = vmul.f32 %v5596, 0.044715
        %v5662 = vmul.f32 %v5630, %v5487
        %v5663 = vmul.f32 %v5631, %v5489
        %v5664 = vmul.f32 %v5632, %v5560
        %v5665 = vmul.f32 %v5633, %v5562
        %v5666 = vmul.f32 %v5634, %v5491
        %v5667 = vmul.f32 %v5635, %v5493
        %v5668 = vmul.f32 %v5636, %v5564
        %v5669 = vmul.f32 %v5637, %v5566
        %v5670 = vmul.f32 %v5638, %v5497
        %v5671 = vmul.f32 %v5639, %v5499
        %v5672 = vmul.f32 %v5640, %v5570
        %v5673 = vmul.f32 %v5641, %v5572
        %v5674 = vmul.f32 %v5642, %v5501
        %v5675 = vmul.f32 %v5643, %v5503
        %v5676 = vmul.f32 %v5644, %v5574
        %v5677 = vmul.f32 %v5645, %v5576
        %v5678 = vmul.f32 %v5646, %v5507
        %v5679 = vmul.f32 %v5647, %v5509
        %v5680 = vmul.f32 %v5648, %v5580
        %v5681 = vmul.f32 %v5649, %v5582
        %v5682 = vmul.f32 %v5650, %v5511
        %v5683 = vmul.f32 %v5651, %v5513
        %v5684 = vmul.f32 %v5652, %v5584
        %v5685 = vmul.f32 %v5653, %v5586
        %v5686 = vmul.f32 %v5654, %v5517
        %v5687 = vmul.f32 %v5655, %v5519
        %v5688 = vmul.f32 %v5656, %v5590
        %v5689 = vmul.f32 %v5657, %v5592
        %v5690 = vmul.f32 %v5658, %v5521
        %v5691 = vmul.f32 %v5659, %v5523
        %v5692 = vmul.f32 %v5660, %v5594
        %v5693 = vmul.f32 %v5661, %v5596
        %v5694 = vmul.f32 %v5662, %v5487
        %v5695 = vmul.f32 %v5663, %v5489
        %v5696 = vmul.f32 %v5664, %v5560
        %v5697 = vmul.f32 %v5665, %v5562
        %v5698 = vmul.f32 %v5666, %v5491
        %v5699 = vmul.f32 %v5667, %v5493
        %v5700 = vmul.f32 %v5668, %v5564
        %v5701 = vmul.f32 %v5669, %v5566
        %v5702 = vmul.f32 %v5670, %v5497
        %v5703 = vmul.f32 %v5671, %v5499
        %v5704 = vmul.f32 %v5672, %v5570
        %v5705 = vmul.f32 %v5673, %v5572
        %v5706 = vmul.f32 %v5674, %v5501
        %v5707 = vmul.f32 %v5675, %v5503
        %v5708 = vmul.f32 %v5676, %v5574
        %v5709 = vmul.f32 %v5677, %v5576
        %v5710 = vmul.f32 %v5678, %v5507
        %v5711 = vmul.f32 %v5679, %v5509
        %v5712 = vmul.f32 %v5680, %v5580
        %v5713 = vmul.f32 %v5681, %v5582
        %v5714 = vmul.f32 %v5682, %v5511
        %v5715 = vmul.f32 %v5683, %v5513
        %v5716 = vmul.f32 %v5684, %v5584
        %v5717 = vmul.f32 %v5685, %v5586
        %v5718 = vmul.f32 %v5686, %v5517
        %v5719 = vmul.f32 %v5687, %v5519
        %v5720 = vmul.f32 %v5688, %v5590
        %v5721 = vmul.f32 %v5689, %v5592
        %v5722 = vmul.f32 %v5690, %v5521
        %v5723 = vmul.f32 %v5691, %v5523
        %v5724 = vmul.f32 %v5692, %v5594
        %v5725 = vmul.f32 %v5693, %v5596
        %v5726 = vadd.f32 %v5487, %v5694
        %v5727 = vadd.f32 %v5489, %v5695
        %v5728 = vadd.f32 %v5560, %v5696
        %v5729 = vadd.f32 %v5562, %v5697
        %v5730 = vadd.f32 %v5491, %v5698
        %v5731 = vadd.f32 %v5493, %v5699
        %v5732 = vadd.f32 %v5564, %v5700
        %v5733 = vadd.f32 %v5566, %v5701
        %v5734 = vadd.f32 %v5497, %v5702
        %v5735 = vadd.f32 %v5499, %v5703
        %v5736 = vadd.f32 %v5570, %v5704
        %v5737 = vadd.f32 %v5572, %v5705
        %v5738 = vadd.f32 %v5501, %v5706
        %v5739 = vadd.f32 %v5503, %v5707
        %v5740 = vadd.f32 %v5574, %v5708
        %v5741 = vadd.f32 %v5576, %v5709
        %v5742 = vadd.f32 %v5507, %v5710
        %v5743 = vadd.f32 %v5509, %v5711
        %v5744 = vadd.f32 %v5580, %v5712
        %v5745 = vadd.f32 %v5582, %v5713
        %v5746 = vadd.f32 %v5511, %v5714
        %v5747 = vadd.f32 %v5513, %v5715
        %v5748 = vadd.f32 %v5584, %v5716
        %v5749 = vadd.f32 %v5586, %v5717
        %v5750 = vadd.f32 %v5517, %v5718
        %v5751 = vadd.f32 %v5519, %v5719
        %v5752 = vadd.f32 %v5590, %v5720
        %v5753 = vadd.f32 %v5592, %v5721
        %v5754 = vadd.f32 %v5521, %v5722
        %v5755 = vadd.f32 %v5523, %v5723
        %v5756 = vadd.f32 %v5594, %v5724
        %v5757 = vadd.f32 %v5596, %v5725
        %v5758 = vmul.f32 %v5726, 0.7978846
        %v5759 = vmul.f32 %v5727, 0.7978846
        %v5760 = vmul.f32 %v5728, 0.7978846
        %v5761 = vmul.f32 %v5729, 0.7978846
        %v5762 = vmul.f32 %v5730, 0.7978846
        %v5763 = vmul.f32 %v5731, 0.7978846
        %v5764 = vmul.f32 %v5732, 0.7978846
        %v5765 = vmul.f32 %v5733, 0.7978846
        %v5766 = vmul.f32 %v5734, 0.7978846
        %v5767 = vmul.f32 %v5735, 0.7978846
        %v5768 = vmul.f32 %v5736, 0.7978846
        %v5769 = vmul.f32 %v5737, 0.7978846
        %v5770 = vmul.f32 %v5738, 0.7978846
        %v5771 = vmul.f32 %v5739, 0.7978846
        %v5772 = vmul.f32 %v5740, 0.7978846
        %v5773 = vmul.f32 %v5741, 0.7978846
        %v5774 = vmul.f32 %v5742, 0.7978846
        %v5775 = vmul.f32 %v5743, 0.7978846
        %v5776 = vmul.f32 %v5744, 0.7978846
        %v5777 = vmul.f32 %v5745, 0.7978846
        %v5778 = vmul.f32 %v5746, 0.7978846
        %v5779 = vmul.f32 %v5747, 0.7978846
        %v5780 = vmul.f32 %v5748, 0.7978846
        %v5781 = vmul.f32 %v5749, 0.7978846
        %v5782 = vmul.f32 %v5750, 0.7978846
        %v5783 = vmul.f32 %v5751, 0.7978846
        %v5784 = vmul.f32 %v5752, 0.7978846
        %v5785 = vmul.f32 %v5753, 0.7978846
        %v5786 = vmul.f32 %v5754, 0.7978846
        %v5787 = vmul.f32 %v5755, 0.7978846
        %v5788 = vmul.f32 %v5756, 0.7978846
        %v5789 = vmul.f32 %v5757, 0.7978846
        %v5790 = vtanh.pop %v5758
        %v5791 = vtanh.pop %v5759
        %v5792 = vtanh.pop %v5760
        %v5793 = vtanh.pop %v5761
        %v5794 = vtanh.pop %v5762
        %v5795 = vtanh.pop %v5763
        %v5796 = vtanh.pop %v5764
        %v5797 = vtanh.pop %v5765
        %v5798 = vtanh.pop %v5766
        %v5799 = vtanh.pop %v5767
        %v5800 = vtanh.pop %v5768
        %v5801 = vtanh.pop %v5769
        %v5802 = vtanh.pop %v5770
        %v5803 = vtanh.pop %v5771
        %v5804 = vtanh.pop %v5772
        %v5805 = vtanh.pop %v5773
        %v5806 = vtanh.pop %v5774
        %v5807 = vtanh.pop %v5775
        %v5808 = vtanh.pop %v5776
        %v5809 = vtanh.pop %v5777
        %v5810 = vtanh.pop %v5778
        %v5811 = vtanh.pop %v5779
        %v5812 = vtanh.pop %v5780
        %v5813 = vtanh.pop %v5781
        %v5814 = vtanh.pop %v5782
        %v5815 = vtanh.pop %v5783
        %v5816 = vtanh.pop %v5784
        %v5817 = vtanh.pop %v5785
        %v5818 = vtanh.pop %v5786
        %v5819 = vtanh.pop %v5787
        %v5820 = vtanh.pop %v5788
        %v5821 = vtanh.pop %v5789
        %v5822 = vadd.f32 %v5790, 1.0
        %v5823 = vadd.f32 %v5791, 1.0
        %v5824 = vadd.f32 %v5792, 1.0
        %v5825 = vadd.f32 %v5793, 1.0
        %v5826 = vadd.f32 %v5794, 1.0
        %v5827 = vadd.f32 %v5795, 1.0
        %v5828 = vadd.f32 %v5796, 1.0
        %v5829 = vadd.f32 %v5797, 1.0
        %v5830 = vadd.f32 %v5798, 1.0
        %v5831 = vadd.f32 %v5799, 1.0
        %v5832 = vadd.f32 %v5800, 1.0
        %v5833 = vadd.f32 %v5801, 1.0
        %v5834 = vadd.f32 %v5802, 1.0
        %v5835 = vadd.f32 %v5803, 1.0
        %v5836 = vadd.f32 %v5804, 1.0
        %v5837 = vadd.f32 %v5805, 1.0
        %v5838 = vadd.f32 %v5806, 1.0
        %v5839 = vadd.f32 %v5807, 1.0
        %v5840 = vadd.f32 %v5808, 1.0
        %v5841 = vadd.f32 %v5809, 1.0
        %v5842 = vadd.f32 %v5810, 1.0
        %v5843 = vadd.f32 %v5811, 1.0
        %v5844 = vadd.f32 %v5812, 1.0
        %v5845 = vadd.f32 %v5813, 1.0
        %v5846 = vadd.f32 %v5814, 1.0
        %v5847 = vadd.f32 %v5815, 1.0
        %v5848 = vadd.f32 %v5816, 1.0
        %v5849 = vadd.f32 %v5817, 1.0
        %v5850 = vadd.f32 %v5818, 1.0
        %v5851 = vadd.f32 %v5819, 1.0
        %v5852 = vadd.f32 %v5820, 1.0
        %v5853 = vadd.f32 %v5821, 1.0
        %v5854 = vmul.f32 %v5598, %v5822
        %v5855 = vmul.f32 %v5599, %v5823
        %v5856 = vmul.f32 %v5600, %v5824
        %v5857 = vmul.f32 %v5601, %v5825
        %v5858 = vmul.f32 %v5602, %v5826
        %v5859 = vmul.f32 %v5603, %v5827
        %v5860 = vmul.f32 %v5604, %v5828
        %v5861 = vmul.f32 %v5605, %v5829
        %v5862 = vmul.f32 %v5606, %v5830
        %v5863 = vmul.f32 %v5607, %v5831
        %v5864 = vmul.f32 %v5608, %v5832
        %v5865 = vmul.f32 %v5609, %v5833
        %v5866 = vmul.f32 %v5610, %v5834
        %v5867 = vmul.f32 %v5611, %v5835
        %v5868 = vmul.f32 %v5612, %v5836
        %v5869 = vmul.f32 %v5613, %v5837
        %v5870 = vmul.f32 %v5614, %v5838
        %v5871 = vmul.f32 %v5615, %v5839
        %v5872 = vmul.f32 %v5616, %v5840
        %v5873 = vmul.f32 %v5617, %v5841
        %v5874 = vmul.f32 %v5618, %v5842
        %v5875 = vmul.f32 %v5619, %v5843
        %v5876 = vmul.f32 %v5620, %v5844
        %v5877 = vmul.f32 %v5621, %v5845
        %v5878 = vmul.f32 %v5622, %v5846
        %v5879 = vmul.f32 %v5623, %v5847
        %v5880 = vmul.f32 %v5624, %v5848
        %v5881 = vmul.f32 %v5625, %v5849
        %v5882 = vmul.f32 %v5626, %v5850
        %v5883 = vmul.f32 %v5627, %v5851
        %v5884 = vmul.f32 %v5628, %v5852
        %v5885 = vmul.f32 %v5629, %v5853
        %v5886 = vpack.c.bf16 %v5858, %v5854
        %v5887 = vpack.c.bf16 %v5859, %v5855
        %v5888 = vpack.c.bf16 %v5860, %v5856
        %v5889 = vpack.c.bf16 %v5861, %v5857
        %v5890 = vpack.c.bf16 %v5866, %v5862
        %v5891 = vpack.c.bf16 %v5867, %v5863
        %v5892 = vpack.c.bf16 %v5868, %v5864
        %v5893 = vpack.c.bf16 %v5869, %v5865
        %v5894 = vpack.c.bf16 %v5874, %v5870
        %v5895 = vpack.c.bf16 %v5875, %v5871
        %v5896 = vpack.c.bf16 %v5876, %v5872
        %v5897 = vpack.c.bf16 %v5877, %v5873
        %v5898 = vpack.c.bf16 %v5882, %v5878
        %v5899 = vpack.c.bf16 %v5883, %v5879
        %v5900 = vpack.c.bf16 %v5884, %v5880
        %v5901 = vpack.c.bf16 %v5885, %v5881
        %v5902 = vld [vmem:[#allocation23] sm:$0xf]
        %v5903 = vld [vmem:[#allocation23 + $0x4] sm:$0xf]
        %v5904 = vld [vmem:[#allocation23 + $0x8] sm:$0xf]
        %v5905 = vld [vmem:[#allocation23 + $0xc] sm:$0xf]
        %v5906 = vld [vmem:[#allocation23 + $0x10] sm:$0xf]
        %v5907 = vld [vmem:[#allocation23 + $0x14] sm:$0xf]
        %v5908 = vld [vmem:[#allocation23 + $0x18] sm:$0xf]
        %v5909 = vld [vmem:[#allocation23 + $0x1c] sm:$0xf]
        %v5910 = vld [vmem:[#allocation23 + $0x20] sm:$0xf]
        %v5911 = vld [vmem:[#allocation23 + $0x24] sm:$0xf]
        %v5912 = vld [vmem:[#allocation23 + $0x28] sm:$0xf]
        %v5913 = vld [vmem:[#allocation23 + $0x2c] sm:$0xf]
        %v5914 = vld [vmem:[#allocation23 + $0x30] sm:$0xf]
        %v5915 = vld [vmem:[#allocation23 + $0x34] sm:$0xf]
        %v5916 = vld [vmem:[#allocation23 + $0x38] sm:$0xf]
        %v5917 = vld [vmem:[#allocation23 + $0x3c] sm:$0xf]
        %v5918 = vld [vmem:[#allocation23 + $0x40] sm:$0xf]
        %v5919 = vld [vmem:[#allocation23 + $0x44] sm:$0xf]
        %v5920 = vld [vmem:[#allocation23 + $0x48] sm:$0xf]
        %v5921 = vld [vmem:[#allocation23 + $0x4c] sm:$0xf]
        %v5922 = vld [vmem:[#allocation23 + $0x50] sm:$0xf]
        %v5923 = vld [vmem:[#allocation23 + $0x54] sm:$0xf]
        %v5924 = vld [vmem:[#allocation23 + $0x58] sm:$0xf]
        %v5925 = vld [vmem:[#allocation23 + $0x5c] sm:$0xf]
        %v5926 = vld [vmem:[#allocation23 + $0x60] sm:$0xf]
        %v5927 = vld [vmem:[#allocation23 + $0x64] sm:$0xf]
        %v5928 = vld [vmem:[#allocation23 + $0x68] sm:$0xf]
        %v5929 = vld [vmem:[#allocation23 + $0x6c] sm:$0xf]
        %v5930 = vld [vmem:[#allocation23 + $0x70] sm:$0xf]
        %v5931 = vld [vmem:[#allocation23 + $0x74] sm:$0xf]
        %v5932 = vld [vmem:[#allocation23 + $0x78] sm:$0xf]
        %v5933 = vld [vmem:[#allocation23 + $0x7c] sm:$0xf]
        %v5934 = vld [vmem:[#allocation23 + $0x80] sm:$0xf]
        %v5935 = vld [vmem:[#allocation23 + $0x84] sm:$0xf]
        %v5936 = vld [vmem:[#allocation23 + $0x88] sm:$0xf]
        %v5937 = vld [vmem:[#allocation23 + $0x8c] sm:$0xf]
        %v5938 = vld [vmem:[#allocation23 + $0x90] sm:$0xf]
        %v5939 = vld [vmem:[#allocation23 + $0x94] sm:$0xf]
        %v5940 = vld [vmem:[#allocation23 + $0x98] sm:$0xf]
        %v5941 = vld [vmem:[#allocation23 + $0x9c] sm:$0xf]
        %v5942 = vld [vmem:[#allocation23 + $0xa0] sm:$0xf]
        %v5943 = vld [vmem:[#allocation23 + $0xa4] sm:$0xf]
        %v5944 = vld [vmem:[#allocation23 + $0xa8] sm:$0xf]
        %v5945 = vld [vmem:[#allocation23 + $0xac] sm:$0xf]
        %v5946 = vld [vmem:[#allocation23 + $0xb0] sm:$0xf]
        %v5947 = vld [vmem:[#allocation23 + $0xb4] sm:$0xf]
        %v5948 = vld [vmem:[#allocation23 + $0xb8] sm:$0xf]
        %v5949 = vld [vmem:[#allocation23 + $0xbc] sm:$0xf]
        %v5950 = vld [vmem:[#allocation23 + $0xc0] sm:$0xf]
        %v5951 = vld [vmem:[#allocation23 + $0xc4] sm:$0xf]
        %v5952 = vld [vmem:[#allocation23 + $0xc8] sm:$0xf]
        %v5953 = vld [vmem:[#allocation23 + $0xcc] sm:$0xf]
        %v5954 = vld [vmem:[#allocation23 + $0xd0] sm:$0xf]
        %v5955 = vld [vmem:[#allocation23 + $0xd4] sm:$0xf]
        %v5956 = vld [vmem:[#allocation23 + $0xd8] sm:$0xf]
        %v5957 = vld [vmem:[#allocation23 + $0xdc] sm:$0xf]
        %v5958 = vld [vmem:[#allocation23 + $0xe0] sm:$0xf]
        %v5959 = vld [vmem:[#allocation23 + $0xe4] sm:$0xf]
        %v5960 = vld [vmem:[#allocation23 + $0xe8] sm:$0xf]
        %v5961 = vld [vmem:[#allocation23 + $0xec] sm:$0xf]
        %v5962 = vld [vmem:[#allocation23 + $0xf0] sm:$0xf]
        %v5963 = vld [vmem:[#allocation23 + $0xf4] sm:$0xf]
        %v5964 = vld [vmem:[#allocation23 + $0xf8] sm:$0xf]
        %v5965 = vld [vmem:[#allocation23 + $0xfc] sm:$0xf]
        %v5966 = vld [vmem:[%s20] sm:$0x1]
        %v5968 = vlaneseq
        %v5969 = vshrl.u32 %v5968, 7
        %v5970 = vsub.s32 0, %v5969
        %v5971 = vrot.slane %v5966, %v5970
        %v6037 = vunpack.c.l.b16 %v5902
        %v6038 = vunpack.c.l.b16 %v5903
        %v6039 = vunpack.c.l.b16 %v5904
        %v6040 = vunpack.c.l.b16 %v5905
        %v6041 = vunpack.c.l.b16 %v5906
        %v6042 = vunpack.c.l.b16 %v5907
        %v6043 = vunpack.c.l.b16 %v5908
        %v6044 = vunpack.c.l.b16 %v5909
        %v6045 = vunpack.c.l.b16 %v5910
        %v6046 = vunpack.c.l.b16 %v5911
        %v6047 = vunpack.c.l.b16 %v5912
        %v6048 = vunpack.c.l.b16 %v5913
        %v6049 = vunpack.c.l.b16 %v5914
        %v6050 = vunpack.c.l.b16 %v5915
        %v6051 = vunpack.c.l.b16 %v5916
        %v6052 = vunpack.c.l.b16 %v5917
        %v6053 = vunpack.c.l.b16 %v5918
        %v6054 = vunpack.c.l.b16 %v5919
        %v6055 = vunpack.c.l.b16 %v5920
        %v6056 = vunpack.c.l.b16 %v5921
        %v6057 = vunpack.c.l.b16 %v5922
        %v6058 = vunpack.c.l.b16 %v5923
        %v6059 = vunpack.c.l.b16 %v5924
        %v6060 = vunpack.c.l.b16 %v5925
        %v6061 = vunpack.c.l.b16 %v5926
        %v6062 = vunpack.c.l.b16 %v5927
        %v6063 = vunpack.c.l.b16 %v5928
        %v6064 = vunpack.c.l.b16 %v5929
        %v6065 = vunpack.c.l.b16 %v5930
        %v6066 = vunpack.c.l.b16 %v5931
        %v6067 = vunpack.c.l.b16 %v5932
        %v6068 = vunpack.c.l.b16 %v5933
        %v6069 = vunpack.c.l.b16 %v5934
        %v6070 = vunpack.c.l.b16 %v5935
        %v6071 = vunpack.c.l.b16 %v5936
        %v6072 = vunpack.c.l.b16 %v5937
        %v6073 = vunpack.c.l.b16 %v5938
        %v6074 = vunpack.c.l.b16 %v5939
        %v6075 = vunpack.c.l.b16 %v5940
        %v6076 = vunpack.c.l.b16 %v5941
        %v6077 = vunpack.c.l.b16 %v5942
        %v6078 = vunpack.c.l.b16 %v5943
        %v6079 = vunpack.c.l.b16 %v5944
        %v6080 = vunpack.c.l.b16 %v5945
        %v6081 = vunpack.c.l.b16 %v5946
        %v6082 = vunpack.c.l.b16 %v5947
        %v6083 = vunpack.c.l.b16 %v5948
        %v6084 = vunpack.c.l.b16 %v5949
        %v6085 = vunpack.c.l.b16 %v5950
        %v6086 = vunpack.c.l.b16 %v5951
        %v6087 = vunpack.c.l.b16 %v5952
        %v6088 = vunpack.c.l.b16 %v5953
        %v6089 = vunpack.c.l.b16 %v5954
        %v6090 = vunpack.c.l.b16 %v5955
        %v6091 = vunpack.c.l.b16 %v5956
        %v6092 = vunpack.c.l.b16 %v5957
        %v6093 = vunpack.c.l.b16 %v5958
        %v6094 = vunpack.c.l.b16 %v5959
        %v6095 = vunpack.c.l.b16 %v5960
        %v6096 = vunpack.c.l.b16 %v5961
        %v6097 = vunpack.c.l.b16 %v5962
        %v6098 = vunpack.c.l.b16 %v5963
        %v6099 = vunpack.c.l.b16 %v5964
        %v6100 = vunpack.c.l.b16 %v5965
        %v6101 = vpack.c.b16 %v6038, %v6037
        %v6102 = vpack.c.b16 %v6040, %v6039
        %v6103 = vpack.c.b16 %v6042, %v6041
        %v6104 = vpack.c.b16 %v6044, %v6043
        %v6105 = vpack.c.b16 %v6046, %v6045
        %v6106 = vpack.c.b16 %v6048, %v6047
        %v6107 = vpack.c.b16 %v6050, %v6049
        %v6108 = vpack.c.b16 %v6052, %v6051
        %v6109 = vpack.c.b16 %v6054, %v6053
        %v6110 = vpack.c.b16 %v6056, %v6055
        %v6111 = vpack.c.b16 %v6058, %v6057
        %v6112 = vpack.c.b16 %v6060, %v6059
        %v6113 = vpack.c.b16 %v6062, %v6061
        %v6114 = vpack.c.b16 %v6064, %v6063
        %v6115 = vpack.c.b16 %v6066, %v6065
        %v6116 = vpack.c.b16 %v6068, %v6067
        %v6117 = vpack.c.b16 %v6070, %v6069
        %v6118 = vpack.c.b16 %v6072, %v6071
        %v6119 = vpack.c.b16 %v6074, %v6073
        %v6120 = vpack.c.b16 %v6076, %v6075
        %v6121 = vpack.c.b16 %v6078, %v6077
        %v6122 = vpack.c.b16 %v6080, %v6079
        %v6123 = vpack.c.b16 %v6082, %v6081
        %v6124 = vpack.c.b16 %v6084, %v6083
        %v6125 = vpack.c.b16 %v6086, %v6085
        %v6126 = vpack.c.b16 %v6088, %v6087
        %v6127 = vpack.c.b16 %v6090, %v6089
        %v6128 = vpack.c.b16 %v6092, %v6091
        %v6129 = vpack.c.b16 %v6094, %v6093
        %v6130 = vpack.c.b16 %v6096, %v6095
        %v6131 = vpack.c.b16 %v6098, %v6097
        %v6132 = vpack.c.b16 %v6100, %v6099
        %6165 = vmatprep.subr.bf16.mxu0 0
        %6166 = vmatpush1.bf16.msra.mxu0 %v6108
        %6167 = vmatprep.subr.bf16.mxu0 0
        %6168 = vmatpush1.bf16.msra.mxu0 %v6107
        %6169 = vmatprep.subr.bf16.mxu0 0
        %6170 = vmatpush1.bf16.msra.mxu0 %v6106
        %6171 = vmatprep.subr.bf16.mxu0 0
        %6172 = vmatpush1.bf16.msra.mxu0 %v6105
        %6173 = vmatprep.subr.bf16.mxu0 0
        %6174 = vmatpush1.bf16.msra.mxu0 %v6104
        %6175 = vmatprep.subr.bf16.mxu0 0
        %6176 = vmatpush1.bf16.msra.mxu0 %v6103
        %6177 = vmatprep.subr.bf16.mxu0 0
        %6178 = vmatpush1.bf16.msra.mxu0 %v6102
        %6179 = vmatprep.subr.bf16.mxu0 0
        %6180 = vmatpush1.bf16.msra.mxu0 %v6101
        %6181 = vmatprep.subr.bf16.mxu0 0
        %6182 = vmatpush2.bf16.msra.mxu0 %v6116
        %6183 = vmatprep.subr.bf16.mxu0 0
        %6184 = vmatpush2.bf16.msra.mxu0 %v6115
        %6185 = vmatprep.subr.bf16.mxu0 0
        %6186 = vmatpush2.bf16.msra.mxu0 %v6114
        %6187 = vmatprep.subr.bf16.mxu0 0
        %6188 = vmatpush2.bf16.msra.mxu0 %v6113
        %6189 = vmatprep.subr.bf16.mxu0 0
        %6190 = vmatpush2.bf16.msra.mxu0 %v6112
        %6191 = vmatprep.subr.bf16.mxu0 0
        %6192 = vmatpush2.bf16.msra.mxu0 %v6111
        %6193 = vmatprep.subr.bf16.mxu0 0
        %6194 = vmatpush2.bf16.msra.mxu0 %v6110
        %6195 = vmatprep.subr.bf16.mxu0 0
        %6196 = vmatpush2.bf16.msra.mxu0 %v6109
        %6197 = vmatprep.mubr.bf16.mxu0 %v5887
        %6198 = vmatmul.mubr.bf16.gmra.mxu0 %v5886
        %v6199 = vpop.f32.mrf.mxu0
        %v6200 = vadd.f32 %v5971, %v6199
        %v6201 = vpop.f32.mrf.mxu0
        %v6202 = vpop.f32.mrf.mxu0
        %v6203 = vadd.f32 %v5971, %v6202
        %v6204 = vpop.f32.mrf.mxu0
        %6205 = vmatprep.mubr.bf16.mxu0 %v5891
        %6206 = vmatmul.mubr.bf16.gmra.mxu0 %v5890
        %v6207 = vpop.f32.mrf.mxu0
        %v6208 = vadd.f32 %v5971, %v6207
        %v6209 = vpop.f32.mrf.mxu0
        %v6210 = vpop.f32.mrf.mxu0
        %v6211 = vadd.f32 %v5971, %v6210
        %v6212 = vpop.f32.mrf.mxu0
        %6213 = vmatprep.mubr.bf16.mxu0 %v5895
        %6214 = vmatmul.mubr.bf16.gmra.mxu0 %v5894
        %v6215 = vpop.f32.mrf.mxu0
        %v6216 = vadd.f32 %v5971, %v6215
        %v6217 = vpop.f32.mrf.mxu0
        %v6218 = vpop.f32.mrf.mxu0
        %v6219 = vadd.f32 %v5971, %v6218
        %v6220 = vpop.f32.mrf.mxu0
        %6221 = vmatprep.mubr.bf16.mxu0 %v5899
        %6222 = vmatmul.mubr.bf16.gmra.mxu0 %v5898
        %v6223 = vpop.f32.mrf.mxu0
        %v6224 = vadd.f32 %v5971, %v6223
        %v6225 = vpop.f32.mrf.mxu0
        %v6226 = vpop.f32.mrf.mxu0
        %v6227 = vadd.f32 %v5971, %v6226
        %v6228 = vpop.f32.mrf.mxu0
        %6229 = vdwg.mxu0
        %6230 = vmatprep.subr.bf16.mxu0 0
        %6231 = vmatpush1.bf16.msra.mxu0 %v6124
        %6232 = vmatprep.subr.bf16.mxu0 0
        %6233 = vmatpush1.bf16.msra.mxu0 %v6123
        %6234 = vmatprep.subr.bf16.mxu0 0
        %6235 = vmatpush1.bf16.msra.mxu0 %v6122
        %6236 = vmatprep.subr.bf16.mxu0 0
        %6237 = vmatpush1.bf16.msra.mxu0 %v6121
        %6238 = vmatprep.subr.bf16.mxu0 0
        %6239 = vmatpush1.bf16.msra.mxu0 %v6120
        %6240 = vmatprep.subr.bf16.mxu0 0
        %6241 = vmatpush1.bf16.msra.mxu0 %v6119
        %6242 = vmatprep.subr.bf16.mxu0 0
        %6243 = vmatpush1.bf16.msra.mxu0 %v6118
        %6244 = vmatprep.subr.bf16.mxu0 0
        %6245 = vmatpush1.bf16.msra.mxu0 %v6117
        %6246 = vmatprep.subr.bf16.mxu0 0
        %6247 = vmatpush2.bf16.msra.mxu0 %v6132
        %6248 = vmatprep.subr.bf16.mxu0 0
        %6249 = vmatpush2.bf16.msra.mxu0 %v6131
        %6250 = vmatprep.subr.bf16.mxu0 0
        %6251 = vmatpush2.bf16.msra.mxu0 %v6130
        %6252 = vmatprep.subr.bf16.mxu0 0
        %6253 = vmatpush2.bf16.msra.mxu0 %v6129
        %6254 = vmatprep.subr.bf16.mxu0 0
        %6255 = vmatpush2.bf16.msra.mxu0 %v6128
        %6256 = vmatprep.subr.bf16.mxu0 0
        %6257 = vmatpush2.bf16.msra.mxu0 %v6127
        %6258 = vmatprep.subr.bf16.mxu0 0
        %6259 = vmatpush2.bf16.msra.mxu0 %v6126
        %6260 = vmatprep.subr.bf16.mxu0 0
        %6261 = vmatpush2.bf16.msra.mxu0 %v6125
        %6262 = vmatprep.mubr.bf16.mxu0 %v5889
        %6263 = vmatmul.mubr.bf16.gmra.mxu0 %v5888
        %v6264 = vpop.f32.mrf.mxu0
        %v6265 = vadd.f32 %v6200, %v6264
        %v6266 = vpop.f32.mrf.mxu0
        %v6267 = vpop.f32.mrf.mxu0
        %v6268 = vadd.f32 %v6203, %v6267
        %v6269 = vpop.f32.mrf.mxu0
        %6270 = vmatprep.mubr.bf16.mxu0 %v5893
        %6271 = vmatmul.mubr.bf16.gmra.mxu0 %v5892
        %v6272 = vpop.f32.mrf.mxu0
        %v6273 = vadd.f32 %v6208, %v6272
        %v6274 = vpop.f32.mrf.mxu0
        %v6275 = vpop.f32.mrf.mxu0
        %v6276 = vadd.f32 %v6211, %v6275
        %v6277 = vpop.f32.mrf.mxu0
        %6278 = vmatprep.mubr.bf16.mxu0 %v5897
        %6279 = vmatmul.mubr.bf16.gmra.mxu0 %v5896
        %v6280 = vpop.f32.mrf.mxu0
        %v6281 = vadd.f32 %v6216, %v6280
        %v6282 = vpop.f32.mrf.mxu0
        %v6283 = vpop.f32.mrf.mxu0
        %v6284 = vadd.f32 %v6219, %v6283
        %v6285 = vpop.f32.mrf.mxu0
        %6286 = vmatprep.mubr.bf16.mxu0 %v5901
        %6287 = vmatmul.mubr.bf16.gmra.mxu0 %v5900
        %v6288 = vpop.f32.mrf.mxu0
        %v6289 = vadd.f32 %v6224, %v6288
        %v6290 = vpop.f32.mrf.mxu0
        %v6291 = vpop.f32.mrf.mxu0
        %v6292 = vadd.f32 %v6227, %v6291
        %v6293 = vpop.f32.mrf.mxu0
        %6294 = vdwg.mxu0
        %v6295 = vlaneseq
        %v6296 = vshrl.u32 %v6295, 7
        %v6297 = vsub.s32 5, %v6296
        %v6298 = vrot.slane %v908, %v6297
        %v6299 = vmul.f32 %v6298, %v6265
        %v6300 = vmul.f32 %v6298, %v6268
        %v6301 = vmul.f32 %v6298, %v6273
        %v6302 = vmul.f32 %v6298, %v6276
        %v6303 = vmul.f32 %v6298, %v6281
        %v6304 = vmul.f32 %v6298, %v6284
        %v6305 = vmul.f32 %v6298, %v6289
        %v6306 = vmul.f32 %v6298, %v6292
        %v6307 = vadd.f32 %v5114, %v6299
        %v6308 = vadd.f32 %v5115, %v6300
        %v6309 = vadd.f32 %v5116, %v6301
        %v6310 = vadd.f32 %v5117, %v6302
        %v6311 = vadd.f32 %v5118, %v6303
        %v6312 = vadd.f32 %v5119, %v6304
        %v6313 = vadd.f32 %v5120, %v6305
        %v6314 = vadd.f32 %v5121, %v6306
        %6315 = vst [vmem:[%s898] sm:$0xff] %v6307
        %6316 = vst [vmem:[%s898 + $0x8] sm:$0xff] %v6308
        %6317 = vst [vmem:[%s898 + $0x10] sm:$0xff] %v6309
        %6318 = vst [vmem:[%s898 + $0x18] sm:$0xff] %v6310
        %6319 = vst [vmem:[%s898 + $0x20] sm:$0xff] %v6311
        %6320 = vst [vmem:[%s898 + $0x28] sm:$0xff] %v6312
        %6321 = vst [vmem:[%s898 + $0x30] sm:$0xff] %v6313
        %6322 = vst [vmem:[%s898 + $0x38] sm:$0xff] %v6314
        %s6323 = sand.u32 %s530, 1
        %s6324 = scalar_lea.sflag [#allocation8], %s6323
        %s6325 = sand.u32 %s530, 1
        %s6326 = smul.addr %s6325, 64
        %s6327 = scalar_lea.vmem [#allocation24], %s6326
        // Predicated region
        $region153: #{tpu_custom_call.1} parent=103 // pred_check
          %p6328 = pneg %p540
        $region154: #{tpu_custom_call.1} parent=103 // pred_check_branch
          %6330 = sbr.rel (%p6328) target = $region156
        $region155: #{tpu_custom_call.1} parent=103 // pred_region
          %s6331 = smul.u32 8, %s50
          %s6333 = ssub.s32 1024, 1024
          %6334 = vsyncadd %s6324, %s6333
          %s6335 = smul.addr %s49, 16
          %s6336 = sadd.s32 %s6331, %s6335
          %s6337 = smul.addr %s6336, 128
          %s6338 = scalar_lea.hbm %s21, %s6337
          %s6339 = sshll.u32 %s6327, 4
          %s6340 = int_to_ptr.vmem [resolvable:$true] %s6339
          %6345 = dma.vmem_to_hbm [thread:$0]  %s6340, 1024, %s6338, %s6324, 128, 128, 8
        $region156: #{tpu_custom_call.1} parent=103 // pred_fallthru
          _
      $region104: #{tpu_custom_call.1} parent=5 // pred_fallthru
        _
      %p6346 = scmp.le.s32.totalorder 2, %s40
      // Predicated region
      $region157: #{tpu_custom_call.1} parent=5 // pred_check
        %p6347 = pneg %p6346
      $region158: #{tpu_custom_call.1} parent=5 // pred_check_branch
        %6349 = sbr.rel (%p6347) target = $region160
      $region159: #{tpu_custom_call.1} parent=5 // pred_region
        %s6350 = ssub.s32 %s40, 2
        // Predicated region
        $region161: #{tpu_custom_call.1} parent=159 // pred_check
          %p6351 = pneg %p546
        $region162: #{tpu_custom_call.1} parent=159 // pred_check_branch
          %6353 = sbr.rel (%p6351) target = $region164
        $region163: #{tpu_custom_call.1} parent=159 // pred_region
          %s6354 = sand.u32 %s531, 1
          %s6355 = scalar_lea.sflag [#allocation8], %s6354
          %s6356 = sand.u32 %s531, 1
          %s6357 = smul.addr %s6356, 64
          %s6358 = scalar_lea.vmem [#allocation24], %s6357
          %6359 = dma.done %s6355, 1024
        $region164: #{tpu_custom_call.1} parent=159 // pred_fallthru
          _
      $region160: #{tpu_custom_call.1} parent=5 // pred_fallthru
        _
    $region6: #{tpu_custom_call.1} parent=1 // loop_footer
      %s44 = sadd.s32 1, %s40
    $region7: #{tpu_custom_call.1} parent=1 // loop_footer_branch
      %39 = sbr.rel target = $region3
    $region8: #{tpu_custom_call.1} parent=1 // loop_exit
      _
    %6360 = vsyncpa [#allocation7], 1
    %s6361 = scalar_lea.sflag [#allocation7], 1
    %6362 = vsyncpa %s6361, 1
    %6363 = vsyncpa [#allocation10], 1
    %s6364 = scalar_lea.sflag [#allocation10], 1
    %6365 = vsyncpa %s6364, 1
    %6366 = vsyncpa [#allocation13], 1
    %6367 = vsyncpa [#allocation16], 1
    %6368 = vsyncpa [#allocation19], 1
    %6369 = vsyncpa [#allocation22], 1
    %6370 = vsyncpa [#allocation8], 1
    %s6371 = scalar_lea.sflag [#allocation8], 1
    %6372 = vsyncpa %s6371, 1

</llo_original>
